<compile_context>
chip_gen: v7x
topology: tpu7x:2x2x1
jax: 0.10.0
libtpu: 0.0.40
codegen_flags: <defaults>
</compile_context>

<pallas_src>
import functools
import math

import jax
import jax.numpy as jnp
from jax import lax
from jax.experimental import pallas as pl
from jax.experimental.pallas import tpu as pltpu

EPS = 1e-5
LANE = 128
_VMEM_LIMIT = 48 * 1024 * 1024  # conservative: also fits v7x's 64 MiB physical VMEM


def _round_up(a, b):
    return (a + b - 1) // b * b


def _pick_strip(rows_needed, w, c):
    """Output-strip height (multiple of 8); keeps one f32 window around ~4 MiB."""
    budget_rows = (4 * 1024 * 1024) // max(1, 4 * (w + 2) * c)
    budget_rows = max(8, (budget_rows // 8) * 8)
    rows8 = _round_up(max(int(rows_needed), 1), 8)
    return min(rows8, budget_rows)


# --------------------------------------------------------------------------------------
# conv1: host-side im2col'd first conv (K = 9*Cin), bias, BN1 partial stats,
#        spatially padded (zero-column) bf16 output that conv2 reads directly.
# --------------------------------------------------------------------------------------
def _conv1_kernel(x_ref, w_ref, b_ref, o_ref, st_ref, *, H, W, th):
    # x_ref : (1, th, W, 9*Cin) bf16, row r holds the 3x3xCin patch of conv output row r-1
    # w_ref : (9*Cin, Cout) bf16      b_ref: (1, Cout) f32
    # o_ref : (1, th, W+2, Cout) bf16 (stored with 1 zero column on each side)
    # st_ref: (1, 2, W, Cout) f32 partial [sum; sum_sq] for BN1 batch statistics
    i = pl.program_id(1)
    K9 = x_ref.shape[3]
    Cout = o_ref.shape[3]

    slab = x_ref[0].reshape(th * W, K9)
    acc = jnp.broadcast_to(b_ref[0].astype(jnp.float32), (th * W, Cout))
    acc = acc + jnp.dot(slab, w_ref[...], preferred_element_type=jnp.float32)
    res = acc.reshape(th, W, Cout)

    # Partial BN statistics: only mask rows (tiny (th,1,1) mask), reduce over the
    # untiled row axis (pure VPU adds), finish the W reduction in plain JAX.
    orow = i * th + lax.broadcasted_iota(jnp.int32, (th, 1, 1), 0)
    rmask = ((orow >= 1) & (orow <= H)).astype(jnp.float32)   # real stored rows are [1, H+1)
    resm = res * rmask
    st_ref[0, 0] = jnp.sum(resm, axis=0)
    st_ref[0, 1] = jnp.sum(resm * res, axis=0)

    # Spatially padded output strip (zero left/right columns); rows outside [1, H+1) may
    # hold non-zero values -- conv2 re-zeroes exactly those positions when it reads them.
    zc = jnp.zeros((th, 1, Cout), o_ref.dtype)
    o_ref[0, :, 0:1, :] = zc
    o_ref[0, :, 1:W + 1, :] = res.astype(o_ref.dtype)
    o_ref[0, :, W + 1:W + 2, :] = zc


def _conv1_call(xi9, w, b, *, H, W, th, Hs1, Cp):
    N = xi9.shape[0]
    K9 = xi9.shape[3]
    GH = Hs1 // th
    kernel = functools.partial(_conv1_kernel, H=H, W=W, th=th)
    return pl.pallas_call(
        kernel,
        out_shape=(
            jax.ShapeDtypeStruct((N, Hs1, W + 2, Cp), jnp.bfloat16),
            jax.ShapeDtypeStruct((N * GH, 2, W, Cp), jnp.float32),
        ),
        grid_spec=pltpu.PrefetchScalarGridSpec(
            num_scalar_prefetch=0,
            grid=(N, GH),
            in_specs=[
                pl.BlockSpec((1, th, W, K9), lambda n, i: (n, i, 0, 0)),
                pl.BlockSpec((K9, Cp), lambda n, i: (0, 0)),
                pl.BlockSpec((1, Cp), lambda n, i: (0, 0)),
            ],
            out_specs=[
                pl.BlockSpec((1, th, W + 2, Cp), lambda n, i: (n, i, 0, 0)),
                pl.BlockSpec((1, 2, W, Cp), lambda n, i: (n * GH + i, 0, 0, 0)),
            ],
        ),
        compiler_params=pltpu.CompilerParams(
            dimension_semantics=("parallel", "parallel"),
            vmem_limit_bytes=_VMEM_LIMIT),
    )(xi9, w, b)


# --------------------------------------------------------------------------------------
# conv2: BN1+ReLU fused into the input read (staged into a bf16 VMEM scratch window),
#        per-dy fused K=3*C matmuls from the scratch ref, bias, BN2 partial stats.
# --------------------------------------------------------------------------------------
def _conv2_kernel(xa_ref, xb_ref, w_ref, b_ref, sc_ref, sh_ref,
                  o_ref, st_ref, xs_ref, *, H, W, th, n_strips):
    # xa_ref: (1, th, W+2, C) bf16 strip of y1_store     xb_ref: (1, 2, W+2, C) 2-row halo
    # w_ref : (3, 3*C, C) bf16 (pre-reshaped)            b_ref : (1, C) f32
    # sc/sh : (1, C) f32 fused BN1 affine                o_ref : (1, th, W, C) bf16
    # st_ref: (1, 2, W, C) f32 partial BN2 statistics
    # xs_ref: (th+2, W+2, C) bf16 scratch -- the BN1+ReLU'd, re-zero-padded input window
    C = xa_ref.shape[3]
    Wp2 = xa_ref.shape[2]
    i = pl.program_id(1)

    # ---- stage the halo window into VMEM scratch, fusing BN1 + ReLU into the write ----
    sc = sc_ref[0]
    sh = sh_ref[0]
    xs_ref[0:th] = jnp.maximum(
        xa_ref[0].astype(jnp.float32) * sc + sh, 0.0).astype(jnp.bfloat16)
    xs_ref[th:th + 2] = jnp.maximum(
        xb_ref[0].astype(jnp.float32) * sc + sh, 0.0).astype(jnp.bfloat16)

    # Re-zero the stored spatial padding (the affine moved the stored zeros to max(shift,0)).
    zcol = jnp.zeros((th + 2, 1, C), jnp.bfloat16)
    xs_ref[:, 0:1, :] = zcol
    xs_ref[:, W + 1:W + 2, :] = zcol

    @pl.when(i == 0)
    def _():
        xs_ref[0:1] = jnp.zeros((1, Wp2, C), jnp.bfloat16)

    bot = (H + 1) - (n_strips - 1) * th        # first padding row in the LAST strip's window

    @pl.when(i == n_strips - 1)
    def _():
        xs_ref[bot:th + 2] = jnp.zeros((th + 2 - bot, Wp2, C), jnp.bfloat16)

    # ---- per-dy fused K = 3*C matmuls sliced from the scratch window ------------------
    acc = jnp.broadcast_to(b_ref[0].astype(jnp.float32), (th * W, C))
    for dy in range(3):
        slab = jnp.concatenate(
            [xs_ref[dy:dy + th, dx:dx + W, :] for dx in range(3)],
            axis=-1).reshape(th * W, 3 * C)
        acc = acc + jnp.dot(slab, w_ref[dy], preferred_element_type=jnp.float32)
    res = acc.reshape(th, W, C)

    # ---- partial BN2 statistics (row-masked only; reduce over the untiled row axis) ---
    orow = i * th + lax.broadcasted_iota(jnp.int32, (th, 1, 1), 0)
    rmask = (orow < H).astype(jnp.float32)
    resm = res * rmask
    st_ref[0, 0] = jnp.sum(resm, axis=0)
    st_ref[0, 1] = jnp.sum(resm * res, axis=0)

    o_ref[0] = res.astype(o_ref.dtype)


def _conv2_call(y1_store, w, b, sc, sh, *, H, W, th, Hs2, Cp):
    N = y1_store.shape[0]
    Wp2 = y1_store.shape[2]
    GH = Hs2 // th
    h2 = th // 2
    kernel = functools.partial(_conv2_kernel, H=H, W=W, th=th, n_strips=GH)
    return pl.pallas_call(
        kernel,
        out_shape=(
            jax.ShapeDtypeStruct((N, Hs2, W, Cp), jnp.bfloat16),
            jax.ShapeDtypeStruct((N * GH, 2, W, Cp), jnp.float32),
        ),
        grid_spec=pltpu.PrefetchScalarGridSpec(
            num_scalar_prefetch=0,
            grid=(N, GH),
            in_specs=[
                # main strip and a 2-row halo view of the SAME array
                pl.BlockSpec((1, th, Wp2, Cp), lambda n, i: (n, i, 0, 0)),
                pl.BlockSpec((1, 2, Wp2, Cp), lambda n, i: (n, (i + 1) * h2, 0, 0)),
                pl.BlockSpec((3, 3 * Cp, Cp), lambda n, i: (0, 0, 0)),
                pl.BlockSpec((1, Cp), lambda n, i: (0, 0)),
                pl.BlockSpec((1, Cp), lambda n, i: (0, 0)),
                pl.BlockSpec((1, Cp), lambda n, i: (0, 0)),
            ],
            out_specs=[
                pl.BlockSpec((1, th, W, Cp), lambda n, i: (n, i, 0, 0)),
                pl.BlockSpec((1, 2, W, Cp), lambda n, i: (n * GH + i, 0, 0, 0)),
            ],
            scratch_shapes=[pltpu.VMEM((th + 2, Wp2, Cp), jnp.bfloat16)],
        ),
        compiler_params=pltpu.CompilerParams(
            dimension_semantics=("parallel", "parallel"),
            vmem_limit_bytes=_VMEM_LIMIT),
    )(y1_store, y1_store, w, b, sc, sh)


# --------------------------------------------------------------------------------------
# BN2 + ReLU over a flat lane-dense (rows, 128) view of the bf16 conv2 output.
# --------------------------------------------------------------------------------------
def _bn_relu_kernel(y_ref, sc_ref, sh_ref, o_ref):
    y = y_ref[...].astype(jnp.float32)
    o_ref[...] = jnp.maximum(y * sc_ref[...] + sh_ref[...], 0.0).astype(o_ref.dtype)


def _bn_relu(y_flat, scale, shift):
    R, C = y_flat.shape
    blk = R
    for cand in (4096, 2048, 1024, 512, 256, 128, 64, 32, 16, 8):
        if R % cand == 0:
            blk = cand
            break
    return pl.pallas_call(
        _bn_relu_kernel,
        out_shape=jax.ShapeDtypeStruct((R, C), jnp.float32),
        grid_spec=pltpu.PrefetchScalarGridSpec(
            num_scalar_prefetch=0,
            grid=(R // blk,),
            in_specs=[
                pl.BlockSpec((blk, C), lambda r: (r, 0)),
                pl.BlockSpec((1, C), lambda r: (0, 0)),
                pl.BlockSpec((1, C), lambda r: (0, 0)),
            ],
            out_specs=pl.BlockSpec((blk, C), lambda r: (r, 0)),
        ),
        compiler_params=pltpu.CompilerParams(
            dimension_semantics=("parallel",),
            vmem_limit_bytes=_VMEM_LIMIT),
    )(y_flat, scale, shift)


def _bn_affine_from_stats(stats, gamma_p, beta_p, count):
    # Finalize training-mode (biased-variance) BatchNorm from in-kernel partial sums.
    s = jnp.sum(stats, axis=(0, 2))                      # (2, Cp)
    mean = s[0] / count
    var = jnp.maximum(s[1] / count - mean * mean, 0.0)
    scale = gamma_p / jnp.sqrt(var + EPS)
    shift = beta_p - mean * scale
    return scale[None, :].astype(jnp.float32), shift[None, :].astype(jnp.float32)


# --------------------------------------------------------------------------------------
# Forward pass (NCHW f32 in / out, like the PyTorch module).
# --------------------------------------------------------------------------------------
def double_conv_forward(x_nchw, params):
    N, Cin, H, W = x_nchw.shape
    Cout = params["gamma1"].shape[0]
    Cp = _round_up(Cout, LANE)
    K9 = 9 * Cin

    x = jnp.transpose(x_nchw, (0, 2, 3, 1)).astype(jnp.float32)   # NHWC

    # ---- static tiling / padded-layout arithmetic ---------------------------------
    th2 = _pick_strip(H, W, Cp)                 # conv2 output strip rows
    GH2 = -(-H // th2)
    Hs2 = GH2 * th2                             # conv2 stored output rows (>= H)
    th1 = _pick_strip(Hs2 + 2, W, Cp)           # conv1 output strip rows
    GH1 = -(-(Hs2 + 2) // th1)
    Hs1 = GH1 * th1                             # y1_store rows: [1 zero][H real][padding]

    # ---- parameters: out-channels zero-padded to Cp, weights pre-reshaped to bf16 ---
    w1r = jnp.pad(params["w1"], ((0, 0), (0, 0), (0, 0), (0, Cp - Cout))
                  ).reshape(K9, Cp).astype(jnp.bfloat16)
    w2r = jnp.pad(params["w2"], ((0, 0), (0, 0), (0, Cp - Cout), (0, Cp - Cout))
                  ).reshape(3, 3 * Cp, Cp).astype(jnp.bfloat16)
    b1 = jnp.pad(params["b1"], ((0, 0), (0, Cp - Cout))).astype(jnp.float32)
    b2 = jnp.pad(params["b2"], ((0, 0), (0, Cp - Cout))).astype(jnp.float32)
    g1 = jnp.pad(params["gamma1"], (0, Cp - Cout))
    be1 = jnp.pad(params["beta1"], (0, Cp - Cout))
    g2 = jnp.pad(params["gamma2"], (0, Cp - Cout))
    be2 = jnp.pad(params["beta2"], (0, Cp - Cout))

    # ---- host-side im2col for the tiny-Cin first conv (lane dim becomes 9*Cin) ------
    xp = jnp.pad(x, ((0, 0), (1, 1), (1, 1), (0, 0)))
    patches = jnp.concatenate(
        [xp[:, dy:dy + H, dx:dx + W, :] for dy in range(3) for dx in range(3)], axis=-1)
    # row r of xi9 holds the patch of conv output row r-1 (so y1_store carries its own
    # 1-row top zero border for conv2); trailing rows are zero padding.
    xi9 = jnp.pad(patches, ((0, 0), (1, Hs1 - H - 1), (0, 0), (0, 0))).astype(jnp.bfloat16)

    # conv1 -> spatially padded, lane-dense bf16 y1 + BN1 partial stats
    y1_store, st1 = _conv1_call(xi9, w1r, b1, H=H, W=W, th=th1, Hs1=Hs1, Cp=Cp)

    count = float(N * H * W)
    sc1, sh1 = _bn_affine_from_stats(st1, g1, be1, count)

    # conv2 (BN1+ReLU fused into its input read) -> bf16 y2 + BN2 partial stats
    y2, st2 = _conv2_call(y1_store, w2r, b2, sc1, sh1, H=H, W=W, th=th2, Hs2=Hs2, Cp=Cp)
    sc2, sh2 = _bn_affine_from_stats(st2, g2, be2, count)

    # BN2 + ReLU over a flat lane-dense bf16 view, then strip padding and go back to NCHW.
    out = _bn_relu(y2.reshape(N * Hs2 * W, Cp), sc2, sh2)
    out = out.reshape(N, Hs2, W, Cp)[:, :H, :, :Cout]
    # TODO(synk): fold this slice + NHWC->NCHW transpose into the BN2 kernel's out_spec.
    return jnp.transpose(out, (0, 3, 1, 2))


def init_params(key, in_ch, out_ch):
    ks = jax.random.split(key, 8)
    w1 = jax.random.normal(ks[0], (3, 3, in_ch, out_ch), jnp.float32) / math.sqrt(9 * in_ch)
    b1 = 0.05 * jax.random.normal(ks[1], (1, out_ch), jnp.float32)
    w2 = jax.random.normal(ks[2], (3, 3, out_ch, out_ch), jnp.float32) / math.sqrt(9 * out_ch)
    b2 = 0.05 * jax.random.normal(ks[3], (1, out_ch), jnp.float32)
    gamma1 = 1.0 + 0.1 * jax.random.normal(ks[4], (out_ch,), jnp.float32)
    beta1 = 0.1 * jax.random.normal(ks[5], (out_ch,), jnp.float32)
    gamma2 = 1.0 + 0.1 * jax.random.normal(ks[6], (out_ch,), jnp.float32)
    beta2 = 0.1 * jax.random.normal(ks[7], (out_ch,), jnp.float32)
    return dict(w1=w1, b1=b1, w2=w2, b2=b2,
                gamma1=gamma1, beta1=beta1, gamma2=gamma2, beta2=beta2)


if __name__ == "__main__":
    key = jax.random.PRNGKey(0)
    k_x, k_p = jax.random.split(key)
    N, C_in, C_out, H, W = 2, 4, 8, 16, 16
    x = jax.random.normal(k_x, (N, C_in, H, W), jnp.float32)   # NCHW like PyTorch
    params = init_params(k_p, C_in, C_out)

    out = jax.jit(double_conv_forward)(x, params)
    jax.block_until_ready(out)
    assert out.shape == (N, C_out, H, W)
    print("KERNEL_OK")
</pallas_src>

<mosaic_0001>
module attributes {stable_mosaic.version = 11 : i64} {
  func.func @_conv1_kernel(%arg0: i32, %arg1: i32, %arg2: memref<1x24x16x36xbf16, #tpu.memory_space<vmem>>, %arg3: memref<36x128xbf16, #tpu.memory_space<vmem>>, %arg4: memref<1x128xf32, #tpu.memory_space<vmem>>, %arg5: memref<1x24x18x128xbf16, #tpu.memory_space<vmem>>, %arg6: memref<1x2x16x128xf32, #tpu.memory_space<vmem>>) attributes {dimension_semantics = [#tpu.dimension_semantics<parallel>, #tpu.dimension_semantics<parallel>], iteration_bounds = array<i64: 2, 1>, scalar_prefetch = 0 : i64, scratch_operands = 0 : i64, tpu.core_type = #tpu.core_type<tc>, window_params = [{transform_indices = @transform_0, window_bounds = array<i64: 1, 24, 16, 36>}, {pipeline_mode = #tpu.pipeline_mode<synchronous>, transform_indices = @transform_1, window_bounds = array<i64: 36, 128>}, {pipeline_mode = #tpu.pipeline_mode<synchronous>, transform_indices = @transform_2, window_bounds = array<i64: 1, 128>}, {transform_indices = @transform_3, window_bounds = array<i64: 1, 24, 18, 128>}, {transform_indices = @transform_4, window_bounds = array<i64: 1, 2, 16, 128>}]} {
    %c0 = arith.constant 0 : index
    %c0_0 = arith.constant 0 : index
    %c0_1 = arith.constant 0 : index
    %c0_2 = arith.constant 0 : index
    %0 = vector.load %arg2[%c0, %c0_0, %c0_1, %c0_2] : memref<1x24x16x36xbf16, #tpu.memory_space<vmem>>, vector<1x24x16x36xbf16>
    %1 = vector.shape_cast %0 : vector<1x24x16x36xbf16> to vector<24x16x36xbf16>
    %2 = vector.shape_cast %1 : vector<24x16x36xbf16> to vector<384x36xbf16>
    %c0_3 = arith.constant 0 : index
    %c0_4 = arith.constant 0 : index
    %3 = vector.load %arg4[%c0_3, %c0_4] : memref<1x128xf32, #tpu.memory_space<vmem>>, vector<1x128xf32>
    %4 = vector.shape_cast %3 : vector<1x128xf32> to vector<128xf32>
    %5 = vector.shape_cast %4 : vector<128xf32> to vector<1x128xf32>
    %6 = vector.broadcast %5 : vector<1x128xf32> to vector<384x128xf32>
    %c0_5 = arith.constant 0 : index
    %c0_6 = arith.constant 0 : index
    %7 = vector.load %arg3[%c0_5, %c0_6] : memref<36x128xbf16, #tpu.memory_space<vmem>>, vector<36x128xbf16>
    %cst = arith.constant dense<0.000000e+00> : vector<384x128xf32>
    %8 = tpu.matmul %2, %7, %cst {dimension_numbers = #tpu.dot_dimension_numbers<[1], [0], [0], [1], [0, 0, 1, 1], [], []>} : vector<384x36xbf16>, vector<36x128xbf16>, vector<384x128xf32> -> vector<384x128xf32>
    %9 = arith.addf %6, %8 : vector<384x128xf32>
    %10 = vector.shape_cast %9 : vector<384x128xf32> to vector<24x16x128xf32>
    %c24_i32 = arith.constant 24 : i32
    %11 = arith.muli %arg1, %c24_i32 : i32
    %12 = tpu.iota {dimensions = array<i32: 0>} : vector<24x1x1xi32>
    %13 = vector.broadcast %11 : i32 to vector<24x1x1xi32>
    %14 = arith.addi %13, %12 : vector<24x1x1xi32>
    %c1_i32 = arith.constant 1 : i32
    %15 = vector.broadcast %c1_i32 : i32 to vector<24x1x1xi32>
    %16 = arith.cmpi sge, %14, %15 : vector<24x1x1xi32>
    %c16_i32 = arith.constant 16 : i32
    %17 = vector.broadcast %c16_i32 : i32 to vector<24x1x1xi32>
    %18 = arith.cmpi sle, %14, %17 : vector<24x1x1xi32>
    %19 = arith.andi %16, %18 : vector<24x1x1xi1>
    %20 = arith.extui %19 : vector<24x1x1xi1> to vector<24x1x1xi32>
    %21 = arith.sitofp %20 : vector<24x1x1xi32> to vector<24x1x1xf32>
    %22 = vector.broadcast %21 : vector<24x1x1xf32> to vector<24x16x128xf32>
    %23 = arith.mulf %10, %22 : vector<24x16x128xf32>
    %cst_7 = arith.constant dense<0.000000e+00> : vector<16x128xf32>
    %24 = vector.multi_reduction <add>, %23, %cst_7 [0] : vector<24x16x128xf32> to vector<16x128xf32>
    %c0_8 = arith.constant 0 : index
    %c0_9 = arith.constant 0 : index
    %c0_10 = arith.constant 0 : index
    %c0_11 = arith.constant 0 : index
    %25 = vector.load %arg6[%c0_8, %c0_9, %c0_10, %c0_11] : memref<1x2x16x128xf32, #tpu.memory_space<vmem>>, vector<1x1x16x128xf32>
    %26 = vector.shape_cast %25 : vector<1x1x16x128xf32> to vector<16x128xf32>
    %27 = vector.shape_cast %24 : vector<16x128xf32> to vector<1x1x16x128xf32>
    tpu.vector_store %arg6[%c0_8, %c0_9, %c0_10, %c0_11], %27 {strides = array<i32>} : memref<1x2x16x128xf32, #tpu.memory_space<vmem>>, vector<1x1x16x128xf32>,
    %28 = arith.mulf %23, %10 : vector<24x16x128xf32>
    %cst_12 = arith.constant dense<0.000000e+00> : vector<16x128xf32>
    %29 = vector.multi_reduction <add>, %28, %cst_12 [0] : vector<24x16x128xf32> to vector<16x128xf32>
    %c0_13 = arith.constant 0 : index
    %c1 = arith.constant 1 : index
    %c0_14 = arith.constant 0 : index
    %c0_15 = arith.constant 0 : index
    %30 = vector.load %arg6[%c0_13, %c1, %c0_14, %c0_15] : memref<1x2x16x128xf32, #tpu.memory_space<vmem>>, vector<1x1x16x128xf32>
    %31 = vector.shape_cast %30 : vector<1x1x16x128xf32> to vector<16x128xf32>
    %32 = vector.shape_cast %29 : vector<16x128xf32> to vector<1x1x16x128xf32>
    tpu.vector_store %arg6[%c0_13, %c1, %c0_14, %c0_15], %32 {strides = array<i32>} : memref<1x2x16x128xf32, #tpu.memory_space<vmem>>, vector<1x1x16x128xf32>,
    %cst_16 = arith.constant 0.000000e+00 : bf16
    %33 = vector.broadcast %cst_16 : bf16 to vector<24x1x128xbf16>
    %c0_17 = arith.constant 0 : index
    %c0_18 = arith.constant 0 : index
    %c0_19 = arith.constant 0 : index
    %c0_20 = arith.constant 0 : index
    %34 = vector.load %arg5[%c0_17, %c0_18, %c0_19, %c0_20] : memref<1x24x18x128xbf16, #tpu.memory_space<vmem>>, vector<1x24x1x128xbf16>
    %35 = vector.shape_cast %34 : vector<1x24x1x128xbf16> to vector<24x1x128xbf16>
    %36 = vector.shape_cast %33 : vector<24x1x128xbf16> to vector<1x24x1x128xbf16>
    tpu.vector_store %arg5[%c0_17, %c0_18, %c0_19, %c0_20], %36 {strides = array<i32>} : memref<1x24x18x128xbf16, #tpu.memory_space<vmem>>, vector<1x24x1x128xbf16>,
    %37 = arith.truncf %10 : vector<24x16x128xf32> to vector<24x16x128xbf16>
    %c0_21 = arith.constant 0 : index
    %c0_22 = arith.constant 0 : index
    %c1_23 = arith.constant 1 : index
    %c0_24 = arith.constant 0 : index
    %38 = vector.load %arg5[%c0_21, %c0_22, %c1_23, %c0_24] : memref<1x24x18x128xbf16, #tpu.memory_space<vmem>>, vector<1x24x16x128xbf16>
    %39 = vector.shape_cast %38 : vector<1x24x16x128xbf16> to vector<24x16x128xbf16>
    %40 = vector.shape_cast %37 : vector<24x16x128xbf16> to vector<1x24x16x128xbf16>
    tpu.vector_store %arg5[%c0_21, %c0_22, %c1_23, %c0_24], %40 {strides = array<i32>} : memref<1x24x18x128xbf16, #tpu.memory_space<vmem>>, vector<1x24x16x128xbf16>,
    %c0_25 = arith.constant 0 : index
    %c0_26 = arith.constant 0 : index
    %c17 = arith.constant 17 : index
    %c0_27 = arith.constant 0 : index
    %41 = vector.load %arg5[%c0_25, %c0_26, %c17, %c0_27] : memref<1x24x18x128xbf16, #tpu.memory_space<vmem>>, vector<1x24x1x128xbf16>
    %42 = vector.shape_cast %41 : vector<1x24x1x128xbf16> to vector<24x1x128xbf16>
    %43 = vector.shape_cast %33 : vector<24x1x128xbf16> to vector<1x24x1x128xbf16>
    tpu.vector_store %arg5[%c0_25, %c0_26, %c17, %c0_27], %43 {strides = array<i32>} : memref<1x24x18x128xbf16, #tpu.memory_space<vmem>>, vector<1x24x1x128xbf16>,
    return
  }
  func.func @transform_0(%arg0: i32, %arg1: i32) -> (i32, i32, i32, i32) {
    %c0_i32 = arith.constant 0 : i32
    %c0_i32_0 = arith.constant 0 : i32
    %c0_i32_1 = arith.constant 0 : i32
    return %arg0, %arg1, %c0_i32, %c0_i32_0 : i32, i32, i32, i32
  }
  func.func @transform_1(%arg0: i32, %arg1: i32) -> (i32, i32) {
    %c0_i32 = arith.constant 0 : i32
    %c0_i32_0 = arith.constant 0 : i32
    %c0_i32_1 = arith.constant 0 : i32
    return %c0_i32, %c0_i32_0 : i32, i32
  }
  func.func @transform_2(%arg0: i32, %arg1: i32) -> (i32, i32) {
    %c0_i32 = arith.constant 0 : i32
    %c0_i32_0 = arith.constant 0 : i32
    %c0_i32_1 = arith.constant 0 : i32
    return %c0_i32, %c0_i32_0 : i32, i32
  }
  func.func @transform_3(%arg0: i32, %arg1: i32) -> (i32, i32, i32, i32) {
    %c0_i32 = arith.constant 0 : i32
    %c0_i32_0 = arith.constant 0 : i32
    %c0_i32_1 = arith.constant 0 : i32
    return %arg0, %arg1, %c0_i32, %c0_i32_0 : i32, i32, i32, i32
  }
  func.func @transform_4(%arg0: i32, %arg1: i32) -> (i32, i32, i32, i32) {
    %c1_i32 = arith.constant 1 : i32
    %0 = arith.muli %arg0, %c1_i32 : i32
    %1 = arith.addi %0, %arg1 : i32
    %c0_i32 = arith.constant 0 : i32
    %c0_i32_0 = arith.constant 0 : i32
    %c0_i32_1 = arith.constant 0 : i32
    %c0_i32_2 = arith.constant 0 : i32
    return %1, %c0_i32, %c0_i32_0, %c0_i32_1 : i32, i32, i32, i32
  }
}

module attributes {stable_mosaic.version = 11 : i64} {
  func.func @_conv2_kernel(%arg0: i32, %arg1: i32, %arg2: memref<1x16x18x128xbf16, #tpu.memory_space<vmem>>, %arg3: memref<1x2x18x128xbf16, #tpu.memory_space<vmem>>, %arg4: memref<3x384x128xbf16, #tpu.memory_space<vmem>>, %arg5: memref<1x128xf32, #tpu.memory_space<vmem>>, %arg6: memref<1x128xf32, #tpu.memory_space<vmem>>, %arg7: memref<1x128xf32, #tpu.memory_space<vmem>>, %arg8: memref<1x16x16x128xbf16, #tpu.memory_space<vmem>>, %arg9: memref<1x2x16x128xf32, #tpu.memory_space<vmem>>, %arg10: memref<18x18x128xbf16, #tpu.memory_space<vmem>>) attributes {dimension_semantics = [#tpu.dimension_semantics<parallel>, #tpu.dimension_semantics<parallel>], iteration_bounds = array<i64: 2, 1>, scalar_prefetch = 0 : i64, scratch_operands = 1 : i64, tpu.core_type = #tpu.core_type<tc>, window_params = [{transform_indices = @transform_0, window_bounds = array<i64: 1, 16, 18, 128>}, {transform_indices = @transform_1, window_bounds = array<i64: 1, 2, 18, 128>}, {pipeline_mode = #tpu.pipeline_mode<synchronous>, transform_indices = @transform_2, window_bounds = array<i64: 3, 384, 128>}, {pipeline_mode = #tpu.pipeline_mode<synchronous>, transform_indices = @transform_3, window_bounds = array<i64: 1, 128>}, {pipeline_mode = #tpu.pipeline_mode<synchronous>, transform_indices = @transform_4, window_bounds = array<i64: 1, 128>}, {pipeline_mode = #tpu.pipeline_mode<synchronous>, transform_indices = @transform_5, window_bounds = array<i64: 1, 128>}, {transform_indices = @transform_6, window_bounds = array<i64: 1, 16, 16, 128>}, {transform_indices = @transform_7, window_bounds = array<i64: 1, 2, 16, 128>}]} {
    %c0 = arith.constant 0 : index
    %c0_0 = arith.constant 0 : index
    %0 = vector.load %arg6[%c0, %c0_0] : memref<1x128xf32, #tpu.memory_space<vmem>>, vector<1x128xf32>
    %1 = vector.shape_cast %0 : vector<1x128xf32> to vector<128xf32>
    %c0_1 = arith.constant 0 : index
    %c0_2 = arith.constant 0 : index
    %2 = vector.load %arg7[%c0_1, %c0_2] : memref<1x128xf32, #tpu.memory_space<vmem>>, vector<1x128xf32>
    %3 = vector.shape_cast %2 : vector<1x128xf32> to vector<128xf32>
    %c0_3 = arith.constant 0 : index
    %c0_4 = arith.constant 0 : index
    %c0_5 = arith.constant 0 : index
    %c0_6 = arith.constant 0 : index
    %4 = vector.load %arg2[%c0_3, %c0_4, %c0_5, %c0_6] : memref<1x16x18x128xbf16, #tpu.memory_space<vmem>>, vector<1x16x18x128xbf16>
    %5 = vector.shape_cast %4 : vector<1x16x18x128xbf16> to vector<16x18x128xbf16>
    %6 = arith.extf %5 : vector<16x18x128xbf16> to vector<16x18x128xf32>
    %7 = vector.shape_cast %1 : vector<128xf32> to vector<1x1x128xf32>
    %8 = vector.broadcast %7 : vector<1x1x128xf32> to vector<16x18x128xf32>
    %9 = arith.mulf %6, %8 : vector<16x18x128xf32>
    %10 = vector.shape_cast %3 : vector<128xf32> to vector<1x1x128xf32>
    %11 = vector.broadcast %10 : vector<1x1x128xf32> to vector<16x18x128xf32>
    %12 = arith.addf %9, %11 : vector<16x18x128xf32>
    %cst = arith.constant 0.000000e+00 : f32
    %13 = vector.broadcast %cst : f32 to vector<16x18x128xf32>
    %14 = arith.maximumf %12, %13 : vector<16x18x128xf32>
    %15 = arith.truncf %14 : vector<16x18x128xf32> to vector<16x18x128xbf16>
    %c0_7 = arith.constant 0 : index
    %c0_8 = arith.constant 0 : index
    %c0_9 = arith.constant 0 : index
    %16 = vector.load %arg10[%c0_7, %c0_8, %c0_9] : memref<18x18x128xbf16, #tpu.memory_space<vmem>>, vector<16x18x128xbf16>
    tpu.vector_store %arg10[%c0_7, %c0_8, %c0_9], %15 {strides = array<i32>} : memref<18x18x128xbf16, #tpu.memory_space<vmem>>, vector<16x18x128xbf16>,
    %c0_10 = arith.constant 0 : index
    %c0_11 = arith.constant 0 : index
    %c0_12 = arith.constant 0 : index
    %c0_13 = arith.constant 0 : index
    %17 = vector.load %arg3[%c0_10, %c0_11, %c0_12, %c0_13] : memref<1x2x18x128xbf16, #tpu.memory_space<vmem>>, vector<1x2x18x128xbf16>
    %18 = vector.shape_cast %17 : vector<1x2x18x128xbf16> to vector<2x18x128xbf16>
    %19 = arith.extf %18 : vector<2x18x128xbf16> to vector<2x18x128xf32>
    %20 = vector.shape_cast %1 : vector<128xf32> to vector<1x1x128xf32>
    %21 = vector.broadcast %20 : vector<1x1x128xf32> to vector<2x18x128xf32>
    %22 = arith.mulf %19, %21 : vector<2x18x128xf32>
    %23 = vector.shape_cast %3 : vector<128xf32> to vector<1x1x128xf32>
    %24 = vector.broadcast %23 : vector<1x1x128xf32> to vector<2x18x128xf32>
    %25 = arith.addf %22, %24 : vector<2x18x128xf32>
    %cst_14 = arith.constant 0.000000e+00 : f32
    %26 = vector.broadcast %cst_14 : f32 to vector<2x18x128xf32>
    %27 = arith.maximumf %25, %26 : vector<2x18x128xf32>
    %28 = arith.truncf %27 : vector<2x18x128xf32> to vector<2x18x128xbf16>
    %c16 = arith.constant 16 : index
    %c0_15 = arith.constant 0 : index
    %c0_16 = arith.constant 0 : index
    %29 = vector.load %arg10[%c16, %c0_15, %c0_16] : memref<18x18x128xbf16, #tpu.memory_space<vmem>>, vector<2x18x128xbf16>
    tpu.vector_store %arg10[%c16, %c0_15, %c0_16], %28 {strides = array<i32>} : memref<18x18x128xbf16, #tpu.memory_space<vmem>>, vector<2x18x128xbf16>,
    %cst_17 = arith.constant 0.000000e+00 : bf16
    %30 = vector.broadcast %cst_17 : bf16 to vector<18x1x128xbf16>
    %c0_18 = arith.constant 0 : index
    %c0_19 = arith.constant 0 : index
    %c0_20 = arith.constant 0 : index
    %31 = vector.load %arg10[%c0_18, %c0_19, %c0_20] : memref<18x18x128xbf16, #tpu.memory_space<vmem>>, vector<18x1x128xbf16>
    tpu.vector_store %arg10[%c0_18, %c0_19, %c0_20], %30 {strides = array<i32>} : memref<18x18x128xbf16, #tpu.memory_space<vmem>>, vector<18x1x128xbf16>,
    %c0_21 = arith.constant 0 : index
    %c17 = arith.constant 17 : index
    %c0_22 = arith.constant 0 : index
    %32 = vector.load %arg10[%c0_21, %c17, %c0_22] : memref<18x18x128xbf16, #tpu.memory_space<vmem>>, vector<18x1x128xbf16>
    tpu.vector_store %arg10[%c0_21, %c17, %c0_22], %30 {strides = array<i32>} : memref<18x18x128xbf16, #tpu.memory_space<vmem>>, vector<18x1x128xbf16>,
    %c0_i32 = arith.constant 0 : i32
    %33 = arith.cmpi eq, %arg1, %c0_i32 : i32
    %34 = arith.extui %33 : i1 to i32
    %c0_i32_23 = arith.constant 0 : i32
    %35 = arith.cmpi ne, %34, %c0_i32_23 : i32
    scf.if %35 {
      %cst_80 = arith.constant 0.000000e+00 : bf16
      %94 = vector.broadcast %cst_80 : bf16 to vector<1x18x128xbf16>
      %c0_81 = arith.constant 0 : index
      %c0_82 = arith.constant 0 : index
      %c0_83 = arith.constant 0 : index
      %95 = vector.load %arg10[%c0_81, %c0_82, %c0_83] : memref<18x18x128xbf16, #tpu.memory_space<vmem>>, vector<1x18x128xbf16>
      tpu.vector_store %arg10[%c0_81, %c0_82, %c0_83], %94 {strides = array<i32>} : memref<18x18x128xbf16, #tpu.memory_space<vmem>>, vector<1x18x128xbf16>,
    } else {
    }
    %c0_i32_24 = arith.constant 0 : i32
    %36 = arith.cmpi eq, %arg1, %c0_i32_24 : i32
    %37 = arith.extui %36 : i1 to i32
    %c0_i32_25 = arith.constant 0 : i32
    %38 = arith.cmpi ne, %37, %c0_i32_25 : i32
    scf.if %38 {
      %cst_80 = arith.constant 0.000000e+00 : bf16
      %94 = vector.broadcast %cst_80 : bf16 to vector<1x18x128xbf16>
      %c17_81 = arith.constant 17 : index
      %c0_82 = arith.constant 0 : index
      %c0_83 = arith.constant 0 : index
      %95 = vector.load %arg10[%c17_81, %c0_82, %c0_83] : memref<18x18x128xbf16, #tpu.memory_space<vmem>>, vector<1x18x128xbf16>
      tpu.vector_store %arg10[%c17_81, %c0_82, %c0_83], %94 {strides = array<i32>} : memref<18x18x128xbf16, #tpu.memory_space<vmem>>, vector<1x18x128xbf16>,
    } else {
    }
    %c0_26 = arith.constant 0 : index
    %c0_27 = arith.constant 0 : index
    %39 = vector.load %arg5[%c0_26, %c0_27] : memref<1x128xf32, #tpu.memory_space<vmem>>, vector<1x128xf32>
    %40 = vector.shape_cast %39 : vector<1x128xf32> to vector<128xf32>
    %41 = vector.shape_cast %40 : vector<128xf32> to vector<1x128xf32>
    %42 = vector.broadcast %41 : vector<1x128xf32> to vector<256x128xf32>
    %c0_28 = arith.constant 0 : index
    %c0_29 = arith.constant 0 : index
    %c0_30 = arith.constant 0 : index
    %43 = vector.load %arg10[%c0_28, %c0_29, %c0_30] : memref<18x18x128xbf16, #tpu.memory_space<vmem>>, vector<16x16x128xbf16>
    %c0_31 = arith.constant 0 : index
    %c1 = arith.constant 1 : index
    %c0_32 = arith.constant 0 : index
    %44 = vector.load %arg10[%c0_31, %c1, %c0_32] : memref<18x18x128xbf16, #tpu.memory_space<vmem>>, vector<16x16x128xbf16>
    %c0_33 = arith.constant 0 : index
    %c2 = arith.constant 2 : index
    %c0_34 = arith.constant 0 : index
    %45 = vector.load %arg10[%c0_33, %c2, %c0_34] : memref<18x18x128xbf16, #tpu.memory_space<vmem>>, vector<16x16x128xbf16>
    %46 = tpu.concatenate %43, %44, %45 in 2 : vector<16x16x128xbf16>, vector<16x16x128xbf16>, vector<16x16x128xbf16> -> vector<16x16x384xbf16>
    %47 = vector.shape_cast %46 : vector<16x16x384xbf16> to vector<256x384xbf16>
    %c0_35 = arith.constant 0 : index
    %c0_36 = arith.constant 0 : index
    %c0_37 = arith.constant 0 : index
    %48 = vector.load %arg4[%c0_35, %c0_36, %c0_37] : memref<3x384x128xbf16, #tpu.memory_space<vmem>>, vector<1x384x128xbf16>
    %49 = vector.shape_cast %48 : vector<1x384x128xbf16> to vector<384x128xbf16>
    %cst_38 = arith.constant dense<0.000000e+00> : vector<256x128xf32>
    %50 = tpu.matmul %47, %49, %cst_38 {dimension_numbers = #tpu.dot_dimension_numbers<[1], [0], [0], [1], [0, 0, 1, 1], [], []>} : vector<256x384xbf16>, vector<384x128xbf16>, vector<256x128xf32> -> vector<256x128xf32>
    %51 = arith.addf %42, %50 : vector<256x128xf32>
    %c1_39 = arith.constant 1 : index
    %c0_40 = arith.constant 0 : index
    %c0_41 = arith.constant 0 : index
    %52 = vector.load %arg10[%c1_39, %c0_40, %c0_41] : memref<18x18x128xbf16, #tpu.memory_space<vmem>>, vector<16x16x128xbf16>
    %c1_42 = arith.constant 1 : index
    %c1_43 = arith.constant 1 : index
    %c0_44 = arith.constant 0 : index
    %53 = vector.load %arg10[%c1_42, %c1_43, %c0_44] : memref<18x18x128xbf16, #tpu.memory_space<vmem>>, vector<16x16x128xbf16>
    %c1_45 = arith.constant 1 : index
    %c2_46 = arith.constant 2 : index
    %c0_47 = arith.constant 0 : index
    %54 = vector.load %arg10[%c1_45, %c2_46, %c0_47] : memref<18x18x128xbf16, #tpu.memory_space<vmem>>, vector<16x16x128xbf16>
    %55 = tpu.concatenate %52, %53, %54 in 2 : vector<16x16x128xbf16>, vector<16x16x128xbf16>, vector<16x16x128xbf16> -> vector<16x16x384xbf16>
    %56 = vector.shape_cast %55 : vector<16x16x384xbf16> to vector<256x384xbf16>
    %c1_48 = arith.constant 1 : index
    %c0_49 = arith.constant 0 : index
    %c0_50 = arith.constant 0 : index
    %57 = vector.load %arg4[%c1_48, %c0_49, %c0_50] : memref<3x384x128xbf16, #tpu.memory_space<vmem>>, vector<1x384x128xbf16>
    %58 = vector.shape_cast %57 : vector<1x384x128xbf16> to vector<384x128xbf16>
    %cst_51 = arith.constant dense<0.000000e+00> : vector<256x128xf32>
    %59 = tpu.matmul %56, %58, %cst_51 {dimension_numbers = #tpu.dot_dimension_numbers<[1], [0], [0], [1], [0, 0, 1, 1], [], []>} : vector<256x384xbf16>, vector<384x128xbf16>, vector<256x128xf32> -> vector<256x128xf32>
    %60 = arith.addf %51, %59 : vector<256x128xf32>
    %c2_52 = arith.constant 2 : index
    %c0_53 = arith.constant 0 : index
    %c0_54 = arith.constant 0 : index
    %61 = vector.load %arg10[%c2_52, %c0_53, %c0_54] : memref<18x18x128xbf16, #tpu.memory_space<vmem>>, vector<16x16x128xbf16>
    %c2_55 = arith.constant 2 : index
    %c1_56 = arith.constant 1 : index
    %c0_57 = arith.constant 0 : index
    %62 = vector.load %arg10[%c2_55, %c1_56, %c0_57] : memref<18x18x128xbf16, #tpu.memory_space<vmem>>, vector<16x16x128xbf16>
    %c2_58 = arith.constant 2 : index
    %c2_59 = arith.constant 2 : index
    %c0_60 = arith.constant 0 : index
    %63 = vector.load %arg10[%c2_58, %c2_59, %c0_60] : memref<18x18x128xbf16, #tpu.memory_space<vmem>>, vector<16x16x128xbf16>
    %64 = tpu.concatenate %61, %62, %63 in 2 : vector<16x16x128xbf16>, vector<16x16x128xbf16>, vector<16x16x128xbf16> -> vector<16x16x384xbf16>
    %65 = vector.shape_cast %64 : vector<16x16x384xbf16> to vector<256x384xbf16>
    %c2_61 = arith.constant 2 : index
    %c0_62 = arith.constant 0 : index
    %c0_63 = arith.constant 0 : index
    %66 = vector.load %arg4[%c2_61, %c0_62, %c0_63] : memref<3x384x128xbf16, #tpu.memory_space<vmem>>, vector<1x384x128xbf16>
    %67 = vector.shape_cast %66 : vector<1x384x128xbf16> to vector<384x128xbf16>
    %cst_64 = arith.constant dense<0.000000e+00> : vector<256x128xf32>
    %68 = tpu.matmul %65, %67, %cst_64 {dimension_numbers = #tpu.dot_dimension_numbers<[1], [0], [0], [1], [0, 0, 1, 1], [], []>} : vector<256x384xbf16>, vector<384x128xbf16>, vector<256x128xf32> -> vector<256x128xf32>
    %69 = arith.addf %60, %68 : vector<256x128xf32>
    %70 = vector.shape_cast %69 : vector<256x128xf32> to vector<16x16x128xf32>
    %c16_i32 = arith.constant 16 : i32
    %71 = arith.muli %arg1, %c16_i32 : i32
    %72 = tpu.iota {dimensions = array<i32: 0>} : vector<16x1x1xi32>
    %73 = vector.broadcast %71 : i32 to vector<16x1x1xi32>
    %74 = arith.addi %73, %72 : vector<16x1x1xi32>
    %c16_i32_65 = arith.constant 16 : i32
    %75 = vector.broadcast %c16_i32_65 : i32 to vector<16x1x1xi32>
    %76 = arith.cmpi slt, %74, %75 : vector<16x1x1xi32>
    %77 = arith.extui %76 : vector<16x1x1xi1> to vector<16x1x1xi32>
    %78 = arith.sitofp %77 : vector<16x1x1xi32> to vector<16x1x1xf32>
    %79 = vector.broadcast %78 : vector<16x1x1xf32> to vector<16x16x128xf32>
    %80 = arith.mulf %70, %79 : vector<16x16x128xf32>
    %cst_66 = arith.constant dense<0.000000e+00> : vector<16x128xf32>
    %81 = vector.multi_reduction <add>, %80, %cst_66 [0] : vector<16x16x128xf32> to vector<16x128xf32>
    %c0_67 = arith.constant 0 : index
    %c0_68 = arith.constant 0 : index
    %c0_69 = arith.constant 0 : index
    %c0_70 = arith.constant 0 : index
    %82 = vector.load %arg9[%c0_67, %c0_68, %c0_69, %c0_70] : memref<1x2x16x128xf32, #tpu.memory_space<vmem>>, vector<1x1x16x128xf32>
    %83 = vector.shape_cast %82 : vector<1x1x16x128xf32> to vector<16x128xf32>
    %84 = vector.shape_cast %81 : vector<16x128xf32> to vector<1x1x16x128xf32>
    tpu.vector_store %arg9[%c0_67, %c0_68, %c0_69, %c0_70], %84 {strides = array<i32>} : memref<1x2x16x128xf32, #tpu.memory_space<vmem>>, vector<1x1x16x128xf32>,
    %85 = arith.mulf %80, %70 : vector<16x16x128xf32>
    %cst_71 = arith.constant dense<0.000000e+00> : vector<16x128xf32>
    %86 = vector.multi_reduction <add>, %85, %cst_71 [0] : vector<16x16x128xf32> to vector<16x128xf32>
    %c0_72 = arith.constant 0 : index
    %c1_73 = arith.constant 1 : index
    %c0_74 = arith.constant 0 : index
    %c0_75 = arith.constant 0 : index
    %87 = vector.load %arg9[%c0_72, %c1_73, %c0_74, %c0_75] : memref<1x2x16x128xf32, #tpu.memory_space<vmem>>, vector<1x1x16x128xf32>
    %88 = vector.shape_cast %87 : vector<1x1x16x128xf32> to vector<16x128xf32>
    %89 = vector.shape_cast %86 : vector<16x128xf32> to vector<1x1x16x128xf32>
    tpu.vector_store %arg9[%c0_72, %c1_73, %c0_74, %c0_75], %89 {strides = array<i32>} : memref<1x2x16x128xf32, #tpu.memory_space<vmem>>, vector<1x1x16x128xf32>,
    %90 = arith.truncf %70 : vector<16x16x128xf32> to vector<16x16x128xbf16>
    %c0_76 = arith.constant 0 : index
    %c0_77 = arith.constant 0 : index
    %c0_78 = arith.constant 0 : index
    %c0_79 = arith.constant 0 : index
    %91 = vector.load %arg8[%c0_76, %c0_77, %c0_78, %c0_79] : memref<1x16x16x128xbf16, #tpu.memory_space<vmem>>, vector<1x16x16x128xbf16>
    %92 = vector.shape_cast %91 : vector<1x16x16x128xbf16> to vector<16x16x128xbf16>
    %93 = vector.shape_cast %90 : vector<16x16x128xbf16> to vector<1x16x16x128xbf16>
    tpu.vector_store %arg8[%c0_76, %c0_77, %c0_78, %c0_79], %93 {strides = array<i32>} : memref<1x16x16x128xbf16, #tpu.memory_space<vmem>>, vector<1x16x16x128xbf16>,
    return
  }
  func.func @transform_0(%arg0: i32, %arg1: i32) -> (i32, i32, i32, i32) {
    %c0_i32 = arith.constant 0 : i32
    %c0_i32_0 = arith.constant 0 : i32
    %c0_i32_1 = arith.constant 0 : i32
    return %arg0, %arg1, %c0_i32, %c0_i32_0 : i32, i32, i32, i32
  }
  func.func @transform_1(%arg0: i32, %arg1: i32) -> (i32, i32, i32, i32) {
    %c1_i32 = arith.constant 1 : i32
    %0 = arith.addi %arg1, %c1_i32 : i32
    %c8_i32 = arith.constant 8 : i32
    %1 = arith.muli %0, %c8_i32 : i32
    %c0_i32 = arith.constant 0 : i32
    %c0_i32_0 = arith.constant 0 : i32
    %c0_i32_1 = arith.constant 0 : i32
    return %arg0, %1, %c0_i32, %c0_i32_0 : i32, i32, i32, i32
  }
  func.func @transform_2(%arg0: i32, %arg1: i32) -> (i32, i32, i32) {
    %c0_i32 = arith.constant 0 : i32
    %c0_i32_0 = arith.constant 0 : i32
    %c0_i32_1 = arith.constant 0 : i32
    %c0_i32_2 = arith.constant 0 : i32
    return %c0_i32, %c0_i32_0, %c0_i32_1 : i32, i32, i32
  }
  func.func @transform_3(%arg0: i32, %arg1: i32) -> (i32, i32) {
    %c0_i32 = arith.constant 0 : i32
    %c0_i32_0 = arith.constant 0 : i32
    %c0_i32_1 = arith.constant 0 : i32
    return %c0_i32, %c0_i32_0 : i32, i32
  }
  func.func @transform_4(%arg0: i32, %arg1: i32) -> (i32, i32) {
    %c0_i32 = arith.constant 0 : i32
    %c0_i32_0 = arith.constant 0 : i32
    %c0_i32_1 = arith.constant 0 : i32
    return %c0_i32, %c0_i32_0 : i32, i32
  }
  func.func @transform_5(%arg0: i32, %arg1: i32) -> (i32, i32) {
    %c0_i32 = arith.constant 0 : i32
    %c0_i32_0 = arith.constant 0 : i32
    %c0_i32_1 = arith.constant 0 : i32
    return %c0_i32, %c0_i32_0 : i32, i32
  }
  func.func @transform_6(%arg0: i32, %arg1: i32) -> (i32, i32, i32, i32) {
    %c0_i32 = arith.constant 0 : i32
    %c0_i32_0 = arith.constant 0 : i32
    %c0_i32_1 = arith.constant 0 : i32
    return %arg0, %arg1, %c0_i32, %c0_i32_0 : i32, i32, i32, i32
  }
  func.func @transform_7(%arg0: i32, %arg1: i32) -> (i32, i32, i32, i32) {
    %c1_i32 = arith.constant 1 : i32
    %0 = arith.muli %arg0, %c1_i32 : i32
    %1 = arith.addi %0, %arg1 : i32
    %c0_i32 = arith.constant 0 : i32
    %c0_i32_0 = arith.constant 0 : i32
    %c0_i32_1 = arith.constant 0 : i32
    %c0_i32_2 = arith.constant 0 : i32
    return %1, %c0_i32, %c0_i32_0, %c0_i32_1 : i32, i32, i32, i32
  }
}

module attributes {stable_mosaic.version = 11 : i64} {
  func.func @_bn_relu_kernel(%arg0: i32, %arg1: memref<512x128xbf16, #tpu.memory_space<vmem>>, %arg2: memref<1x128xf32, #tpu.memory_space<vmem>>, %arg3: memref<1x128xf32, #tpu.memory_space<vmem>>, %arg4: memref<512x128xf32, #tpu.memory_space<vmem>>) attributes {dimension_semantics = [#tpu.dimension_semantics<parallel>], iteration_bounds = array<i64: 1>, scalar_prefetch = 0 : i64, scratch_operands = 0 : i64, tpu.core_type = #tpu.core_type<tc>, window_params = [{transform_indices = @transform_0, window_bounds = array<i64: 512, 128>}, {pipeline_mode = #tpu.pipeline_mode<synchronous>, transform_indices = @transform_1, window_bounds = array<i64: 1, 128>}, {pipeline_mode = #tpu.pipeline_mode<synchronous>, transform_indices = @transform_2, window_bounds = array<i64: 1, 128>}, {transform_indices = @transform_3, window_bounds = array<i64: 512, 128>}]} {
    %c0 = arith.constant 0 : index
    %c0_0 = arith.constant 0 : index
    %0 = vector.load %arg1[%c0, %c0_0] : memref<512x128xbf16, #tpu.memory_space<vmem>>, vector<512x128xbf16>
    %1 = arith.extf %0 : vector<512x128xbf16> to vector<512x128xf32>
    %c0_1 = arith.constant 0 : index
    %c0_2 = arith.constant 0 : index
    %2 = vector.load %arg2[%c0_1, %c0_2] : memref<1x128xf32, #tpu.memory_space<vmem>>, vector<1x128xf32>
    %3 = vector.broadcast %2 : vector<1x128xf32> to vector<512x128xf32>
    %4 = arith.mulf %1, %3 : vector<512x128xf32>
    %c0_3 = arith.constant 0 : index
    %c0_4 = arith.constant 0 : index
    %5 = vector.load %arg3[%c0_3, %c0_4] : memref<1x128xf32, #tpu.memory_space<vmem>>, vector<1x128xf32>
    %6 = vector.broadcast %5 : vector<1x128xf32> to vector<512x128xf32>
    %7 = arith.addf %4, %6 : vector<512x128xf32>
    %cst = arith.constant 0.000000e+00 : f32
    %8 = vector.broadcast %cst : f32 to vector<512x128xf32>
    %9 = arith.maximumf %7, %8 : vector<512x128xf32>
    %c0_5 = arith.constant 0 : index
    %c0_6 = arith.constant 0 : index
    %10 = vector.load %arg4[%c0_5, %c0_6] : memref<512x128xf32, #tpu.memory_space<vmem>>, vector<512x128xf32>
    tpu.vector_store %arg4[%c0_5, %c0_6], %9 {strides = array<i32>} : memref<512x128xf32, #tpu.memory_space<vmem>>, vector<512x128xf32>,
    return
  }
  func.func @transform_0(%arg0: i32) -> (i32, i32) {
    %c0_i32 = arith.constant 0 : i32
    %c0_i32_0 = arith.constant 0 : i32
    return %arg0, %c0_i32 : i32, i32
  }
  func.func @transform_1(%arg0: i32) -> (i32, i32) {
    %c0_i32 = arith.constant 0 : i32
    %c0_i32_0 = arith.constant 0 : i32
    %c0_i32_1 = arith.constant 0 : i32
    return %c0_i32, %c0_i32_0 : i32, i32
  }
  func.func @transform_2(%arg0: i32) -> (i32, i32) {
    %c0_i32 = arith.constant 0 : i32
    %c0_i32_0 = arith.constant 0 : i32
    %c0_i32_1 = arith.constant 0 : i32
    return %c0_i32, %c0_i32_0 : i32, i32
  }
  func.func @transform_3(%arg0: i32) -> (i32, i32) {
    %c0_i32 = arith.constant 0 : i32
    %c0_i32_0 = arith.constant 0 : i32
    return %arg0, %c0_i32 : i32, i32
  }
}

</mosaic_0001>

<llo_original>
// kernel: double_conv_forward.5
$region0: #{double_conv_forward.5}
  #allocation0 [shape = 'u32[]', space=smem, size = 0x4, offset = 0x4, fixed_abs, tag = 'smem constant byte address 0x4 - core index']
  #allocation1 [shape = 'u32[144,128]{1,0:T(1,128)}', space=vmem, size = 0x12000, scoped, tag = 'internal scratch']
  %s0 = inlined_call_operand.vmem [shape: bf16[512,128], index: 0, kind: input, shape index: {}]
  %s1 = inlined_call_operand.vmem [shape: f32[1,128], index: 1, kind: input, shape index: {}]
  %s2 = inlined_call_operand.vmem [shape: f32[1,128], index: 2, kind: input, shape index: {}]
  %s3 = inlined_call_operand.vmem [shape: f32[512,128], index: 3, kind: output, shape index: {}]
  %s4 = sld [smem:[#allocation0]]
  $region22: #{double_conv_forward.5} parent=0
    _
  %s6 = ssub.s32 1, %s4
  %s7 = scalar_select 0, %s6, %s4
  // Predicated region
  $region2: #{double_conv_forward.5} parent=0 // pred_check
    _
  $region3: #{double_conv_forward.5} parent=0 // pred_check_branch
    %9 = sbr.rel (0) target = $region5
  $region4: #{double_conv_forward.5} parent=0 // pred_region
    _
  $region5: #{double_conv_forward.5} parent=0 // pred_fallthru
    _
  // Predicated region
  $region6: #{double_conv_forward.5} parent=0 // pred_check
    _
  $region7: #{double_conv_forward.5} parent=0 // pred_check_branch
    %11 = sbr.rel (0) target = $region9
  $region8: #{double_conv_forward.5} parent=0 // pred_region
    _
  $region9: #{double_conv_forward.5} parent=0 // pred_fallthru
    _
  // Predicated region
  $region10: #{double_conv_forward.5} parent=0 // pred_check
    _
  $region11: #{double_conv_forward.5} parent=0 // pred_check_branch
    %13 = sbr.rel (0) target = $region13
  $region12: #{double_conv_forward.5} parent=0 // pred_region
    _
  $region13: #{double_conv_forward.5} parent=0 // pred_fallthru
    _
  %v14 = vld [vmem:[%s0] sm:$0xf]
  %v15 = vld [vmem:[%s0 + $0x4] sm:$0xf]
  %v16 = vld [vmem:[%s0 + $0x8] sm:$0xf]
  %v17 = vld [vmem:[%s0 + $0xc] sm:$0xf]
  %v18 = vld [vmem:[%s0 + $0x10] sm:$0xf]
  %v19 = vld [vmem:[%s0 + $0x14] sm:$0xf]
  %v20 = vld [vmem:[%s0 + $0x18] sm:$0xf]
  %v21 = vld [vmem:[%s0 + $0x1c] sm:$0xf]
  %v22 = vld [vmem:[%s0 + $0x20] sm:$0xf]
  %v23 = vld [vmem:[%s0 + $0x24] sm:$0xf]
  %v24 = vld [vmem:[%s0 + $0x28] sm:$0xf]
  %v25 = vld [vmem:[%s0 + $0x2c] sm:$0xf]
  %v26 = vld [vmem:[%s0 + $0x30] sm:$0xf]
  %v27 = vld [vmem:[%s0 + $0x34] sm:$0xf]
  %v28 = vld [vmem:[%s0 + $0x38] sm:$0xf]
  %v29 = vld [vmem:[%s0 + $0x3c] sm:$0xf]
  %v30 = vld [vmem:[%s0 + $0x40] sm:$0xf]
  %v31 = vld [vmem:[%s0 + $0x44] sm:$0xf]
  %v32 = vld [vmem:[%s0 + $0x48] sm:$0xf]
  %v33 = vld [vmem:[%s0 + $0x4c] sm:$0xf]
  %v34 = vld [vmem:[%s0 + $0x50] sm:$0xf]
  %v35 = vld [vmem:[%s0 + $0x54] sm:$0xf]
  %v36 = vld [vmem:[%s0 + $0x58] sm:$0xf]
  %v37 = vld [vmem:[%s0 + $0x5c] sm:$0xf]
  %v38 = vld [vmem:[%s0 + $0x60] sm:$0xf]
  %v39 = vld [vmem:[%s0 + $0x64] sm:$0xf]
  %v40 = vld [vmem:[%s0 + $0x68] sm:$0xf]
  %v41 = vld [vmem:[%s0 + $0x6c] sm:$0xf]
  %v42 = vld [vmem:[%s0 + $0x70] sm:$0xf]
  %v43 = vld [vmem:[%s0 + $0x74] sm:$0xf]
  %v44 = vld [vmem:[%s0 + $0x78] sm:$0xf]
  %v45 = vld [vmem:[%s0 + $0x7c] sm:$0xf]
  %v46 = vld [vmem:[%s0 + $0x80] sm:$0xf]
  %v47 = vld [vmem:[%s0 + $0x84] sm:$0xf]
  %v48 = vld [vmem:[%s0 + $0x88] sm:$0xf]
  %v49 = vld [vmem:[%s0 + $0x8c] sm:$0xf]
  %v50 = vld [vmem:[%s0 + $0x90] sm:$0xf]
  %v51 = vld [vmem:[%s0 + $0x94] sm:$0xf]
  %v52 = vld [vmem:[%s0 + $0x98] sm:$0xf]
  %v53 = vld [vmem:[%s0 + $0x9c] sm:$0xf]
  %v54 = vld [vmem:[%s0 + $0xa0] sm:$0xf]
  %v55 = vld [vmem:[%s0 + $0xa4] sm:$0xf]
  %v56 = vld [vmem:[%s0 + $0xa8] sm:$0xf]
  %v57 = vld [vmem:[%s0 + $0xac] sm:$0xf]
  %v58 = vld [vmem:[%s0 + $0xb0] sm:$0xf]
  %v59 = vld [vmem:[%s0 + $0xb4] sm:$0xf]
  %v60 = vld [vmem:[%s0 + $0xb8] sm:$0xf]
  %v61 = vld [vmem:[%s0 + $0xbc] sm:$0xf]
  %v62 = vld [vmem:[%s0 + $0xc0] sm:$0xf]
  %v63 = vld [vmem:[%s0 + $0xc4] sm:$0xf]
  %v64 = vld [vmem:[%s0 + $0xc8] sm:$0xf]
  %v65 = vld [vmem:[%s0 + $0xcc] sm:$0xf]
  %v66 = vld [vmem:[%s0 + $0xd0] sm:$0xf]
  %v67 = vld [vmem:[%s0 + $0xd4] sm:$0xf]
  %v68 = vld [vmem:[%s0 + $0xd8] sm:$0xf]
  %v69 = vld [vmem:[%s0 + $0xdc] sm:$0xf]
  %v70 = vld [vmem:[%s0 + $0xe0] sm:$0xf]
  %v71 = vld [vmem:[%s0 + $0xe4] sm:$0xf]
  %v72 = vld [vmem:[%s0 + $0xe8] sm:$0xf]
  %v73 = vld [vmem:[%s0 + $0xec] sm:$0xf]
  %v74 = vld [vmem:[%s0 + $0xf0] sm:$0xf]
  %v75 = vld [vmem:[%s0 + $0xf4] sm:$0xf]
  %v76 = vld [vmem:[%s0 + $0xf8] sm:$0xf]
  %v77 = vld [vmem:[%s0 + $0xfc] sm:$0xf]
  %v78 = vunpack.c.l.bf16 %v14
  %v79 = vunpack.c.l.bf16 %v15
  %v80 = vunpack.c.l.bf16 %v16
  %v81 = vunpack.c.l.bf16 %v17
  %v82 = vunpack.c.l.bf16 %v18
  %v83 = vunpack.c.l.bf16 %v19
  %v84 = vunpack.c.l.bf16 %v20
  %v85 = vunpack.c.l.bf16 %v21
  %v86 = vunpack.c.l.bf16 %v22
  %v87 = vunpack.c.l.bf16 %v23
  %v88 = vunpack.c.l.bf16 %v24
  %v89 = vunpack.c.l.bf16 %v25
  %v90 = vunpack.c.l.bf16 %v26
  %v91 = vunpack.c.l.bf16 %v27
  %v92 = vunpack.c.l.bf16 %v28
  %v93 = vunpack.c.l.bf16 %v29
  %v94 = vunpack.c.l.bf16 %v30
  %v95 = vunpack.c.l.bf16 %v31
  %v96 = vunpack.c.l.bf16 %v32
  %v97 = vunpack.c.l.bf16 %v33
  %v98 = vunpack.c.l.bf16 %v34
  %v99 = vunpack.c.l.bf16 %v35
  %v100 = vunpack.c.l.bf16 %v36
  %v101 = vunpack.c.l.bf16 %v37
  %v102 = vunpack.c.l.bf16 %v38
  %v103 = vunpack.c.l.bf16 %v39
  %v104 = vunpack.c.l.bf16 %v40
  %v105 = vunpack.c.l.bf16 %v41
  %v106 = vunpack.c.l.bf16 %v42
  %v107 = vunpack.c.l.bf16 %v43
  %v108 = vunpack.c.l.bf16 %v44
  %v109 = vunpack.c.l.bf16 %v45
  %v110 = vunpack.c.l.bf16 %v46
  %v111 = vunpack.c.l.bf16 %v47
  %v112 = vunpack.c.l.bf16 %v48
  %v113 = vunpack.c.l.bf16 %v49
  %v114 = vunpack.c.l.bf16 %v50
  %v115 = vunpack.c.l.bf16 %v51
  %v116 = vunpack.c.l.bf16 %v52
  %v117 = vunpack.c.l.bf16 %v53
  %v118 = vunpack.c.l.bf16 %v54
  %v119 = vunpack.c.l.bf16 %v55
  %v120 = vunpack.c.l.bf16 %v56
  %v121 = vunpack.c.l.bf16 %v57
  %v122 = vunpack.c.l.bf16 %v58
  %v123 = vunpack.c.l.bf16 %v59
  %v124 = vunpack.c.l.bf16 %v60
  %v125 = vunpack.c.l.bf16 %v61
  %v126 = vunpack.c.l.bf16 %v62
  %v127 = vunpack.c.l.bf16 %v63
  %v128 = vunpack.c.l.bf16 %v64
  %v129 = vunpack.c.l.bf16 %v65
  %v130 = vunpack.c.l.bf16 %v66
  %v131 = vunpack.c.l.bf16 %v67
  %v132 = vunpack.c.l.bf16 %v68
  %v133 = vunpack.c.l.bf16 %v69
  %v134 = vunpack.c.l.bf16 %v70
  %v135 = vunpack.c.l.bf16 %v71
  %v136 = vunpack.c.l.bf16 %v72
  %v137 = vunpack.c.l.bf16 %v73
  %v138 = vunpack.c.l.bf16 %v74
  %v139 = vunpack.c.l.bf16 %v75
  %v140 = vunpack.c.l.bf16 %v76
  %v141 = vunpack.c.l.bf16 %v77
  %v142 = vld [vmem:[%s1] sm:$0x1]
  %v144 = vlaneseq
  %v145 = vshrl.u32 %v144, 7
  %v146 = vsub.s32 0, %v145
  %v147 = vrot.slane %v142, %v146
  %v149 = vmul.f32 %v78, %v147
  %v150 = vmul.f32 %v79, %v147
  %v151 = vmul.f32 %v80, %v147
  %v152 = vmul.f32 %v81, %v147
  %v153 = vmul.f32 %v82, %v147
  %v154 = vmul.f32 %v83, %v147
  %v155 = vmul.f32 %v84, %v147
  %v156 = vmul.f32 %v85, %v147
  %v157 = vmul.f32 %v86, %v147
  %v158 = vmul.f32 %v87, %v147
  %v159 = vmul.f32 %v88, %v147
  %v160 = vmul.f32 %v89, %v147
  %v161 = vmul.f32 %v90, %v147
  %v162 = vmul.f32 %v91, %v147
  %v163 = vmul.f32 %v92, %v147
  %v164 = vmul.f32 %v93, %v147
  %v165 = vmul.f32 %v94, %v147
  %v166 = vmul.f32 %v95, %v147
  %v167 = vmul.f32 %v96, %v147
  %v168 = vmul.f32 %v97, %v147
  %v169 = vmul.f32 %v98, %v147
  %v170 = vmul.f32 %v99, %v147
  %v171 = vmul.f32 %v100, %v147
  %v172 = vmul.f32 %v101, %v147
  %v173 = vmul.f32 %v102, %v147
  %v174 = vmul.f32 %v103, %v147
  %v175 = vmul.f32 %v104, %v147
  %v176 = vmul.f32 %v105, %v147
  %v177 = vmul.f32 %v106, %v147
  %v178 = vmul.f32 %v107, %v147
  %v179 = vmul.f32 %v108, %v147
  %v180 = vmul.f32 %v109, %v147
  %v181 = vmul.f32 %v110, %v147
  %v182 = vmul.f32 %v111, %v147
  %v183 = vmul.f32 %v112, %v147
  %v184 = vmul.f32 %v113, %v147
  %v185 = vmul.f32 %v114, %v147
  %v186 = vmul.f32 %v115, %v147
  %v187 = vmul.f32 %v116, %v147
  %v188 = vmul.f32 %v117, %v147
  %v189 = vmul.f32 %v118, %v147
  %v190 = vmul.f32 %v119, %v147
  %v191 = vmul.f32 %v120, %v147
  %v192 = vmul.f32 %v121, %v147
  %v193 = vmul.f32 %v122, %v147
  %v194 = vmul.f32 %v123, %v147
  %v195 = vmul.f32 %v124, %v147
  %v196 = vmul.f32 %v125, %v147
  %v197 = vmul.f32 %v126, %v147
  %v198 = vmul.f32 %v127, %v147
  %v199 = vmul.f32 %v128, %v147
  %v200 = vmul.f32 %v129, %v147
  %v201 = vmul.f32 %v130, %v147
  %v202 = vmul.f32 %v131, %v147
  %v203 = vmul.f32 %v132, %v147
  %v204 = vmul.f32 %v133, %v147
  %v205 = vmul.f32 %v134, %v147
  %v206 = vmul.f32 %v135, %v147
  %v207 = vmul.f32 %v136, %v147
  %v208 = vmul.f32 %v137, %v147
  %v209 = vmul.f32 %v138, %v147
  %v210 = vmul.f32 %v139, %v147
  %v211 = vmul.f32 %v140, %v147
  %v212 = vmul.f32 %v141, %v147
  %v213 = vld [vmem:[%s2] sm:$0x1]
  %v215 = vlaneseq
  %v216 = vshrl.u32 %v215, 7
  %v217 = vsub.s32 0, %v216
  %v218 = vrot.slane %v213, %v217
  %v220 = vadd.f32 %v149, %v218
  %v221 = vadd.f32 %v150, %v218
  %v222 = vadd.f32 %v151, %v218
  %v223 = vadd.f32 %v152, %v218
  %v224 = vadd.f32 %v153, %v218
  %v225 = vadd.f32 %v154, %v218
  %v226 = vadd.f32 %v155, %v218
  %v227 = vadd.f32 %v156, %v218
  %v228 = vadd.f32 %v157, %v218
  %v229 = vadd.f32 %v158, %v218
  %v230 = vadd.f32 %v159, %v218
  %v231 = vadd.f32 %v160, %v218
  %v232 = vadd.f32 %v161, %v218
  %v233 = vadd.f32 %v162, %v218
  %v234 = vadd.f32 %v163, %v218
  %v235 = vadd.f32 %v164, %v218
  %v236 = vadd.f32 %v165, %v218
  %v237 = vadd.f32 %v166, %v218
  %v238 = vadd.f32 %v167, %v218
  %v239 = vadd.f32 %v168, %v218
  %v240 = vadd.f32 %v169, %v218
  %v241 = vadd.f32 %v170, %v218
  %v242 = vadd.f32 %v171, %v218
  %v243 = vadd.f32 %v172, %v218
  %v244 = vadd.f32 %v173, %v218
  %v245 = vadd.f32 %v174, %v218
  %v246 = vadd.f32 %v175, %v218
  %v247 = vadd.f32 %v176, %v218
  %v248 = vadd.f32 %v177, %v218
  %v249 = vadd.f32 %v178, %v218
  %v250 = vadd.f32 %v179, %v218
  %v251 = vadd.f32 %v180, %v218
  %v252 = vadd.f32 %v181, %v218
  %v253 = vadd.f32 %v182, %v218
  %v254 = vadd.f32 %v183, %v218
  %v255 = vadd.f32 %v184, %v218
  %v256 = vadd.f32 %v185, %v218
  %v257 = vadd.f32 %v186, %v218
  %v258 = vadd.f32 %v187, %v218
  %v259 = vadd.f32 %v188, %v218
  %v260 = vadd.f32 %v189, %v218
  %v261 = vadd.f32 %v190, %v218
  %v262 = vadd.f32 %v191, %v218
  %v263 = vadd.f32 %v192, %v218
  %v264 = vadd.f32 %v193, %v218
  %v265 = vadd.f32 %v194, %v218
  %v266 = vadd.f32 %v195, %v218
  %v267 = vadd.f32 %v196, %v218
  %v268 = vadd.f32 %v197, %v218
  %v269 = vadd.f32 %v198, %v218
  %v270 = vadd.f32 %v199, %v218
  %v271 = vadd.f32 %v200, %v218
  %v272 = vadd.f32 %v201, %v218
  %v273 = vadd.f32 %v202, %v218
  %v274 = vadd.f32 %v203, %v218
  %v275 = vadd.f32 %v204, %v218
  %v276 = vadd.f32 %v205, %v218
  %v277 = vadd.f32 %v206, %v218
  %v278 = vadd.f32 %v207, %v218
  %v279 = vadd.f32 %v208, %v218
  %v280 = vadd.f32 %v209, %v218
  %v281 = vadd.f32 %v210, %v218
  %v282 = vadd.f32 %v211, %v218
  %v283 = vadd.f32 %v212, %v218
  %v284 = vmax.f32 %v220, 0.0
  %v285 = vmax.f32 %v221, 0.0
  %v286 = vmax.f32 %v222, 0.0
  %v287 = vmax.f32 %v223, 0.0
  %v288 = vmax.f32 %v224, 0.0
  %v289 = vmax.f32 %v225, 0.0
  %v290 = vmax.f32 %v226, 0.0
  %v291 = vmax.f32 %v227, 0.0
  %v292 = vmax.f32 %v228, 0.0
  %v293 = vmax.f32 %v229, 0.0
  %v294 = vmax.f32 %v230, 0.0
  %v295 = vmax.f32 %v231, 0.0
  %v296 = vmax.f32 %v232, 0.0
  %v297 = vmax.f32 %v233, 0.0
  %v298 = vmax.f32 %v234, 0.0
  %v299 = vmax.f32 %v235, 0.0
  %v300 = vmax.f32 %v236, 0.0
  %v301 = vmax.f32 %v237, 0.0
  %v302 = vmax.f32 %v238, 0.0
  %v303 = vmax.f32 %v239, 0.0
  %v304 = vmax.f32 %v240, 0.0
  %v305 = vmax.f32 %v241, 0.0
  %v306 = vmax.f32 %v242, 0.0
  %v307 = vmax.f32 %v243, 0.0
  %v308 = vmax.f32 %v244, 0.0
  %v309 = vmax.f32 %v245, 0.0
  %v310 = vmax.f32 %v246, 0.0
  %v311 = vmax.f32 %v247, 0.0
  %v312 = vmax.f32 %v248, 0.0
  %v313 = vmax.f32 %v249, 0.0
  %v314 = vmax.f32 %v250, 0.0
  %v315 = vmax.f32 %v251, 0.0
  %v316 = vmax.f32 %v252, 0.0
  %v317 = vmax.f32 %v253, 0.0
  %v318 = vmax.f32 %v254, 0.0
  %v319 = vmax.f32 %v255, 0.0
  %v320 = vmax.f32 %v256, 0.0
  %v321 = vmax.f32 %v257, 0.0
  %v322 = vmax.f32 %v258, 0.0
  %v323 = vmax.f32 %v259, 0.0
  %v324 = vmax.f32 %v260, 0.0
  %v325 = vmax.f32 %v261, 0.0
  %v326 = vmax.f32 %v262, 0.0
  %v327 = vmax.f32 %v263, 0.0
  %v328 = vmax.f32 %v264, 0.0
  %v329 = vmax.f32 %v265, 0.0
  %v330 = vmax.f32 %v266, 0.0
  %v331 = vmax.f32 %v267, 0.0
  %v332 = vmax.f32 %v268, 0.0
  %v333 = vmax.f32 %v269, 0.0
  %v334 = vmax.f32 %v270, 0.0
  %v335 = vmax.f32 %v271, 0.0
  %v336 = vmax.f32 %v272, 0.0
  %v337 = vmax.f32 %v273, 0.0
  %v338 = vmax.f32 %v274, 0.0
  %v339 = vmax.f32 %v275, 0.0
  %v340 = vmax.f32 %v276, 0.0
  %v341 = vmax.f32 %v277, 0.0
  %v342 = vmax.f32 %v278, 0.0
  %v343 = vmax.f32 %v279, 0.0
  %v344 = vmax.f32 %v280, 0.0
  %v345 = vmax.f32 %v281, 0.0
  %v346 = vmax.f32 %v282, 0.0
  %v347 = vmax.f32 %v283, 0.0
  %348 = vst [vmem:[%s3] sm:$0xff] %v284
  %349 = vst [vmem:[%s3 + $0x8] sm:$0xff] %v285
  %350 = vst [vmem:[%s3 + $0x10] sm:$0xff] %v286
  %351 = vst [vmem:[%s3 + $0x18] sm:$0xff] %v287
  %352 = vst [vmem:[%s3 + $0x20] sm:$0xff] %v288
  %353 = vst [vmem:[%s3 + $0x28] sm:$0xff] %v289
  %354 = vst [vmem:[%s3 + $0x30] sm:$0xff] %v290
  %355 = vst [vmem:[%s3 + $0x38] sm:$0xff] %v291
  %356 = vst [vmem:[%s3 + $0x40] sm:$0xff] %v292
  %357 = vst [vmem:[%s3 + $0x48] sm:$0xff] %v293
  %358 = vst [vmem:[%s3 + $0x50] sm:$0xff] %v294
  %359 = vst [vmem:[%s3 + $0x58] sm:$0xff] %v295
  %360 = vst [vmem:[%s3 + $0x60] sm:$0xff] %v296
  %361 = vst [vmem:[%s3 + $0x68] sm:$0xff] %v297
  %362 = vst [vmem:[%s3 + $0x70] sm:$0xff] %v298
  %363 = vst [vmem:[%s3 + $0x78] sm:$0xff] %v299
  %364 = vst [vmem:[%s3 + $0x80] sm:$0xff] %v300
  %365 = vst [vmem:[%s3 + $0x88] sm:$0xff] %v301
  %366 = vst [vmem:[%s3 + $0x90] sm:$0xff] %v302
  %367 = vst [vmem:[%s3 + $0x98] sm:$0xff] %v303
  %368 = vst [vmem:[%s3 + $0xa0] sm:$0xff] %v304
  %369 = vst [vmem:[%s3 + $0xa8] sm:$0xff] %v305
  %370 = vst [vmem:[%s3 + $0xb0] sm:$0xff] %v306
  %371 = vst [vmem:[%s3 + $0xb8] sm:$0xff] %v307
  %372 = vst [vmem:[%s3 + $0xc0] sm:$0xff] %v308
  %373 = vst [vmem:[%s3 + $0xc8] sm:$0xff] %v309
  %374 = vst [vmem:[%s3 + $0xd0] sm:$0xff] %v310
  %375 = vst [vmem:[%s3 + $0xd8] sm:$0xff] %v311
  %376 = vst [vmem:[%s3 + $0xe0] sm:$0xff] %v312
  %377 = vst [vmem:[%s3 + $0xe8] sm:$0xff] %v313
  %378 = vst [vmem:[%s3 + $0xf0] sm:$0xff] %v314
  %379 = vst [vmem:[%s3 + $0xf8] sm:$0xff] %v315
  %380 = vst [vmem:[%s3 + $0x100] sm:$0xff] %v316
  %381 = vst [vmem:[%s3 + $0x108] sm:$0xff] %v317
  %382 = vst [vmem:[%s3 + $0x110] sm:$0xff] %v318
  %383 = vst [vmem:[%s3 + $0x118] sm:$0xff] %v319
  %384 = vst [vmem:[%s3 + $0x120] sm:$0xff] %v320
  %385 = vst [vmem:[%s3 + $0x128] sm:$0xff] %v321
  %386 = vst [vmem:[%s3 + $0x130] sm:$0xff] %v322
  %387 = vst [vmem:[%s3 + $0x138] sm:$0xff] %v323
  %388 = vst [vmem:[%s3 + $0x140] sm:$0xff] %v324
  %389 = vst [vmem:[%s3 + $0x148] sm:$0xff] %v325
  %390 = vst [vmem:[%s3 + $0x150] sm:$0xff] %v326
  %391 = vst [vmem:[%s3 + $0x158] sm:$0xff] %v327
  %392 = vst [vmem:[%s3 + $0x160] sm:$0xff] %v328
  %393 = vst [vmem:[%s3 + $0x168] sm:$0xff] %v329
  %394 = vst [vmem:[%s3 + $0x170] sm:$0xff] %v330
  %395 = vst [vmem:[%s3 + $0x178] sm:$0xff] %v331
  %396 = vst [vmem:[%s3 + $0x180] sm:$0xff] %v332
  %397 = vst [vmem:[%s3 + $0x188] sm:$0xff] %v333
  %398 = vst [vmem:[%s3 + $0x190] sm:$0xff] %v334
  %399 = vst [vmem:[%s3 + $0x198] sm:$0xff] %v335
  %400 = vst [vmem:[%s3 + $0x1a0] sm:$0xff] %v336
  %401 = vst [vmem:[%s3 + $0x1a8] sm:$0xff] %v337
  %402 = vst [vmem:[%s3 + $0x1b0] sm:$0xff] %v338
  %403 = vst [vmem:[%s3 + $0x1b8] sm:$0xff] %v339
  %404 = vst [vmem:[%s3 + $0x1c0] sm:$0xff] %v340
  %405 = vst [vmem:[%s3 + $0x1c8] sm:$0xff] %v341
  %406 = vst [vmem:[%s3 + $0x1d0] sm:$0xff] %v342
  %407 = vst [vmem:[%s3 + $0x1d8] sm:$0xff] %v343
  %408 = vst [vmem:[%s3 + $0x1e0] sm:$0xff] %v344
  %409 = vst [vmem:[%s3 + $0x1e8] sm:$0xff] %v345
  %410 = vst [vmem:[%s3 + $0x1f0] sm:$0xff] %v346
  %411 = vst [vmem:[%s3 + $0x1f8] sm:$0xff] %v347
  // Predicated region
  $region14: #{double_conv_forward.5} parent=0 // pred_check
    _
  $region15: #{double_conv_forward.5} parent=0 // pred_check_branch
    %413 = sbr.rel (0) target = $region17
  $region16: #{double_conv_forward.5} parent=0 // pred_region
    _
  $region17: #{double_conv_forward.5} parent=0 // pred_fallthru
    _
  // Predicated region
  $region18: #{double_conv_forward.5} parent=0 // pred_check
    _
  $region19: #{double_conv_forward.5} parent=0 // pred_check_branch
    %415 = sbr.rel (0) target = $region21
  $region20: #{double_conv_forward.5} parent=0 // pred_region
    _
  $region21: #{double_conv_forward.5} parent=0 // pred_fallthru
    _

// kernel: double_conv_forward.3
$region0: #{double_conv_forward.3}
  #allocation0 [shape = 'u32[]', space=smem, size = 0x4, offset = 0x4, fixed_abs, tag = 'smem constant byte address 0x4 - core index']
  #allocation1 [shape = 'u32[144,128]{1,0:T(1,128)}', space=vmem, size = 0x12000, scoped, tag = 'internal scratch']
  %s0 = inlined_call_operand.vmem [shape: bf16[2,24,16,36], index: 0, kind: input, shape index: {}]
  %s1 = inlined_call_operand.vmem [shape: bf16[36,128], index: 1, kind: input, shape index: {}]
  %s2 = inlined_call_operand.vmem [shape: f32[1,128], index: 2, kind: input, shape index: {}]
  %s3 = inlined_call_operand.vmem [shape: bf16[2,24,18,128], index: 3, kind: output, shape index: {0}]
  %s4 = inlined_call_operand.vmem [shape: f32[2,2,16,128], index: 4, kind: output, shape index: {1}]
  %5 = xla_tuple %s3, %s4
  %s6 = sld [smem:[#allocation0]]
  $region53: #{double_conv_forward.3} parent=0
    _
  %s8 = ssub.s32 1, %s6
  %s9 = scalar_select 0, %s8, %s6
  loop: start=0, step=1, limit=4
  $region2: #{double_conv_forward.3} parent=0 // loop_pre_header
    _
  $region3: #{double_conv_forward.3} parent=0 // loop_header
    %s11 = sphi 0, %s15
    %p12 = scmp.ge.s32.totalorder %s11, 4
    %s18 = sphi 0, %s30
    %s19 = sphi 0, %s26
    %s20 = sphi 0, %s18
    %s21 = sphi 0, %s19
    %s22 = sphi 0, %s20
    %s23 = sphi 0, %s21
    %s35 = sphi 0, %s37
    %s38 = sphi 0, %s35
    %s39 = sphi 0, %s38
    %s55 = sphi 0, %s39
    %s59 = sphi 0, %s59
    %s61 = sphi 0, %s59
    %s62 = sphi 0, %s61
    %s76 = sphi 0, %s62
    %s80 = sphi 0, %s80
    %s82 = sphi 0, %s80
    %s83 = sphi 0, %s82
    %s97 = sphi 0, %s83
    %s105 = sphi 0, %s107
    %s108 = sphi 0, %s105
    %s109 = sphi 0, %s108
    %s125 = sphi 0, %s109
    %s133 = sphi 0, %s135
    %s136 = sphi 0, %s133
    %s137 = sphi 0, %s136
    %s153 = sphi 0, %s137
  $region4: #{double_conv_forward.3} parent=0 // loop_header_branch
    %14 = sbr.rel (%p12) target = $region8
  $region5: #{double_conv_forward.3} parent=0 // loop_body
    %s16 = ssub.s32 %s11, 1
    %s17 = ssub.s32 %s11, 2
    %s24 = sadd.s32 1, %s19
    %p25 = scmp.ge.s32.totalorder %s24, 1
    %s26 = scalar_select %p25, 0, %s24
    %s27 = sadd.s32 1, %s18
    %s28 = scalar_select %p25, %s27, %s18
    %p29 = scmp.ge.s32.totalorder %s28, 2
    %s30 = scalar_select %p29, 0, %s28
    %s31 = ssub.s32 %s18, %s30
    %s32 = ssub.s32 %s19, %s26
    %s33 = sor.u32 %s31, %s32
    %p34 = scmp.eq.s32.totalorder %s33, 0
    %s36 = sadd.s32 %s35, 1
    %s37 = scalar_select %p34, %s35, %s36
    %p40 = pneg %p34
    %p41 = scmp.eq.s32.totalorder %s11, 1
    %p42 = por %p40, %p41
    %p43 = scmp.ne.s32.totalorder %s35, %s38
    %p44 = scmp.eq.s32.totalorder %s11, 0
    %p45 = por %p43, %p44
    %p46 = scmp.ne.s32.totalorder %s35, %s38
    %p47 = scmp.eq.s32.totalorder %s16, 1
    %p48 = por %p46, %p47
    %p49 = scmp.ne.s32.totalorder %s38, %s39
    %p50 = scmp.eq.s32.totalorder %s16, 0
    %p51 = por %p49, %p50
    %p52 = scmp.ne.s32.totalorder %s38, %s39
    %p53 = scmp.eq.s32.totalorder %s17, 1
    %p54 = por %p52, %p53
    %p56 = scmp.ne.s32.totalorder %s39, %s55
    %p57 = scmp.eq.s32.totalorder %s17, 0
    %p58 = por %p56, %p57
    %s60 = sadd.s32 %s59, 1
    %p63 = scmp.eq.s32.totalorder %s11, 1
    %p64 = scmp.ne.s32.totalorder %s59, %s61
    %p65 = scmp.eq.s32.totalorder %s11, 0
    %p66 = por %p64, %p65
    %p67 = scmp.ne.s32.totalorder %s59, %s61
    %p68 = scmp.eq.s32.totalorder %s16, 1
    %p69 = por %p67, %p68
    %p70 = scmp.ne.s32.totalorder %s61, %s62
    %p71 = scmp.eq.s32.totalorder %s16, 0
    %p72 = por %p70, %p71
    %p73 = scmp.ne.s32.totalorder %s61, %s62
    %p74 = scmp.eq.s32.totalorder %s17, 1
    %p75 = por %p73, %p74
    %p77 = scmp.ne.s32.totalorder %s62, %s76
    %p78 = scmp.eq.s32.totalorder %s17, 0
    %p79 = por %p77, %p78
    %s81 = sadd.s32 %s80, 1
    %p84 = scmp.eq.s32.totalorder %s11, 1
    %p85 = scmp.ne.s32.totalorder %s80, %s82
    %p86 = scmp.eq.s32.totalorder %s11, 0
    %p87 = por %p85, %p86
    %p88 = scmp.ne.s32.totalorder %s80, %s82
    %p89 = scmp.eq.s32.totalorder %s16, 1
    %p90 = por %p88, %p89
    %p91 = scmp.ne.s32.totalorder %s82, %s83
    %p92 = scmp.eq.s32.totalorder %s16, 0
    %p93 = por %p91, %p92
    %p94 = scmp.ne.s32.totalorder %s82, %s83
    %p95 = scmp.eq.s32.totalorder %s17, 1
    %p96 = por %p94, %p95
    %p98 = scmp.ne.s32.totalorder %s83, %s97
    %p99 = scmp.eq.s32.totalorder %s17, 0
    %p100 = por %p98, %p99
    %s101 = ssub.s32 %s18, %s30
    %s102 = ssub.s32 %s19, %s26
    %s103 = sor.u32 %s101, %s102
    %p104 = scmp.eq.s32.totalorder %s103, 0
    %s106 = sadd.s32 %s105, 1
    %s107 = scalar_select %p104, %s105, %s106
    %p110 = pneg %p104
    %p111 = scmp.eq.s32.totalorder %s11, 1
    %p112 = por %p110, %p111
    %p113 = scmp.ne.s32.totalorder %s105, %s108
    %p114 = scmp.eq.s32.totalorder %s11, 0
    %p115 = por %p113, %p114
    %p116 = scmp.ne.s32.totalorder %s105, %s108
    %p117 = scmp.eq.s32.totalorder %s16, 1
    %p118 = por %p116, %p117
    %p119 = scmp.ne.s32.totalorder %s108, %s109
    %p120 = scmp.eq.s32.totalorder %s16, 0
    %p121 = por %p119, %p120
    %p122 = scmp.ne.s32.totalorder %s108, %s109
    %p123 = scmp.eq.s32.totalorder %s17, 1
    %p124 = por %p122, %p123
    %p126 = scmp.ne.s32.totalorder %s109, %s125
    %p127 = scmp.eq.s32.totalorder %s17, 0
    %p128 = por %p126, %p127
    %s129 = sadd.s32 %s18, %s19
    %s130 = sadd.s32 %s30, %s26
    %s131 = ssub.s32 %s129, %s130
    %p132 = scmp.eq.s32.totalorder %s131, 0
    %s134 = sadd.s32 %s133, 1
    %s135 = scalar_select %p132, %s133, %s134
    %p138 = pneg %p132
    %p139 = scmp.eq.s32.totalorder %s11, 1
    %p140 = por %p138, %p139
    %p141 = scmp.ne.s32.totalorder %s133, %s136
    %p142 = scmp.eq.s32.totalorder %s11, 0
    %p143 = por %p141, %p142
    %p144 = scmp.ne.s32.totalorder %s133, %s136
    %p145 = scmp.eq.s32.totalorder %s16, 1
    %p146 = por %p144, %p145
    %p147 = scmp.ne.s32.totalorder %s136, %s137
    %p148 = scmp.eq.s32.totalorder %s16, 0
    %p149 = por %p147, %p148
    %p150 = scmp.ne.s32.totalorder %s136, %s137
    %p151 = scmp.eq.s32.totalorder %s17, 1
    %p152 = por %p150, %p151
    %p154 = scmp.ne.s32.totalorder %s137, %s153
    %p155 = scmp.eq.s32.totalorder %s17, 0
    %p156 = por %p154, %p155
    %p157 = scmp.le.s32.totalorder 1, %s11
    %p158 = scmp.lt.s32.totalorder %s11, 3
    %p159 = pnand %p157, %p158
    %p160 = pneg %p159
    // Predicated region
    $region9: #{double_conv_forward.3} parent=5 // pred_check
      _
    $region10: #{double_conv_forward.3} parent=5 // pred_check_branch
      %162 = sbr.rel (%p159) target = $region12
    $region11: #{double_conv_forward.3} parent=5 // pred_region
      %s163 = ssub.s32 %s11, 1
      // Predicated region
      $region13: #{double_conv_forward.3} parent=11 // pred_check
        %p164 = pneg %p72
      $region14: #{double_conv_forward.3} parent=11 // pred_check_branch
        %166 = sbr.rel (%p164) target = $region16
      $region15: #{double_conv_forward.3} parent=11 // pred_region
        _
      $region16: #{double_conv_forward.3} parent=11 // pred_fallthru
        _
      // Predicated region
      $region17: #{double_conv_forward.3} parent=11 // pred_check
        %p167 = pneg %p93
      $region18: #{double_conv_forward.3} parent=11 // pred_check_branch
        %169 = sbr.rel (%p167) target = $region20
      $region19: #{double_conv_forward.3} parent=11 // pred_region
        _
      $region20: #{double_conv_forward.3} parent=11 // pred_fallthru
        _
    $region12: #{double_conv_forward.3} parent=5 // pred_fallthru
      _
    %p170 = scmp.lt.s32.totalorder %s11, 2
    // Predicated region
    $region21: #{double_conv_forward.3} parent=5 // pred_check
      %p171 = pneg %p170
    $region22: #{double_conv_forward.3} parent=5 // pred_check_branch
      %173 = sbr.rel (%p171) target = $region24
    $region23: #{double_conv_forward.3} parent=5 // pred_region
      // Predicated region
      $region25: #{double_conv_forward.3} parent=23 // pred_check
        %p174 = pneg %p45
      $region26: #{double_conv_forward.3} parent=23 // pred_check_branch
        %176 = sbr.rel (%p174) target = $region28
      $region27: #{double_conv_forward.3} parent=23 // pred_region
        %s177 = smul.u32 24, %s19
        %p178 = scmp.lt.s32.totalorder %s18, 1
        %s179 = scalar_select %p178, %s18, 1
        %p180 = scmp.lt.s32.totalorder %s177, 23
        %s181 = scalar_select %p180, %s177, 23
        %s182 = smul.addr %s181, 2
        %s183 = smul.addr %s179, 48
        %s184 = sadd.s32 %s182, %s183
        %s185 = smul.addr %s184, 4
        %s186 = scalar_lea.vmem %s0, %s185
        %s187 = smul.u32 24, %s19
      $region28: #{double_conv_forward.3} parent=23 // pred_fallthru
        _
    $region24: #{double_conv_forward.3} parent=5 // pred_fallthru
      _
    %p188 = scmp.le.s32.totalorder 1, %s11
    %p189 = scmp.lt.s32.totalorder %s11, 3
    %p190 = pnand %p188, %p189
    %p191 = pneg %p190
    // Predicated region
    $region29: #{double_conv_forward.3} parent=5 // pred_check
      _
    $region30: #{double_conv_forward.3} parent=5 // pred_check_branch
      %193 = sbr.rel (%p190) target = $region32
    $region31: #{double_conv_forward.3} parent=5 // pred_region
      %s194 = ssub.s32 %s11, 1
      %s195 = smul.u32 24, %s21
      %p196 = scmp.lt.s32.totalorder %s20, 1
      %s197 = scalar_select %p196, %s20, 1
      %p198 = scmp.lt.s32.totalorder %s195, 23
      %s199 = scalar_select %p198, %s195, 23
      %s200 = smul.addr %s199, 2
      %s201 = smul.addr %s197, 48
      %s202 = sadd.s32 %s200, %s201
      %s203 = smul.addr %s202, 4
      %s204 = scalar_lea.vmem %s0, %s203
      %p205 = pneg %p51
      %p206 = pneg %p48
      %p207 = pneg %p72
      %p208 = pneg %p69
      %p209 = pneg %p93
      %p210 = pneg %p90
      %p211 = pneg %p121
      %p212 = pneg %p118
      %s213 = smul.u32 24, %s21
      %p214 = scmp.lt.s32.totalorder %s20, 1
      %s215 = scalar_select %p214, %s20, 1
      %p216 = scmp.lt.s32.totalorder %s213, 23
      %s217 = scalar_select %p216, %s213, 23
      %s218 = smul.addr %s217, 3
      %s219 = smul.addr %s215, 72
      %s220 = sadd.s32 %s218, %s219
      %s221 = smul.addr %s220, 4
      %s222 = scalar_lea.vmem %s3, %s221
      %p223 = pneg %p149
      %p224 = pneg %p146
      %s225 = sadd.s32 %s20, %s21
      %p226 = scmp.lt.s32.totalorder %s225, 1
      %s227 = scalar_select %p226, %s225, 1
      %s228 = smul.addr %s227, 4
      %s229 = smul.addr %s228, 8
      %s230 = scalar_lea.vmem %s4, %s229
      %s231 = smul.u32 24, %s21
      %p232 = scmp.lt.s32.totalorder %s20, 1
      %s233 = scalar_select %p232, %s20, 1
      %p234 = scmp.lt.s32.totalorder %s231, 23
      %s235 = scalar_select %p234, %s231, 23
      %s236 = smul.addr %s235, 2
      %s237 = smul.addr %s233, 48
      %s238 = sadd.s32 %s236, %s237
      %s239 = smul.addr %s238, 4
      %s240 = scalar_lea.vmem %s0, %s239
      %s241 = smul.u32 24, %s21
      %s242 = smul.u32 24, %s21
      %p243 = scmp.lt.s32.totalorder %s20, 1
      %s244 = scalar_select %p243, %s20, 1
      %p245 = scmp.lt.s32.totalorder %s242, 23
      %s246 = scalar_select %p245, %s242, 23
      %s247 = smul.addr %s246, 3
      %s248 = smul.addr %s244, 72
      %s249 = sadd.s32 %s247, %s248
      %s250 = smul.addr %s249, 4
      %s251 = scalar_lea.vmem %s3, %s250
      %s252 = smul.u32 24, %s21
      %s253 = sadd.s32 %s20, %s21
      %p254 = scmp.lt.s32.totalorder %s253, 1
      %s255 = scalar_select %p254, %s253, 1
      %s256 = smul.addr %s255, 4
      %s257 = smul.addr %s256, 8
      %s258 = scalar_lea.vmem %s4, %s257
      %s259 = sadd.s32 %s20, %s21
      %v261 = vld [vmem:[%s240] sm:$0xf]
      %v262 = vld [vmem:[%s240 + $0x4] sm:$0xf]
      %v263 = vld [vmem:[%s240 + $0x8] sm:$0xf]
      %v264 = vld [vmem:[%s240 + $0xc] sm:$0xf]
      %v265 = vld [vmem:[%s240 + $0x10] sm:$0xf]
      %v266 = vld [vmem:[%s240 + $0x14] sm:$0xf]
      %v267 = vld [vmem:[%s240 + $0x18] sm:$0xf]
      %v268 = vld [vmem:[%s240 + $0x1c] sm:$0xf]
      %v269 = vld [vmem:[%s240 + $0x20] sm:$0xf]
      %v270 = vld [vmem:[%s240 + $0x24] sm:$0xf]
      %v271 = vld [vmem:[%s240 + $0x28] sm:$0xf]
      %v272 = vld [vmem:[%s240 + $0x2c] sm:$0xf]
      %v273 = vld [vmem:[%s240 + $0x30] sm:$0xf]
      %v274 = vld [vmem:[%s240 + $0x34] sm:$0xf]
      %v275 = vld [vmem:[%s240 + $0x38] sm:$0xf]
      %v276 = vld [vmem:[%s240 + $0x3c] sm:$0xf]
      %v277 = vld [vmem:[%s240 + $0x40] sm:$0xf]
      %v278 = vld [vmem:[%s240 + $0x44] sm:$0xf]
      %v279 = vld [vmem:[%s240 + $0x48] sm:$0xf]
      %v280 = vld [vmem:[%s240 + $0x4c] sm:$0xf]
      %v281 = vld [vmem:[%s240 + $0x50] sm:$0xf]
      %v282 = vld [vmem:[%s240 + $0x54] sm:$0xf]
      %v283 = vld [vmem:[%s240 + $0x58] sm:$0xf]
      %v284 = vld [vmem:[%s240 + $0x5c] sm:$0xf]
      %v285 = vld [vmem:[%s240 + $0x60] sm:$0xf]
      %v286 = vld [vmem:[%s240 + $0x64] sm:$0xf]
      %v287 = vld [vmem:[%s240 + $0x68] sm:$0xf]
      %v288 = vld [vmem:[%s240 + $0x6c] sm:$0xf]
      %v289 = vld [vmem:[%s240 + $0x70] sm:$0xf]
      %v290 = vld [vmem:[%s240 + $0x74] sm:$0xf]
      %v291 = vld [vmem:[%s240 + $0x78] sm:$0xf]
      %v292 = vld [vmem:[%s240 + $0x7c] sm:$0xf]
      %v293 = vld [vmem:[%s240 + $0x80] sm:$0xf]
      %v294 = vld [vmem:[%s240 + $0x84] sm:$0xf]
      %v295 = vld [vmem:[%s240 + $0x88] sm:$0xf]
      %v296 = vld [vmem:[%s240 + $0x8c] sm:$0xf]
      %v297 = vld [vmem:[%s240 + $0x90] sm:$0xf]
      %v298 = vld [vmem:[%s240 + $0x94] sm:$0xf]
      %v299 = vld [vmem:[%s240 + $0x98] sm:$0xf]
      %v300 = vld [vmem:[%s240 + $0x9c] sm:$0xf]
      %v301 = vld [vmem:[%s240 + $0xa0] sm:$0xf]
      %v302 = vld [vmem:[%s240 + $0xa4] sm:$0xf]
      %v303 = vld [vmem:[%s240 + $0xa8] sm:$0xf]
      %v304 = vld [vmem:[%s240 + $0xac] sm:$0xf]
      %v305 = vld [vmem:[%s240 + $0xb0] sm:$0xf]
      %v306 = vld [vmem:[%s240 + $0xb4] sm:$0xf]
      %v307 = vld [vmem:[%s240 + $0xb8] sm:$0xf]
      %v308 = vld [vmem:[%s240 + $0xbc] sm:$0xf]
      %v309 = vld [vmem:[%s2] sm:$0x1]
      %v311 = vlaneseq
      %v312 = vshrl.u32 %v311, 7
      %v313 = vsub.s32 0, %v312
      %v314 = vrot.slane %v309, %v313
      %v316 = vld [vmem:[%s1] sm:$0xf]
      %v317 = vld [vmem:[%s1 + $0x4] sm:$0xf]
      %v318 = vld [vmem:[%s1 + $0x8] sm:$0xf]
      %v319 = vld [vmem:[%s1 + $0xc] sm:$0xf]
      %v320 = vld [vmem:[%s1 + $0x10] sm:$0x3]
      %v369 = vunpack.c.l.b16 %v261
      %v370 = vunpack.c.l.b16 %v262
      %v371 = vunpack.c.l.b16 %v263
      %v372 = vunpack.c.l.b16 %v264
      %v373 = vunpack.c.l.b16 %v265
      %v374 = vunpack.c.l.b16 %v266
      %v375 = vunpack.c.l.b16 %v267
      %v376 = vunpack.c.l.b16 %v268
      %v377 = vunpack.c.l.b16 %v269
      %v378 = vunpack.c.l.b16 %v270
      %v379 = vunpack.c.l.b16 %v271
      %v380 = vunpack.c.l.b16 %v272
      %v381 = vunpack.c.l.b16 %v273
      %v382 = vunpack.c.l.b16 %v274
      %v383 = vunpack.c.l.b16 %v275
      %v384 = vunpack.c.l.b16 %v276
      %v385 = vunpack.c.l.b16 %v277
      %v386 = vunpack.c.l.b16 %v278
      %v387 = vunpack.c.l.b16 %v279
      %v388 = vunpack.c.l.b16 %v280
      %v389 = vunpack.c.l.b16 %v281
      %v390 = vunpack.c.l.b16 %v282
      %v391 = vunpack.c.l.b16 %v283
      %v392 = vunpack.c.l.b16 %v284
      %v393 = vunpack.c.l.b16 %v285
      %v394 = vunpack.c.l.b16 %v286
      %v395 = vunpack.c.l.b16 %v287
      %v396 = vunpack.c.l.b16 %v288
      %v397 = vunpack.c.l.b16 %v289
      %v398 = vunpack.c.l.b16 %v290
      %v399 = vunpack.c.l.b16 %v291
      %v400 = vunpack.c.l.b16 %v292
      %v401 = vunpack.c.l.b16 %v293
      %v402 = vunpack.c.l.b16 %v294
      %v403 = vunpack.c.l.b16 %v295
      %v404 = vunpack.c.l.b16 %v296
      %v405 = vunpack.c.l.b16 %v297
      %v406 = vunpack.c.l.b16 %v298
      %v407 = vunpack.c.l.b16 %v299
      %v408 = vunpack.c.l.b16 %v300
      %v409 = vunpack.c.l.b16 %v301
      %v410 = vunpack.c.l.b16 %v302
      %v411 = vunpack.c.l.b16 %v303
      %v412 = vunpack.c.l.b16 %v304
      %v413 = vunpack.c.l.b16 %v305
      %v414 = vunpack.c.l.b16 %v306
      %v415 = vunpack.c.l.b16 %v307
      %v416 = vunpack.c.l.b16 %v308
      %v417 = vpack.c.b16 %v370, %v369
      %v418 = vpack.c.b16 %v372, %v371
      %v419 = vpack.c.b16 %v374, %v373
      %v420 = vpack.c.b16 %v376, %v375
      %v421 = vpack.c.b16 %v378, %v377
      %v422 = vpack.c.b16 %v380, %v379
      %v423 = vpack.c.b16 %v382, %v381
      %v424 = vpack.c.b16 %v384, %v383
      %v425 = vpack.c.b16 %v386, %v385
      %v426 = vpack.c.b16 %v388, %v387
      %v427 = vpack.c.b16 %v390, %v389
      %v428 = vpack.c.b16 %v392, %v391
      %v429 = vpack.c.b16 %v394, %v393
      %v430 = vpack.c.b16 %v396, %v395
      %v431 = vpack.c.b16 %v398, %v397
      %v432 = vpack.c.b16 %v400, %v399
      %v433 = vpack.c.b16 %v402, %v401
      %v434 = vpack.c.b16 %v404, %v403
      %v435 = vpack.c.b16 %v406, %v405
      %v436 = vpack.c.b16 %v408, %v407
      %v437 = vpack.c.b16 %v410, %v409
      %v438 = vpack.c.b16 %v412, %v411
      %v439 = vpack.c.b16 %v414, %v413
      %v440 = vpack.c.b16 %v416, %v415
      %v446 = vunpack.c.l.b16 %v316
      %v447 = vunpack.c.l.b16 %v317
      %v448 = vunpack.c.l.b16 %v318
      %v449 = vunpack.c.l.b16 %v319
      %v450 = vunpack.c.l.b16 %v320
      %v451 = vpack.c.b16 %v447, %v446
      %v452 = vpack.c.b16 %v449, %v448
      %v453 = vpack.c.b16 %v450, %v450
      %vm456 = vcmask 293888
      %v458 = vsel %vm456, %v417, 0
      %v461 = vsel %vm456, %v418, 0
      %v464 = vsel %vm456, %v419, 0
      %v467 = vsel %vm456, %v420, 0
      %v470 = vsel %vm456, %v421, 0
      %v473 = vsel %vm456, %v422, 0
      %v476 = vsel %vm456, %v423, 0
      %v479 = vsel %vm456, %v424, 0
      %v482 = vsel %vm456, %v425, 0
      %v485 = vsel %vm456, %v426, 0
      %v488 = vsel %vm456, %v427, 0
      %v491 = vsel %vm456, %v428, 0
      %v494 = vsel %vm456, %v429, 0
      %v497 = vsel %vm456, %v430, 0
      %v500 = vsel %vm456, %v431, 0
      %v503 = vsel %vm456, %v432, 0
      %v506 = vsel %vm456, %v433, 0
      %v509 = vsel %vm456, %v434, 0
      %v512 = vsel %vm456, %v435, 0
      %v515 = vsel %vm456, %v436, 0
      %v518 = vsel %vm456, %v437, 0
      %v521 = vsel %vm456, %v438, 0
      %v524 = vsel %vm456, %v439, 0
      %v527 = vsel %vm456, %v440, 0
      %vm529 = vcmask 1041408
      %v531 = vsel %vm529, %v453, 0
      %533 = vmatprep.subr.bf16.mxu0 0
      %534 = vmatpush1.bf16.msra.mxu0 %v451
      %535 = vmatprep.subr.bf16.mxu0 0
      %536 = vmatpush1.bf16.msra.mxu0 %v452
      %537 = vmatprep.subr.bf16.mxu0 0
      %538 = vmatpush1.bf16.msra.mxu0 %v531
      %539 = vmatprep.subr.bf16.mxu0 0
      %540 = vmatpush1.bf16.msra.mxu0 0
      %541 = vmatprep.subr.bf16.mxu0 0
      %542 = vmatpush1.bf16.msra.mxu0 0
      %543 = vmatprep.subr.bf16.mxu0 0
      %544 = vmatpush1.bf16.msra.mxu0 0
      %545 = vmatprep.subr.bf16.mxu0 0
      %546 = vmatpush1.bf16.msra.mxu0 0
      %547 = vmatprep.subr.bf16.mxu0 0
      %548 = vmatpush1.bf16.msra.mxu0 0
      %549 = vmatprep.subr.bf16.mxu0 0
      %550 = vmatpush1.bf16.msra.mxu0 0
      %551 = vmatprep.subr.bf16.mxu0 0
      %552 = vmatpush1.bf16.msra.mxu0 0
      %553 = vmatprep.subr.bf16.mxu0 0
      %554 = vmatpush1.bf16.msra.mxu0 0
      %555 = vmatprep.subr.bf16.mxu0 0
      %556 = vmatpush1.bf16.msra.mxu0 0
      %557 = vmatprep.subr.bf16.mxu0 0
      %558 = vmatpush1.bf16.msra.mxu0 0
      %559 = vmatprep.subr.bf16.mxu0 0
      %560 = vmatpush1.bf16.msra.mxu0 0
      %561 = vmatprep.subr.bf16.mxu0 0
      %562 = vmatpush1.bf16.msra.mxu0 0
      %563 = vmatprep.subr.bf16.mxu0 0
      %564 = vmatpush1.bf16.msra.mxu0 0
      %565 = vmatprep.mubr.bf16.mxu0 0
      %566 = vmatmul.mubr.bf16.gmra.mrb[0].mxu0 %v458
      %v567 = vpop.f32.mrb[0].mxu0
      %v568 = vadd.f32 0.0, %v567
      %v569 = vpop.f32.mrb[0].mxu0
      %v570 = vpop.f32.mrb[0].mxu0
      %v571 = vadd.f32 0.0, %v570
      %v572 = vpop.f32.mrb[0].mxu0
      %573 = vmatprep.mubr.bf16.mxu0 0
      %574 = vmatmul.mubr.bf16.gmra.mrb[0].mxu0 %v461
      %v575 = vpop.f32.mrb[0].mxu0
      %v576 = vadd.f32 0.0, %v575
      %v577 = vpop.f32.mrb[0].mxu0
      %v578 = vpop.f32.mrb[0].mxu0
      %v579 = vadd.f32 0.0, %v578
      %v580 = vpop.f32.mrb[0].mxu0
      %581 = vmatprep.mubr.bf16.mxu0 0
      %582 = vmatmul.mubr.bf16.gmra.mrb[0].mxu0 %v464
      %v583 = vpop.f32.mrb[0].mxu0
      %v584 = vadd.f32 0.0, %v583
      %v585 = vpop.f32.mrb[0].mxu0
      %v586 = vpop.f32.mrb[0].mxu0
      %v587 = vadd.f32 0.0, %v586
      %v588 = vpop.f32.mrb[0].mxu0
      %589 = vmatprep.mubr.bf16.mxu0 0
      %590 = vmatmul.mubr.bf16.gmra.mrb[0].mxu0 %v467
      %v591 = vpop.f32.mrb[0].mxu0
      %v592 = vadd.f32 0.0, %v591
      %v593 = vpop.f32.mrb[0].mxu0
      %v594 = vpop.f32.mrb[0].mxu0
      %v595 = vadd.f32 0.0, %v594
      %v596 = vpop.f32.mrb[0].mxu0
      %597 = vmatprep.mubr.bf16.mxu0 0
      %598 = vmatmul.mubr.bf16.gmra.mrb[0].mxu0 %v470
      %v599 = vpop.f32.mrb[0].mxu0
      %v600 = vadd.f32 0.0, %v599
      %v601 = vpop.f32.mrb[0].mxu0
      %v602 = vpop.f32.mrb[0].mxu0
      %v603 = vadd.f32 0.0, %v602
      %v604 = vpop.f32.mrb[0].mxu0
      %605 = vmatprep.mubr.bf16.mxu0 0
      %606 = vmatmul.mubr.bf16.gmra.mrb[0].mxu0 %v473
      %v607 = vpop.f32.mrb[0].mxu0
      %v608 = vadd.f32 0.0, %v607
      %v609 = vpop.f32.mrb[0].mxu0
      %v610 = vpop.f32.mrb[0].mxu0
      %v611 = vadd.f32 0.0, %v610
      %v612 = vpop.f32.mrb[0].mxu0
      %613 = vmatprep.mubr.bf16.mxu0 0
      %614 = vmatmul.mubr.bf16.gmra.mrb[0].mxu0 %v476
      %v615 = vpop.f32.mrb[0].mxu0
      %v616 = vadd.f32 0.0, %v615
      %v617 = vpop.f32.mrb[0].mxu0
      %v618 = vpop.f32.mrb[0].mxu0
      %v619 = vadd.f32 0.0, %v618
      %v620 = vpop.f32.mrb[0].mxu0
      %621 = vmatprep.mubr.bf16.mxu0 0
      %622 = vmatmul.mubr.bf16.gmra.mrb[0].mxu0 %v479
      %v623 = vpop.f32.mrb[0].mxu0
      %v624 = vadd.f32 0.0, %v623
      %v625 = vpop.f32.mrb[0].mxu0
      %v626 = vpop.f32.mrb[0].mxu0
      %v627 = vadd.f32 0.0, %v626
      %v628 = vpop.f32.mrb[0].mxu0
      %629 = vmatprep.mubr.bf16.mxu0 0
      %630 = vmatmul.mubr.bf16.gmra.mrb[0].mxu0 %v482
      %v631 = vpop.f32.mrb[0].mxu0
      %v632 = vadd.f32 0.0, %v631
      %v633 = vpop.f32.mrb[0].mxu0
      %v634 = vpop.f32.mrb[0].mxu0
      %v635 = vadd.f32 0.0, %v634
      %v636 = vpop.f32.mrb[0].mxu0
      %637 = vmatprep.mubr.bf16.mxu0 0
      %638 = vmatmul.mubr.bf16.gmra.mrb[0].mxu0 %v485
      %v639 = vpop.f32.mrb[0].mxu0
      %v640 = vadd.f32 0.0, %v639
      %v641 = vpop.f32.mrb[0].mxu0
      %v642 = vpop.f32.mrb[0].mxu0
      %v643 = vadd.f32 0.0, %v642
      %v644 = vpop.f32.mrb[0].mxu0
      %645 = vmatprep.mubr.bf16.mxu0 0
      %646 = vmatmul.mubr.bf16.gmra.mrb[0].mxu0 %v488
      %v647 = vpop.f32.mrb[0].mxu0
      %v648 = vadd.f32 0.0, %v647
      %v649 = vpop.f32.mrb[0].mxu0
      %v650 = vpop.f32.mrb[0].mxu0
      %v651 = vadd.f32 0.0, %v650
      %v652 = vpop.f32.mrb[0].mxu0
      %653 = vmatprep.mubr.bf16.mxu0 0
      %654 = vmatmul.mubr.bf16.gmra.mrb[0].mxu0 %v491
      %v655 = vpop.f32.mrb[0].mxu0
      %v656 = vadd.f32 0.0, %v655
      %v657 = vpop.f32.mrb[0].mxu0
      %v658 = vpop.f32.mrb[0].mxu0
      %v659 = vadd.f32 0.0, %v658
      %v660 = vpop.f32.mrb[0].mxu0
      %661 = vmatprep.mubr.bf16.mxu0 0
      %662 = vmatmul.mubr.bf16.gmra.mrb[0].mxu0 %v494
      %v663 = vpop.f32.mrb[0].mxu0
      %v664 = vadd.f32 0.0, %v663
      %v665 = vpop.f32.mrb[0].mxu0
      %v666 = vpop.f32.mrb[0].mxu0
      %v667 = vadd.f32 0.0, %v666
      %v668 = vpop.f32.mrb[0].mxu0
      %669 = vmatprep.mubr.bf16.mxu0 0
      %670 = vmatmul.mubr.bf16.gmra.mrb[0].mxu0 %v497
      %v671 = vpop.f32.mrb[0].mxu0
      %v672 = vadd.f32 0.0, %v671
      %v673 = vpop.f32.mrb[0].mxu0
      %v674 = vpop.f32.mrb[0].mxu0
      %v675 = vadd.f32 0.0, %v674
      %v676 = vpop.f32.mrb[0].mxu0
      %677 = vmatprep.mubr.bf16.mxu0 0
      %678 = vmatmul.mubr.bf16.gmra.mrb[0].mxu0 %v500
      %v679 = vpop.f32.mrb[0].mxu0
      %v680 = vadd.f32 0.0, %v679
      %v681 = vpop.f32.mrb[0].mxu0
      %v682 = vpop.f32.mrb[0].mxu0
      %v683 = vadd.f32 0.0, %v682
      %v684 = vpop.f32.mrb[0].mxu0
      %685 = vmatprep.mubr.bf16.mxu0 0
      %686 = vmatmul.mubr.bf16.gmra.mrb[0].mxu0 %v503
      %v687 = vpop.f32.mrb[0].mxu0
      %v688 = vadd.f32 0.0, %v687
      %v689 = vpop.f32.mrb[0].mxu0
      %v690 = vpop.f32.mrb[0].mxu0
      %v691 = vadd.f32 0.0, %v690
      %v692 = vpop.f32.mrb[0].mxu0
      %693 = vmatprep.mubr.bf16.mxu0 0
      %694 = vmatmul.mubr.bf16.gmra.mrb[0].mxu0 %v506
      %v695 = vpop.f32.mrb[0].mxu0
      %v696 = vadd.f32 0.0, %v695
      %v697 = vpop.f32.mrb[0].mxu0
      %v698 = vpop.f32.mrb[0].mxu0
      %v699 = vadd.f32 0.0, %v698
      %v700 = vpop.f32.mrb[0].mxu0
      %701 = vmatprep.mubr.bf16.mxu0 0
      %702 = vmatmul.mubr.bf16.gmra.mrb[0].mxu0 %v509
      %v703 = vpop.f32.mrb[0].mxu0
      %v704 = vadd.f32 0.0, %v703
      %v705 = vpop.f32.mrb[0].mxu0
      %v706 = vpop.f32.mrb[0].mxu0
      %v707 = vadd.f32 0.0, %v706
      %v708 = vpop.f32.mrb[0].mxu0
      %709 = vmatprep.mubr.bf16.mxu0 0
      %710 = vmatmul.mubr.bf16.gmra.mrb[0].mxu0 %v512
      %v711 = vpop.f32.mrb[0].mxu0
      %v712 = vadd.f32 0.0, %v711
      %v713 = vpop.f32.mrb[0].mxu0
      %v714 = vpop.f32.mrb[0].mxu0
      %v715 = vadd.f32 0.0, %v714
      %v716 = vpop.f32.mrb[0].mxu0
      %717 = vmatprep.mubr.bf16.mxu0 0
      %718 = vmatmul.mubr.bf16.gmra.mrb[0].mxu0 %v515
      %v719 = vpop.f32.mrb[0].mxu0
      %v720 = vadd.f32 0.0, %v719
      %v721 = vpop.f32.mrb[0].mxu0
      %v722 = vpop.f32.mrb[0].mxu0
      %v723 = vadd.f32 0.0, %v722
      %v724 = vpop.f32.mrb[0].mxu0
      %725 = vmatprep.mubr.bf16.mxu0 0
      %726 = vmatmul.mubr.bf16.gmra.mrb[0].mxu0 %v518
      %v727 = vpop.f32.mrb[0].mxu0
      %v728 = vadd.f32 0.0, %v727
      %v729 = vpop.f32.mrb[0].mxu0
      %v730 = vpop.f32.mrb[0].mxu0
      %v731 = vadd.f32 0.0, %v730
      %v732 = vpop.f32.mrb[0].mxu0
      %733 = vmatprep.mubr.bf16.mxu0 0
      %734 = vmatmul.mubr.bf16.gmra.mrb[0].mxu0 %v521
      %v735 = vpop.f32.mrb[0].mxu0
      %v736 = vadd.f32 0.0, %v735
      %v737 = vpop.f32.mrb[0].mxu0
      %v738 = vpop.f32.mrb[0].mxu0
      %v739 = vadd.f32 0.0, %v738
      %v740 = vpop.f32.mrb[0].mxu0
      %741 = vmatprep.mubr.bf16.mxu0 0
      %742 = vmatmul.mubr.bf16.gmra.mrb[0].mxu0 %v524
      %v743 = vpop.f32.mrb[0].mxu0
      %v744 = vadd.f32 0.0, %v743
      %v745 = vpop.f32.mrb[0].mxu0
      %v746 = vpop.f32.mrb[0].mxu0
      %v747 = vadd.f32 0.0, %v746
      %v748 = vpop.f32.mrb[0].mxu0
      %749 = vmatprep.mubr.bf16.mxu0 0
      %750 = vmatmul.mubr.bf16.gmra.mrb[0].mxu0 %v527
      %v751 = vpop.f32.mrb[0].mxu0
      %v752 = vadd.f32 0.0, %v751
      %v753 = vpop.f32.mrb[0].mxu0
      %v754 = vpop.f32.mrb[0].mxu0
      %v755 = vadd.f32 0.0, %v754
      %v756 = vpop.f32.mrb[0].mxu0
      %757 = vdwg.mxu0
      %v758 = vadd.f32 %v314, %v568
      %v759 = vadd.f32 %v314, %v571
      %v760 = vadd.f32 %v314, %v576
      %v761 = vadd.f32 %v314, %v579
      %v762 = vadd.f32 %v314, %v584
      %v763 = vadd.f32 %v314, %v587
      %v764 = vadd.f32 %v314, %v592
      %v765 = vadd.f32 %v314, %v595
      %v766 = vadd.f32 %v314, %v600
      %v767 = vadd.f32 %v314, %v603
      %v768 = vadd.f32 %v314, %v608
      %v769 = vadd.f32 %v314, %v611
      %v770 = vadd.f32 %v314, %v616
      %v771 = vadd.f32 %v314, %v619
      %v772 = vadd.f32 %v314, %v624
      %v773 = vadd.f32 %v314, %v627
      %v774 = vadd.f32 %v314, %v632
      %v775 = vadd.f32 %v314, %v635
      %v776 = vadd.f32 %v314, %v640
      %v777 = vadd.f32 %v314, %v643
      %v778 = vadd.f32 %v314, %v648
      %v779 = vadd.f32 %v314, %v651
      %v780 = vadd.f32 %v314, %v656
      %v781 = vadd.f32 %v314, %v659
      %v782 = vadd.f32 %v314, %v664
      %v783 = vadd.f32 %v314, %v667
      %v784 = vadd.f32 %v314, %v672
      %v785 = vadd.f32 %v314, %v675
      %v786 = vadd.f32 %v314, %v680
      %v787 = vadd.f32 %v314, %v683
      %v788 = vadd.f32 %v314, %v688
      %v789 = vadd.f32 %v314, %v691
      %v790 = vadd.f32 %v314, %v696
      %v791 = vadd.f32 %v314, %v699
      %v792 = vadd.f32 %v314, %v704
      %v793 = vadd.f32 %v314, %v707
      %v794 = vadd.f32 %v314, %v712
      %v795 = vadd.f32 %v314, %v715
      %v796 = vadd.f32 %v314, %v720
      %v797 = vadd.f32 %v314, %v723
      %v798 = vadd.f32 %v314, %v728
      %v799 = vadd.f32 %v314, %v731
      %v800 = vadd.f32 %v314, %v736
      %v801 = vadd.f32 %v314, %v739
      %v802 = vadd.f32 %v314, %v744
      %v803 = vadd.f32 %v314, %v747
      %v804 = vadd.f32 %v314, %v752
      %v805 = vadd.f32 %v314, %v755
      %s806 = smul.u32 %s21, 24
      %v807 = vstv %s806
      %v808 = vadd.s32 %v807, 1
      %v809 = vadd.s32 %v807, 2
      %v810 = vadd.s32 %v807, 3
      %v811 = vadd.s32 %v807, 4
      %v812 = vadd.s32 %v807, 5
      %v813 = vadd.s32 %v807, 6
      %v814 = vadd.s32 %v807, 7
      %v815 = vadd.s32 %v807, 8
      %v816 = vadd.s32 %v807, 9
      %v817 = vadd.s32 %v807, 10
      %v818 = vadd.s32 %v807, 11
      %v819 = vadd.s32 %v807, 12
      %v820 = vadd.s32 %v807, 13
      %v821 = vadd.s32 %v807, 14
      %v822 = vadd.s32 %v807, 15
      %v823 = vadd.s32 %v807, 16
      %v824 = vadd.s32 %v807, 17
      %v825 = vadd.s32 %v807, 18
      %v826 = vadd.s32 %v807, 19
      %v827 = vadd.s32 %v807, 20
      %v828 = vadd.s32 %v807, 21
      %v829 = vadd.s32 %v807, 22
      %v830 = vadd.s32 %v807, 23
      %vm831 = vcmp.ge.s32.totalorder %v807, 1
      %vm832 = vcmp.ge.s32.totalorder %v808, 1
      %vm833 = vcmp.ge.s32.totalorder %v809, 1
      %vm834 = vcmp.ge.s32.totalorder %v810, 1
      %vm835 = vcmp.ge.s32.totalorder %v811, 1
      %vm836 = vcmp.ge.s32.totalorder %v812, 1
      %vm837 = vcmp.ge.s32.totalorder %v813, 1
      %vm838 = vcmp.ge.s32.totalorder %v814, 1
      %vm839 = vcmp.ge.s32.totalorder %v815, 1
      %vm840 = vcmp.ge.s32.totalorder %v816, 1
      %vm841 = vcmp.ge.s32.totalorder %v817, 1
      %vm842 = vcmp.ge.s32.totalorder %v818, 1
      %vm843 = vcmp.ge.s32.totalorder %v819, 1
      %vm844 = vcmp.ge.s32.totalorder %v820, 1
      %vm845 = vcmp.ge.s32.totalorder %v821, 1
      %vm846 = vcmp.ge.s32.totalorder %v822, 1
      %vm847 = vcmp.ge.s32.totalorder %v823, 1
      %vm848 = vcmp.ge.s32.totalorder %v824, 1
      %vm849 = vcmp.ge.s32.totalorder %v825, 1
      %vm850 = vcmp.ge.s32.totalorder %v826, 1
      %vm851 = vcmp.ge.s32.totalorder %v827, 1
      %vm852 = vcmp.ge.s32.totalorder %v828, 1
      %vm853 = vcmp.ge.s32.totalorder %v829, 1
      %vm854 = vcmp.ge.s32.totalorder %v830, 1
      %vm855 = vcmp.le.s32.totalorder %v807, 16
      %vm856 = vcmp.le.s32.totalorder %v808, 16
      %vm857 = vcmp.le.s32.totalorder %v809, 16
      %vm858 = vcmp.le.s32.totalorder %v810, 16
      %vm859 = vcmp.le.s32.totalorder %v811, 16
      %vm860 = vcmp.le.s32.totalorder %v812, 16
      %vm861 = vcmp.le.s32.totalorder %v813, 16
      %vm862 = vcmp.le.s32.totalorder %v814, 16
      %vm863 = vcmp.le.s32.totalorder %v815, 16
      %vm864 = vcmp.le.s32.totalorder %v816, 16
      %vm865 = vcmp.le.s32.totalorder %v817, 16
      %vm866 = vcmp.le.s32.totalorder %v818, 16
      %vm867 = vcmp.le.s32.totalorder %v819, 16
      %vm868 = vcmp.le.s32.totalorder %v820, 16
      %vm869 = vcmp.le.s32.totalorder %v821, 16
      %vm870 = vcmp.le.s32.totalorder %v822, 16
      %vm871 = vcmp.le.s32.totalorder %v823, 16
      %vm872 = vcmp.le.s32.totalorder %v824, 16
      %vm873 = vcmp.le.s32.totalorder %v825, 16
      %vm874 = vcmp.le.s32.totalorder %v826, 16
      %vm875 = vcmp.le.s32.totalorder %v827, 16
      %vm876 = vcmp.le.s32.totalorder %v828, 16
      %vm877 = vcmp.le.s32.totalorder %v829, 16
      %vm878 = vcmp.le.s32.totalorder %v830, 16
      %vm879 = vmand %vm831, %vm855
      %vm880 = vmand %vm832, %vm856
      %vm881 = vmand %vm833, %vm857
      %vm882 = vmand %vm834, %vm858
      %vm883 = vmand %vm835, %vm859
      %vm884 = vmand %vm836, %vm860
      %vm885 = vmand %vm837, %vm861
      %vm886 = vmand %vm838, %vm862
      %vm887 = vmand %vm839, %vm863
      %vm888 = vmand %vm840, %vm864
      %vm889 = vmand %vm841, %vm865
      %vm890 = vmand %vm842, %vm866
      %vm891 = vmand %vm843, %vm867
      %vm892 = vmand %vm844, %vm868
      %vm893 = vmand %vm845, %vm869
      %vm894 = vmand %vm846, %vm870
      %vm895 = vmand %vm847, %vm871
      %vm896 = vmand %vm848, %vm872
      %vm897 = vmand %vm849, %vm873
      %vm898 = vmand %vm850, %vm874
      %vm899 = vmand %vm851, %vm875
      %vm900 = vmand %vm852, %vm876
      %vm901 = vmand %vm853, %vm877
      %vm902 = vmand %vm854, %vm878
      %v903 = vsel %vm879, 1, 0
      %v904 = vsel %vm880, 1, 0
      %v905 = vsel %vm881, 1, 0
      %v906 = vsel %vm882, 1, 0
      %v907 = vsel %vm883, 1, 0
      %v908 = vsel %vm884, 1, 0
      %v909 = vsel %vm885, 1, 0
      %v910 = vsel %vm886, 1, 0
      %v911 = vsel %vm887, 1, 0
      %v912 = vsel %vm888, 1, 0
      %v913 = vsel %vm889, 1, 0
      %v914 = vsel %vm890, 1, 0
      %v915 = vsel %vm891, 1, 0
      %v916 = vsel %vm892, 1, 0
      %v917 = vsel %vm893, 1, 0
      %v918 = vsel %vm894, 1, 0
      %v919 = vsel %vm895, 1, 0
      %v920 = vsel %vm896, 1, 0
      %v921 = vsel %vm897, 1, 0
      %v922 = vsel %vm898, 1, 0
      %v923 = vsel %vm899, 1, 0
      %v924 = vsel %vm900, 1, 0
      %v925 = vsel %vm901, 1, 0
      %v926 = vsel %vm902, 1, 0
      %v927 = vcvt.s32.f32 %v903
      %v928 = vcvt.s32.f32 %v904
      %v929 = vcvt.s32.f32 %v905
      %v930 = vcvt.s32.f32 %v906
      %v931 = vcvt.s32.f32 %v907
      %v932 = vcvt.s32.f32 %v908
      %v933 = vcvt.s32.f32 %v909
      %v934 = vcvt.s32.f32 %v910
      %v935 = vcvt.s32.f32 %v911
      %v936 = vcvt.s32.f32 %v912
      %v937 = vcvt.s32.f32 %v913
      %v938 = vcvt.s32.f32 %v914
      %v939 = vcvt.s32.f32 %v915
      %v940 = vcvt.s32.f32 %v916
      %v941 = vcvt.s32.f32 %v917
      %v942 = vcvt.s32.f32 %v918
      %v943 = vcvt.s32.f32 %v919
      %v944 = vcvt.s32.f32 %v920
      %v945 = vcvt.s32.f32 %v921
      %v946 = vcvt.s32.f32 %v922
      %v947 = vcvt.s32.f32 %v923
      %v948 = vcvt.s32.f32 %v924
      %v949 = vcvt.s32.f32 %v925
      %v950 = vcvt.s32.f32 %v926
      %v951 = vmul.f32 %v758, %v927
      %v952 = vmul.f32 %v759, %v927
      %v953 = vmul.f32 %v760, %v928
      %v954 = vmul.f32 %v761, %v928
      %v955 = vmul.f32 %v762, %v929
      %v956 = vmul.f32 %v763, %v929
      %v957 = vmul.f32 %v764, %v930
      %v958 = vmul.f32 %v765, %v930
      %v959 = vmul.f32 %v766, %v931
      %v960 = vmul.f32 %v767, %v931
      %v961 = vmul.f32 %v768, %v932
      %v962 = vmul.f32 %v769, %v932
      %v963 = vmul.f32 %v770, %v933
      %v964 = vmul.f32 %v771, %v933
      %v965 = vmul.f32 %v772, %v934
      %v966 = vmul.f32 %v773, %v934
      %v967 = vmul.f32 %v774, %v935
      %v968 = vmul.f32 %v775, %v935
      %v969 = vmul.f32 %v776, %v936
      %v970 = vmul.f32 %v777, %v936
      %v971 = vmul.f32 %v778, %v937
      %v972 = vmul.f32 %v779, %v937
      %v973 = vmul.f32 %v780, %v938
      %v974 = vmul.f32 %v781, %v938
      %v975 = vmul.f32 %v782, %v939
      %v976 = vmul.f32 %v783, %v939
      %v977 = vmul.f32 %v784, %v940
      %v978 = vmul.f32 %v785, %v940
      %v979 = vmul.f32 %v786, %v941
      %v980 = vmul.f32 %v787, %v941
      %v981 = vmul.f32 %v788, %v942
      %v982 = vmul.f32 %v789, %v942
      %v983 = vmul.f32 %v790, %v943
      %v984 = vmul.f32 %v791, %v943
      %v985 = vmul.f32 %v792, %v944
      %v986 = vmul.f32 %v793, %v944
      %v987 = vmul.f32 %v794, %v945
      %v988 = vmul.f32 %v795, %v945
      %v989 = vmul.f32 %v796, %v946
      %v990 = vmul.f32 %v797, %v946
      %v991 = vmul.f32 %v798, %v947
      %v992 = vmul.f32 %v799, %v947
      %v993 = vmul.f32 %v800, %v948
      %v994 = vmul.f32 %v801, %v948
      %v995 = vmul.f32 %v802, %v949
      %v996 = vmul.f32 %v803, %v949
      %v997 = vmul.f32 %v804, %v950
      %v998 = vmul.f32 %v805, %v950
      %v999 = vadd.f32 %v951, %v953
      %v1000 = vadd.f32 %v999, %v955
      %v1001 = vadd.f32 %v1000, %v957
      %v1002 = vadd.f32 %v1001, %v959
      %v1003 = vadd.f32 %v1002, %v961
      %v1004 = vadd.f32 %v1003, %v963
      %v1005 = vadd.f32 %v1004, %v965
      %v1006 = vadd.f32 %v1005, %v967
      %v1007 = vadd.f32 %v1006, %v969
      %v1008 = vadd.f32 %v1007, %v971
      %v1009 = vadd.f32 %v1008, %v973
      %v1010 = vadd.f32 %v1009, %v975
      %v1011 = vadd.f32 %v1010, %v977
      %v1012 = vadd.f32 %v1011, %v979
      %v1013 = vadd.f32 %v1012, %v981
      %v1014 = vadd.f32 %v1013, %v983
      %v1015 = vadd.f32 %v1014, %v985
      %v1016 = vadd.f32 %v1015, %v987
      %v1017 = vadd.f32 %v1016, %v989
      %v1018 = vadd.f32 %v1017, %v991
      %v1019 = vadd.f32 %v1018, %v993
      %v1020 = vadd.f32 %v1019, %v995
      %v1021 = vadd.f32 %v1020, %v997
      %v1022 = vadd.f32 %v952, %v954
      %v1023 = vadd.f32 %v1022, %v956
      %v1024 = vadd.f32 %v1023, %v958
      %v1025 = vadd.f32 %v1024, %v960
      %v1026 = vadd.f32 %v1025, %v962
      %v1027 = vadd.f32 %v1026, %v964
      %v1028 = vadd.f32 %v1027, %v966
      %v1029 = vadd.f32 %v1028, %v968
      %v1030 = vadd.f32 %v1029, %v970
      %v1031 = vadd.f32 %v1030, %v972
      %v1032 = vadd.f32 %v1031, %v974
      %v1033 = vadd.f32 %v1032, %v976
      %v1034 = vadd.f32 %v1033, %v978
      %v1035 = vadd.f32 %v1034, %v980
      %v1036 = vadd.f32 %v1035, %v982
      %v1037 = vadd.f32 %v1036, %v984
      %v1038 = vadd.f32 %v1037, %v986
      %v1039 = vadd.f32 %v1038, %v988
      %v1040 = vadd.f32 %v1039, %v990
      %v1041 = vadd.f32 %v1040, %v992
      %v1042 = vadd.f32 %v1041, %v994
      %v1043 = vadd.f32 %v1042, %v996
      %v1044 = vadd.f32 %v1043, %v998
      %1045 = vst [vmem:[%s258] sm:$0xff] %v1021
      %1046 = vst [vmem:[%s258 + $0x8] sm:$0xff] %v1044
      %v1047 = vmul.f32 %v951, %v758
      %v1048 = vmul.f32 %v952, %v759
      %v1049 = vmul.f32 %v953, %v760
      %v1050 = vmul.f32 %v954, %v761
      %v1051 = vmul.f32 %v955, %v762
      %v1052 = vmul.f32 %v956, %v763
      %v1053 = vmul.f32 %v957, %v764
      %v1054 = vmul.f32 %v958, %v765
      %v1055 = vmul.f32 %v959, %v766
      %v1056 = vmul.f32 %v960, %v767
      %v1057 = vmul.f32 %v961, %v768
      %v1058 = vmul.f32 %v962, %v769
      %v1059 = vmul.f32 %v963, %v770
      %v1060 = vmul.f32 %v964, %v771
      %v1061 = vmul.f32 %v965, %v772
      %v1062 = vmul.f32 %v966, %v773
      %v1063 = vmul.f32 %v967, %v774
      %v1064 = vmul.f32 %v968, %v775
      %v1065 = vmul.f32 %v969, %v776
      %v1066 = vmul.f32 %v970, %v777
      %v1067 = vmul.f32 %v971, %v778
      %v1068 = vmul.f32 %v972, %v779
      %v1069 = vmul.f32 %v973, %v780
      %v1070 = vmul.f32 %v974, %v781
      %v1071 = vmul.f32 %v975, %v782
      %v1072 = vmul.f32 %v976, %v783
      %v1073 = vmul.f32 %v977, %v784
      %v1074 = vmul.f32 %v978, %v785
      %v1075 = vmul.f32 %v979, %v786
      %v1076 = vmul.f32 %v980, %v787
      %v1077 = vmul.f32 %v981, %v788
      %v1078 = vmul.f32 %v982, %v789
      %v1079 = vmul.f32 %v983, %v790
      %v1080 = vmul.f32 %v984, %v791
      %v1081 = vmul.f32 %v985, %v792
      %v1082 = vmul.f32 %v986, %v793
      %v1083 = vmul.f32 %v987, %v794
      %v1084 = vmul.f32 %v988, %v795
      %v1085 = vmul.f32 %v989, %v796
      %v1086 = vmul.f32 %v990, %v797
      %v1087 = vmul.f32 %v991, %v798
      %v1088 = vmul.f32 %v992, %v799
      %v1089 = vmul.f32 %v993, %v800
      %v1090 = vmul.f32 %v994, %v801
      %v1091 = vmul.f32 %v995, %v802
      %v1092 = vmul.f32 %v996, %v803
      %v1093 = vmul.f32 %v997, %v804
      %v1094 = vmul.f32 %v998, %v805
      %v1095 = vadd.f32 %v1047, %v1049
      %v1096 = vadd.f32 %v1095, %v1051
      %v1097 = vadd.f32 %v1096, %v1053
      %v1098 = vadd.f32 %v1097, %v1055
      %v1099 = vadd.f32 %v1098, %v1057
      %v1100 = vadd.f32 %v1099, %v1059
      %v1101 = vadd.f32 %v1100, %v1061
      %v1102 = vadd.f32 %v1101, %v1063
      %v1103 = vadd.f32 %v1102, %v1065
      %v1104 = vadd.f32 %v1103, %v1067
      %v1105 = vadd.f32 %v1104, %v1069
      %v1106 = vadd.f32 %v1105, %v1071
      %v1107 = vadd.f32 %v1106, %v1073
      %v1108 = vadd.f32 %v1107, %v1075
      %v1109 = vadd.f32 %v1108, %v1077
      %v1110 = vadd.f32 %v1109, %v1079
      %v1111 = vadd.f32 %v1110, %v1081
      %v1112 = vadd.f32 %v1111, %v1083
      %v1113 = vadd.f32 %v1112, %v1085
      %v1114 = vadd.f32 %v1113, %v1087
      %v1115 = vadd.f32 %v1114, %v1089
      %v1116 = vadd.f32 %v1115, %v1091
      %v1117 = vadd.f32 %v1116, %v1093
      %v1118 = vadd.f32 %v1048, %v1050
      %v1119 = vadd.f32 %v1118, %v1052
      %v1120 = vadd.f32 %v1119, %v1054
      %v1121 = vadd.f32 %v1120, %v1056
      %v1122 = vadd.f32 %v1121, %v1058
      %v1123 = vadd.f32 %v1122, %v1060
      %v1124 = vadd.f32 %v1123, %v1062
      %v1125 = vadd.f32 %v1124, %v1064
      %v1126 = vadd.f32 %v1125, %v1066
      %v1127 = vadd.f32 %v1126, %v1068
      %v1128 = vadd.f32 %v1127, %v1070
      %v1129 = vadd.f32 %v1128, %v1072
      %v1130 = vadd.f32 %v1129, %v1074
      %v1131 = vadd.f32 %v1130, %v1076
      %v1132 = vadd.f32 %v1131, %v1078
      %v1133 = vadd.f32 %v1132, %v1080
      %v1134 = vadd.f32 %v1133, %v1082
      %v1135 = vadd.f32 %v1134, %v1084
      %v1136 = vadd.f32 %v1135, %v1086
      %v1137 = vadd.f32 %v1136, %v1088
      %v1138 = vadd.f32 %v1137, %v1090
      %v1139 = vadd.f32 %v1138, %v1092
      %v1140 = vadd.f32 %v1139, %v1094
      %s1141 = scalar_lea.vmem %s258, 16
      %1142 = vst [vmem:[%s1141] sm:$0xff] %v1117
      %1143 = vst [vmem:[%s1141 + $0x8] sm:$0xff] %v1140
      %vm1144 = vcmask 1040384
      %vm1145 = vsmask.f32 256
      %vm1146 = vmand %vm1144, %vm1145
      %v1147 = vld [vmem:[%s251] sm:$0x1]
      %v1148 = vsel %vm1146, 0, %v1147
      %1149 = vst [vmem:[%s251] sm:$0x1] %v1148
      %v1150 = vld [vmem:[%s251 + $0xc] sm:$0x1]
      %v1151 = vsel %vm1146, 0, %v1150
      %1152 = vst [vmem:[%s251 + $0xc] sm:$0x1] %v1151
      %v1153 = vld [vmem:[%s251 + $0x18] sm:$0x1]
      %v1154 = vsel %vm1146, 0, %v1153
      %1155 = vst [vmem:[%s251 + $0x18] sm:$0x1] %v1154
      %v1156 = vld [vmem:[%s251 + $0x24] sm:$0x1]
      %v1157 = vsel %vm1146, 0, %v1156
      %1158 = vst [vmem:[%s251 + $0x24] sm:$0x1] %v1157
      %v1159 = vld [vmem:[%s251 + $0x30] sm:$0x1]
      %v1160 = vsel %vm1146, 0, %v1159
      %1161 = vst [vmem:[%s251 + $0x30] sm:$0x1] %v1160
      %v1162 = vld [vmem:[%s251 + $0x3c] sm:$0x1]
      %v1163 = vsel %vm1146, 0, %v1162
      %1164 = vst [vmem:[%s251 + $0x3c] sm:$0x1] %v1163
      %v1165 = vld [vmem:[%s251 + $0x48] sm:$0x1]
      %v1166 = vsel %vm1146, 0, %v1165
      %1167 = vst [vmem:[%s251 + $0x48] sm:$0x1] %v1166
      %v1168 = vld [vmem:[%s251 + $0x54] sm:$0x1]
      %v1169 = vsel %vm1146, 0, %v1168
      %1170 = vst [vmem:[%s251 + $0x54] sm:$0x1] %v1169
      %v1171 = vld [vmem:[%s251 + $0x60] sm:$0x1]
      %v1172 = vsel %vm1146, 0, %v1171
      %1173 = vst [vmem:[%s251 + $0x60] sm:$0x1] %v1172
      %v1174 = vld [vmem:[%s251 + $0x6c] sm:$0x1]
      %v1175 = vsel %vm1146, 0, %v1174
      %1176 = vst [vmem:[%s251 + $0x6c] sm:$0x1] %v1175
      %v1177 = vld [vmem:[%s251 + $0x78] sm:$0x1]
      %v1178 = vsel %vm1146, 0, %v1177
      %1179 = vst [vmem:[%s251 + $0x78] sm:$0x1] %v1178
      %v1180 = vld [vmem:[%s251 + $0x84] sm:$0x1]
      %v1181 = vsel %vm1146, 0, %v1180
      %1182 = vst [vmem:[%s251 + $0x84] sm:$0x1] %v1181
      %v1183 = vld [vmem:[%s251 + $0x90] sm:$0x1]
      %v1184 = vsel %vm1146, 0, %v1183
      %1185 = vst [vmem:[%s251 + $0x90] sm:$0x1] %v1184
      %v1186 = vld [vmem:[%s251 + $0x9c] sm:$0x1]
      %v1187 = vsel %vm1146, 0, %v1186
      %1188 = vst [vmem:[%s251 + $0x9c] sm:$0x1] %v1187
      %v1189 = vld [vmem:[%s251 + $0xa8] sm:$0x1]
      %v1190 = vsel %vm1146, 0, %v1189
      %1191 = vst [vmem:[%s251 + $0xa8] sm:$0x1] %v1190
      %v1192 = vld [vmem:[%s251 + $0xb4] sm:$0x1]
      %v1193 = vsel %vm1146, 0, %v1192
      %1194 = vst [vmem:[%s251 + $0xb4] sm:$0x1] %v1193
      %v1195 = vld [vmem:[%s251 + $0xc0] sm:$0x1]
      %v1196 = vsel %vm1146, 0, %v1195
      %1197 = vst [vmem:[%s251 + $0xc0] sm:$0x1] %v1196
      %v1198 = vld [vmem:[%s251 + $0xcc] sm:$0x1]
      %v1199 = vsel %vm1146, 0, %v1198
      %1200 = vst [vmem:[%s251 + $0xcc] sm:$0x1] %v1199
      %v1201 = vld [vmem:[%s251 + $0xd8] sm:$0x1]
      %v1202 = vsel %vm1146, 0, %v1201
      %1203 = vst [vmem:[%s251 + $0xd8] sm:$0x1] %v1202
      %v1204 = vld [vmem:[%s251 + $0xe4] sm:$0x1]
      %v1205 = vsel %vm1146, 0, %v1204
      %1206 = vst [vmem:[%s251 + $0xe4] sm:$0x1] %v1205
      %v1207 = vld [vmem:[%s251 + $0xf0] sm:$0x1]
      %v1208 = vsel %vm1146, 0, %v1207
      %1209 = vst [vmem:[%s251 + $0xf0] sm:$0x1] %v1208
      %v1210 = vld [vmem:[%s251 + $0xfc] sm:$0x1]
      %v1211 = vsel %vm1146, 0, %v1210
      %1212 = vst [vmem:[%s251 + $0xfc] sm:$0x1] %v1211
      %v1213 = vld [vmem:[%s251 + $0x108] sm:$0x1]
      %v1214 = vsel %vm1146, 0, %v1213
      %1215 = vst [vmem:[%s251 + $0x108] sm:$0x1] %v1214
      %v1216 = vld [vmem:[%s251 + $0x114] sm:$0x1]
      %v1217 = vsel %vm1146, 0, %v1216
      %1218 = vst [vmem:[%s251 + $0x114] sm:$0x1] %v1217
      %v1219 = vpack.c.bf16 %v759, %v758
      %v1220 = vpack.c.bf16 %v761, %v760
      %v1221 = vpack.c.bf16 %v763, %v762
      %v1222 = vpack.c.bf16 %v765, %v764
      %v1223 = vpack.c.bf16 %v767, %v766
      %v1224 = vpack.c.bf16 %v769, %v768
      %v1225 = vpack.c.bf16 %v771, %v770
      %v1226 = vpack.c.bf16 %v773, %v772
      %v1227 = vpack.c.bf16 %v775, %v774
      %v1228 = vpack.c.bf16 %v777, %v776
      %v1229 = vpack.c.bf16 %v779, %v778
      %v1230 = vpack.c.bf16 %v781, %v780
      %v1231 = vpack.c.bf16 %v783, %v782
      %v1232 = vpack.c.bf16 %v785, %v784
      %v1233 = vpack.c.bf16 %v787, %v786
      %v1234 = vpack.c.bf16 %v789, %v788
      %v1235 = vpack.c.bf16 %v791, %v790
      %v1236 = vpack.c.bf16 %v793, %v792
      %v1237 = vpack.c.bf16 %v795, %v794
      %v1238 = vpack.c.bf16 %v797, %v796
      %v1239 = vpack.c.bf16 %v799, %v798
      %v1240 = vpack.c.bf16 %v801, %v800
      %v1241 = vpack.c.bf16 %v803, %v802
      %v1242 = vpack.c.bf16 %v805, %v804
      %v1267 = vunpack.c.l.b16 %v1219
      %v1268 = vunpack.c.h.b16 %v1219
      %v1269 = vunpack.c.l.b16 %v1220
      %v1270 = vunpack.c.h.b16 %v1220
      %v1271 = vunpack.c.l.b16 %v1221
      %v1272 = vunpack.c.h.b16 %v1221
      %v1273 = vunpack.c.l.b16 %v1222
      %v1274 = vunpack.c.h.b16 %v1222
      %v1275 = vunpack.c.l.b16 %v1223
      %v1276 = vunpack.c.h.b16 %v1223
      %v1277 = vunpack.c.l.b16 %v1224
      %v1278 = vunpack.c.h.b16 %v1224
      %v1279 = vunpack.c.l.b16 %v1225
      %v1280 = vunpack.c.h.b16 %v1225
      %v1281 = vunpack.c.l.b16 %v1226
      %v1282 = vunpack.c.h.b16 %v1226
      %v1283 = vunpack.c.l.b16 %v1227
      %v1284 = vunpack.c.h.b16 %v1227
      %v1285 = vunpack.c.l.b16 %v1228
      %v1286 = vunpack.c.h.b16 %v1228
      %v1287 = vunpack.c.l.b16 %v1229
      %v1288 = vunpack.c.h.b16 %v1229
      %v1289 = vunpack.c.l.b16 %v1230
      %v1290 = vunpack.c.h.b16 %v1230
      %v1291 = vunpack.c.l.b16 %v1231
      %v1292 = vunpack.c.h.b16 %v1231
      %v1293 = vunpack.c.l.b16 %v1232
      %v1294 = vunpack.c.h.b16 %v1232
      %v1295 = vunpack.c.l.b16 %v1233
      %v1296 = vunpack.c.h.b16 %v1233
      %v1297 = vunpack.c.l.b16 %v1234
      %v1298 = vunpack.c.h.b16 %v1234
      %v1299 = vunpack.c.l.b16 %v1235
      %v1300 = vunpack.c.h.b16 %v1235
      %v1301 = vunpack.c.l.b16 %v1236
      %v1302 = vunpack.c.h.b16 %v1236
      %v1303 = vunpack.c.l.b16 %v1237
      %v1304 = vunpack.c.h.b16 %v1237
      %v1305 = vunpack.c.l.b16 %v1238
      %v1306 = vunpack.c.h.b16 %v1238
      %v1307 = vunpack.c.l.b16 %v1239
      %v1308 = vunpack.c.h.b16 %v1239
      %v1309 = vunpack.c.l.b16 %v1240
      %v1310 = vunpack.c.h.b16 %v1240
      %v1311 = vunpack.c.l.b16 %v1241
      %v1312 = vunpack.c.h.b16 %v1241
      %v1313 = vunpack.c.l.b16 %v1242
      %v1314 = vunpack.c.h.b16 %v1242
      %v1315 = vpack.c.b16 %v1267, %v1267
      %v1316 = vpack.c.b16 %v1268, %v1268
      %v1317 = vpack.c.b16 %v1269, %v1269
      %v1318 = vpack.c.b16 %v1270, %v1270
      %v1319 = vpack.c.b16 %v1271, %v1271
      %v1320 = vpack.c.b16 %v1272, %v1272
      %v1321 = vpack.c.b16 %v1273, %v1273
      %v1322 = vpack.c.b16 %v1274, %v1274
      %v1323 = vpack.c.b16 %v1275, %v1275
      %v1324 = vpack.c.b16 %v1276, %v1276
      %v1325 = vpack.c.b16 %v1277, %v1277
      %v1326 = vpack.c.b16 %v1278, %v1278
      %v1327 = vpack.c.b16 %v1279, %v1279
      %v1328 = vpack.c.b16 %v1280, %v1280
      %v1329 = vpack.c.b16 %v1281, %v1281
      %v1330 = vpack.c.b16 %v1282, %v1282
      %v1331 = vpack.c.b16 %v1283, %v1283
      %v1332 = vpack.c.b16 %v1284, %v1284
      %v1333 = vpack.c.b16 %v1285, %v1285
      %v1334 = vpack.c.b16 %v1286, %v1286
      %v1335 = vpack.c.b16 %v1287, %v1287
      %v1336 = vpack.c.b16 %v1288, %v1288
      %v1337 = vpack.c.b16 %v1289, %v1289
      %v1338 = vpack.c.b16 %v1290, %v1290
      %v1339 = vpack.c.b16 %v1291, %v1291
      %v1340 = vpack.c.b16 %v1292, %v1292
      %v1341 = vpack.c.b16 %v1293, %v1293
      %v1342 = vpack.c.b16 %v1294, %v1294
      %v1343 = vpack.c.b16 %v1295, %v1295
      %v1344 = vpack.c.b16 %v1296, %v1296
      %v1345 = vpack.c.b16 %v1297, %v1297
      %v1346 = vpack.c.b16 %v1298, %v1298
      %v1347 = vpack.c.b16 %v1299, %v1299
      %v1348 = vpack.c.b16 %v1300, %v1300
      %v1349 = vpack.c.b16 %v1301, %v1301
      %v1350 = vpack.c.b16 %v1302, %v1302
      %v1351 = vpack.c.b16 %v1303, %v1303
      %v1352 = vpack.c.b16 %v1304, %v1304
      %v1353 = vpack.c.b16 %v1305, %v1305
      %v1354 = vpack.c.b16 %v1306, %v1306
      %v1355 = vpack.c.b16 %v1307, %v1307
      %v1356 = vpack.c.b16 %v1308, %v1308
      %v1357 = vpack.c.b16 %v1309, %v1309
      %v1358 = vpack.c.b16 %v1310, %v1310
      %v1359 = vpack.c.b16 %v1311, %v1311
      %v1360 = vpack.c.b16 %v1312, %v1312
      %v1361 = vpack.c.b16 %v1313, %v1313
      %v1362 = vpack.c.b16 %v1314, %v1314
      %vm1363 = vsmask.f32 4368
      %vm1364 = vmor %vm1145, %vm1363
      %v1366 = vshrl.u32 %v1315, 16
      %v1368 = vrot.slane %v1366, 7
      %v1369 = vshll.u32 %v1315, 16
      %v1371 = vor.u32 %v1368, %v1369
      %v1372 = vrot.slane %v1368, 4
      %v1374 = vshrl.u32 %v1316, 16
      %v1376 = vrot.slane %v1374, 7
      %v1377 = vshll.u32 %v1316, 16
      %v1379 = vor.u32 %v1376, %v1377
      %v1380 = vsel %vm1364, %v1372, %v1379
      %v1381 = vrot.slane %v1376, 4
      %v1383 = vshrl.u32 %v1317, 16
      %v1385 = vrot.slane %v1383, 7
      %v1386 = vshll.u32 %v1317, 16
      %v1388 = vor.u32 %v1385, %v1386
      %v1389 = vrot.slane %v1385, 4
      %v1391 = vshrl.u32 %v1318, 16
      %v1393 = vrot.slane %v1391, 7
      %v1394 = vshll.u32 %v1318, 16
      %v1396 = vor.u32 %v1393, %v1394
      %v1397 = vsel %vm1364, %v1389, %v1396
      %v1398 = vrot.slane %v1393, 4
      %v1400 = vshrl.u32 %v1319, 16
      %v1402 = vrot.slane %v1400, 7
      %v1403 = vshll.u32 %v1319, 16
      %v1405 = vor.u32 %v1402, %v1403
      %v1406 = vrot.slane %v1402, 4
      %v1408 = vshrl.u32 %v1320, 16
      %v1410 = vrot.slane %v1408, 7
      %v1411 = vshll.u32 %v1320, 16
      %v1413 = vor.u32 %v1410, %v1411
      %v1414 = vsel %vm1364, %v1406, %v1413
      %v1415 = vrot.slane %v1410, 4
      %v1417 = vshrl.u32 %v1321, 16
      %v1419 = vrot.slane %v1417, 7
      %v1420 = vshll.u32 %v1321, 16
      %v1422 = vor.u32 %v1419, %v1420
      %v1423 = vrot.slane %v1419, 4
      %v1425 = vshrl.u32 %v1322, 16
      %v1427 = vrot.slane %v1425, 7
      %v1428 = vshll.u32 %v1322, 16
      %v1430 = vor.u32 %v1427, %v1428
      %v1431 = vsel %vm1364, %v1423, %v1430
      %v1432 = vrot.slane %v1427, 4
      %v1434 = vshrl.u32 %v1323, 16
      %v1436 = vrot.slane %v1434, 7
      %v1437 = vshll.u32 %v1323, 16
      %v1439 = vor.u32 %v1436, %v1437
      %v1440 = vrot.slane %v1436, 4
      %v1442 = vshrl.u32 %v1324, 16
      %v1444 = vrot.slane %v1442, 7
      %v1445 = vshll.u32 %v1324, 16
      %v1447 = vor.u32 %v1444, %v1445
      %v1448 = vsel %vm1364, %v1440, %v1447
      %v1449 = vrot.slane %v1444, 4
      %v1451 = vshrl.u32 %v1325, 16
      %v1453 = vrot.slane %v1451, 7
      %v1454 = vshll.u32 %v1325, 16
      %v1456 = vor.u32 %v1453, %v1454
      %v1457 = vrot.slane %v1453, 4
      %v1459 = vshrl.u32 %v1326, 16
      %v1461 = vrot.slane %v1459, 7
      %v1462 = vshll.u32 %v1326, 16
      %v1464 = vor.u32 %v1461, %v1462
      %v1465 = vsel %vm1364, %v1457, %v1464
      %v1466 = vrot.slane %v1461, 4
      %v1468 = vshrl.u32 %v1327, 16
      %v1470 = vrot.slane %v1468, 7
      %v1471 = vshll.u32 %v1327, 16
      %v1473 = vor.u32 %v1470, %v1471
      %v1474 = vrot.slane %v1470, 4
      %v1476 = vshrl.u32 %v1328, 16
      %v1478 = vrot.slane %v1476, 7
      %v1479 = vshll.u32 %v1328, 16
      %v1481 = vor.u32 %v1478, %v1479
      %v1482 = vsel %vm1364, %v1474, %v1481
      %v1483 = vrot.slane %v1478, 4
      %v1485 = vshrl.u32 %v1329, 16
      %v1487 = vrot.slane %v1485, 7
      %v1488 = vshll.u32 %v1329, 16
      %v1490 = vor.u32 %v1487, %v1488
      %v1491 = vrot.slane %v1487, 4
      %v1493 = vshrl.u32 %v1330, 16
      %v1495 = vrot.slane %v1493, 7
      %v1496 = vshll.u32 %v1330, 16
      %v1498 = vor.u32 %v1495, %v1496
      %v1499 = vsel %vm1364, %v1491, %v1498
      %v1500 = vrot.slane %v1495, 4
      %v1502 = vshrl.u32 %v1331, 16
      %v1504 = vrot.slane %v1502, 7
      %v1505 = vshll.u32 %v1331, 16
      %v1507 = vor.u32 %v1504, %v1505
      %v1508 = vrot.slane %v1504, 4
      %v1510 = vshrl.u32 %v1332, 16
      %v1512 = vrot.slane %v1510, 7
      %v1513 = vshll.u32 %v1332, 16
      %v1515 = vor.u32 %v1512, %v1513
      %v1516 = vsel %vm1364, %v1508, %v1515
      %v1517 = vrot.slane %v1512, 4
      %v1519 = vshrl.u32 %v1333, 16
      %v1521 = vrot.slane %v1519, 7
      %v1522 = vshll.u32 %v1333, 16
      %v1524 = vor.u32 %v1521, %v1522
      %v1525 = vrot.slane %v1521, 4
      %v1527 = vshrl.u32 %v1334, 16
      %v1529 = vrot.slane %v1527, 7
      %v1530 = vshll.u32 %v1334, 16
      %v1532 = vor.u32 %v1529, %v1530
      %v1533 = vsel %vm1364, %v1525, %v1532
      %v1534 = vrot.slane %v1529, 4
      %v1536 = vshrl.u32 %v1335, 16
      %v1538 = vrot.slane %v1536, 7
      %v1539 = vshll.u32 %v1335, 16
      %v1541 = vor.u32 %v1538, %v1539
      %v1542 = vrot.slane %v1538, 4
      %v1544 = vshrl.u32 %v1336, 16
      %v1546 = vrot.slane %v1544, 7
      %v1547 = vshll.u32 %v1336, 16
      %v1549 = vor.u32 %v1546, %v1547
      %v1550 = vsel %vm1364, %v1542, %v1549
      %v1551 = vrot.slane %v1546, 4
      %v1553 = vshrl.u32 %v1337, 16
      %v1555 = vrot.slane %v1553, 7
      %v1556 = vshll.u32 %v1337, 16
      %v1558 = vor.u32 %v1555, %v1556
      %v1559 = vrot.slane %v1555, 4
      %v1561 = vshrl.u32 %v1338, 16
      %v1563 = vrot.slane %v1561, 7
      %v1564 = vshll.u32 %v1338, 16
      %v1566 = vor.u32 %v1563, %v1564
      %v1567 = vsel %vm1364, %v1559, %v1566
      %v1568 = vrot.slane %v1563, 4
      %v1570 = vshrl.u32 %v1339, 16
      %v1572 = vrot.slane %v1570, 7
      %v1573 = vshll.u32 %v1339, 16
      %v1575 = vor.u32 %v1572, %v1573
      %v1576 = vrot.slane %v1572, 4
      %v1578 = vshrl.u32 %v1340, 16
      %v1580 = vrot.slane %v1578, 7
      %v1581 = vshll.u32 %v1340, 16
      %v1583 = vor.u32 %v1580, %v1581
      %v1584 = vsel %vm1364, %v1576, %v1583
      %v1585 = vrot.slane %v1580, 4
      %v1587 = vshrl.u32 %v1341, 16
      %v1589 = vrot.slane %v1587, 7
      %v1590 = vshll.u32 %v1341, 16
      %v1592 = vor.u32 %v1589, %v1590
      %v1593 = vrot.slane %v1589, 4
      %v1595 = vshrl.u32 %v1342, 16
      %v1597 = vrot.slane %v1595, 7
      %v1598 = vshll.u32 %v1342, 16
      %v1600 = vor.u32 %v1597, %v1598
      %v1601 = vsel %vm1364, %v1593, %v1600
      %v1602 = vrot.slane %v1597, 4
      %v1604 = vshrl.u32 %v1343, 16
      %v1606 = vrot.slane %v1604, 7
      %v1607 = vshll.u32 %v1343, 16
      %v1609 = vor.u32 %v1606, %v1607
      %v1610 = vrot.slane %v1606, 4
      %v1612 = vshrl.u32 %v1344, 16
      %v1614 = vrot.slane %v1612, 7
      %v1615 = vshll.u32 %v1344, 16
      %v1617 = vor.u32 %v1614, %v1615
      %v1618 = vsel %vm1364, %v1610, %v1617
      %v1619 = vrot.slane %v1614, 4
      %v1621 = vshrl.u32 %v1345, 16
      %v1623 = vrot.slane %v1621, 7
      %v1624 = vshll.u32 %v1345, 16
      %v1626 = vor.u32 %v1623, %v1624
      %v1627 = vrot.slane %v1623, 4
      %v1629 = vshrl.u32 %v1346, 16
      %v1631 = vrot.slane %v1629, 7
      %v1632 = vshll.u32 %v1346, 16
      %v1634 = vor.u32 %v1631, %v1632
      %v1635 = vsel %vm1364, %v1627, %v1634
      %v1636 = vrot.slane %v1631, 4
      %v1638 = vshrl.u32 %v1347, 16
      %v1640 = vrot.slane %v1638, 7
      %v1641 = vshll.u32 %v1347, 16
      %v1643 = vor.u32 %v1640, %v1641
      %v1644 = vrot.slane %v1640, 4
      %v1646 = vshrl.u32 %v1348, 16
      %v1648 = vrot.slane %v1646, 7
      %v1649 = vshll.u32 %v1348, 16
      %v1651 = vor.u32 %v1648, %v1649
      %v1652 = vsel %vm1364, %v1644, %v1651
      %v1653 = vrot.slane %v1648, 4
      %v1655 = vshrl.u32 %v1349, 16
      %v1657 = vrot.slane %v1655, 7
      %v1658 = vshll.u32 %v1349, 16
      %v1660 = vor.u32 %v1657, %v1658
      %v1661 = vrot.slane %v1657, 4
      %v1663 = vshrl.u32 %v1350, 16
      %v1665 = vrot.slane %v1663, 7
      %v1666 = vshll.u32 %v1350, 16
      %v1668 = vor.u32 %v1665, %v1666
      %v1669 = vsel %vm1364, %v1661, %v1668
      %v1670 = vrot.slane %v1665, 4
      %v1672 = vshrl.u32 %v1351, 16
      %v1674 = vrot.slane %v1672, 7
      %v1675 = vshll.u32 %v1351, 16
      %v1677 = vor.u32 %v1674, %v1675
      %v1678 = vrot.slane %v1674, 4
      %v1680 = vshrl.u32 %v1352, 16
      %v1682 = vrot.slane %v1680, 7
      %v1683 = vshll.u32 %v1352, 16
      %v1685 = vor.u32 %v1682, %v1683
      %v1686 = vsel %vm1364, %v1678, %v1685
      %v1687 = vrot.slane %v1682, 4
      %v1689 = vshrl.u32 %v1353, 16
      %v1691 = vrot.slane %v1689, 7
      %v1692 = vshll.u32 %v1353, 16
      %v1694 = vor.u32 %v1691, %v1692
      %v1695 = vrot.slane %v1691, 4
      %v1697 = vshrl.u32 %v1354, 16
      %v1699 = vrot.slane %v1697, 7
      %v1700 = vshll.u32 %v1354, 16
      %v1702 = vor.u32 %v1699, %v1700
      %v1703 = vsel %vm1364, %v1695, %v1702
      %v1704 = vrot.slane %v1699, 4
      %v1706 = vshrl.u32 %v1355, 16
      %v1708 = vrot.slane %v1706, 7
      %v1709 = vshll.u32 %v1355, 16
      %v1711 = vor.u32 %v1708, %v1709
      %v1712 = vrot.slane %v1708, 4
      %v1714 = vshrl.u32 %v1356, 16
      %v1716 = vrot.slane %v1714, 7
      %v1717 = vshll.u32 %v1356, 16
      %v1719 = vor.u32 %v1716, %v1717
      %v1720 = vsel %vm1364, %v1712, %v1719
      %v1721 = vrot.slane %v1716, 4
      %v1723 = vshrl.u32 %v1357, 16
      %v1725 = vrot.slane %v1723, 7
      %v1726 = vshll.u32 %v1357, 16
      %v1728 = vor.u32 %v1725, %v1726
      %v1729 = vrot.slane %v1725, 4
      %v1731 = vshrl.u32 %v1358, 16
      %v1733 = vrot.slane %v1731, 7
      %v1734 = vshll.u32 %v1358, 16
      %v1736 = vor.u32 %v1733, %v1734
      %v1737 = vsel %vm1364, %v1729, %v1736
      %v1738 = vrot.slane %v1733, 4
      %v1740 = vshrl.u32 %v1359, 16
      %v1742 = vrot.slane %v1740, 7
      %v1743 = vshll.u32 %v1359, 16
      %v1745 = vor.u32 %v1742, %v1743
      %v1746 = vrot.slane %v1742, 4
      %v1748 = vshrl.u32 %v1360, 16
      %v1750 = vrot.slane %v1748, 7
      %v1751 = vshll.u32 %v1360, 16
      %v1753 = vor.u32 %v1750, %v1751
      %v1754 = vsel %vm1364, %v1746, %v1753
      %v1755 = vrot.slane %v1750, 4
      %v1757 = vshrl.u32 %v1361, 16
      %v1759 = vrot.slane %v1757, 7
      %v1760 = vshll.u32 %v1361, 16
      %v1762 = vor.u32 %v1759, %v1760
      %v1763 = vrot.slane %v1759, 4
      %v1765 = vshrl.u32 %v1362, 16
      %v1767 = vrot.slane %v1765, 7
      %v1768 = vshll.u32 %v1362, 16
      %v1770 = vor.u32 %v1767, %v1768
      %v1771 = vsel %vm1364, %v1763, %v1770
      %v1772 = vrot.slane %v1767, 4
      %vm1845 = vcmask 1043456
      %vm1846 = vsmask.f32 7938
      %vm1847 = vmand %vm1845, %vm1846
      %v1848 = vld [vmem:[%s251] sm:$0xf]
      %v1849 = vsel %vm1847, %v1371, %v1848
      %1850 = vst [vmem:[%s251] sm:$0xf] %v1849
      %1851 = vst [vmem:[%s251 + $0x4] sm:$0xf] %v1380
      %v1852 = vld [vmem:[%s251 + $0x8] sm:$0x1]
      %v1853 = vsel %vm1146, %v1381, %v1852
      %1854 = vst [vmem:[%s251 + $0x8] sm:$0x1] %v1853
      %v1855 = vld [vmem:[%s251 + $0xc] sm:$0xf]
      %v1856 = vsel %vm1847, %v1388, %v1855
      %1857 = vst [vmem:[%s251 + $0xc] sm:$0xf] %v1856
      %1858 = vst [vmem:[%s251 + $0x10] sm:$0xf] %v1397
      %v1859 = vld [vmem:[%s251 + $0x14] sm:$0x1]
      %v1860 = vsel %vm1146, %v1398, %v1859
      %1861 = vst [vmem:[%s251 + $0x14] sm:$0x1] %v1860
      %v1862 = vld [vmem:[%s251 + $0x18] sm:$0xf]
      %v1863 = vsel %vm1847, %v1405, %v1862
      %1864 = vst [vmem:[%s251 + $0x18] sm:$0xf] %v1863
      %1865 = vst [vmem:[%s251 + $0x1c] sm:$0xf] %v1414
      %v1866 = vld [vmem:[%s251 + $0x20] sm:$0x1]
      %v1867 = vsel %vm1146, %v1415, %v1866
      %1868 = vst [vmem:[%s251 + $0x20] sm:$0x1] %v1867
      %v1869 = vld [vmem:[%s251 + $0x24] sm:$0xf]
      %v1870 = vsel %vm1847, %v1422, %v1869
      %1871 = vst [vmem:[%s251 + $0x24] sm:$0xf] %v1870
      %1872 = vst [vmem:[%s251 + $0x28] sm:$0xf] %v1431
      %v1873 = vld [vmem:[%s251 + $0x2c] sm:$0x1]
      %v1874 = vsel %vm1146, %v1432, %v1873
      %1875 = vst [vmem:[%s251 + $0x2c] sm:$0x1] %v1874
      %v1876 = vld [vmem:[%s251 + $0x30] sm:$0xf]
      %v1877 = vsel %vm1847, %v1439, %v1876
      %1878 = vst [vmem:[%s251 + $0x30] sm:$0xf] %v1877
      %1879 = vst [vmem:[%s251 + $0x34] sm:$0xf] %v1448
      %v1880 = vld [vmem:[%s251 + $0x38] sm:$0x1]
      %v1881 = vsel %vm1146, %v1449, %v1880
      %1882 = vst [vmem:[%s251 + $0x38] sm:$0x1] %v1881
      %v1883 = vld [vmem:[%s251 + $0x3c] sm:$0xf]
      %v1884 = vsel %vm1847, %v1456, %v1883
      %1885 = vst [vmem:[%s251 + $0x3c] sm:$0xf] %v1884
      %1886 = vst [vmem:[%s251 + $0x40] sm:$0xf] %v1465
      %v1887 = vld [vmem:[%s251 + $0x44] sm:$0x1]
      %v1888 = vsel %vm1146, %v1466, %v1887
      %1889 = vst [vmem:[%s251 + $0x44] sm:$0x1] %v1888
      %v1890 = vld [vmem:[%s251 + $0x48] sm:$0xf]
      %v1891 = vsel %vm1847, %v1473, %v1890
      %1892 = vst [vmem:[%s251 + $0x48] sm:$0xf] %v1891
      %1893 = vst [vmem:[%s251 + $0x4c] sm:$0xf] %v1482
      %v1894 = vld [vmem:[%s251 + $0x50] sm:$0x1]
      %v1895 = vsel %vm1146, %v1483, %v1894
      %1896 = vst [vmem:[%s251 + $0x50] sm:$0x1] %v1895
      %v1897 = vld [vmem:[%s251 + $0x54] sm:$0xf]
      %v1898 = vsel %vm1847, %v1490, %v1897
      %1899 = vst [vmem:[%s251 + $0x54] sm:$0xf] %v1898
      %1900 = vst [vmem:[%s251 + $0x58] sm:$0xf] %v1499
      %v1901 = vld [vmem:[%s251 + $0x5c] sm:$0x1]
      %v1902 = vsel %vm1146, %v1500, %v1901
      %1903 = vst [vmem:[%s251 + $0x5c] sm:$0x1] %v1902
      %v1904 = vld [vmem:[%s251 + $0x60] sm:$0xf]
      %v1905 = vsel %vm1847, %v1507, %v1904
      %1906 = vst [vmem:[%s251 + $0x60] sm:$0xf] %v1905
      %1907 = vst [vmem:[%s251 + $0x64] sm:$0xf] %v1516
      %v1908 = vld [vmem:[%s251 + $0x68] sm:$0x1]
      %v1909 = vsel %vm1146, %v1517, %v1908
      %1910 = vst [vmem:[%s251 + $0x68] sm:$0x1] %v1909
      %v1911 = vld [vmem:[%s251 + $0x6c] sm:$0xf]
      %v1912 = vsel %vm1847, %v1524, %v1911
      %1913 = vst [vmem:[%s251 + $0x6c] sm:$0xf] %v1912
      %1914 = vst [vmem:[%s251 + $0x70] sm:$0xf] %v1533
      %v1915 = vld [vmem:[%s251 + $0x74] sm:$0x1]
      %v1916 = vsel %vm1146, %v1534, %v1915
      %1917 = vst [vmem:[%s251 + $0x74] sm:$0x1] %v1916
      %v1918 = vld [vmem:[%s251 + $0x78] sm:$0xf]
      %v1919 = vsel %vm1847, %v1541, %v1918
      %1920 = vst [vmem:[%s251 + $0x78] sm:$0xf] %v1919
      %1921 = vst [vmem:[%s251 + $0x7c] sm:$0xf] %v1550
      %v1922 = vld [vmem:[%s251 + $0x80] sm:$0x1]
      %v1923 = vsel %vm1146, %v1551, %v1922
      %1924 = vst [vmem:[%s251 + $0x80] sm:$0x1] %v1923
      %v1925 = vld [vmem:[%s251 + $0x84] sm:$0xf]
      %v1926 = vsel %vm1847, %v1558, %v1925
      %1927 = vst [vmem:[%s251 + $0x84] sm:$0xf] %v1926
      %1928 = vst [vmem:[%s251 + $0x88] sm:$0xf] %v1567
      %v1929 = vld [vmem:[%s251 + $0x8c] sm:$0x1]
      %v1930 = vsel %vm1146, %v1568, %v1929
      %1931 = vst [vmem:[%s251 + $0x8c] sm:$0x1] %v1930
      %v1932 = vld [vmem:[%s251 + $0x90] sm:$0xf]
      %v1933 = vsel %vm1847, %v1575, %v1932
      %1934 = vst [vmem:[%s251 + $0x90] sm:$0xf] %v1933
      %1935 = vst [vmem:[%s251 + $0x94] sm:$0xf] %v1584
      %v1936 = vld [vmem:[%s251 + $0x98] sm:$0x1]
      %v1937 = vsel %vm1146, %v1585, %v1936
      %1938 = vst [vmem:[%s251 + $0x98] sm:$0x1] %v1937
      %v1939 = vld [vmem:[%s251 + $0x9c] sm:$0xf]
      %v1940 = vsel %vm1847, %v1592, %v1939
      %1941 = vst [vmem:[%s251 + $0x9c] sm:$0xf] %v1940
      %1942 = vst [vmem:[%s251 + $0xa0] sm:$0xf] %v1601
      %v1943 = vld [vmem:[%s251 + $0xa4] sm:$0x1]
      %v1944 = vsel %vm1146, %v1602, %v1943
      %1945 = vst [vmem:[%s251 + $0xa4] sm:$0x1] %v1944
      %v1946 = vld [vmem:[%s251 + $0xa8] sm:$0xf]
      %v1947 = vsel %vm1847, %v1609, %v1946
      %1948 = vst [vmem:[%s251 + $0xa8] sm:$0xf] %v1947
      %1949 = vst [vmem:[%s251 + $0xac] sm:$0xf] %v1618
      %v1950 = vld [vmem:[%s251 + $0xb0] sm:$0x1]
      %v1951 = vsel %vm1146, %v1619, %v1950
      %1952 = vst [vmem:[%s251 + $0xb0] sm:$0x1] %v1951
      %v1953 = vld [vmem:[%s251 + $0xb4] sm:$0xf]
      %v1954 = vsel %vm1847, %v1626, %v1953
      %1955 = vst [vmem:[%s251 + $0xb4] sm:$0xf] %v1954
      %1956 = vst [vmem:[%s251 + $0xb8] sm:$0xf] %v1635
      %v1957 = vld [vmem:[%s251 + $0xbc] sm:$0x1]
      %v1958 = vsel %vm1146, %v1636, %v1957
      %1959 = vst [vmem:[%s251 + $0xbc] sm:$0x1] %v1958
      %v1960 = vld [vmem:[%s251 + $0xc0] sm:$0xf]
      %v1961 = vsel %vm1847, %v1643, %v1960
      %1962 = vst [vmem:[%s251 + $0xc0] sm:$0xf] %v1961
      %1963 = vst [vmem:[%s251 + $0xc4] sm:$0xf] %v1652
      %v1964 = vld [vmem:[%s251 + $0xc8] sm:$0x1]
      %v1965 = vsel %vm1146, %v1653, %v1964
      %1966 = vst [vmem:[%s251 + $0xc8] sm:$0x1] %v1965
      %v1967 = vld [vmem:[%s251 + $0xcc] sm:$0xf]
      %v1968 = vsel %vm1847, %v1660, %v1967
      %1969 = vst [vmem:[%s251 + $0xcc] sm:$0xf] %v1968
      %1970 = vst [vmem:[%s251 + $0xd0] sm:$0xf] %v1669
      %v1971 = vld [vmem:[%s251 + $0xd4] sm:$0x1]
      %v1972 = vsel %vm1146, %v1670, %v1971
      %1973 = vst [vmem:[%s251 + $0xd4] sm:$0x1] %v1972
      %v1974 = vld [vmem:[%s251 + $0xd8] sm:$0xf]
      %v1975 = vsel %vm1847, %v1677, %v1974
      %1976 = vst [vmem:[%s251 + $0xd8] sm:$0xf] %v1975
      %1977 = vst [vmem:[%s251 + $0xdc] sm:$0xf] %v1686
      %v1978 = vld [vmem:[%s251 + $0xe0] sm:$0x1]
      %v1979 = vsel %vm1146, %v1687, %v1978
      %1980 = vst [vmem:[%s251 + $0xe0] sm:$0x1] %v1979
      %v1981 = vld [vmem:[%s251 + $0xe4] sm:$0xf]
      %v1982 = vsel %vm1847, %v1694, %v1981
      %1983 = vst [vmem:[%s251 + $0xe4] sm:$0xf] %v1982
      %1984 = vst [vmem:[%s251 + $0xe8] sm:$0xf] %v1703
      %v1985 = vld [vmem:[%s251 + $0xec] sm:$0x1]
      %v1986 = vsel %vm1146, %v1704, %v1985
      %1987 = vst [vmem:[%s251 + $0xec] sm:$0x1] %v1986
      %v1988 = vld [vmem:[%s251 + $0xf0] sm:$0xf]
      %v1989 = vsel %vm1847, %v1711, %v1988
      %1990 = vst [vmem:[%s251 + $0xf0] sm:$0xf] %v1989
      %1991 = vst [vmem:[%s251 + $0xf4] sm:$0xf] %v1720
      %v1992 = vld [vmem:[%s251 + $0xf8] sm:$0x1]
      %v1993 = vsel %vm1146, %v1721, %v1992
      %1994 = vst [vmem:[%s251 + $0xf8] sm:$0x1] %v1993
      %v1995 = vld [vmem:[%s251 + $0xfc] sm:$0xf]
      %v1996 = vsel %vm1847, %v1728, %v1995
      %1997 = vst [vmem:[%s251 + $0xfc] sm:$0xf] %v1996
      %1998 = vst [vmem:[%s251 + $0x100] sm:$0xf] %v1737
      %v1999 = vld [vmem:[%s251 + $0x104] sm:$0x1]
      %v2000 = vsel %vm1146, %v1738, %v1999
      %2001 = vst [vmem:[%s251 + $0x104] sm:$0x1] %v2000
      %v2002 = vld [vmem:[%s251 + $0x108] sm:$0xf]
      %v2003 = vsel %vm1847, %v1745, %v2002
      %2004 = vst [vmem:[%s251 + $0x108] sm:$0xf] %v2003
      %2005 = vst [vmem:[%s251 + $0x10c] sm:$0xf] %v1754
      %v2006 = vld [vmem:[%s251 + $0x110] sm:$0x1]
      %v2007 = vsel %vm1146, %v1755, %v2006
      %2008 = vst [vmem:[%s251 + $0x110] sm:$0x1] %v2007
      %v2009 = vld [vmem:[%s251 + $0x114] sm:$0xf]
      %v2010 = vsel %vm1847, %v1762, %v2009
      %2011 = vst [vmem:[%s251 + $0x114] sm:$0xf] %v2010
      %2012 = vst [vmem:[%s251 + $0x118] sm:$0xf] %v1771
      %v2013 = vld [vmem:[%s251 + $0x11c] sm:$0x1]
      %v2014 = vsel %vm1146, %v1772, %v2013
      %2015 = vst [vmem:[%s251 + $0x11c] sm:$0x1] %v2014
      %vm2016 = vmand %vm1144, %vm1846
      %v2017 = vld [vmem:[%s251 + $0x8] sm:$0x1]
      %v2018 = vsel %vm2016, 0, %v2017
      %2019 = vst [vmem:[%s251 + $0x8] sm:$0x1] %v2018
      %v2020 = vld [vmem:[%s251 + $0x14] sm:$0x1]
      %v2021 = vsel %vm2016, 0, %v2020
      %2022 = vst [vmem:[%s251 + $0x14] sm:$0x1] %v2021
      %v2023 = vld [vmem:[%s251 + $0x20] sm:$0x1]
      %v2024 = vsel %vm2016, 0, %v2023
      %2025 = vst [vmem:[%s251 + $0x20] sm:$0x1] %v2024
      %v2026 = vld [vmem:[%s251 + $0x2c] sm:$0x1]
      %v2027 = vsel %vm2016, 0, %v2026
      %2028 = vst [vmem:[%s251 + $0x2c] sm:$0x1] %v2027
      %v2029 = vld [vmem:[%s251 + $0x38] sm:$0x1]
      %v2030 = vsel %vm2016, 0, %v2029
      %2031 = vst [vmem:[%s251 + $0x38] sm:$0x1] %v2030
      %v2032 = vld [vmem:[%s251 + $0x44] sm:$0x1]
      %v2033 = vsel %vm2016, 0, %v2032
      %2034 = vst [vmem:[%s251 + $0x44] sm:$0x1] %v2033
      %v2035 = vld [vmem:[%s251 + $0x50] sm:$0x1]
      %v2036 = vsel %vm2016, 0, %v2035
      %2037 = vst [vmem:[%s251 + $0x50] sm:$0x1] %v2036
      %v2038 = vld [vmem:[%s251 + $0x5c] sm:$0x1]
      %v2039 = vsel %vm2016, 0, %v2038
      %2040 = vst [vmem:[%s251 + $0x5c] sm:$0x1] %v2039
      %v2041 = vld [vmem:[%s251 + $0x68] sm:$0x1]
      %v2042 = vsel %vm2016, 0, %v2041
      %2043 = vst [vmem:[%s251 + $0x68] sm:$0x1] %v2042
      %v2044 = vld [vmem:[%s251 + $0x74] sm:$0x1]
      %v2045 = vsel %vm2016, 0, %v2044
      %2046 = vst [vmem:[%s251 + $0x74] sm:$0x1] %v2045
      %v2047 = vld [vmem:[%s251 + $0x80] sm:$0x1]
      %v2048 = vsel %vm2016, 0, %v2047
      %2049 = vst [vmem:[%s251 + $0x80] sm:$0x1] %v2048
      %v2050 = vld [vmem:[%s251 + $0x8c] sm:$0x1]
      %v2051 = vsel %vm2016, 0, %v2050
      %2052 = vst [vmem:[%s251 + $0x8c] sm:$0x1] %v2051
      %v2053 = vld [vmem:[%s251 + $0x98] sm:$0x1]
      %v2054 = vsel %vm2016, 0, %v2053
      %2055 = vst [vmem:[%s251 + $0x98] sm:$0x1] %v2054
      %v2056 = vld [vmem:[%s251 + $0xa4] sm:$0x1]
      %v2057 = vsel %vm2016, 0, %v2056
      %2058 = vst [vmem:[%s251 + $0xa4] sm:$0x1] %v2057
      %v2059 = vld [vmem:[%s251 + $0xb0] sm:$0x1]
      %v2060 = vsel %vm2016, 0, %v2059
      %2061 = vst [vmem:[%s251 + $0xb0] sm:$0x1] %v2060
      %v2062 = vld [vmem:[%s251 + $0xbc] sm:$0x1]
      %v2063 = vsel %vm2016, 0, %v2062
      %2064 = vst [vmem:[%s251 + $0xbc] sm:$0x1] %v2063
      %v2065 = vld [vmem:[%s251 + $0xc8] sm:$0x1]
      %v2066 = vsel %vm2016, 0, %v2065
      %2067 = vst [vmem:[%s251 + $0xc8] sm:$0x1] %v2066
      %v2068 = vld [vmem:[%s251 + $0xd4] sm:$0x1]
      %v2069 = vsel %vm2016, 0, %v2068
      %2070 = vst [vmem:[%s251 + $0xd4] sm:$0x1] %v2069
      %v2071 = vld [vmem:[%s251 + $0xe0] sm:$0x1]
      %v2072 = vsel %vm2016, 0, %v2071
      %2073 = vst [vmem:[%s251 + $0xe0] sm:$0x1] %v2072
      %v2074 = vld [vmem:[%s251 + $0xec] sm:$0x1]
      %v2075 = vsel %vm2016, 0, %v2074
      %2076 = vst [vmem:[%s251 + $0xec] sm:$0x1] %v2075
      %v2077 = vld [vmem:[%s251 + $0xf8] sm:$0x1]
      %v2078 = vsel %vm2016, 0, %v2077
      %2079 = vst [vmem:[%s251 + $0xf8] sm:$0x1] %v2078
      %v2080 = vld [vmem:[%s251 + $0x104] sm:$0x1]
      %v2081 = vsel %vm2016, 0, %v2080
      %2082 = vst [vmem:[%s251 + $0x104] sm:$0x1] %v2081
      %v2083 = vld [vmem:[%s251 + $0x110] sm:$0x1]
      %v2084 = vsel %vm2016, 0, %v2083
      %2085 = vst [vmem:[%s251 + $0x110] sm:$0x1] %v2084
      %v2086 = vld [vmem:[%s251 + $0x11c] sm:$0x1]
      %v2087 = vsel %vm2016, 0, %v2086
      %2088 = vst [vmem:[%s251 + $0x11c] sm:$0x1] %v2087
      %s2089 = smul.u32 24, %s21
      %p2090 = scmp.lt.s32.totalorder %s20, 1
      %s2091 = scalar_select %p2090, %s20, 1
      %p2092 = scmp.lt.s32.totalorder %s2089, 23
      %s2093 = scalar_select %p2092, %s2089, 23
      %s2094 = smul.addr %s2093, 3
      %s2095 = smul.addr %s2091, 72
      %s2096 = sadd.s32 %s2094, %s2095
      %s2097 = smul.addr %s2096, 4
      %s2098 = scalar_lea.vmem %s3, %s2097
      %s2099 = sadd.s32 %s20, %s21
      %p2100 = scmp.lt.s32.totalorder %s2099, 1
      %s2101 = scalar_select %p2100, %s2099, 1
      %s2102 = smul.addr %s2101, 4
      %s2103 = smul.addr %s2102, 8
      %s2104 = scalar_lea.vmem %s4, %s2103
      // Predicated region
      $region33: #{double_conv_forward.3} parent=31 // pred_check
        %p2105 = pneg %p118
      $region34: #{double_conv_forward.3} parent=31 // pred_check_branch
        %2107 = sbr.rel (%p2105) target = $region36
      $region35: #{double_conv_forward.3} parent=31 // pred_region
        %s2108 = smul.u32 24, %s21
      $region36: #{double_conv_forward.3} parent=31 // pred_fallthru
        _
      // Predicated region
      $region37: #{double_conv_forward.3} parent=31 // pred_check
        %p2109 = pneg %p146
      $region38: #{double_conv_forward.3} parent=31 // pred_check_branch
        %2111 = sbr.rel (%p2109) target = $region40
      $region39: #{double_conv_forward.3} parent=31 // pred_region
        %s2112 = sadd.s32 %s20, %s21
      $region40: #{double_conv_forward.3} parent=31 // pred_fallthru
        _
    $region32: #{double_conv_forward.3} parent=5 // pred_fallthru
      _
    %p2113 = scmp.le.s32.totalorder 2, %s11
    // Predicated region
    $region41: #{double_conv_forward.3} parent=5 // pred_check
      %p2114 = pneg %p2113
    $region42: #{double_conv_forward.3} parent=5 // pred_check_branch
      %2116 = sbr.rel (%p2114) target = $region44
    $region43: #{double_conv_forward.3} parent=5 // pred_region
      %s2117 = ssub.s32 %s11, 2
      // Predicated region
      $region45: #{double_conv_forward.3} parent=43 // pred_check
        %p2118 = pneg %p124
      $region46: #{double_conv_forward.3} parent=43 // pred_check_branch
        %2120 = sbr.rel (%p2118) target = $region48
      $region47: #{double_conv_forward.3} parent=43 // pred_region
        %s2121 = smul.u32 24, %s23
        %p2122 = scmp.lt.s32.totalorder %s22, 1
        %s2123 = scalar_select %p2122, %s22, 1
        %p2124 = scmp.lt.s32.totalorder %s2121, 23
        %s2125 = scalar_select %p2124, %s2121, 23
        %s2126 = smul.addr %s2125, 3
        %s2127 = smul.addr %s2123, 72
        %s2128 = sadd.s32 %s2126, %s2127
        %s2129 = smul.addr %s2128, 4
        %s2130 = scalar_lea.vmem %s3, %s2129
      $region48: #{double_conv_forward.3} parent=43 // pred_fallthru
        _
      // Predicated region
      $region49: #{double_conv_forward.3} parent=43 // pred_check
        %p2131 = pneg %p152
      $region50: #{double_conv_forward.3} parent=43 // pred_check_branch
        %2133 = sbr.rel (%p2131) target = $region52
      $region51: #{double_conv_forward.3} parent=43 // pred_region
        %s2134 = sadd.s32 %s22, %s23
        %p2135 = scmp.lt.s32.totalorder %s2134, 1
        %s2136 = scalar_select %p2135, %s2134, 1
        %s2137 = smul.addr %s2136, 4
        %s2138 = smul.addr %s2137, 8
        %s2139 = scalar_lea.vmem %s4, %s2138
      $region52: #{double_conv_forward.3} parent=43 // pred_fallthru
        _
    $region44: #{double_conv_forward.3} parent=5 // pred_fallthru
      _
  $region6: #{double_conv_forward.3} parent=0 // loop_footer
    %s15 = sadd.s32 1, %s11
  $region7: #{double_conv_forward.3} parent=0 // loop_footer_branch
    %10 = sbr.rel target = $region3
  $region8: #{double_conv_forward.3} parent=0 // loop_exit
    _

// kernel: double_conv_forward.4
$region0: #{double_conv_forward.4}
  #allocation0 [shape = 'u32[]', space=smem, size = 0x4, offset = 0x4, fixed_abs, tag = 'smem constant byte address 0x4 - core index']
  #allocation1 [shape = 'u32[144,128]{1,0:T(1,128)}', space=vmem, size = 0x12000, scoped, tag = 'internal scratch']
  #allocation2 [shape = 'bf16[18,18,128]{2,1,0:T(8,128)(2,1)}', space=vmem, size = 0x1b000, scoped, tag = 'scratch operand']
  %s0 = inlined_call_operand.vmem [shape: bf16[2,24,18,128], index: 0, kind: input, shape index: {}, may-alias: {0,1}]
  %s1 = inlined_call_operand.vmem [shape: bf16[2,24,18,128], index: 1, kind: input, shape index: {}, may-alias: {0,1}]
  %s2 = inlined_call_operand.vmem [shape: bf16[3,384,128], index: 2, kind: input, shape index: {}]
  %s3 = inlined_call_operand.vmem [shape: f32[1,128], index: 3, kind: input, shape index: {}]
  %s4 = inlined_call_operand.vmem [shape: f32[1,128], index: 4, kind: input, shape index: {}]
  %s5 = inlined_call_operand.vmem [shape: f32[1,128], index: 5, kind: input, shape index: {}]
  %s6 = inlined_call_operand.vmem [shape: bf16[2,16,16,128], index: 6, kind: output, shape index: {0}]
  %s7 = inlined_call_operand.vmem [shape: f32[2,2,16,128], index: 7, kind: output, shape index: {1}]
  %8 = xla_tuple %s6, %s7
  %s9 = sld [smem:[#allocation0]]
  $region69: #{double_conv_forward.4} parent=0
    _
  %s11 = ssub.s32 1, %s9
  %s12 = scalar_select 0, %s11, %s9
  loop: start=0, step=1, limit=4
  $region2: #{double_conv_forward.4} parent=0 // loop_pre_header
    _
  $region3: #{double_conv_forward.4} parent=0 // loop_header
    %s14 = sphi 0, %s18
    %p15 = scmp.ge.s32.totalorder %s14, 4
    %s21 = sphi 0, %s33
    %s22 = sphi 0, %s29
    %s23 = sphi 0, %s21
    %s24 = sphi 0, %s22
    %s25 = sphi 0, %s23
    %s26 = sphi 0, %s24
    %s38 = sphi 0, %s40
    %s41 = sphi 0, %s38
    %s42 = sphi 0, %s41
    %s58 = sphi 0, %s42
    %s70 = sphi 0, %s72
    %s73 = sphi 0, %s70
    %s74 = sphi 0, %s73
    %s90 = sphi 0, %s74
    %s94 = sphi 0, %s94
    %s96 = sphi 0, %s94
    %s97 = sphi 0, %s96
    %s111 = sphi 0, %s97
    %s115 = sphi 0, %s115
    %s117 = sphi 0, %s115
    %s118 = sphi 0, %s117
    %s132 = sphi 0, %s118
    %s136 = sphi 0, %s136
    %s138 = sphi 0, %s136
    %s139 = sphi 0, %s138
    %s153 = sphi 0, %s139
    %s157 = sphi 0, %s157
    %s159 = sphi 0, %s157
    %s160 = sphi 0, %s159
    %s174 = sphi 0, %s160
    %s182 = sphi 0, %s184
    %s185 = sphi 0, %s182
    %s186 = sphi 0, %s185
    %s202 = sphi 0, %s186
    %s210 = sphi 0, %s212
    %s213 = sphi 0, %s210
    %s214 = sphi 0, %s213
    %s230 = sphi 0, %s214
  $region4: #{double_conv_forward.4} parent=0 // loop_header_branch
    %17 = sbr.rel (%p15) target = $region8
  $region5: #{double_conv_forward.4} parent=0 // loop_body
    %s19 = ssub.s32 %s14, 1
    %s20 = ssub.s32 %s14, 2
    %s27 = sadd.s32 1, %s22
    %p28 = scmp.ge.s32.totalorder %s27, 1
    %s29 = scalar_select %p28, 0, %s27
    %s30 = sadd.s32 1, %s21
    %s31 = scalar_select %p28, %s30, %s21
    %p32 = scmp.ge.s32.totalorder %s31, 2
    %s33 = scalar_select %p32, 0, %s31
    %s34 = ssub.s32 %s21, %s33
    %s35 = ssub.s32 %s22, %s29
    %s36 = sor.u32 %s34, %s35
    %p37 = scmp.eq.s32.totalorder %s36, 0
    %s39 = sadd.s32 %s38, 1
    %s40 = scalar_select %p37, %s38, %s39
    %p43 = pneg %p37
    %p44 = scmp.eq.s32.totalorder %s14, 1
    %p45 = por %p43, %p44
    %p46 = scmp.ne.s32.totalorder %s38, %s41
    %p47 = scmp.eq.s32.totalorder %s14, 0
    %p48 = por %p46, %p47
    %p49 = scmp.ne.s32.totalorder %s38, %s41
    %p50 = scmp.eq.s32.totalorder %s19, 1
    %p51 = por %p49, %p50
    %p52 = scmp.ne.s32.totalorder %s41, %s42
    %p53 = scmp.eq.s32.totalorder %s19, 0
    %p54 = por %p52, %p53
    %p55 = scmp.ne.s32.totalorder %s41, %s42
    %p56 = scmp.eq.s32.totalorder %s20, 1
    %p57 = por %p55, %p56
    %p59 = scmp.ne.s32.totalorder %s42, %s58
    %p60 = scmp.eq.s32.totalorder %s20, 0
    %p61 = por %p59, %p60
    %s62 = sadd.s32 %s22, 1
    %s63 = smul.u32 %s62, 8
    %s64 = sadd.s32 %s29, 1
    %s65 = smul.u32 %s64, 8
    %s66 = ssub.s32 %s21, %s33
    %s67 = ssub.s32 %s63, %s65
    %s68 = sor.u32 %s66, %s67
    %p69 = scmp.eq.s32.totalorder %s68, 0
    %s71 = sadd.s32 %s70, 1
    %s72 = scalar_select %p69, %s70, %s71
    %p75 = pneg %p69
    %p76 = scmp.eq.s32.totalorder %s14, 1
    %p77 = por %p75, %p76
    %p78 = scmp.ne.s32.totalorder %s70, %s73
    %p79 = scmp.eq.s32.totalorder %s14, 0
    %p80 = por %p78, %p79
    %p81 = scmp.ne.s32.totalorder %s70, %s73
    %p82 = scmp.eq.s32.totalorder %s19, 1
    %p83 = por %p81, %p82
    %p84 = scmp.ne.s32.totalorder %s73, %s74
    %p85 = scmp.eq.s32.totalorder %s19, 0
    %p86 = por %p84, %p85
    %p87 = scmp.ne.s32.totalorder %s73, %s74
    %p88 = scmp.eq.s32.totalorder %s20, 1
    %p89 = por %p87, %p88
    %p91 = scmp.ne.s32.totalorder %s74, %s90
    %p92 = scmp.eq.s32.totalorder %s20, 0
    %p93 = por %p91, %p92
    %s95 = sadd.s32 %s94, 1
    %p98 = scmp.eq.s32.totalorder %s14, 1
    %p99 = scmp.ne.s32.totalorder %s94, %s96
    %p100 = scmp.eq.s32.totalorder %s14, 0
    %p101 = por %p99, %p100
    %p102 = scmp.ne.s32.totalorder %s94, %s96
    %p103 = scmp.eq.s32.totalorder %s19, 1
    %p104 = por %p102, %p103
    %p105 = scmp.ne.s32.totalorder %s96, %s97
    %p106 = scmp.eq.s32.totalorder %s19, 0
    %p107 = por %p105, %p106
    %p108 = scmp.ne.s32.totalorder %s96, %s97
    %p109 = scmp.eq.s32.totalorder %s20, 1
    %p110 = por %p108, %p109
    %p112 = scmp.ne.s32.totalorder %s97, %s111
    %p113 = scmp.eq.s32.totalorder %s20, 0
    %p114 = por %p112, %p113
    %s116 = sadd.s32 %s115, 1
    %p119 = scmp.eq.s32.totalorder %s14, 1
    %p120 = scmp.ne.s32.totalorder %s115, %s117
    %p121 = scmp.eq.s32.totalorder %s14, 0
    %p122 = por %p120, %p121
    %p123 = scmp.ne.s32.totalorder %s115, %s117
    %p124 = scmp.eq.s32.totalorder %s19, 1
    %p125 = por %p123, %p124
    %p126 = scmp.ne.s32.totalorder %s117, %s118
    %p127 = scmp.eq.s32.totalorder %s19, 0
    %p128 = por %p126, %p127
    %p129 = scmp.ne.s32.totalorder %s117, %s118
    %p130 = scmp.eq.s32.totalorder %s20, 1
    %p131 = por %p129, %p130
    %p133 = scmp.ne.s32.totalorder %s118, %s132
    %p134 = scmp.eq.s32.totalorder %s20, 0
    %p135 = por %p133, %p134
    %s137 = sadd.s32 %s136, 1
    %p140 = scmp.eq.s32.totalorder %s14, 1
    %p141 = scmp.ne.s32.totalorder %s136, %s138
    %p142 = scmp.eq.s32.totalorder %s14, 0
    %p143 = por %p141, %p142
    %p144 = scmp.ne.s32.totalorder %s136, %s138
    %p145 = scmp.eq.s32.totalorder %s19, 1
    %p146 = por %p144, %p145
    %p147 = scmp.ne.s32.totalorder %s138, %s139
    %p148 = scmp.eq.s32.totalorder %s19, 0
    %p149 = por %p147, %p148
    %p150 = scmp.ne.s32.totalorder %s138, %s139
    %p151 = scmp.eq.s32.totalorder %s20, 1
    %p152 = por %p150, %p151
    %p154 = scmp.ne.s32.totalorder %s139, %s153
    %p155 = scmp.eq.s32.totalorder %s20, 0
    %p156 = por %p154, %p155
    %s158 = sadd.s32 %s157, 1
    %p161 = scmp.eq.s32.totalorder %s14, 1
    %p162 = scmp.ne.s32.totalorder %s157, %s159
    %p163 = scmp.eq.s32.totalorder %s14, 0
    %p164 = por %p162, %p163
    %p165 = scmp.ne.s32.totalorder %s157, %s159
    %p166 = scmp.eq.s32.totalorder %s19, 1
    %p167 = por %p165, %p166
    %p168 = scmp.ne.s32.totalorder %s159, %s160
    %p169 = scmp.eq.s32.totalorder %s19, 0
    %p170 = por %p168, %p169
    %p171 = scmp.ne.s32.totalorder %s159, %s160
    %p172 = scmp.eq.s32.totalorder %s20, 1
    %p173 = por %p171, %p172
    %p175 = scmp.ne.s32.totalorder %s160, %s174
    %p176 = scmp.eq.s32.totalorder %s20, 0
    %p177 = por %p175, %p176
    %s178 = ssub.s32 %s21, %s33
    %s179 = ssub.s32 %s22, %s29
    %s180 = sor.u32 %s178, %s179
    %p181 = scmp.eq.s32.totalorder %s180, 0
    %s183 = sadd.s32 %s182, 1
    %s184 = scalar_select %p181, %s182, %s183
    %p187 = pneg %p181
    %p188 = scmp.eq.s32.totalorder %s14, 1
    %p189 = por %p187, %p188
    %p190 = scmp.ne.s32.totalorder %s182, %s185
    %p191 = scmp.eq.s32.totalorder %s14, 0
    %p192 = por %p190, %p191
    %p193 = scmp.ne.s32.totalorder %s182, %s185
    %p194 = scmp.eq.s32.totalorder %s19, 1
    %p195 = por %p193, %p194
    %p196 = scmp.ne.s32.totalorder %s185, %s186
    %p197 = scmp.eq.s32.totalorder %s19, 0
    %p198 = por %p196, %p197
    %p199 = scmp.ne.s32.totalorder %s185, %s186
    %p200 = scmp.eq.s32.totalorder %s20, 1
    %p201 = por %p199, %p200
    %p203 = scmp.ne.s32.totalorder %s186, %s202
    %p204 = scmp.eq.s32.totalorder %s20, 0
    %p205 = por %p203, %p204
    %s206 = sadd.s32 %s21, %s22
    %s207 = sadd.s32 %s33, %s29
    %s208 = ssub.s32 %s206, %s207
    %p209 = scmp.eq.s32.totalorder %s208, 0
    %s211 = sadd.s32 %s210, 1
    %s212 = scalar_select %p209, %s210, %s211
    %p215 = pneg %p209
    %p216 = scmp.eq.s32.totalorder %s14, 1
    %p217 = por %p215, %p216
    %p218 = scmp.ne.s32.totalorder %s210, %s213
    %p219 = scmp.eq.s32.totalorder %s14, 0
    %p220 = por %p218, %p219
    %p221 = scmp.ne.s32.totalorder %s210, %s213
    %p222 = scmp.eq.s32.totalorder %s19, 1
    %p223 = por %p221, %p222
    %p224 = scmp.ne.s32.totalorder %s213, %s214
    %p225 = scmp.eq.s32.totalorder %s19, 0
    %p226 = por %p224, %p225
    %p227 = scmp.ne.s32.totalorder %s213, %s214
    %p228 = scmp.eq.s32.totalorder %s20, 1
    %p229 = por %p227, %p228
    %p231 = scmp.ne.s32.totalorder %s214, %s230
    %p232 = scmp.eq.s32.totalorder %s20, 0
    %p233 = por %p231, %p232
    %p234 = scmp.le.s32.totalorder 1, %s14
    %p235 = scmp.lt.s32.totalorder %s14, 3
    %p236 = pnand %p234, %p235
    %p237 = pneg %p236
    // Predicated region
    $region9: #{double_conv_forward.4} parent=5 // pred_check
      _
    $region10: #{double_conv_forward.4} parent=5 // pred_check_branch
      %239 = sbr.rel (%p236) target = $region12
    $region11: #{double_conv_forward.4} parent=5 // pred_region
      %s240 = ssub.s32 %s14, 1
      // Predicated region
      $region13: #{double_conv_forward.4} parent=11 // pred_check
        %p241 = pneg %p107
      $region14: #{double_conv_forward.4} parent=11 // pred_check_branch
        %243 = sbr.rel (%p241) target = $region16
      $region15: #{double_conv_forward.4} parent=11 // pred_region
        _
      $region16: #{double_conv_forward.4} parent=11 // pred_fallthru
        _
      // Predicated region
      $region17: #{double_conv_forward.4} parent=11 // pred_check
        %p244 = pneg %p128
      $region18: #{double_conv_forward.4} parent=11 // pred_check_branch
        %246 = sbr.rel (%p244) target = $region20
      $region19: #{double_conv_forward.4} parent=11 // pred_region
        _
      $region20: #{double_conv_forward.4} parent=11 // pred_fallthru
        _
      // Predicated region
      $region21: #{double_conv_forward.4} parent=11 // pred_check
        %p247 = pneg %p149
      $region22: #{double_conv_forward.4} parent=11 // pred_check_branch
        %249 = sbr.rel (%p247) target = $region24
      $region23: #{double_conv_forward.4} parent=11 // pred_region
        _
      $region24: #{double_conv_forward.4} parent=11 // pred_fallthru
        _
      // Predicated region
      $region25: #{double_conv_forward.4} parent=11 // pred_check
        %p250 = pneg %p170
      $region26: #{double_conv_forward.4} parent=11 // pred_check_branch
        %252 = sbr.rel (%p250) target = $region28
      $region27: #{double_conv_forward.4} parent=11 // pred_region
        _
      $region28: #{double_conv_forward.4} parent=11 // pred_fallthru
        _
    $region12: #{double_conv_forward.4} parent=5 // pred_fallthru
      _
    %p253 = scmp.lt.s32.totalorder %s14, 2
    // Predicated region
    $region29: #{double_conv_forward.4} parent=5 // pred_check
      %p254 = pneg %p253
    $region30: #{double_conv_forward.4} parent=5 // pred_check_branch
      %256 = sbr.rel (%p254) target = $region32
    $region31: #{double_conv_forward.4} parent=5 // pred_region
      // Predicated region
      $region33: #{double_conv_forward.4} parent=31 // pred_check
        %p257 = pneg %p48
      $region34: #{double_conv_forward.4} parent=31 // pred_check_branch
        %259 = sbr.rel (%p257) target = $region36
      $region35: #{double_conv_forward.4} parent=31 // pred_region
        %s260 = smul.u32 16, %s22
        %s261 = ssub.s32 24, %s260
        %p262 = scmp.lt.s32.totalorder %s261, 16
        %s263 = scalar_select %p262, %s261, 16
        %s264 = smul.u32 64, %s263
        %s265 = smul.u32 %s264, 3
        %p266 = scmp.lt.s32.totalorder %s21, 1
        %s267 = scalar_select %p266, %s21, 1
        %p268 = scmp.lt.s32.totalorder %s260, 23
        %s269 = scalar_select %p268, %s260, 23
        %s270 = smul.addr %s269, 3
        %s271 = smul.addr %s267, 72
        %s272 = sadd.s32 %s270, %s271
        %s273 = smul.addr %s272, 4
        %s274 = scalar_lea.vmem %s0, %s273
        %s275 = smul.u32 16, %s22
        %s276 = ssub.s32 24, %s275
        %p277 = scmp.lt.s32.totalorder %s276, 16
        %s278 = scalar_select %p277, %s276, 16
        %s279 = smul.u32 64, %s278
        %s280 = smul.u32 %s279, 3
      $region36: #{double_conv_forward.4} parent=31 // pred_fallthru
        _
      // Predicated region
      $region37: #{double_conv_forward.4} parent=31 // pred_check
        %p281 = pneg %p80
      $region38: #{double_conv_forward.4} parent=31 // pred_check_branch
        %283 = sbr.rel (%p281) target = $region40
      $region39: #{double_conv_forward.4} parent=31 // pred_region
        %s284 = sadd.s32 %s22, 1
        %s285 = smul.u32 %s284, 8
        %s286 = smul.u32 2, %s285
        %p287 = scmp.lt.s32.totalorder %s21, 1
        %s288 = scalar_select %p287, %s21, 1
        %p289 = scmp.lt.s32.totalorder %s286, 23
        %s290 = scalar_select %p289, %s286, 23
        %s291 = smul.addr %s290, 3
        %s292 = smul.addr %s288, 72
        %s293 = sadd.s32 %s291, %s292
        %s294 = smul.addr %s293, 4
        %s295 = scalar_lea.vmem %s1, %s294
        %s296 = sadd.s32 %s22, 1
        %s297 = smul.u32 %s296, 8
        %s298 = smul.u32 2, %s297
      $region40: #{double_conv_forward.4} parent=31 // pred_fallthru
        _
    $region32: #{double_conv_forward.4} parent=5 // pred_fallthru
      _
    %p299 = scmp.le.s32.totalorder 1, %s14
    %p300 = scmp.lt.s32.totalorder %s14, 3
    %p301 = pnand %p299, %p300
    %p302 = pneg %p301
    // Predicated region
    $region41: #{double_conv_forward.4} parent=5 // pred_check
      _
    $region42: #{double_conv_forward.4} parent=5 // pred_check_branch
      %304 = sbr.rel (%p301) target = $region44
    $region43: #{double_conv_forward.4} parent=5 // pred_region
      %s305 = ssub.s32 %s14, 1
      %s306 = smul.u32 16, %s24
      %s307 = ssub.s32 24, %s306
      %p308 = scmp.lt.s32.totalorder %s307, 16
      %s309 = scalar_select %p308, %s307, 16
      %s310 = smul.u32 64, %s309
      %s311 = smul.u32 %s310, 3
      %p312 = scmp.lt.s32.totalorder %s23, 1
      %s313 = scalar_select %p312, %s23, 1
      %p314 = scmp.lt.s32.totalorder %s306, 23
      %s315 = scalar_select %p314, %s306, 23
      %s316 = smul.addr %s315, 3
      %s317 = smul.addr %s313, 72
      %s318 = sadd.s32 %s316, %s317
      %s319 = smul.addr %s318, 4
      %s320 = scalar_lea.vmem %s0, %s319
      %p321 = pneg %p54
      %p322 = pneg %p51
      %s323 = sadd.s32 %s24, 1
      %s324 = smul.u32 %s323, 8
      %s325 = smul.u32 2, %s324
      %p326 = scmp.lt.s32.totalorder %s23, 1
      %s327 = scalar_select %p326, %s23, 1
      %p328 = scmp.lt.s32.totalorder %s325, 23
      %s329 = scalar_select %p328, %s325, 23
      %s330 = smul.addr %s329, 3
      %s331 = smul.addr %s327, 72
      %s332 = sadd.s32 %s330, %s331
      %s333 = smul.addr %s332, 4
      %s334 = scalar_lea.vmem %s1, %s333
      %p335 = pneg %p86
      %p336 = pneg %p83
      %p337 = pneg %p107
      %p338 = pneg %p104
      %p339 = pneg %p128
      %p340 = pneg %p125
      %p341 = pneg %p149
      %p342 = pneg %p146
      %p343 = pneg %p170
      %p344 = pneg %p167
      %p345 = pneg %p198
      %p346 = pneg %p195
      %s347 = smul.u32 16, %s24
      %p348 = scmp.lt.s32.totalorder %s23, 1
      %s349 = scalar_select %p348, %s23, 1
      %p350 = scmp.lt.s32.totalorder %s347, 15
      %s351 = scalar_select %p350, %s347, 15
      %s352 = smul.addr %s351, 2
      %s353 = smul.addr %s349, 32
      %s354 = sadd.s32 %s352, %s353
      %s355 = smul.addr %s354, 4
      %s356 = scalar_lea.vmem %s6, %s355
      %p357 = pneg %p226
      %p358 = pneg %p223
      %s359 = sadd.s32 %s23, %s24
      %p360 = scmp.lt.s32.totalorder %s359, 1
      %s361 = scalar_select %p360, %s359, 1
      %s362 = smul.addr %s361, 4
      %s363 = smul.addr %s362, 8
      %s364 = scalar_lea.vmem %s7, %s363
      %s365 = smul.u32 16, %s24
      %s366 = ssub.s32 24, %s365
      %p367 = scmp.lt.s32.totalorder %s366, 16
      %s368 = scalar_select %p367, %s366, 16
      %s369 = smul.u32 64, %s368
      %s370 = smul.u32 %s369, 3
      %p371 = scmp.lt.s32.totalorder %s23, 1
      %s372 = scalar_select %p371, %s23, 1
      %p373 = scmp.lt.s32.totalorder %s365, 23
      %s374 = scalar_select %p373, %s365, 23
      %s375 = smul.addr %s374, 3
      %s376 = smul.addr %s372, 72
      %s377 = sadd.s32 %s375, %s376
      %s378 = smul.addr %s377, 4
      %s379 = scalar_lea.vmem %s0, %s378
      %s380 = smul.u32 16, %s24
      %s381 = ssub.s32 24, %s380
      %p382 = scmp.lt.s32.totalorder %s381, 16
      %s383 = scalar_select %p382, %s381, 16
      %s384 = smul.u32 64, %s383
      %s385 = smul.u32 %s384, 3
      %s386 = sadd.s32 %s24, 1
      %s387 = smul.u32 %s386, 8
      %s388 = smul.u32 2, %s387
      %p389 = scmp.lt.s32.totalorder %s23, 1
      %s390 = scalar_select %p389, %s23, 1
      %p391 = scmp.lt.s32.totalorder %s388, 23
      %s392 = scalar_select %p391, %s388, 23
      %s393 = smul.addr %s392, 3
      %s394 = smul.addr %s390, 72
      %s395 = sadd.s32 %s393, %s394
      %s396 = smul.addr %s395, 4
      %s397 = scalar_lea.vmem %s1, %s396
      %s398 = sadd.s32 %s24, 1
      %s399 = smul.u32 %s398, 8
      %s400 = smul.u32 2, %s399
      %s401 = smul.u32 16, %s24
      %p402 = scmp.lt.s32.totalorder %s23, 1
      %s403 = scalar_select %p402, %s23, 1
      %p404 = scmp.lt.s32.totalorder %s401, 15
      %s405 = scalar_select %p404, %s401, 15
      %s406 = smul.addr %s405, 2
      %s407 = smul.addr %s403, 32
      %s408 = sadd.s32 %s406, %s407
      %s409 = smul.addr %s408, 4
      %s410 = scalar_lea.vmem %s6, %s409
      %s411 = smul.u32 16, %s24
      %s412 = sadd.s32 %s23, %s24
      %p413 = scmp.lt.s32.totalorder %s412, 1
      %s414 = scalar_select %p413, %s412, 1
      %s415 = smul.addr %s414, 4
      %s416 = smul.addr %s415, 8
      %s417 = scalar_lea.vmem %s7, %s416
      %s418 = sadd.s32 %s23, %s24
      %v420 = vld [vmem:[%s4] sm:$0x1]
      %v421 = vld [vmem:[%s5] sm:$0x1]
      %v422 = vld [vmem:[%s379] sm:$0xf]
      %v423 = vld [vmem:[%s379 + $0x4] sm:$0xf]
      %v424 = vld [vmem:[%s379 + $0x8] sm:$0x1]
      %v425 = vld [vmem:[%s379 + $0xc] sm:$0xf]
      %v426 = vld [vmem:[%s379 + $0x10] sm:$0xf]
      %v427 = vld [vmem:[%s379 + $0x14] sm:$0x1]
      %v428 = vld [vmem:[%s379 + $0x18] sm:$0xf]
      %v429 = vld [vmem:[%s379 + $0x1c] sm:$0xf]
      %v430 = vld [vmem:[%s379 + $0x20] sm:$0x1]
      %v431 = vld [vmem:[%s379 + $0x24] sm:$0xf]
      %v432 = vld [vmem:[%s379 + $0x28] sm:$0xf]
      %v433 = vld [vmem:[%s379 + $0x2c] sm:$0x1]
      %v434 = vld [vmem:[%s379 + $0x30] sm:$0xf]
      %v435 = vld [vmem:[%s379 + $0x34] sm:$0xf]
      %v436 = vld [vmem:[%s379 + $0x38] sm:$0x1]
      %v437 = vld [vmem:[%s379 + $0x3c] sm:$0xf]
      %v438 = vld [vmem:[%s379 + $0x40] sm:$0xf]
      %v439 = vld [vmem:[%s379 + $0x44] sm:$0x1]
      %v440 = vld [vmem:[%s379 + $0x48] sm:$0xf]
      %v441 = vld [vmem:[%s379 + $0x4c] sm:$0xf]
      %v442 = vld [vmem:[%s379 + $0x50] sm:$0x1]
      %v443 = vld [vmem:[%s379 + $0x54] sm:$0xf]
      %v444 = vld [vmem:[%s379 + $0x58] sm:$0xf]
      %v445 = vld [vmem:[%s379 + $0x5c] sm:$0x1]
      %v446 = vld [vmem:[%s379 + $0x60] sm:$0xf]
      %v447 = vld [vmem:[%s379 + $0x64] sm:$0xf]
      %v448 = vld [vmem:[%s379 + $0x68] sm:$0x1]
      %v449 = vld [vmem:[%s379 + $0x6c] sm:$0xf]
      %v450 = vld [vmem:[%s379 + $0x70] sm:$0xf]
      %v451 = vld [vmem:[%s379 + $0x74] sm:$0x1]
      %v452 = vld [vmem:[%s379 + $0x78] sm:$0xf]
      %v453 = vld [vmem:[%s379 + $0x7c] sm:$0xf]
      %v454 = vld [vmem:[%s379 + $0x80] sm:$0x1]
      %v455 = vld [vmem:[%s379 + $0x84] sm:$0xf]
      %v456 = vld [vmem:[%s379 + $0x88] sm:$0xf]
      %v457 = vld [vmem:[%s379 + $0x8c] sm:$0x1]
      %v458 = vld [vmem:[%s379 + $0x90] sm:$0xf]
      %v459 = vld [vmem:[%s379 + $0x94] sm:$0xf]
      %v460 = vld [vmem:[%s379 + $0x98] sm:$0x1]
      %v461 = vld [vmem:[%s379 + $0x9c] sm:$0xf]
      %v462 = vld [vmem:[%s379 + $0xa0] sm:$0xf]
      %v463 = vld [vmem:[%s379 + $0xa4] sm:$0x1]
      %v464 = vld [vmem:[%s379 + $0xa8] sm:$0xf]
      %v465 = vld [vmem:[%s379 + $0xac] sm:$0xf]
      %v466 = vld [vmem:[%s379 + $0xb0] sm:$0x1]
      %v467 = vld [vmem:[%s379 + $0xb4] sm:$0xf]
      %v468 = vld [vmem:[%s379 + $0xb8] sm:$0xf]
      %v469 = vld [vmem:[%s379 + $0xbc] sm:$0x1]
      %v470 = vunpack.c.l.bf16 %v422
      %v471 = vunpack.c.l.bf16 %v423
      %v472 = vunpack.c.l.bf16 %v424
      %v473 = vunpack.c.l.bf16 %v425
      %v474 = vunpack.c.l.bf16 %v426
      %v475 = vunpack.c.l.bf16 %v427
      %v476 = vunpack.c.l.bf16 %v428
      %v477 = vunpack.c.l.bf16 %v429
      %v478 = vunpack.c.l.bf16 %v430
      %v479 = vunpack.c.l.bf16 %v431
      %v480 = vunpack.c.l.bf16 %v432
      %v481 = vunpack.c.l.bf16 %v433
      %v482 = vunpack.c.l.bf16 %v434
      %v483 = vunpack.c.l.bf16 %v435
      %v484 = vunpack.c.l.bf16 %v436
      %v485 = vunpack.c.l.bf16 %v437
      %v486 = vunpack.c.l.bf16 %v438
      %v487 = vunpack.c.l.bf16 %v439
      %v488 = vunpack.c.l.bf16 %v440
      %v489 = vunpack.c.l.bf16 %v441
      %v490 = vunpack.c.l.bf16 %v442
      %v491 = vunpack.c.l.bf16 %v443
      %v492 = vunpack.c.l.bf16 %v444
      %v493 = vunpack.c.l.bf16 %v445
      %v494 = vunpack.c.l.bf16 %v446
      %v495 = vunpack.c.l.bf16 %v447
      %v496 = vunpack.c.l.bf16 %v448
      %v497 = vunpack.c.l.bf16 %v449
      %v498 = vunpack.c.l.bf16 %v450
      %v499 = vunpack.c.l.bf16 %v451
      %v500 = vunpack.c.l.bf16 %v452
      %v501 = vunpack.c.l.bf16 %v453
      %v502 = vunpack.c.l.bf16 %v454
      %v503 = vunpack.c.l.bf16 %v455
      %v504 = vunpack.c.l.bf16 %v456
      %v505 = vunpack.c.l.bf16 %v457
      %v506 = vunpack.c.l.bf16 %v458
      %v507 = vunpack.c.l.bf16 %v459
      %v508 = vunpack.c.l.bf16 %v460
      %v509 = vunpack.c.l.bf16 %v461
      %v510 = vunpack.c.l.bf16 %v462
      %v511 = vunpack.c.l.bf16 %v463
      %v512 = vunpack.c.l.bf16 %v464
      %v513 = vunpack.c.l.bf16 %v465
      %v514 = vunpack.c.l.bf16 %v466
      %v515 = vunpack.c.l.bf16 %v467
      %v516 = vunpack.c.l.bf16 %v468
      %v517 = vunpack.c.l.bf16 %v469
      %v519 = vlaneseq
      %v520 = vshrl.u32 %v519, 7
      %v521 = vsub.s32 0, %v520
      %v522 = vrot.slane %v420, %v521
      %v524 = vmul.f32 %v470, %v522
      %v525 = vmul.f32 %v471, %v522
      %v526 = vmul.f32 %v472, %v522
      %v527 = vmul.f32 %v473, %v522
      %v528 = vmul.f32 %v474, %v522
      %v529 = vmul.f32 %v475, %v522
      %v530 = vmul.f32 %v476, %v522
      %v531 = vmul.f32 %v477, %v522
      %v532 = vmul.f32 %v478, %v522
      %v533 = vmul.f32 %v479, %v522
      %v534 = vmul.f32 %v480, %v522
      %v535 = vmul.f32 %v481, %v522
      %v536 = vmul.f32 %v482, %v522
      %v537 = vmul.f32 %v483, %v522
      %v538 = vmul.f32 %v484, %v522
      %v539 = vmul.f32 %v485, %v522
      %v540 = vmul.f32 %v486, %v522
      %v541 = vmul.f32 %v487, %v522
      %v542 = vmul.f32 %v488, %v522
      %v543 = vmul.f32 %v489, %v522
      %v544 = vmul.f32 %v490, %v522
      %v545 = vmul.f32 %v491, %v522
      %v546 = vmul.f32 %v492, %v522
      %v547 = vmul.f32 %v493, %v522
      %v548 = vmul.f32 %v494, %v522
      %v549 = vmul.f32 %v495, %v522
      %v550 = vmul.f32 %v496, %v522
      %v551 = vmul.f32 %v497, %v522
      %v552 = vmul.f32 %v498, %v522
      %v553 = vmul.f32 %v499, %v522
      %v554 = vmul.f32 %v500, %v522
      %v555 = vmul.f32 %v501, %v522
      %v556 = vmul.f32 %v502, %v522
      %v557 = vmul.f32 %v503, %v522
      %v558 = vmul.f32 %v504, %v522
      %v559 = vmul.f32 %v505, %v522
      %v560 = vmul.f32 %v506, %v522
      %v561 = vmul.f32 %v507, %v522
      %v562 = vmul.f32 %v508, %v522
      %v563 = vmul.f32 %v509, %v522
      %v564 = vmul.f32 %v510, %v522
      %v565 = vmul.f32 %v511, %v522
      %v566 = vmul.f32 %v512, %v522
      %v567 = vmul.f32 %v513, %v522
      %v568 = vmul.f32 %v514, %v522
      %v569 = vmul.f32 %v515, %v522
      %v570 = vmul.f32 %v516, %v522
      %v571 = vmul.f32 %v517, %v522
      %v573 = vlaneseq
      %v574 = vshrl.u32 %v573, 7
      %v575 = vsub.s32 0, %v574
      %v576 = vrot.slane %v421, %v575
      %v578 = vadd.f32 %v524, %v576
      %v579 = vadd.f32 %v525, %v576
      %v580 = vadd.f32 %v526, %v576
      %v581 = vadd.f32 %v527, %v576
      %v582 = vadd.f32 %v528, %v576
      %v583 = vadd.f32 %v529, %v576
      %v584 = vadd.f32 %v530, %v576
      %v585 = vadd.f32 %v531, %v576
      %v586 = vadd.f32 %v532, %v576
      %v587 = vadd.f32 %v533, %v576
      %v588 = vadd.f32 %v534, %v576
      %v589 = vadd.f32 %v535, %v576
      %v590 = vadd.f32 %v536, %v576
      %v591 = vadd.f32 %v537, %v576
      %v592 = vadd.f32 %v538, %v576
      %v593 = vadd.f32 %v539, %v576
      %v594 = vadd.f32 %v540, %v576
      %v595 = vadd.f32 %v541, %v576
      %v596 = vadd.f32 %v542, %v576
      %v597 = vadd.f32 %v543, %v576
      %v598 = vadd.f32 %v544, %v576
      %v599 = vadd.f32 %v545, %v576
      %v600 = vadd.f32 %v546, %v576
      %v601 = vadd.f32 %v547, %v576
      %v602 = vadd.f32 %v548, %v576
      %v603 = vadd.f32 %v549, %v576
      %v604 = vadd.f32 %v550, %v576
      %v605 = vadd.f32 %v551, %v576
      %v606 = vadd.f32 %v552, %v576
      %v607 = vadd.f32 %v553, %v576
      %v608 = vadd.f32 %v554, %v576
      %v609 = vadd.f32 %v555, %v576
      %v610 = vadd.f32 %v556, %v576
      %v611 = vadd.f32 %v557, %v576
      %v612 = vadd.f32 %v558, %v576
      %v613 = vadd.f32 %v559, %v576
      %v614 = vadd.f32 %v560, %v576
      %v615 = vadd.f32 %v561, %v576
      %v616 = vadd.f32 %v562, %v576
      %v617 = vadd.f32 %v563, %v576
      %v618 = vadd.f32 %v564, %v576
      %v619 = vadd.f32 %v565, %v576
      %v620 = vadd.f32 %v566, %v576
      %v621 = vadd.f32 %v567, %v576
      %v622 = vadd.f32 %v568, %v576
      %v623 = vadd.f32 %v569, %v576
      %v624 = vadd.f32 %v570, %v576
      %v625 = vadd.f32 %v571, %v576
      %v626 = vmax.f32 %v578, 0.0
      %v627 = vmax.f32 %v579, 0.0
      %v628 = vmax.f32 %v580, 0.0
      %v629 = vmax.f32 %v581, 0.0
      %v630 = vmax.f32 %v582, 0.0
      %v631 = vmax.f32 %v583, 0.0
      %v632 = vmax.f32 %v584, 0.0
      %v633 = vmax.f32 %v585, 0.0
      %v634 = vmax.f32 %v586, 0.0
      %v635 = vmax.f32 %v587, 0.0
      %v636 = vmax.f32 %v588, 0.0
      %v637 = vmax.f32 %v589, 0.0
      %v638 = vmax.f32 %v590, 0.0
      %v639 = vmax.f32 %v591, 0.0
      %v640 = vmax.f32 %v592, 0.0
      %v641 = vmax.f32 %v593, 0.0
      %v642 = vmax.f32 %v594, 0.0
      %v643 = vmax.f32 %v595, 0.0
      %v644 = vmax.f32 %v596, 0.0
      %v645 = vmax.f32 %v597, 0.0
      %v646 = vmax.f32 %v598, 0.0
      %v647 = vmax.f32 %v599, 0.0
      %v648 = vmax.f32 %v600, 0.0
      %v649 = vmax.f32 %v601, 0.0
      %v650 = vmax.f32 %v602, 0.0
      %v651 = vmax.f32 %v603, 0.0
      %v652 = vmax.f32 %v604, 0.0
      %v653 = vmax.f32 %v605, 0.0
      %v654 = vmax.f32 %v606, 0.0
      %v655 = vmax.f32 %v607, 0.0
      %v656 = vmax.f32 %v608, 0.0
      %v657 = vmax.f32 %v609, 0.0
      %v658 = vmax.f32 %v610, 0.0
      %v659 = vmax.f32 %v611, 0.0
      %v660 = vmax.f32 %v612, 0.0
      %v661 = vmax.f32 %v613, 0.0
      %v662 = vmax.f32 %v614, 0.0
      %v663 = vmax.f32 %v615, 0.0
      %v664 = vmax.f32 %v616, 0.0
      %v665 = vmax.f32 %v617, 0.0
      %v666 = vmax.f32 %v618, 0.0
      %v667 = vmax.f32 %v619, 0.0
      %v668 = vmax.f32 %v620, 0.0
      %v669 = vmax.f32 %v621, 0.0
      %v670 = vmax.f32 %v622, 0.0
      %v671 = vmax.f32 %v623, 0.0
      %v672 = vmax.f32 %v624, 0.0
      %v673 = vmax.f32 %v625, 0.0
      %v674 = vpack.c.bf16 %v627, %v626
      %v675 = vpack.c.bf16 %v628, %v628
      %v676 = vpack.c.bf16 %v630, %v629
      %v677 = vpack.c.bf16 %v631, %v631
      %v678 = vpack.c.bf16 %v633, %v632
      %v679 = vpack.c.bf16 %v634, %v634
      %v680 = vpack.c.bf16 %v636, %v635
      %v681 = vpack.c.bf16 %v637, %v637
      %v682 = vpack.c.bf16 %v639, %v638
      %v683 = vpack.c.bf16 %v640, %v640
      %v684 = vpack.c.bf16 %v642, %v641
      %v685 = vpack.c.bf16 %v643, %v643
      %v686 = vpack.c.bf16 %v645, %v644
      %v687 = vpack.c.bf16 %v646, %v646
      %v688 = vpack.c.bf16 %v648, %v647
      %v689 = vpack.c.bf16 %v649, %v649
      %v690 = vpack.c.bf16 %v651, %v650
      %v691 = vpack.c.bf16 %v652, %v652
      %v692 = vpack.c.bf16 %v654, %v653
      %v693 = vpack.c.bf16 %v655, %v655
      %v694 = vpack.c.bf16 %v657, %v656
      %v695 = vpack.c.bf16 %v658, %v658
      %v696 = vpack.c.bf16 %v660, %v659
      %v697 = vpack.c.bf16 %v661, %v661
      %v698 = vpack.c.bf16 %v663, %v662
      %v699 = vpack.c.bf16 %v664, %v664
      %v700 = vpack.c.bf16 %v666, %v665
      %v701 = vpack.c.bf16 %v667, %v667
      %v702 = vpack.c.bf16 %v669, %v668
      %v703 = vpack.c.bf16 %v670, %v670
      %v704 = vpack.c.bf16 %v672, %v671
      %v705 = vpack.c.bf16 %v673, %v673
      %v738 = vunpack.c.l.b16 %v674
      %v739 = vunpack.c.h.b16 %v674
      %v740 = vunpack.c.l.b16 %v675
      %v741 = vunpack.c.l.b16 %v676
      %v742 = vunpack.c.h.b16 %v676
      %v743 = vunpack.c.l.b16 %v677
      %v744 = vunpack.c.l.b16 %v678
      %v745 = vunpack.c.h.b16 %v678
      %v746 = vunpack.c.l.b16 %v679
      %v747 = vunpack.c.l.b16 %v680
      %v748 = vunpack.c.h.b16 %v680
      %v749 = vunpack.c.l.b16 %v681
      %v750 = vunpack.c.l.b16 %v682
      %v751 = vunpack.c.h.b16 %v682
      %v752 = vunpack.c.l.b16 %v683
      %v753 = vunpack.c.l.b16 %v684
      %v754 = vunpack.c.h.b16 %v684
      %v755 = vunpack.c.l.b16 %v685
      %v756 = vunpack.c.l.b16 %v686
      %v757 = vunpack.c.h.b16 %v686
      %v758 = vunpack.c.l.b16 %v687
      %v759 = vunpack.c.l.b16 %v688
      %v760 = vunpack.c.h.b16 %v688
      %v761 = vunpack.c.l.b16 %v689
      %v762 = vunpack.c.l.b16 %v690
      %v763 = vunpack.c.h.b16 %v690
      %v764 = vunpack.c.l.b16 %v691
      %v765 = vunpack.c.l.b16 %v692
      %v766 = vunpack.c.h.b16 %v692
      %v767 = vunpack.c.l.b16 %v693
      %v768 = vunpack.c.l.b16 %v694
      %v769 = vunpack.c.h.b16 %v694
      %v770 = vunpack.c.l.b16 %v695
      %v771 = vunpack.c.l.b16 %v696
      %v772 = vunpack.c.h.b16 %v696
      %v773 = vunpack.c.l.b16 %v697
      %v774 = vunpack.c.l.b16 %v698
      %v775 = vunpack.c.h.b16 %v698
      %v776 = vunpack.c.l.b16 %v699
      %v777 = vunpack.c.l.b16 %v700
      %v778 = vunpack.c.h.b16 %v700
      %v779 = vunpack.c.l.b16 %v701
      %v780 = vunpack.c.l.b16 %v702
      %v781 = vunpack.c.h.b16 %v702
      %v782 = vunpack.c.l.b16 %v703
      %v783 = vunpack.c.l.b16 %v704
      %v784 = vunpack.c.h.b16 %v704
      %v785 = vunpack.c.l.b16 %v705
      %v786 = vpack.c.b16 %v738, %v738
      %v787 = vpack.c.b16 %v739, %v739
      %v788 = vpack.c.b16 %v740, %v740
      %v789 = vpack.c.b16 %v741, %v741
      %v790 = vpack.c.b16 %v742, %v742
      %v791 = vpack.c.b16 %v743, %v743
      %v792 = vpack.c.b16 %v744, %v744
      %v793 = vpack.c.b16 %v745, %v745
      %v794 = vpack.c.b16 %v746, %v746
      %v795 = vpack.c.b16 %v747, %v747
      %v796 = vpack.c.b16 %v748, %v748
      %v797 = vpack.c.b16 %v749, %v749
      %v798 = vpack.c.b16 %v750, %v750
      %v799 = vpack.c.b16 %v751, %v751
      %v800 = vpack.c.b16 %v752, %v752
      %v801 = vpack.c.b16 %v753, %v753
      %v802 = vpack.c.b16 %v754, %v754
      %v803 = vpack.c.b16 %v755, %v755
      %v804 = vpack.c.b16 %v756, %v756
      %v805 = vpack.c.b16 %v757, %v757
      %v806 = vpack.c.b16 %v758, %v758
      %v807 = vpack.c.b16 %v759, %v759
      %v808 = vpack.c.b16 %v760, %v760
      %v809 = vpack.c.b16 %v761, %v761
      %v810 = vpack.c.b16 %v762, %v762
      %v811 = vpack.c.b16 %v763, %v763
      %v812 = vpack.c.b16 %v764, %v764
      %v813 = vpack.c.b16 %v765, %v765
      %v814 = vpack.c.b16 %v766, %v766
      %v815 = vpack.c.b16 %v767, %v767
      %v816 = vpack.c.b16 %v768, %v768
      %v817 = vpack.c.b16 %v769, %v769
      %v818 = vpack.c.b16 %v770, %v770
      %v819 = vpack.c.b16 %v771, %v771
      %v820 = vpack.c.b16 %v772, %v772
      %v821 = vpack.c.b16 %v773, %v773
      %v822 = vpack.c.b16 %v774, %v774
      %v823 = vpack.c.b16 %v775, %v775
      %v824 = vpack.c.b16 %v776, %v776
      %v825 = vpack.c.b16 %v777, %v777
      %v826 = vpack.c.b16 %v778, %v778
      %v827 = vpack.c.b16 %v779, %v779
      %v828 = vpack.c.b16 %v780, %v780
      %v829 = vpack.c.b16 %v781, %v781
      %v830 = vpack.c.b16 %v782, %v782
      %v831 = vpack.c.b16 %v783, %v783
      %v832 = vpack.c.b16 %v784, %v784
      %v833 = vpack.c.b16 %v785, %v785
      %882 = vst [vmem:[#allocation2] sm:$0xf] %v786
      %883 = vst [vmem:[#allocation2 + $0x4] sm:$0xf] %v787
      %884 = vst [vmem:[#allocation2 + $0x8] sm:$0x1] %v788
      %885 = vst [vmem:[#allocation2 + $0xc] sm:$0xf] %v789
      %886 = vst [vmem:[#allocation2 + $0x10] sm:$0xf] %v790
      %887 = vst [vmem:[#allocation2 + $0x14] sm:$0x1] %v791
      %888 = vst [vmem:[#allocation2 + $0x18] sm:$0xf] %v792
      %889 = vst [vmem:[#allocation2 + $0x1c] sm:$0xf] %v793
      %890 = vst [vmem:[#allocation2 + $0x20] sm:$0x1] %v794
      %891 = vst [vmem:[#allocation2 + $0x24] sm:$0xf] %v795
      %892 = vst [vmem:[#allocation2 + $0x28] sm:$0xf] %v796
      %893 = vst [vmem:[#allocation2 + $0x2c] sm:$0x1] %v797
      %894 = vst [vmem:[#allocation2 + $0x30] sm:$0xf] %v798
      %895 = vst [vmem:[#allocation2 + $0x34] sm:$0xf] %v799
      %896 = vst [vmem:[#allocation2 + $0x38] sm:$0x1] %v800
      %897 = vst [vmem:[#allocation2 + $0x3c] sm:$0xf] %v801
      %898 = vst [vmem:[#allocation2 + $0x40] sm:$0xf] %v802
      %899 = vst [vmem:[#allocation2 + $0x44] sm:$0x1] %v803
      %900 = vst [vmem:[#allocation2 + $0x48] sm:$0xf] %v804
      %901 = vst [vmem:[#allocation2 + $0x4c] sm:$0xf] %v805
      %902 = vst [vmem:[#allocation2 + $0x50] sm:$0x1] %v806
      %903 = vst [vmem:[#allocation2 + $0x54] sm:$0xf] %v807
      %904 = vst [vmem:[#allocation2 + $0x58] sm:$0xf] %v808
      %905 = vst [vmem:[#allocation2 + $0x5c] sm:$0x1] %v809
      %906 = vst [vmem:[#allocation2 + $0x60] sm:$0xf] %v810
      %907 = vst [vmem:[#allocation2 + $0x64] sm:$0xf] %v811
      %908 = vst [vmem:[#allocation2 + $0x68] sm:$0x1] %v812
      %909 = vst [vmem:[#allocation2 + $0x6c] sm:$0xf] %v813
      %910 = vst [vmem:[#allocation2 + $0x70] sm:$0xf] %v814
      %911 = vst [vmem:[#allocation2 + $0x74] sm:$0x1] %v815
      %912 = vst [vmem:[#allocation2 + $0x78] sm:$0xf] %v816
      %913 = vst [vmem:[#allocation2 + $0x7c] sm:$0xf] %v817
      %914 = vst [vmem:[#allocation2 + $0x80] sm:$0x1] %v818
      %915 = vst [vmem:[#allocation2 + $0x84] sm:$0xf] %v819
      %916 = vst [vmem:[#allocation2 + $0x88] sm:$0xf] %v820
      %917 = vst [vmem:[#allocation2 + $0x8c] sm:$0x1] %v821
      %918 = vst [vmem:[#allocation2 + $0x90] sm:$0xf] %v822
      %919 = vst [vmem:[#allocation2 + $0x94] sm:$0xf] %v823
      %920 = vst [vmem:[#allocation2 + $0x98] sm:$0x1] %v824
      %921 = vst [vmem:[#allocation2 + $0x9c] sm:$0xf] %v825
      %922 = vst [vmem:[#allocation2 + $0xa0] sm:$0xf] %v826
      %923 = vst [vmem:[#allocation2 + $0xa4] sm:$0x1] %v827
      %924 = vst [vmem:[#allocation2 + $0xa8] sm:$0xf] %v828
      %925 = vst [vmem:[#allocation2 + $0xac] sm:$0xf] %v829
      %926 = vst [vmem:[#allocation2 + $0xb0] sm:$0x1] %v830
      %927 = vst [vmem:[#allocation2 + $0xb4] sm:$0xf] %v831
      %928 = vst [vmem:[#allocation2 + $0xb8] sm:$0xf] %v832
      %929 = vst [vmem:[#allocation2 + $0xbc] sm:$0x1] %v833
      %v930 = vld [vmem:[%s397] sm:$0xf]
      %v931 = vld [vmem:[%s397 + $0x4] sm:$0xf]
      %v932 = vld [vmem:[%s397 + $0x8] sm:$0x1]
      %v933 = vld [vmem:[%s397 + $0xc] sm:$0xf]
      %v934 = vld [vmem:[%s397 + $0x10] sm:$0xf]
      %v935 = vld [vmem:[%s397 + $0x14] sm:$0x1]
      %v936 = vunpack.c.l.bf16 %v930
      %v937 = vunpack.c.l.bf16 %v931
      %v938 = vunpack.c.l.bf16 %v932
      %v939 = vunpack.c.l.bf16 %v933
      %v940 = vunpack.c.l.bf16 %v934
      %v941 = vunpack.c.l.bf16 %v935
      %v942 = vmul.f32 %v936, %v522
      %v943 = vmul.f32 %v937, %v522
      %v944 = vmul.f32 %v938, %v522
      %v945 = vmul.f32 %v939, %v522
      %v946 = vmul.f32 %v940, %v522
      %v947 = vmul.f32 %v941, %v522
      %v948 = vadd.f32 %v942, %v576
      %v949 = vadd.f32 %v943, %v576
      %v950 = vadd.f32 %v944, %v576
      %v951 = vadd.f32 %v945, %v576
      %v952 = vadd.f32 %v946, %v576
      %v953 = vadd.f32 %v947, %v576
      %v954 = vmax.f32 %v948, 0.0
      %v955 = vmax.f32 %v949, 0.0
      %v956 = vmax.f32 %v950, 0.0
      %v957 = vmax.f32 %v951, 0.0
      %v958 = vmax.f32 %v952, 0.0
      %v959 = vmax.f32 %v953, 0.0
      %v960 = vpack.c.bf16 %v955, %v954
      %v961 = vpack.c.bf16 %v956, %v956
      %v962 = vpack.c.bf16 %v958, %v957
      %v963 = vpack.c.bf16 %v959, %v959
      %v968 = vunpack.c.l.b16 %v960
      %v969 = vunpack.c.h.b16 %v960
      %v970 = vunpack.c.l.b16 %v961
      %v971 = vunpack.c.l.b16 %v962
      %v972 = vunpack.c.h.b16 %v962
      %v973 = vunpack.c.l.b16 %v963
      %v974 = vpack.c.b16 %v968, %v968
      %v975 = vpack.c.b16 %v969, %v969
      %v976 = vpack.c.b16 %v970, %v970
      %v977 = vpack.c.b16 %v971, %v971
      %v978 = vpack.c.b16 %v972, %v972
      %v979 = vpack.c.b16 %v973, %v973
      %s986 = scalar_lea.vmem [#allocation2], 192
      %987 = vst [vmem:[%s986] sm:$0xf] %v974
      %988 = vst [vmem:[%s986 + $0x4] sm:$0xf] %v975
      %989 = vst [vmem:[%s986 + $0x8] sm:$0x1] %v976
      %990 = vst [vmem:[%s986 + $0xc] sm:$0xf] %v977
      %991 = vst [vmem:[%s986 + $0x10] sm:$0xf] %v978
      %992 = vst [vmem:[%s986 + $0x14] sm:$0x1] %v979
      %vm993 = vcmask 1040384
      %vm994 = vsmask.f32 256
      %vm995 = vmand %vm993, %vm994
      %v996 = vld [vmem:[#allocation2] sm:$0x1]
      %v997 = vsel %vm995, 0, %v996
      %998 = vst [vmem:[#allocation2] sm:$0x1] %v997
      %v999 = vld [vmem:[#allocation2 + $0xc] sm:$0x1]
      %v1000 = vsel %vm995, 0, %v999
      %1001 = vst [vmem:[#allocation2 + $0xc] sm:$0x1] %v1000
      %v1002 = vld [vmem:[#allocation2 + $0x18] sm:$0x1]
      %v1003 = vsel %vm995, 0, %v1002
      %1004 = vst [vmem:[#allocation2 + $0x18] sm:$0x1] %v1003
      %v1005 = vld [vmem:[#allocation2 + $0x24] sm:$0x1]
      %v1006 = vsel %vm995, 0, %v1005
      %1007 = vst [vmem:[#allocation2 + $0x24] sm:$0x1] %v1006
      %v1008 = vld [vmem:[#allocation2 + $0x30] sm:$0x1]
      %v1009 = vsel %vm995, 0, %v1008
      %1010 = vst [vmem:[#allocation2 + $0x30] sm:$0x1] %v1009
      %v1011 = vld [vmem:[#allocation2 + $0x3c] sm:$0x1]
      %v1012 = vsel %vm995, 0, %v1011
      %1013 = vst [vmem:[#allocation2 + $0x3c] sm:$0x1] %v1012
      %v1014 = vld [vmem:[#allocation2 + $0x48] sm:$0x1]
      %v1015 = vsel %vm995, 0, %v1014
      %1016 = vst [vmem:[#allocation2 + $0x48] sm:$0x1] %v1015
      %v1017 = vld [vmem:[#allocation2 + $0x54] sm:$0x1]
      %v1018 = vsel %vm995, 0, %v1017
      %1019 = vst [vmem:[#allocation2 + $0x54] sm:$0x1] %v1018
      %v1020 = vld [vmem:[#allocation2 + $0x60] sm:$0x1]
      %v1021 = vsel %vm995, 0, %v1020
      %1022 = vst [vmem:[#allocation2 + $0x60] sm:$0x1] %v1021
      %v1023 = vld [vmem:[#allocation2 + $0x6c] sm:$0x1]
      %v1024 = vsel %vm995, 0, %v1023
      %1025 = vst [vmem:[#allocation2 + $0x6c] sm:$0x1] %v1024
      %v1026 = vld [vmem:[#allocation2 + $0x78] sm:$0x1]
      %v1027 = vsel %vm995, 0, %v1026
      %1028 = vst [vmem:[#allocation2 + $0x78] sm:$0x1] %v1027
      %v1029 = vld [vmem:[#allocation2 + $0x84] sm:$0x1]
      %v1030 = vsel %vm995, 0, %v1029
      %1031 = vst [vmem:[#allocation2 + $0x84] sm:$0x1] %v1030
      %v1032 = vld [vmem:[#allocation2 + $0x90] sm:$0x1]
      %v1033 = vsel %vm995, 0, %v1032
      %1034 = vst [vmem:[#allocation2 + $0x90] sm:$0x1] %v1033
      %v1035 = vld [vmem:[#allocation2 + $0x9c] sm:$0x1]
      %v1036 = vsel %vm995, 0, %v1035
      %1037 = vst [vmem:[#allocation2 + $0x9c] sm:$0x1] %v1036
      %v1038 = vld [vmem:[#allocation2 + $0xa8] sm:$0x1]
      %v1039 = vsel %vm995, 0, %v1038
      %1040 = vst [vmem:[#allocation2 + $0xa8] sm:$0x1] %v1039
      %v1041 = vld [vmem:[#allocation2 + $0xb4] sm:$0x1]
      %v1042 = vsel %vm995, 0, %v1041
      %1043 = vst [vmem:[#allocation2 + $0xb4] sm:$0x1] %v1042
      %v1044 = vld [vmem:[#allocation2 + $0xc0] sm:$0x1]
      %v1045 = vsel %vm995, 0, %v1044
      %1046 = vst [vmem:[#allocation2 + $0xc0] sm:$0x1] %v1045
      %v1047 = vld [vmem:[#allocation2 + $0xcc] sm:$0x1]
      %v1048 = vsel %vm995, 0, %v1047
      %1049 = vst [vmem:[#allocation2 + $0xcc] sm:$0x1] %v1048
      %vm1050 = vsmask.f32 7938
      %vm1051 = vmand %vm993, %vm1050
      %v1052 = vld [vmem:[#allocation2 + $0x8] sm:$0x1]
      %v1053 = vsel %vm1051, 0, %v1052
      %1054 = vst [vmem:[#allocation2 + $0x8] sm:$0x1] %v1053
      %v1055 = vld [vmem:[#allocation2 + $0x14] sm:$0x1]
      %v1056 = vsel %vm1051, 0, %v1055
      %1057 = vst [vmem:[#allocation2 + $0x14] sm:$0x1] %v1056
      %v1058 = vld [vmem:[#allocation2 + $0x20] sm:$0x1]
      %v1059 = vsel %vm1051, 0, %v1058
      %1060 = vst [vmem:[#allocation2 + $0x20] sm:$0x1] %v1059
      %v1061 = vld [vmem:[#allocation2 + $0x2c] sm:$0x1]
      %v1062 = vsel %vm1051, 0, %v1061
      %1063 = vst [vmem:[#allocation2 + $0x2c] sm:$0x1] %v1062
      %v1064 = vld [vmem:[#allocation2 + $0x38] sm:$0x1]
      %v1065 = vsel %vm1051, 0, %v1064
      %1066 = vst [vmem:[#allocation2 + $0x38] sm:$0x1] %v1065
      %v1067 = vld [vmem:[#allocation2 + $0x44] sm:$0x1]
      %v1068 = vsel %vm1051, 0, %v1067
      %1069 = vst [vmem:[#allocation2 + $0x44] sm:$0x1] %v1068
      %v1070 = vld [vmem:[#allocation2 + $0x50] sm:$0x1]
      %v1071 = vsel %vm1051, 0, %v1070
      %1072 = vst [vmem:[#allocation2 + $0x50] sm:$0x1] %v1071
      %v1073 = vld [vmem:[#allocation2 + $0x5c] sm:$0x1]
      %v1074 = vsel %vm1051, 0, %v1073
      %1075 = vst [vmem:[#allocation2 + $0x5c] sm:$0x1] %v1074
      %v1076 = vld [vmem:[#allocation2 + $0x68] sm:$0x1]
      %v1077 = vsel %vm1051, 0, %v1076
      %1078 = vst [vmem:[#allocation2 + $0x68] sm:$0x1] %v1077
      %v1079 = vld [vmem:[#allocation2 + $0x74] sm:$0x1]
      %v1080 = vsel %vm1051, 0, %v1079
      %1081 = vst [vmem:[#allocation2 + $0x74] sm:$0x1] %v1080
      %v1082 = vld [vmem:[#allocation2 + $0x80] sm:$0x1]
      %v1083 = vsel %vm1051, 0, %v1082
      %1084 = vst [vmem:[#allocation2 + $0x80] sm:$0x1] %v1083
      %v1085 = vld [vmem:[#allocation2 + $0x8c] sm:$0x1]
      %v1086 = vsel %vm1051, 0, %v1085
      %1087 = vst [vmem:[#allocation2 + $0x8c] sm:$0x1] %v1086
      %v1088 = vld [vmem:[#allocation2 + $0x98] sm:$0x1]
      %v1089 = vsel %vm1051, 0, %v1088
      %1090 = vst [vmem:[#allocation2 + $0x98] sm:$0x1] %v1089
      %v1091 = vld [vmem:[#allocation2 + $0xa4] sm:$0x1]
      %v1092 = vsel %vm1051, 0, %v1091
      %1093 = vst [vmem:[#allocation2 + $0xa4] sm:$0x1] %v1092
      %v1094 = vld [vmem:[#allocation2 + $0xb0] sm:$0x1]
      %v1095 = vsel %vm1051, 0, %v1094
      %1096 = vst [vmem:[#allocation2 + $0xb0] sm:$0x1] %v1095
      %v1097 = vld [vmem:[#allocation2 + $0xbc] sm:$0x1]
      %v1098 = vsel %vm1051, 0, %v1097
      %1099 = vst [vmem:[#allocation2 + $0xbc] sm:$0x1] %v1098
      %v1100 = vld [vmem:[#allocation2 + $0xc8] sm:$0x1]
      %v1101 = vsel %vm1051, 0, %v1100
      %1102 = vst [vmem:[#allocation2 + $0xc8] sm:$0x1] %v1101
      %v1103 = vld [vmem:[#allocation2 + $0xd4] sm:$0x1]
      %v1104 = vsel %vm1051, 0, %v1103
      %1105 = vst [vmem:[#allocation2 + $0xd4] sm:$0x1] %v1104
      %p1106 = scmp.eq.s32.totalorder %s24, 0
      // Predicated region
      $region45: #{double_conv_forward.4} parent=43 // pred_check
        %p1107 = pneg %p1106
      $region46: #{double_conv_forward.4} parent=43 // pred_check_branch
        %1109 = sbr.rel (%p1107) target = $region48
      $region47: #{double_conv_forward.4} parent=43 // pred_region
        %1110 = vst [vmem:[#allocation2] sm:$0xf] 0
        %1111 = vst [vmem:[#allocation2 + $0x4] sm:$0xf] 0
        %1112 = vst [vmem:[#allocation2 + $0x8] sm:$0x1] 0
        %s1113 = scalar_lea.vmem [#allocation2], 204
        %1114 = vst [vmem:[%s1113] sm:$0xf] 0
        %1115 = vst [vmem:[%s1113 + $0x4] sm:$0xf] 0
        %1116 = vst [vmem:[%s1113 + $0x8] sm:$0x1] 0
      $region48: #{double_conv_forward.4} parent=43 // pred_fallthru
        _
      %v1117 = vld [vmem:[%s3] sm:$0x1]
      %v1119 = vlaneseq
      %v1120 = vshrl.u32 %v1119, 7
      %v1121 = vsub.s32 0, %v1120
      %v1122 = vrot.slane %v1117, %v1121
      %v1124 = vld [vmem:[#allocation2] sm:$0xf]
      %v1125 = vld [vmem:[#allocation2 + $0x4] sm:$0xf]
      %v1126 = vld [vmem:[#allocation2 + $0xc] sm:$0xf]
      %v1127 = vld [vmem:[#allocation2 + $0x10] sm:$0xf]
      %v1128 = vld [vmem:[#allocation2 + $0x18] sm:$0xf]
      %v1129 = vld [vmem:[#allocation2 + $0x1c] sm:$0xf]
      %v1130 = vld [vmem:[#allocation2 + $0x24] sm:$0xf]
      %v1131 = vld [vmem:[#allocation2 + $0x28] sm:$0xf]
      %v1132 = vld [vmem:[#allocation2 + $0x30] sm:$0xf]
      %v1133 = vld [vmem:[#allocation2 + $0x34] sm:$0xf]
      %v1134 = vld [vmem:[#allocation2 + $0x3c] sm:$0xf]
      %v1135 = vld [vmem:[#allocation2 + $0x40] sm:$0xf]
      %v1136 = vld [vmem:[#allocation2 + $0x48] sm:$0xf]
      %v1137 = vld [vmem:[#allocation2 + $0x4c] sm:$0xf]
      %v1138 = vld [vmem:[#allocation2 + $0x54] sm:$0xf]
      %v1139 = vld [vmem:[#allocation2 + $0x58] sm:$0xf]
      %v1140 = vld [vmem:[#allocation2 + $0x60] sm:$0xf]
      %v1141 = vld [vmem:[#allocation2 + $0x64] sm:$0xf]
      %v1142 = vld [vmem:[#allocation2 + $0x6c] sm:$0xf]
      %v1143 = vld [vmem:[#allocation2 + $0x70] sm:$0xf]
      %v1144 = vld [vmem:[#allocation2 + $0x78] sm:$0xf]
      %v1145 = vld [vmem:[#allocation2 + $0x7c] sm:$0xf]
      %v1146 = vld [vmem:[#allocation2 + $0x84] sm:$0xf]
      %v1147 = vld [vmem:[#allocation2 + $0x88] sm:$0xf]
      %v1148 = vld [vmem:[#allocation2 + $0x90] sm:$0xf]
      %v1149 = vld [vmem:[#allocation2 + $0x94] sm:$0xf]
      %v1150 = vld [vmem:[#allocation2 + $0x9c] sm:$0xf]
      %v1151 = vld [vmem:[#allocation2 + $0xa0] sm:$0xf]
      %v1152 = vld [vmem:[#allocation2 + $0xa8] sm:$0xf]
      %v1153 = vld [vmem:[#allocation2 + $0xac] sm:$0xf]
      %v1154 = vld [vmem:[#allocation2 + $0xb4] sm:$0xf]
      %v1155 = vld [vmem:[#allocation2 + $0xb8] sm:$0xf]
      %v1156 = vld [vmem:[#allocation2 + $0x8] sm:$0x1]
      %v1157 = vld [vmem:[#allocation2 + $0x14] sm:$0x1]
      %v1158 = vld [vmem:[#allocation2 + $0x20] sm:$0x1]
      %v1159 = vld [vmem:[#allocation2 + $0x2c] sm:$0x1]
      %v1160 = vld [vmem:[#allocation2 + $0x38] sm:$0x1]
      %v1161 = vld [vmem:[#allocation2 + $0x44] sm:$0x1]
      %v1162 = vld [vmem:[#allocation2 + $0x50] sm:$0x1]
      %v1163 = vld [vmem:[#allocation2 + $0x5c] sm:$0x1]
      %v1164 = vld [vmem:[#allocation2 + $0x68] sm:$0x1]
      %v1165 = vld [vmem:[#allocation2 + $0x74] sm:$0x1]
      %v1166 = vld [vmem:[#allocation2 + $0x80] sm:$0x1]
      %v1167 = vld [vmem:[#allocation2 + $0x8c] sm:$0x1]
      %v1168 = vld [vmem:[#allocation2 + $0x98] sm:$0x1]
      %v1169 = vld [vmem:[#allocation2 + $0xa4] sm:$0x1]
      %v1170 = vld [vmem:[#allocation2 + $0xb0] sm:$0x1]
      %v1171 = vld [vmem:[#allocation2 + $0xbc] sm:$0x1]
      %v1172 = vld [vmem:[#allocation2] sm:$0xe]
      %v1173 = vld [vmem:[#allocation2 + $0xc] sm:$0xe]
      %v1174 = vld [vmem:[#allocation2 + $0x18] sm:$0xe]
      %v1175 = vld [vmem:[#allocation2 + $0x24] sm:$0xe]
      %v1176 = vld [vmem:[#allocation2 + $0x30] sm:$0xe]
      %v1177 = vld [vmem:[#allocation2 + $0x3c] sm:$0xe]
      %v1178 = vld [vmem:[#allocation2 + $0x48] sm:$0xe]
      %v1179 = vld [vmem:[#allocation2 + $0x54] sm:$0xe]
      %v1180 = vld [vmem:[#allocation2 + $0x60] sm:$0xe]
      %v1181 = vld [vmem:[#allocation2 + $0x6c] sm:$0xe]
      %v1182 = vld [vmem:[#allocation2 + $0x78] sm:$0xe]
      %v1183 = vld [vmem:[#allocation2 + $0x84] sm:$0xe]
      %v1184 = vld [vmem:[#allocation2 + $0x90] sm:$0xe]
      %v1185 = vld [vmem:[#allocation2 + $0x9c] sm:$0xe]
      %v1186 = vld [vmem:[#allocation2 + $0xa8] sm:$0xe]
      %v1187 = vld [vmem:[#allocation2 + $0xb4] sm:$0xe]
      %v1220 = vunpack.c.l.b16 %v1124
      %v1221 = vunpack.c.l.b16 %v1125
      %v1222 = vunpack.c.l.b16 %v1126
      %v1223 = vunpack.c.l.b16 %v1127
      %v1224 = vunpack.c.l.b16 %v1128
      %v1225 = vunpack.c.l.b16 %v1129
      %v1226 = vunpack.c.l.b16 %v1130
      %v1227 = vunpack.c.l.b16 %v1131
      %v1228 = vunpack.c.l.b16 %v1132
      %v1229 = vunpack.c.l.b16 %v1133
      %v1230 = vunpack.c.l.b16 %v1134
      %v1231 = vunpack.c.l.b16 %v1135
      %v1232 = vunpack.c.l.b16 %v1136
      %v1233 = vunpack.c.l.b16 %v1137
      %v1234 = vunpack.c.l.b16 %v1138
      %v1235 = vunpack.c.l.b16 %v1139
      %v1236 = vunpack.c.l.b16 %v1140
      %v1237 = vunpack.c.l.b16 %v1141
      %v1238 = vunpack.c.l.b16 %v1142
      %v1239 = vunpack.c.l.b16 %v1143
      %v1240 = vunpack.c.l.b16 %v1144
      %v1241 = vunpack.c.l.b16 %v1145
      %v1242 = vunpack.c.l.b16 %v1146
      %v1243 = vunpack.c.l.b16 %v1147
      %v1244 = vunpack.c.l.b16 %v1148
      %v1245 = vunpack.c.l.b16 %v1149
      %v1246 = vunpack.c.l.b16 %v1150
      %v1247 = vunpack.c.l.b16 %v1151
      %v1248 = vunpack.c.l.b16 %v1152
      %v1249 = vunpack.c.l.b16 %v1153
      %v1250 = vunpack.c.l.b16 %v1154
      %v1251 = vunpack.c.l.b16 %v1155
      %v1252 = vpack.c.b16 %v1221, %v1220
      %v1253 = vpack.c.b16 %v1223, %v1222
      %v1254 = vpack.c.b16 %v1225, %v1224
      %v1255 = vpack.c.b16 %v1227, %v1226
      %v1256 = vpack.c.b16 %v1229, %v1228
      %v1257 = vpack.c.b16 %v1231, %v1230
      %v1258 = vpack.c.b16 %v1233, %v1232
      %v1259 = vpack.c.b16 %v1235, %v1234
      %v1260 = vpack.c.b16 %v1237, %v1236
      %v1261 = vpack.c.b16 %v1239, %v1238
      %v1262 = vpack.c.b16 %v1241, %v1240
      %v1263 = vpack.c.b16 %v1243, %v1242
      %v1264 = vpack.c.b16 %v1245, %v1244
      %v1265 = vpack.c.b16 %v1247, %v1246
      %v1266 = vpack.c.b16 %v1249, %v1248
      %v1267 = vpack.c.b16 %v1251, %v1250
      %v1300 = vunpack.c.l.b16 %v1156
      %v1301 = vunpack.c.l.b16 %v1157
      %v1302 = vunpack.c.l.b16 %v1158
      %v1303 = vunpack.c.l.b16 %v1159
      %v1304 = vunpack.c.l.b16 %v1160
      %v1305 = vunpack.c.l.b16 %v1161
      %v1306 = vunpack.c.l.b16 %v1162
      %v1307 = vunpack.c.l.b16 %v1163
      %v1308 = vunpack.c.l.b16 %v1164
      %v1309 = vunpack.c.l.b16 %v1165
      %v1310 = vunpack.c.l.b16 %v1166
      %v1311 = vunpack.c.l.b16 %v1167
      %v1312 = vunpack.c.l.b16 %v1168
      %v1313 = vunpack.c.l.b16 %v1169
      %v1314 = vunpack.c.l.b16 %v1170
      %v1315 = vunpack.c.l.b16 %v1171
      %v1316 = vpack.c.b16 %v1300, %v1300
      %v1317 = vpack.c.b16 %v1301, %v1301
      %v1318 = vpack.c.b16 %v1302, %v1302
      %v1319 = vpack.c.b16 %v1303, %v1303
      %v1320 = vpack.c.b16 %v1304, %v1304
      %v1321 = vpack.c.b16 %v1305, %v1305
      %v1322 = vpack.c.b16 %v1306, %v1306
      %v1323 = vpack.c.b16 %v1307, %v1307
      %v1324 = vpack.c.b16 %v1308, %v1308
      %v1325 = vpack.c.b16 %v1309, %v1309
      %v1326 = vpack.c.b16 %v1310, %v1310
      %v1327 = vpack.c.b16 %v1311, %v1311
      %v1328 = vpack.c.b16 %v1312, %v1312
      %v1329 = vpack.c.b16 %v1313, %v1313
      %v1330 = vpack.c.b16 %v1314, %v1314
      %v1331 = vpack.c.b16 %v1315, %v1315
      %vm1332 = vsmask.f32 7424
      %v1334 = vshrl.u32 %v1252, 16
      %v1336 = vshll.u32 %v1252, 16
      %v1338 = vrot.slane %v1336, 1
      %v1339 = vor.u32 %v1334, %v1338
      %v1341 = vshll.u32 %v1316, 16
      %v1343 = vrot.slane %v1341, 1
      %v1344 = vsel %vm1332, %v1339, %v1343
      %v1346 = vshrl.u32 %v1253, 16
      %v1348 = vshll.u32 %v1253, 16
      %v1350 = vrot.slane %v1348, 1
      %v1351 = vor.u32 %v1346, %v1350
      %v1353 = vshll.u32 %v1317, 16
      %v1355 = vrot.slane %v1353, 1
      %v1356 = vsel %vm1332, %v1351, %v1355
      %v1358 = vshrl.u32 %v1254, 16
      %v1360 = vshll.u32 %v1254, 16
      %v1362 = vrot.slane %v1360, 1
      %v1363 = vor.u32 %v1358, %v1362
      %v1365 = vshll.u32 %v1318, 16
      %v1367 = vrot.slane %v1365, 1
      %v1368 = vsel %vm1332, %v1363, %v1367
      %v1370 = vshrl.u32 %v1255, 16
      %v1372 = vshll.u32 %v1255, 16
      %v1374 = vrot.slane %v1372, 1
      %v1375 = vor.u32 %v1370, %v1374
      %v1377 = vshll.u32 %v1319, 16
      %v1379 = vrot.slane %v1377, 1
      %v1380 = vsel %vm1332, %v1375, %v1379
      %v1382 = vshrl.u32 %v1256, 16
      %v1384 = vshll.u32 %v1256, 16
      %v1386 = vrot.slane %v1384, 1
      %v1387 = vor.u32 %v1382, %v1386
      %v1389 = vshll.u32 %v1320, 16
      %v1391 = vrot.slane %v1389, 1
      %v1392 = vsel %vm1332, %v1387, %v1391
      %v1394 = vshrl.u32 %v1257, 16
      %v1396 = vshll.u32 %v1257, 16
      %v1398 = vrot.slane %v1396, 1
      %v1399 = vor.u32 %v1394, %v1398
      %v1401 = vshll.u32 %v1321, 16
      %v1403 = vrot.slane %v1401, 1
      %v1404 = vsel %vm1332, %v1399, %v1403
      %v1406 = vshrl.u32 %v1258, 16
      %v1408 = vshll.u32 %v1258, 16
      %v1410 = vrot.slane %v1408, 1
      %v1411 = vor.u32 %v1406, %v1410
      %v1413 = vshll.u32 %v1322, 16
      %v1415 = vrot.slane %v1413, 1
      %v1416 = vsel %vm1332, %v1411, %v1415
      %v1418 = vshrl.u32 %v1259, 16
      %v1420 = vshll.u32 %v1259, 16
      %v1422 = vrot.slane %v1420, 1
      %v1423 = vor.u32 %v1418, %v1422
      %v1425 = vshll.u32 %v1323, 16
      %v1427 = vrot.slane %v1425, 1
      %v1428 = vsel %vm1332, %v1423, %v1427
      %v1430 = vshrl.u32 %v1260, 16
      %v1432 = vshll.u32 %v1260, 16
      %v1434 = vrot.slane %v1432, 1
      %v1435 = vor.u32 %v1430, %v1434
      %v1437 = vshll.u32 %v1324, 16
      %v1439 = vrot.slane %v1437, 1
      %v1440 = vsel %vm1332, %v1435, %v1439
      %v1442 = vshrl.u32 %v1261, 16
      %v1444 = vshll.u32 %v1261, 16
      %v1446 = vrot.slane %v1444, 1
      %v1447 = vor.u32 %v1442, %v1446
      %v1449 = vshll.u32 %v1325, 16
      %v1451 = vrot.slane %v1449, 1
      %v1452 = vsel %vm1332, %v1447, %v1451
      %v1454 = vshrl.u32 %v1262, 16
      %v1456 = vshll.u32 %v1262, 16
      %v1458 = vrot.slane %v1456, 1
      %v1459 = vor.u32 %v1454, %v1458
      %v1461 = vshll.u32 %v1326, 16
      %v1463 = vrot.slane %v1461, 1
      %v1464 = vsel %vm1332, %v1459, %v1463
      %v1466 = vshrl.u32 %v1263, 16
      %v1468 = vshll.u32 %v1263, 16
      %v1470 = vrot.slane %v1468, 1
      %v1471 = vor.u32 %v1466, %v1470
      %v1473 = vshll.u32 %v1327, 16
      %v1475 = vrot.slane %v1473, 1
      %v1476 = vsel %vm1332, %v1471, %v1475
      %v1478 = vshrl.u32 %v1264, 16
      %v1480 = vshll.u32 %v1264, 16
      %v1482 = vrot.slane %v1480, 1
      %v1483 = vor.u32 %v1478, %v1482
      %v1485 = vshll.u32 %v1328, 16
      %v1487 = vrot.slane %v1485, 1
      %v1488 = vsel %vm1332, %v1483, %v1487
      %v1490 = vshrl.u32 %v1265, 16
      %v1492 = vshll.u32 %v1265, 16
      %v1494 = vrot.slane %v1492, 1
      %v1495 = vor.u32 %v1490, %v1494
      %v1497 = vshll.u32 %v1329, 16
      %v1499 = vrot.slane %v1497, 1
      %v1500 = vsel %vm1332, %v1495, %v1499
      %v1502 = vshrl.u32 %v1266, 16
      %v1504 = vshll.u32 %v1266, 16
      %v1506 = vrot.slane %v1504, 1
      %v1507 = vor.u32 %v1502, %v1506
      %v1509 = vshll.u32 %v1330, 16
      %v1511 = vrot.slane %v1509, 1
      %v1512 = vsel %vm1332, %v1507, %v1511
      %v1514 = vshrl.u32 %v1267, 16
      %v1516 = vshll.u32 %v1267, 16
      %v1518 = vrot.slane %v1516, 1
      %v1519 = vor.u32 %v1514, %v1518
      %v1521 = vshll.u32 %v1331, 16
      %v1523 = vrot.slane %v1521, 1
      %v1524 = vsel %vm1332, %v1519, %v1523
      %v1557 = vunpack.c.l.b16 %v1172
      %v1558 = vunpack.c.l.b16 %v1173
      %v1559 = vunpack.c.l.b16 %v1174
      %v1560 = vunpack.c.l.b16 %v1175
      %v1561 = vunpack.c.l.b16 %v1176
      %v1562 = vunpack.c.l.b16 %v1177
      %v1563 = vunpack.c.l.b16 %v1178
      %v1564 = vunpack.c.l.b16 %v1179
      %v1565 = vunpack.c.l.b16 %v1180
      %v1566 = vunpack.c.l.b16 %v1181
      %v1567 = vunpack.c.l.b16 %v1182
      %v1568 = vunpack.c.l.b16 %v1183
      %v1569 = vunpack.c.l.b16 %v1184
      %v1570 = vunpack.c.l.b16 %v1185
      %v1571 = vunpack.c.l.b16 %v1186
      %v1572 = vunpack.c.l.b16 %v1187
      %v1573 = vpack.c.b16 %v1221, %v1557
      %v1574 = vpack.c.b16 %v1223, %v1558
      %v1575 = vpack.c.b16 %v1225, %v1559
      %v1576 = vpack.c.b16 %v1227, %v1560
      %v1577 = vpack.c.b16 %v1229, %v1561
      %v1578 = vpack.c.b16 %v1231, %v1562
      %v1579 = vpack.c.b16 %v1233, %v1563
      %v1580 = vpack.c.b16 %v1235, %v1564
      %v1581 = vpack.c.b16 %v1237, %v1565
      %v1582 = vpack.c.b16 %v1239, %v1566
      %v1583 = vpack.c.b16 %v1241, %v1567
      %v1584 = vpack.c.b16 %v1243, %v1568
      %v1585 = vpack.c.b16 %v1245, %v1569
      %v1586 = vpack.c.b16 %v1247, %v1570
      %v1587 = vpack.c.b16 %v1249, %v1571
      %v1588 = vpack.c.b16 %v1251, %v1572
      %vm1589 = vcmask 1046528
      %v1590 = vrot.slane %v1573, 1
      %v1591 = vrot.slane %v1316, 1
      %v1592 = vsel %vm1589, %v1590, %v1591
      %v1593 = vrot.slane %v1574, 1
      %v1594 = vrot.slane %v1317, 1
      %v1595 = vsel %vm1589, %v1593, %v1594
      %v1596 = vrot.slane %v1575, 1
      %v1597 = vrot.slane %v1318, 1
      %v1598 = vsel %vm1589, %v1596, %v1597
      %v1599 = vrot.slane %v1576, 1
      %v1600 = vrot.slane %v1319, 1
      %v1601 = vsel %vm1589, %v1599, %v1600
      %v1602 = vrot.slane %v1577, 1
      %v1603 = vrot.slane %v1320, 1
      %v1604 = vsel %vm1589, %v1602, %v1603
      %v1605 = vrot.slane %v1578, 1
      %v1606 = vrot.slane %v1321, 1
      %v1607 = vsel %vm1589, %v1605, %v1606
      %v1608 = vrot.slane %v1579, 1
      %v1609 = vrot.slane %v1322, 1
      %v1610 = vsel %vm1589, %v1608, %v1609
      %v1611 = vrot.slane %v1580, 1
      %v1612 = vrot.slane %v1323, 1
      %v1613 = vsel %vm1589, %v1611, %v1612
      %v1614 = vrot.slane %v1581, 1
      %v1615 = vrot.slane %v1324, 1
      %v1616 = vsel %vm1589, %v1614, %v1615
      %v1617 = vrot.slane %v1582, 1
      %v1618 = vrot.slane %v1325, 1
      %v1619 = vsel %vm1589, %v1617, %v1618
      %v1620 = vrot.slane %v1583, 1
      %v1621 = vrot.slane %v1326, 1
      %v1622 = vsel %vm1589, %v1620, %v1621
      %v1623 = vrot.slane %v1584, 1
      %v1624 = vrot.slane %v1327, 1
      %v1625 = vsel %vm1589, %v1623, %v1624
      %v1626 = vrot.slane %v1585, 1
      %v1627 = vrot.slane %v1328, 1
      %v1628 = vsel %vm1589, %v1626, %v1627
      %v1629 = vrot.slane %v1586, 1
      %v1630 = vrot.slane %v1329, 1
      %v1631 = vsel %vm1589, %v1629, %v1630
      %v1632 = vrot.slane %v1587, 1
      %v1633 = vrot.slane %v1330, 1
      %v1634 = vsel %vm1589, %v1632, %v1633
      %v1635 = vrot.slane %v1588, 1
      %v1636 = vrot.slane %v1331, 1
      %v1637 = vsel %vm1589, %v1635, %v1636
      %v1654 = vld [vmem:[%s2] sm:$0xf]
      %v1655 = vld [vmem:[%s2 + $0x4] sm:$0xf]
      %v1656 = vld [vmem:[%s2 + $0x8] sm:$0xf]
      %v1657 = vld [vmem:[%s2 + $0xc] sm:$0xf]
      %v1658 = vld [vmem:[%s2 + $0x10] sm:$0xf]
      %v1659 = vld [vmem:[%s2 + $0x14] sm:$0xf]
      %v1660 = vld [vmem:[%s2 + $0x18] sm:$0xf]
      %v1661 = vld [vmem:[%s2 + $0x1c] sm:$0xf]
      %v1662 = vld [vmem:[%s2 + $0x20] sm:$0xf]
      %v1663 = vld [vmem:[%s2 + $0x24] sm:$0xf]
      %v1664 = vld [vmem:[%s2 + $0x28] sm:$0xf]
      %v1665 = vld [vmem:[%s2 + $0x2c] sm:$0xf]
      %v1666 = vld [vmem:[%s2 + $0x30] sm:$0xf]
      %v1667 = vld [vmem:[%s2 + $0x34] sm:$0xf]
      %v1668 = vld [vmem:[%s2 + $0x38] sm:$0xf]
      %v1669 = vld [vmem:[%s2 + $0x3c] sm:$0xf]
      %v1670 = vld [vmem:[%s2 + $0x40] sm:$0xf]
      %v1671 = vld [vmem:[%s2 + $0x44] sm:$0xf]
      %v1672 = vld [vmem:[%s2 + $0x48] sm:$0xf]
      %v1673 = vld [vmem:[%s2 + $0x4c] sm:$0xf]
      %v1674 = vld [vmem:[%s2 + $0x50] sm:$0xf]
      %v1675 = vld [vmem:[%s2 + $0x54] sm:$0xf]
      %v1676 = vld [vmem:[%s2 + $0x58] sm:$0xf]
      %v1677 = vld [vmem:[%s2 + $0x5c] sm:$0xf]
      %v1678 = vld [vmem:[%s2 + $0x60] sm:$0xf]
      %v1679 = vld [vmem:[%s2 + $0x64] sm:$0xf]
      %v1680 = vld [vmem:[%s2 + $0x68] sm:$0xf]
      %v1681 = vld [vmem:[%s2 + $0x6c] sm:$0xf]
      %v1682 = vld [vmem:[%s2 + $0x70] sm:$0xf]
      %v1683 = vld [vmem:[%s2 + $0x74] sm:$0xf]
      %v1684 = vld [vmem:[%s2 + $0x78] sm:$0xf]
      %v1685 = vld [vmem:[%s2 + $0x7c] sm:$0xf]
      %v1686 = vld [vmem:[%s2 + $0x80] sm:$0xf]
      %v1687 = vld [vmem:[%s2 + $0x84] sm:$0xf]
      %v1688 = vld [vmem:[%s2 + $0x88] sm:$0xf]
      %v1689 = vld [vmem:[%s2 + $0x8c] sm:$0xf]
      %v1690 = vld [vmem:[%s2 + $0x90] sm:$0xf]
      %v1691 = vld [vmem:[%s2 + $0x94] sm:$0xf]
      %v1692 = vld [vmem:[%s2 + $0x98] sm:$0xf]
      %v1693 = vld [vmem:[%s2 + $0x9c] sm:$0xf]
      %v1694 = vld [vmem:[%s2 + $0xa0] sm:$0xf]
      %v1695 = vld [vmem:[%s2 + $0xa4] sm:$0xf]
      %v1696 = vld [vmem:[%s2 + $0xa8] sm:$0xf]
      %v1697 = vld [vmem:[%s2 + $0xac] sm:$0xf]
      %v1698 = vld [vmem:[%s2 + $0xb0] sm:$0xf]
      %v1699 = vld [vmem:[%s2 + $0xb4] sm:$0xf]
      %v1700 = vld [vmem:[%s2 + $0xb8] sm:$0xf]
      %v1701 = vld [vmem:[%s2 + $0xbc] sm:$0xf]
      %v1750 = vunpack.c.l.b16 %v1654
      %v1751 = vunpack.c.l.b16 %v1655
      %v1752 = vunpack.c.l.b16 %v1656
      %v1753 = vunpack.c.l.b16 %v1657
      %v1754 = vunpack.c.l.b16 %v1658
      %v1755 = vunpack.c.l.b16 %v1659
      %v1756 = vunpack.c.l.b16 %v1660
      %v1757 = vunpack.c.l.b16 %v1661
      %v1758 = vunpack.c.l.b16 %v1662
      %v1759 = vunpack.c.l.b16 %v1663
      %v1760 = vunpack.c.l.b16 %v1664
      %v1761 = vunpack.c.l.b16 %v1665
      %v1762 = vunpack.c.l.b16 %v1666
      %v1763 = vunpack.c.l.b16 %v1667
      %v1764 = vunpack.c.l.b16 %v1668
      %v1765 = vunpack.c.l.b16 %v1669
      %v1766 = vunpack.c.l.b16 %v1670
      %v1767 = vunpack.c.l.b16 %v1671
      %v1768 = vunpack.c.l.b16 %v1672
      %v1769 = vunpack.c.l.b16 %v1673
      %v1770 = vunpack.c.l.b16 %v1674
      %v1771 = vunpack.c.l.b16 %v1675
      %v1772 = vunpack.c.l.b16 %v1676
      %v1773 = vunpack.c.l.b16 %v1677
      %v1774 = vunpack.c.l.b16 %v1678
      %v1775 = vunpack.c.l.b16 %v1679
      %v1776 = vunpack.c.l.b16 %v1680
      %v1777 = vunpack.c.l.b16 %v1681
      %v1778 = vunpack.c.l.b16 %v1682
      %v1779 = vunpack.c.l.b16 %v1683
      %v1780 = vunpack.c.l.b16 %v1684
      %v1781 = vunpack.c.l.b16 %v1685
      %v1782 = vunpack.c.l.b16 %v1686
      %v1783 = vunpack.c.l.b16 %v1687
      %v1784 = vunpack.c.l.b16 %v1688
      %v1785 = vunpack.c.l.b16 %v1689
      %v1786 = vunpack.c.l.b16 %v1690
      %v1787 = vunpack.c.l.b16 %v1691
      %v1788 = vunpack.c.l.b16 %v1692
      %v1789 = vunpack.c.l.b16 %v1693
      %v1790 = vunpack.c.l.b16 %v1694
      %v1791 = vunpack.c.l.b16 %v1695
      %v1792 = vunpack.c.l.b16 %v1696
      %v1793 = vunpack.c.l.b16 %v1697
      %v1794 = vunpack.c.l.b16 %v1698
      %v1795 = vunpack.c.l.b16 %v1699
      %v1796 = vunpack.c.l.b16 %v1700
      %v1797 = vunpack.c.l.b16 %v1701
      %v1798 = vpack.c.b16 %v1751, %v1750
      %v1799 = vpack.c.b16 %v1753, %v1752
      %v1800 = vpack.c.b16 %v1755, %v1754
      %v1801 = vpack.c.b16 %v1757, %v1756
      %v1802 = vpack.c.b16 %v1759, %v1758
      %v1803 = vpack.c.b16 %v1761, %v1760
      %v1804 = vpack.c.b16 %v1763, %v1762
      %v1805 = vpack.c.b16 %v1765, %v1764
      %v1806 = vpack.c.b16 %v1767, %v1766
      %v1807 = vpack.c.b16 %v1769, %v1768
      %v1808 = vpack.c.b16 %v1771, %v1770
      %v1809 = vpack.c.b16 %v1773, %v1772
      %v1810 = vpack.c.b16 %v1775, %v1774
      %v1811 = vpack.c.b16 %v1777, %v1776
      %v1812 = vpack.c.b16 %v1779, %v1778
      %v1813 = vpack.c.b16 %v1781, %v1780
      %v1814 = vpack.c.b16 %v1783, %v1782
      %v1815 = vpack.c.b16 %v1785, %v1784
      %v1816 = vpack.c.b16 %v1787, %v1786
      %v1817 = vpack.c.b16 %v1789, %v1788
      %v1818 = vpack.c.b16 %v1791, %v1790
      %v1819 = vpack.c.b16 %v1793, %v1792
      %v1820 = vpack.c.b16 %v1795, %v1794
      %v1821 = vpack.c.b16 %v1797, %v1796
      %1846 = vmatprep.subr.bf16.mxu0 0
      %1847 = vmatpush1.bf16.msra.mxu0 %v1798
      %1848 = vmatprep.subr.bf16.mxu0 0
      %1849 = vmatpush1.bf16.msra.mxu0 %v1799
      %1850 = vmatprep.subr.bf16.mxu0 0
      %1851 = vmatpush1.bf16.msra.mxu0 %v1800
      %1852 = vmatprep.subr.bf16.mxu0 0
      %1853 = vmatpush1.bf16.msra.mxu0 %v1801
      %1854 = vmatprep.subr.bf16.mxu0 0
      %1855 = vmatpush1.bf16.msra.mxu0 %v1802
      %1856 = vmatprep.subr.bf16.mxu0 0
      %1857 = vmatpush1.bf16.msra.mxu0 %v1803
      %1858 = vmatprep.subr.bf16.mxu0 0
      %1859 = vmatpush1.bf16.msra.mxu0 %v1804
      %1860 = vmatprep.subr.bf16.mxu0 0
      %1861 = vmatpush1.bf16.msra.mxu0 %v1805
      %1862 = vmatprep.subr.bf16.mxu0 0
      %1863 = vmatpush1.bf16.msra.mxu0 %v1806
      %1864 = vmatprep.subr.bf16.mxu0 0
      %1865 = vmatpush1.bf16.msra.mxu0 %v1807
      %1866 = vmatprep.subr.bf16.mxu0 0
      %1867 = vmatpush1.bf16.msra.mxu0 %v1808
      %1868 = vmatprep.subr.bf16.mxu0 0
      %1869 = vmatpush1.bf16.msra.mxu0 %v1809
      %1870 = vmatprep.subr.bf16.mxu0 0
      %1871 = vmatpush1.bf16.msra.mxu0 %v1810
      %1872 = vmatprep.subr.bf16.mxu0 0
      %1873 = vmatpush1.bf16.msra.mxu0 %v1811
      %1874 = vmatprep.subr.bf16.mxu0 0
      %1875 = vmatpush1.bf16.msra.mxu0 %v1812
      %1876 = vmatprep.subr.bf16.mxu0 0
      %1877 = vmatpush1.bf16.msra.mxu0 %v1813
      %1878 = vmatprep.mubr.bf16.mxu0 %v1344
      %1879 = vmatmul.mubr.bf16.gmra.mrb[0].mxu0 %v1252
      %v1880 = vpop.f32.mrb[0].mxu0
      %v1881 = vadd.f32 0.0, %v1880
      %v1882 = vpop.f32.mrb[0].mxu0
      %v1883 = vpop.f32.mrb[0].mxu0
      %v1884 = vadd.f32 0.0, %v1883
      %v1885 = vpop.f32.mrb[0].mxu0
      %1886 = vmatprep.mubr.bf16.mxu0 %v1356
      %1887 = vmatmul.mubr.bf16.gmra.mrb[0].mxu0 %v1253
      %v1888 = vpop.f32.mrb[0].mxu0
      %v1889 = vadd.f32 0.0, %v1888
      %v1890 = vpop.f32.mrb[0].mxu0
      %v1891 = vpop.f32.mrb[0].mxu0
      %v1892 = vadd.f32 0.0, %v1891
      %v1893 = vpop.f32.mrb[0].mxu0
      %1894 = vmatprep.mubr.bf16.mxu0 %v1368
      %1895 = vmatmul.mubr.bf16.gmra.mrb[0].mxu0 %v1254
      %v1896 = vpop.f32.mrb[0].mxu0
      %v1897 = vadd.f32 0.0, %v1896
      %v1898 = vpop.f32.mrb[0].mxu0
      %v1899 = vpop.f32.mrb[0].mxu0
      %v1900 = vadd.f32 0.0, %v1899
      %v1901 = vpop.f32.mrb[0].mxu0
      %1902 = vmatprep.mubr.bf16.mxu0 %v1380
      %1903 = vmatmul.mubr.bf16.gmra.mrb[0].mxu0 %v1255
      %v1904 = vpop.f32.mrb[0].mxu0
      %v1905 = vadd.f32 0.0, %v1904
      %v1906 = vpop.f32.mrb[0].mxu0
      %v1907 = vpop.f32.mrb[0].mxu0
      %v1908 = vadd.f32 0.0, %v1907
      %v1909 = vpop.f32.mrb[0].mxu0
      %1910 = vmatprep.mubr.bf16.mxu0 %v1392
      %1911 = vmatmul.mubr.bf16.gmra.mrb[0].mxu0 %v1256
      %v1912 = vpop.f32.mrb[0].mxu0
      %v1913 = vadd.f32 0.0, %v1912
      %v1914 = vpop.f32.mrb[0].mxu0
      %v1915 = vpop.f32.mrb[0].mxu0
      %v1916 = vadd.f32 0.0, %v1915
      %v1917 = vpop.f32.mrb[0].mxu0
      %1918 = vmatprep.mubr.bf16.mxu0 %v1404
      %1919 = vmatmul.mubr.bf16.gmra.mrb[0].mxu0 %v1257
      %v1920 = vpop.f32.mrb[0].mxu0
      %v1921 = vadd.f32 0.0, %v1920
      %v1922 = vpop.f32.mrb[0].mxu0
      %v1923 = vpop.f32.mrb[0].mxu0
      %v1924 = vadd.f32 0.0, %v1923
      %v1925 = vpop.f32.mrb[0].mxu0
      %1926 = vmatprep.mubr.bf16.mxu0 %v1416
      %1927 = vmatmul.mubr.bf16.gmra.mrb[0].mxu0 %v1258
      %v1928 = vpop.f32.mrb[0].mxu0
      %v1929 = vadd.f32 0.0, %v1928
      %v1930 = vpop.f32.mrb[0].mxu0
      %v1931 = vpop.f32.mrb[0].mxu0
      %v1932 = vadd.f32 0.0, %v1931
      %v1933 = vpop.f32.mrb[0].mxu0
      %1934 = vmatprep.mubr.bf16.mxu0 %v1428
      %1935 = vmatmul.mubr.bf16.gmra.mrb[0].mxu0 %v1259
      %v1936 = vpop.f32.mrb[0].mxu0
      %v1937 = vadd.f32 0.0, %v1936
      %v1938 = vpop.f32.mrb[0].mxu0
      %v1939 = vpop.f32.mrb[0].mxu0
      %v1940 = vadd.f32 0.0, %v1939
      %v1941 = vpop.f32.mrb[0].mxu0
      %1942 = vmatprep.mubr.bf16.mxu0 %v1440
      %1943 = vmatmul.mubr.bf16.gmra.mrb[0].mxu0 %v1260
      %v1944 = vpop.f32.mrb[0].mxu0
      %v1945 = vadd.f32 0.0, %v1944
      %v1946 = vpop.f32.mrb[0].mxu0
      %v1947 = vpop.f32.mrb[0].mxu0
      %v1948 = vadd.f32 0.0, %v1947
      %v1949 = vpop.f32.mrb[0].mxu0
      %1950 = vmatprep.mubr.bf16.mxu0 %v1452
      %1951 = vmatmul.mubr.bf16.gmra.mrb[0].mxu0 %v1261
      %v1952 = vpop.f32.mrb[0].mxu0
      %v1953 = vadd.f32 0.0, %v1952
      %v1954 = vpop.f32.mrb[0].mxu0
      %v1955 = vpop.f32.mrb[0].mxu0
      %v1956 = vadd.f32 0.0, %v1955
      %v1957 = vpop.f32.mrb[0].mxu0
      %1958 = vmatprep.mubr.bf16.mxu0 %v1464
      %1959 = vmatmul.mubr.bf16.gmra.mrb[0].mxu0 %v1262
      %v1960 = vpop.f32.mrb[0].mxu0
      %v1961 = vadd.f32 0.0, %v1960
      %v1962 = vpop.f32.mrb[0].mxu0
      %v1963 = vpop.f32.mrb[0].mxu0
      %v1964 = vadd.f32 0.0, %v1963
      %v1965 = vpop.f32.mrb[0].mxu0
      %1966 = vmatprep.mubr.bf16.mxu0 %v1476
      %1967 = vmatmul.mubr.bf16.gmra.mrb[0].mxu0 %v1263
      %v1968 = vpop.f32.mrb[0].mxu0
      %v1969 = vadd.f32 0.0, %v1968
      %v1970 = vpop.f32.mrb[0].mxu0
      %v1971 = vpop.f32.mrb[0].mxu0
      %v1972 = vadd.f32 0.0, %v1971
      %v1973 = vpop.f32.mrb[0].mxu0
      %1974 = vmatprep.mubr.bf16.mxu0 %v1488
      %1975 = vmatmul.mubr.bf16.gmra.mrb[0].mxu0 %v1264
      %v1976 = vpop.f32.mrb[0].mxu0
      %v1977 = vadd.f32 0.0, %v1976
      %v1978 = vpop.f32.mrb[0].mxu0
      %v1979 = vpop.f32.mrb[0].mxu0
      %v1980 = vadd.f32 0.0, %v1979
      %v1981 = vpop.f32.mrb[0].mxu0
      %1982 = vmatprep.mubr.bf16.mxu0 %v1500
      %1983 = vmatmul.mubr.bf16.gmra.mrb[0].mxu0 %v1265
      %v1984 = vpop.f32.mrb[0].mxu0
      %v1985 = vadd.f32 0.0, %v1984
      %v1986 = vpop.f32.mrb[0].mxu0
      %v1987 = vpop.f32.mrb[0].mxu0
      %v1988 = vadd.f32 0.0, %v1987
      %v1989 = vpop.f32.mrb[0].mxu0
      %1990 = vmatprep.mubr.bf16.mxu0 %v1512
      %1991 = vmatmul.mubr.bf16.gmra.mrb[0].mxu0 %v1266
      %v1992 = vpop.f32.mrb[0].mxu0
      %v1993 = vadd.f32 0.0, %v1992
      %v1994 = vpop.f32.mrb[0].mxu0
      %v1995 = vpop.f32.mrb[0].mxu0
      %v1996 = vadd.f32 0.0, %v1995
      %v1997 = vpop.f32.mrb[0].mxu0
      %1998 = vmatprep.mubr.bf16.mxu0 %v1524
      %1999 = vmatmul.mubr.bf16.gmra.mrb[0].mxu0 %v1267
      %v2000 = vpop.f32.mrb[0].mxu0
      %v2001 = vadd.f32 0.0, %v2000
      %v2002 = vpop.f32.mrb[0].mxu0
      %v2003 = vpop.f32.mrb[0].mxu0
      %v2004 = vadd.f32 0.0, %v2003
      %v2005 = vpop.f32.mrb[0].mxu0
      %2006 = vdwg.mxu0
      %2007 = vmatprep.subr.bf16.mxu0 0
      %2008 = vmatpush1.bf16.msra.mxu0 %v1814
      %2009 = vmatprep.subr.bf16.mxu0 0
      %2010 = vmatpush1.bf16.msra.mxu0 %v1815
      %2011 = vmatprep.subr.bf16.mxu0 0
      %2012 = vmatpush1.bf16.msra.mxu0 %v1816
      %2013 = vmatprep.subr.bf16.mxu0 0
      %2014 = vmatpush1.bf16.msra.mxu0 %v1817
      %2015 = vmatprep.subr.bf16.mxu0 0
      %2016 = vmatpush1.bf16.msra.mxu0 %v1818
      %2017 = vmatprep.subr.bf16.mxu0 0
      %2018 = vmatpush1.bf16.msra.mxu0 %v1819
      %2019 = vmatprep.subr.bf16.mxu0 0
      %2020 = vmatpush1.bf16.msra.mxu0 %v1820
      %2021 = vmatprep.subr.bf16.mxu0 0
      %2022 = vmatpush1.bf16.msra.mxu0 %v1821
      %2023 = vmatprep.subr.bf16.mxu0 0
      %2024 = vmatpush1.bf16.msra.mxu0 0
      %2025 = vmatprep.subr.bf16.mxu0 0
      %2026 = vmatpush1.bf16.msra.mxu0 0
      %2027 = vmatprep.subr.bf16.mxu0 0
      %2028 = vmatpush1.bf16.msra.mxu0 0
      %2029 = vmatprep.subr.bf16.mxu0 0
      %2030 = vmatpush1.bf16.msra.mxu0 0
      %2031 = vmatprep.subr.bf16.mxu0 0
      %2032 = vmatpush1.bf16.msra.mxu0 0
      %2033 = vmatprep.subr.bf16.mxu0 0
      %2034 = vmatpush1.bf16.msra.mxu0 0
      %2035 = vmatprep.subr.bf16.mxu0 0
      %2036 = vmatpush1.bf16.msra.mxu0 0
      %2037 = vmatprep.subr.bf16.mxu0 0
      %2038 = vmatpush1.bf16.msra.mxu0 0
      %2039 = vmatprep.mubr.bf16.mxu0 0
      %2040 = vmatmul.mubr.bf16.gmra.mrb[0].mxu0 %v1592
      %v2041 = vpop.f32.mrb[0].mxu0
      %v2042 = vadd.f32 %v1881, %v2041
      %v2043 = vpop.f32.mrb[0].mxu0
      %v2044 = vpop.f32.mrb[0].mxu0
      %v2045 = vadd.f32 %v1884, %v2044
      %v2046 = vpop.f32.mrb[0].mxu0
      %2047 = vmatprep.mubr.bf16.mxu0 0
      %2048 = vmatmul.mubr.bf16.gmra.mrb[0].mxu0 %v1595
      %v2049 = vpop.f32.mrb[0].mxu0
      %v2050 = vadd.f32 %v1889, %v2049
      %v2051 = vpop.f32.mrb[0].mxu0
      %v2052 = vpop.f32.mrb[0].mxu0
      %v2053 = vadd.f32 %v1892, %v2052
      %v2054 = vpop.f32.mrb[0].mxu0
      %2055 = vmatprep.mubr.bf16.mxu0 0
      %2056 = vmatmul.mubr.bf16.gmra.mrb[0].mxu0 %v1598
      %v2057 = vpop.f32.mrb[0].mxu0
      %v2058 = vadd.f32 %v1897, %v2057
      %v2059 = vpop.f32.mrb[0].mxu0
      %v2060 = vpop.f32.mrb[0].mxu0
      %v2061 = vadd.f32 %v1900, %v2060
      %v2062 = vpop.f32.mrb[0].mxu0
      %2063 = vmatprep.mubr.bf16.mxu0 0
      %2064 = vmatmul.mubr.bf16.gmra.mrb[0].mxu0 %v1601
      %v2065 = vpop.f32.mrb[0].mxu0
      %v2066 = vadd.f32 %v1905, %v2065
      %v2067 = vpop.f32.mrb[0].mxu0
      %v2068 = vpop.f32.mrb[0].mxu0
      %v2069 = vadd.f32 %v1908, %v2068
      %v2070 = vpop.f32.mrb[0].mxu0
      %2071 = vmatprep.mubr.bf16.mxu0 0
      %2072 = vmatmul.mubr.bf16.gmra.mrb[0].mxu0 %v1604
      %v2073 = vpop.f32.mrb[0].mxu0
      %v2074 = vadd.f32 %v1913, %v2073
      %v2075 = vpop.f32.mrb[0].mxu0
      %v2076 = vpop.f32.mrb[0].mxu0
      %v2077 = vadd.f32 %v1916, %v2076
      %v2078 = vpop.f32.mrb[0].mxu0
      %2079 = vmatprep.mubr.bf16.mxu0 0
      %2080 = vmatmul.mubr.bf16.gmra.mrb[0].mxu0 %v1607
      %v2081 = vpop.f32.mrb[0].mxu0
      %v2082 = vadd.f32 %v1921, %v2081
      %v2083 = vpop.f32.mrb[0].mxu0
      %v2084 = vpop.f32.mrb[0].mxu0
      %v2085 = vadd.f32 %v1924, %v2084
      %v2086 = vpop.f32.mrb[0].mxu0
      %2087 = vmatprep.mubr.bf16.mxu0 0
      %2088 = vmatmul.mubr.bf16.gmra.mrb[0].mxu0 %v1610
      %v2089 = vpop.f32.mrb[0].mxu0
      %v2090 = vadd.f32 %v1929, %v2089
      %v2091 = vpop.f32.mrb[0].mxu0
      %v2092 = vpop.f32.mrb[0].mxu0
      %v2093 = vadd.f32 %v1932, %v2092
      %v2094 = vpop.f32.mrb[0].mxu0
      %2095 = vmatprep.mubr.bf16.mxu0 0
      %2096 = vmatmul.mubr.bf16.gmra.mrb[0].mxu0 %v1613
      %v2097 = vpop.f32.mrb[0].mxu0
      %v2098 = vadd.f32 %v1937, %v2097
      %v2099 = vpop.f32.mrb[0].mxu0
      %v2100 = vpop.f32.mrb[0].mxu0
      %v2101 = vadd.f32 %v1940, %v2100
      %v2102 = vpop.f32.mrb[0].mxu0
      %2103 = vmatprep.mubr.bf16.mxu0 0
      %2104 = vmatmul.mubr.bf16.gmra.mrb[0].mxu0 %v1616
      %v2105 = vpop.f32.mrb[0].mxu0
      %v2106 = vadd.f32 %v1945, %v2105
      %v2107 = vpop.f32.mrb[0].mxu0
      %v2108 = vpop.f32.mrb[0].mxu0
      %v2109 = vadd.f32 %v1948, %v2108
      %v2110 = vpop.f32.mrb[0].mxu0
      %2111 = vmatprep.mubr.bf16.mxu0 0
      %2112 = vmatmul.mubr.bf16.gmra.mrb[0].mxu0 %v1619
      %v2113 = vpop.f32.mrb[0].mxu0
      %v2114 = vadd.f32 %v1953, %v2113
      %v2115 = vpop.f32.mrb[0].mxu0
      %v2116 = vpop.f32.mrb[0].mxu0
      %v2117 = vadd.f32 %v1956, %v2116
      %v2118 = vpop.f32.mrb[0].mxu0
      %2119 = vmatprep.mubr.bf16.mxu0 0
      %2120 = vmatmul.mubr.bf16.gmra.mrb[0].mxu0 %v1622
      %v2121 = vpop.f32.mrb[0].mxu0
      %v2122 = vadd.f32 %v1961, %v2121
      %v2123 = vpop.f32.mrb[0].mxu0
      %v2124 = vpop.f32.mrb[0].mxu0
      %v2125 = vadd.f32 %v1964, %v2124
      %v2126 = vpop.f32.mrb[0].mxu0
      %2127 = vmatprep.mubr.bf16.mxu0 0
      %2128 = vmatmul.mubr.bf16.gmra.mrb[0].mxu0 %v1625
      %v2129 = vpop.f32.mrb[0].mxu0
      %v2130 = vadd.f32 %v1969, %v2129
      %v2131 = vpop.f32.mrb[0].mxu0
      %v2132 = vpop.f32.mrb[0].mxu0
      %v2133 = vadd.f32 %v1972, %v2132
      %v2134 = vpop.f32.mrb[0].mxu0
      %2135 = vmatprep.mubr.bf16.mxu0 0
      %2136 = vmatmul.mubr.bf16.gmra.mrb[0].mxu0 %v1628
      %v2137 = vpop.f32.mrb[0].mxu0
      %v2138 = vadd.f32 %v1977, %v2137
      %v2139 = vpop.f32.mrb[0].mxu0
      %v2140 = vpop.f32.mrb[0].mxu0
      %v2141 = vadd.f32 %v1980, %v2140
      %v2142 = vpop.f32.mrb[0].mxu0
      %2143 = vmatprep.mubr.bf16.mxu0 0
      %2144 = vmatmul.mubr.bf16.gmra.mrb[0].mxu0 %v1631
      %v2145 = vpop.f32.mrb[0].mxu0
      %v2146 = vadd.f32 %v1985, %v2145
      %v2147 = vpop.f32.mrb[0].mxu0
      %v2148 = vpop.f32.mrb[0].mxu0
      %v2149 = vadd.f32 %v1988, %v2148
      %v2150 = vpop.f32.mrb[0].mxu0
      %2151 = vmatprep.mubr.bf16.mxu0 0
      %2152 = vmatmul.mubr.bf16.gmra.mrb[0].mxu0 %v1634
      %v2153 = vpop.f32.mrb[0].mxu0
      %v2154 = vadd.f32 %v1993, %v2153
      %v2155 = vpop.f32.mrb[0].mxu0
      %v2156 = vpop.f32.mrb[0].mxu0
      %v2157 = vadd.f32 %v1996, %v2156
      %v2158 = vpop.f32.mrb[0].mxu0
      %2159 = vmatprep.mubr.bf16.mxu0 0
      %2160 = vmatmul.mubr.bf16.gmra.mrb[0].mxu0 %v1637
      %v2161 = vpop.f32.mrb[0].mxu0
      %v2162 = vadd.f32 %v2001, %v2161
      %v2163 = vpop.f32.mrb[0].mxu0
      %v2164 = vpop.f32.mrb[0].mxu0
      %v2165 = vadd.f32 %v2004, %v2164
      %v2166 = vpop.f32.mrb[0].mxu0
      %2167 = vdwg.mxu0
      %v2168 = vadd.f32 %v1122, %v2042
      %v2169 = vadd.f32 %v1122, %v2045
      %v2170 = vadd.f32 %v1122, %v2050
      %v2171 = vadd.f32 %v1122, %v2053
      %v2172 = vadd.f32 %v1122, %v2058
      %v2173 = vadd.f32 %v1122, %v2061
      %v2174 = vadd.f32 %v1122, %v2066
      %v2175 = vadd.f32 %v1122, %v2069
      %v2176 = vadd.f32 %v1122, %v2074
      %v2177 = vadd.f32 %v1122, %v2077
      %v2178 = vadd.f32 %v1122, %v2082
      %v2179 = vadd.f32 %v1122, %v2085
      %v2180 = vadd.f32 %v1122, %v2090
      %v2181 = vadd.f32 %v1122, %v2093
      %v2182 = vadd.f32 %v1122, %v2098
      %v2183 = vadd.f32 %v1122, %v2101
      %v2184 = vadd.f32 %v1122, %v2106
      %v2185 = vadd.f32 %v1122, %v2109
      %v2186 = vadd.f32 %v1122, %v2114
      %v2187 = vadd.f32 %v1122, %v2117
      %v2188 = vadd.f32 %v1122, %v2122
      %v2189 = vadd.f32 %v1122, %v2125
      %v2190 = vadd.f32 %v1122, %v2130
      %v2191 = vadd.f32 %v1122, %v2133
      %v2192 = vadd.f32 %v1122, %v2138
      %v2193 = vadd.f32 %v1122, %v2141
      %v2194 = vadd.f32 %v1122, %v2146
      %v2195 = vadd.f32 %v1122, %v2149
      %v2196 = vadd.f32 %v1122, %v2154
      %v2197 = vadd.f32 %v1122, %v2157
      %v2198 = vadd.f32 %v1122, %v2162
      %v2199 = vadd.f32 %v1122, %v2165
      %s2200 = scalar_lea.vmem [#allocation2], 12
      %v2201 = vld [vmem:[%s2200] sm:$0xf]
      %v2202 = vld [vmem:[%s2200 + $0x4] sm:$0xf]
      %v2203 = vld [vmem:[%s2200 + $0xc] sm:$0xf]
      %v2204 = vld [vmem:[%s2200 + $0x10] sm:$0xf]
      %v2205 = vld [vmem:[%s2200 + $0x18] sm:$0xf]
      %v2206 = vld [vmem:[%s2200 + $0x1c] sm:$0xf]
      %v2207 = vld [vmem:[%s2200 + $0x24] sm:$0xf]
      %v2208 = vld [vmem:[%s2200 + $0x28] sm:$0xf]
      %v2209 = vld [vmem:[%s2200 + $0x30] sm:$0xf]
      %v2210 = vld [vmem:[%s2200 + $0x34] sm:$0xf]
      %v2211 = vld [vmem:[%s2200 + $0x3c] sm:$0xf]
      %v2212 = vld [vmem:[%s2200 + $0x40] sm:$0xf]
      %v2213 = vld [vmem:[%s2200 + $0x48] sm:$0xf]
      %v2214 = vld [vmem:[%s2200 + $0x4c] sm:$0xf]
      %v2215 = vld [vmem:[%s2200 + $0x54] sm:$0xf]
      %v2216 = vld [vmem:[%s2200 + $0x58] sm:$0xf]
      %v2217 = vld [vmem:[%s2200 + $0x60] sm:$0xf]
      %v2218 = vld [vmem:[%s2200 + $0x64] sm:$0xf]
      %v2219 = vld [vmem:[%s2200 + $0x6c] sm:$0xf]
      %v2220 = vld [vmem:[%s2200 + $0x70] sm:$0xf]
      %v2221 = vld [vmem:[%s2200 + $0x78] sm:$0xf]
      %v2222 = vld [vmem:[%s2200 + $0x7c] sm:$0xf]
      %v2223 = vld [vmem:[%s2200 + $0x84] sm:$0xf]
      %v2224 = vld [vmem:[%s2200 + $0x88] sm:$0xf]
      %v2225 = vld [vmem:[%s2200 + $0x90] sm:$0xf]
      %v2226 = vld [vmem:[%s2200 + $0x94] sm:$0xf]
      %v2227 = vld [vmem:[%s2200 + $0x9c] sm:$0xf]
      %v2228 = vld [vmem:[%s2200 + $0xa0] sm:$0xf]
      %v2229 = vld [vmem:[%s2200 + $0xa8] sm:$0xf]
      %v2230 = vld [vmem:[%s2200 + $0xac] sm:$0xf]
      %v2231 = vld [vmem:[%s2200 + $0xb4] sm:$0xf]
      %v2232 = vld [vmem:[%s2200 + $0xb8] sm:$0xf]
      %v2233 = vld [vmem:[%s2200 + $0x8] sm:$0x1]
      %v2234 = vld [vmem:[%s2200 + $0x14] sm:$0x1]
      %v2235 = vld [vmem:[%s2200 + $0x20] sm:$0x1]
      %v2236 = vld [vmem:[%s2200 + $0x2c] sm:$0x1]
      %v2237 = vld [vmem:[%s2200 + $0x38] sm:$0x1]
      %v2238 = vld [vmem:[%s2200 + $0x44] sm:$0x1]
      %v2239 = vld [vmem:[%s2200 + $0x50] sm:$0x1]
      %v2240 = vld [vmem:[%s2200 + $0x5c] sm:$0x1]
      %v2241 = vld [vmem:[%s2200 + $0x68] sm:$0x1]
      %v2242 = vld [vmem:[%s2200 + $0x74] sm:$0x1]
      %v2243 = vld [vmem:[%s2200 + $0x80] sm:$0x1]
      %v2244 = vld [vmem:[%s2200 + $0x8c] sm:$0x1]
      %v2245 = vld [vmem:[%s2200 + $0x98] sm:$0x1]
      %v2246 = vld [vmem:[%s2200 + $0xa4] sm:$0x1]
      %v2247 = vld [vmem:[%s2200 + $0xb0] sm:$0x1]
      %v2248 = vld [vmem:[%s2200 + $0xbc] sm:$0x1]
      %v2249 = vld [vmem:[%s2200] sm:$0xe]
      %v2250 = vld [vmem:[%s2200 + $0xc] sm:$0xe]
      %v2251 = vld [vmem:[%s2200 + $0x18] sm:$0xe]
      %v2252 = vld [vmem:[%s2200 + $0x24] sm:$0xe]
      %v2253 = vld [vmem:[%s2200 + $0x30] sm:$0xe]
      %v2254 = vld [vmem:[%s2200 + $0x3c] sm:$0xe]
      %v2255 = vld [vmem:[%s2200 + $0x48] sm:$0xe]
      %v2256 = vld [vmem:[%s2200 + $0x54] sm:$0xe]
      %v2257 = vld [vmem:[%s2200 + $0x60] sm:$0xe]
      %v2258 = vld [vmem:[%s2200 + $0x6c] sm:$0xe]
      %v2259 = vld [vmem:[%s2200 + $0x78] sm:$0xe]
      %v2260 = vld [vmem:[%s2200 + $0x84] sm:$0xe]
      %v2261 = vld [vmem:[%s2200 + $0x90] sm:$0xe]
      %v2262 = vld [vmem:[%s2200 + $0x9c] sm:$0xe]
      %v2263 = vld [vmem:[%s2200 + $0xa8] sm:$0xe]
      %v2264 = vld [vmem:[%s2200 + $0xb4] sm:$0xe]
      %v2297 = vunpack.c.l.b16 %v2201
      %v2298 = vunpack.c.l.b16 %v2202
      %v2299 = vunpack.c.l.b16 %v2203
      %v2300 = vunpack.c.l.b16 %v2204
      %v2301 = vunpack.c.l.b16 %v2205
      %v2302 = vunpack.c.l.b16 %v2206
      %v2303 = vunpack.c.l.b16 %v2207
      %v2304 = vunpack.c.l.b16 %v2208
      %v2305 = vunpack.c.l.b16 %v2209
      %v2306 = vunpack.c.l.b16 %v2210
      %v2307 = vunpack.c.l.b16 %v2211
      %v2308 = vunpack.c.l.b16 %v2212
      %v2309 = vunpack.c.l.b16 %v2213
      %v2310 = vunpack.c.l.b16 %v2214
      %v2311 = vunpack.c.l.b16 %v2215
      %v2312 = vunpack.c.l.b16 %v2216
      %v2313 = vunpack.c.l.b16 %v2217
      %v2314 = vunpack.c.l.b16 %v2218
      %v2315 = vunpack.c.l.b16 %v2219
      %v2316 = vunpack.c.l.b16 %v2220
      %v2317 = vunpack.c.l.b16 %v2221
      %v2318 = vunpack.c.l.b16 %v2222
      %v2319 = vunpack.c.l.b16 %v2223
      %v2320 = vunpack.c.l.b16 %v2224
      %v2321 = vunpack.c.l.b16 %v2225
      %v2322 = vunpack.c.l.b16 %v2226
      %v2323 = vunpack.c.l.b16 %v2227
      %v2324 = vunpack.c.l.b16 %v2228
      %v2325 = vunpack.c.l.b16 %v2229
      %v2326 = vunpack.c.l.b16 %v2230
      %v2327 = vunpack.c.l.b16 %v2231
      %v2328 = vunpack.c.l.b16 %v2232
      %v2329 = vpack.c.b16 %v2298, %v2297
      %v2330 = vpack.c.b16 %v2300, %v2299
      %v2331 = vpack.c.b16 %v2302, %v2301
      %v2332 = vpack.c.b16 %v2304, %v2303
      %v2333 = vpack.c.b16 %v2306, %v2305
      %v2334 = vpack.c.b16 %v2308, %v2307
      %v2335 = vpack.c.b16 %v2310, %v2309
      %v2336 = vpack.c.b16 %v2312, %v2311
      %v2337 = vpack.c.b16 %v2314, %v2313
      %v2338 = vpack.c.b16 %v2316, %v2315
      %v2339 = vpack.c.b16 %v2318, %v2317
      %v2340 = vpack.c.b16 %v2320, %v2319
      %v2341 = vpack.c.b16 %v2322, %v2321
      %v2342 = vpack.c.b16 %v2324, %v2323
      %v2343 = vpack.c.b16 %v2326, %v2325
      %v2344 = vpack.c.b16 %v2328, %v2327
      %v2377 = vunpack.c.l.b16 %v2233
      %v2378 = vunpack.c.l.b16 %v2234
      %v2379 = vunpack.c.l.b16 %v2235
      %v2380 = vunpack.c.l.b16 %v2236
      %v2381 = vunpack.c.l.b16 %v2237
      %v2382 = vunpack.c.l.b16 %v2238
      %v2383 = vunpack.c.l.b16 %v2239
      %v2384 = vunpack.c.l.b16 %v2240
      %v2385 = vunpack.c.l.b16 %v2241
      %v2386 = vunpack.c.l.b16 %v2242
      %v2387 = vunpack.c.l.b16 %v2243
      %v2388 = vunpack.c.l.b16 %v2244
      %v2389 = vunpack.c.l.b16 %v2245
      %v2390 = vunpack.c.l.b16 %v2246
      %v2391 = vunpack.c.l.b16 %v2247
      %v2392 = vunpack.c.l.b16 %v2248
      %v2393 = vpack.c.b16 %v2377, %v2377
      %v2394 = vpack.c.b16 %v2378, %v2378
      %v2395 = vpack.c.b16 %v2379, %v2379
      %v2396 = vpack.c.b16 %v2380, %v2380
      %v2397 = vpack.c.b16 %v2381, %v2381
      %v2398 = vpack.c.b16 %v2382, %v2382
      %v2399 = vpack.c.b16 %v2383, %v2383
      %v2400 = vpack.c.b16 %v2384, %v2384
      %v2401 = vpack.c.b16 %v2385, %v2385
      %v2402 = vpack.c.b16 %v2386, %v2386
      %v2403 = vpack.c.b16 %v2387, %v2387
      %v2404 = vpack.c.b16 %v2388, %v2388
      %v2405 = vpack.c.b16 %v2389, %v2389
      %v2406 = vpack.c.b16 %v2390, %v2390
      %v2407 = vpack.c.b16 %v2391, %v2391
      %v2408 = vpack.c.b16 %v2392, %v2392
      %v2410 = vshrl.u32 %v2329, 16
      %v2412 = vshll.u32 %v2329, 16
      %v2414 = vrot.slane %v2412, 1
      %v2415 = vor.u32 %v2410, %v2414
      %v2417 = vshll.u32 %v2393, 16
      %v2419 = vrot.slane %v2417, 1
      %v2420 = vsel %vm1332, %v2415, %v2419
      %v2422 = vshrl.u32 %v2330, 16
      %v2424 = vshll.u32 %v2330, 16
      %v2426 = vrot.slane %v2424, 1
      %v2427 = vor.u32 %v2422, %v2426
      %v2429 = vshll.u32 %v2394, 16
      %v2431 = vrot.slane %v2429, 1
      %v2432 = vsel %vm1332, %v2427, %v2431
      %v2434 = vshrl.u32 %v2331, 16
      %v2436 = vshll.u32 %v2331, 16
      %v2438 = vrot.slane %v2436, 1
      %v2439 = vor.u32 %v2434, %v2438
      %v2441 = vshll.u32 %v2395, 16
      %v2443 = vrot.slane %v2441, 1
      %v2444 = vsel %vm1332, %v2439, %v2443
      %v2446 = vshrl.u32 %v2332, 16
      %v2448 = vshll.u32 %v2332, 16
      %v2450 = vrot.slane %v2448, 1
      %v2451 = vor.u32 %v2446, %v2450
      %v2453 = vshll.u32 %v2396, 16
      %v2455 = vrot.slane %v2453, 1
      %v2456 = vsel %vm1332, %v2451, %v2455
      %v2458 = vshrl.u32 %v2333, 16
      %v2460 = vshll.u32 %v2333, 16
      %v2462 = vrot.slane %v2460, 1
      %v2463 = vor.u32 %v2458, %v2462
      %v2465 = vshll.u32 %v2397, 16
      %v2467 = vrot.slane %v2465, 1
      %v2468 = vsel %vm1332, %v2463, %v2467
      %v2470 = vshrl.u32 %v2334, 16
      %v2472 = vshll.u32 %v2334, 16
      %v2474 = vrot.slane %v2472, 1
      %v2475 = vor.u32 %v2470, %v2474
      %v2477 = vshll.u32 %v2398, 16
      %v2479 = vrot.slane %v2477, 1
      %v2480 = vsel %vm1332, %v2475, %v2479
      %v2482 = vshrl.u32 %v2335, 16
      %v2484 = vshll.u32 %v2335, 16
      %v2486 = vrot.slane %v2484, 1
      %v2487 = vor.u32 %v2482, %v2486
      %v2489 = vshll.u32 %v2399, 16
      %v2491 = vrot.slane %v2489, 1
      %v2492 = vsel %vm1332, %v2487, %v2491
      %v2494 = vshrl.u32 %v2336, 16
      %v2496 = vshll.u32 %v2336, 16
      %v2498 = vrot.slane %v2496, 1
      %v2499 = vor.u32 %v2494, %v2498
      %v2501 = vshll.u32 %v2400, 16
      %v2503 = vrot.slane %v2501, 1
      %v2504 = vsel %vm1332, %v2499, %v2503
      %v2506 = vshrl.u32 %v2337, 16
      %v2508 = vshll.u32 %v2337, 16
      %v2510 = vrot.slane %v2508, 1
      %v2511 = vor.u32 %v2506, %v2510
      %v2513 = vshll.u32 %v2401, 16
      %v2515 = vrot.slane %v2513, 1
      %v2516 = vsel %vm1332, %v2511, %v2515
      %v2518 = vshrl.u32 %v2338, 16
      %v2520 = vshll.u32 %v2338, 16
      %v2522 = vrot.slane %v2520, 1
      %v2523 = vor.u32 %v2518, %v2522
      %v2525 = vshll.u32 %v2402, 16
      %v2527 = vrot.slane %v2525, 1
      %v2528 = vsel %vm1332, %v2523, %v2527
      %v2530 = vshrl.u32 %v2339, 16
      %v2532 = vshll.u32 %v2339, 16
      %v2534 = vrot.slane %v2532, 1
      %v2535 = vor.u32 %v2530, %v2534
      %v2537 = vshll.u32 %v2403, 16
      %v2539 = vrot.slane %v2537, 1
      %v2540 = vsel %vm1332, %v2535, %v2539
      %v2542 = vshrl.u32 %v2340, 16
      %v2544 = vshll.u32 %v2340, 16
      %v2546 = vrot.slane %v2544, 1
      %v2547 = vor.u32 %v2542, %v2546
      %v2549 = vshll.u32 %v2404, 16
      %v2551 = vrot.slane %v2549, 1
      %v2552 = vsel %vm1332, %v2547, %v2551
      %v2554 = vshrl.u32 %v2341, 16
      %v2556 = vshll.u32 %v2341, 16
      %v2558 = vrot.slane %v2556, 1
      %v2559 = vor.u32 %v2554, %v2558
      %v2561 = vshll.u32 %v2405, 16
      %v2563 = vrot.slane %v2561, 1
      %v2564 = vsel %vm1332, %v2559, %v2563
      %v2566 = vshrl.u32 %v2342, 16
      %v2568 = vshll.u32 %v2342, 16
      %v2570 = vrot.slane %v2568, 1
      %v2571 = vor.u32 %v2566, %v2570
      %v2573 = vshll.u32 %v2406, 16
      %v2575 = vrot.slane %v2573, 1
      %v2576 = vsel %vm1332, %v2571, %v2575
      %v2578 = vshrl.u32 %v2343, 16
      %v2580 = vshll.u32 %v2343, 16
      %v2582 = vrot.slane %v2580, 1
      %v2583 = vor.u32 %v2578, %v2582
      %v2585 = vshll.u32 %v2407, 16
      %v2587 = vrot.slane %v2585, 1
      %v2588 = vsel %vm1332, %v2583, %v2587
      %v2590 = vshrl.u32 %v2344, 16
      %v2592 = vshll.u32 %v2344, 16
      %v2594 = vrot.slane %v2592, 1
      %v2595 = vor.u32 %v2590, %v2594
      %v2597 = vshll.u32 %v2408, 16
      %v2599 = vrot.slane %v2597, 1
      %v2600 = vsel %vm1332, %v2595, %v2599
      %v2633 = vunpack.c.l.b16 %v2249
      %v2634 = vunpack.c.l.b16 %v2250
      %v2635 = vunpack.c.l.b16 %v2251
      %v2636 = vunpack.c.l.b16 %v2252
      %v2637 = vunpack.c.l.b16 %v2253
      %v2638 = vunpack.c.l.b16 %v2254
      %v2639 = vunpack.c.l.b16 %v2255
      %v2640 = vunpack.c.l.b16 %v2256
      %v2641 = vunpack.c.l.b16 %v2257
      %v2642 = vunpack.c.l.b16 %v2258
      %v2643 = vunpack.c.l.b16 %v2259
      %v2644 = vunpack.c.l.b16 %v2260
      %v2645 = vunpack.c.l.b16 %v2261
      %v2646 = vunpack.c.l.b16 %v2262
      %v2647 = vunpack.c.l.b16 %v2263
      %v2648 = vunpack.c.l.b16 %v2264
      %v2649 = vpack.c.b16 %v2298, %v2633
      %v2650 = vpack.c.b16 %v2300, %v2634
      %v2651 = vpack.c.b16 %v2302, %v2635
      %v2652 = vpack.c.b16 %v2304, %v2636
      %v2653 = vpack.c.b16 %v2306, %v2637
      %v2654 = vpack.c.b16 %v2308, %v2638
      %v2655 = vpack.c.b16 %v2310, %v2639
      %v2656 = vpack.c.b16 %v2312, %v2640
      %v2657 = vpack.c.b16 %v2314, %v2641
      %v2658 = vpack.c.b16 %v2316, %v2642
      %v2659 = vpack.c.b16 %v2318, %v2643
      %v2660 = vpack.c.b16 %v2320, %v2644
      %v2661 = vpack.c.b16 %v2322, %v2645
      %v2662 = vpack.c.b16 %v2324, %v2646
      %v2663 = vpack.c.b16 %v2326, %v2647
      %v2664 = vpack.c.b16 %v2328, %v2648
      %v2665 = vrot.slane %v2649, 1
      %v2666 = vrot.slane %v2393, 1
      %v2667 = vsel %vm1589, %v2665, %v2666
      %v2668 = vrot.slane %v2650, 1
      %v2669 = vrot.slane %v2394, 1
      %v2670 = vsel %vm1589, %v2668, %v2669
      %v2671 = vrot.slane %v2651, 1
      %v2672 = vrot.slane %v2395, 1
      %v2673 = vsel %vm1589, %v2671, %v2672
      %v2674 = vrot.slane %v2652, 1
      %v2675 = vrot.slane %v2396, 1
      %v2676 = vsel %vm1589, %v2674, %v2675
      %v2677 = vrot.slane %v2653, 1
      %v2678 = vrot.slane %v2397, 1
      %v2679 = vsel %vm1589, %v2677, %v2678
      %v2680 = vrot.slane %v2654, 1
      %v2681 = vrot.slane %v2398, 1
      %v2682 = vsel %vm1589, %v2680, %v2681
      %v2683 = vrot.slane %v2655, 1
      %v2684 = vrot.slane %v2399, 1
      %v2685 = vsel %vm1589, %v2683, %v2684
      %v2686 = vrot.slane %v2656, 1
      %v2687 = vrot.slane %v2400, 1
      %v2688 = vsel %vm1589, %v2686, %v2687
      %v2689 = vrot.slane %v2657, 1
      %v2690 = vrot.slane %v2401, 1
      %v2691 = vsel %vm1589, %v2689, %v2690
      %v2692 = vrot.slane %v2658, 1
      %v2693 = vrot.slane %v2402, 1
      %v2694 = vsel %vm1589, %v2692, %v2693
      %v2695 = vrot.slane %v2659, 1
      %v2696 = vrot.slane %v2403, 1
      %v2697 = vsel %vm1589, %v2695, %v2696
      %v2698 = vrot.slane %v2660, 1
      %v2699 = vrot.slane %v2404, 1
      %v2700 = vsel %vm1589, %v2698, %v2699
      %v2701 = vrot.slane %v2661, 1
      %v2702 = vrot.slane %v2405, 1
      %v2703 = vsel %vm1589, %v2701, %v2702
      %v2704 = vrot.slane %v2662, 1
      %v2705 = vrot.slane %v2406, 1
      %v2706 = vsel %vm1589, %v2704, %v2705
      %v2707 = vrot.slane %v2663, 1
      %v2708 = vrot.slane %v2407, 1
      %v2709 = vsel %vm1589, %v2707, %v2708
      %v2710 = vrot.slane %v2664, 1
      %v2711 = vrot.slane %v2408, 1
      %v2712 = vsel %vm1589, %v2710, %v2711
      %s2729 = scalar_lea.vmem %s2, 192
      %v2730 = vld [vmem:[%s2729] sm:$0xf]
      %v2731 = vld [vmem:[%s2729 + $0x4] sm:$0xf]
      %v2732 = vld [vmem:[%s2729 + $0x8] sm:$0xf]
      %v2733 = vld [vmem:[%s2729 + $0xc] sm:$0xf]
      %v2734 = vld [vmem:[%s2729 + $0x10] sm:$0xf]
      %v2735 = vld [vmem:[%s2729 + $0x14] sm:$0xf]
      %v2736 = vld [vmem:[%s2729 + $0x18] sm:$0xf]
      %v2737 = vld [vmem:[%s2729 + $0x1c] sm:$0xf]
      %v2738 = vld [vmem:[%s2729 + $0x20] sm:$0xf]
      %v2739 = vld [vmem:[%s2729 + $0x24] sm:$0xf]
      %v2740 = vld [vmem:[%s2729 + $0x28] sm:$0xf]
      %v2741 = vld [vmem:[%s2729 + $0x2c] sm:$0xf]
      %v2742 = vld [vmem:[%s2729 + $0x30] sm:$0xf]
      %v2743 = vld [vmem:[%s2729 + $0x34] sm:$0xf]
      %v2744 = vld [vmem:[%s2729 + $0x38] sm:$0xf]
      %v2745 = vld [vmem:[%s2729 + $0x3c] sm:$0xf]
      %v2746 = vld [vmem:[%s2729 + $0x40] sm:$0xf]
      %v2747 = vld [vmem:[%s2729 + $0x44] sm:$0xf]
      %v2748 = vld [vmem:[%s2729 + $0x48] sm:$0xf]
      %v2749 = vld [vmem:[%s2729 + $0x4c] sm:$0xf]
      %v2750 = vld [vmem:[%s2729 + $0x50] sm:$0xf]
      %v2751 = vld [vmem:[%s2729 + $0x54] sm:$0xf]
      %v2752 = vld [vmem:[%s2729 + $0x58] sm:$0xf]
      %v2753 = vld [vmem:[%s2729 + $0x5c] sm:$0xf]
      %v2754 = vld [vmem:[%s2729 + $0x60] sm:$0xf]
      %v2755 = vld [vmem:[%s2729 + $0x64] sm:$0xf]
      %v2756 = vld [vmem:[%s2729 + $0x68] sm:$0xf]
      %v2757 = vld [vmem:[%s2729 + $0x6c] sm:$0xf]
      %v2758 = vld [vmem:[%s2729 + $0x70] sm:$0xf]
      %v2759 = vld [vmem:[%s2729 + $0x74] sm:$0xf]
      %v2760 = vld [vmem:[%s2729 + $0x78] sm:$0xf]
      %v2761 = vld [vmem:[%s2729 + $0x7c] sm:$0xf]
      %v2762 = vld [vmem:[%s2729 + $0x80] sm:$0xf]
      %v2763 = vld [vmem:[%s2729 + $0x84] sm:$0xf]
      %v2764 = vld [vmem:[%s2729 + $0x88] sm:$0xf]
      %v2765 = vld [vmem:[%s2729 + $0x8c] sm:$0xf]
      %v2766 = vld [vmem:[%s2729 + $0x90] sm:$0xf]
      %v2767 = vld [vmem:[%s2729 + $0x94] sm:$0xf]
      %v2768 = vld [vmem:[%s2729 + $0x98] sm:$0xf]
      %v2769 = vld [vmem:[%s2729 + $0x9c] sm:$0xf]
      %v2770 = vld [vmem:[%s2729 + $0xa0] sm:$0xf]
      %v2771 = vld [vmem:[%s2729 + $0xa4] sm:$0xf]
      %v2772 = vld [vmem:[%s2729 + $0xa8] sm:$0xf]
      %v2773 = vld [vmem:[%s2729 + $0xac] sm:$0xf]
      %v2774 = vld [vmem:[%s2729 + $0xb0] sm:$0xf]
      %v2775 = vld [vmem:[%s2729 + $0xb4] sm:$0xf]
      %v2776 = vld [vmem:[%s2729 + $0xb8] sm:$0xf]
      %v2777 = vld [vmem:[%s2729 + $0xbc] sm:$0xf]
      %v2826 = vunpack.c.l.b16 %v2730
      %v2827 = vunpack.c.l.b16 %v2731
      %v2828 = vunpack.c.l.b16 %v2732
      %v2829 = vunpack.c.l.b16 %v2733
      %v2830 = vunpack.c.l.b16 %v2734
      %v2831 = vunpack.c.l.b16 %v2735
      %v2832 = vunpack.c.l.b16 %v2736
      %v2833 = vunpack.c.l.b16 %v2737
      %v2834 = vunpack.c.l.b16 %v2738
      %v2835 = vunpack.c.l.b16 %v2739
      %v2836 = vunpack.c.l.b16 %v2740
      %v2837 = vunpack.c.l.b16 %v2741
      %v2838 = vunpack.c.l.b16 %v2742
      %v2839 = vunpack.c.l.b16 %v2743
      %v2840 = vunpack.c.l.b16 %v2744
      %v2841 = vunpack.c.l.b16 %v2745
      %v2842 = vunpack.c.l.b16 %v2746
      %v2843 = vunpack.c.l.b16 %v2747
      %v2844 = vunpack.c.l.b16 %v2748
      %v2845 = vunpack.c.l.b16 %v2749
      %v2846 = vunpack.c.l.b16 %v2750
      %v2847 = vunpack.c.l.b16 %v2751
      %v2848 = vunpack.c.l.b16 %v2752
      %v2849 = vunpack.c.l.b16 %v2753
      %v2850 = vunpack.c.l.b16 %v2754
      %v2851 = vunpack.c.l.b16 %v2755
      %v2852 = vunpack.c.l.b16 %v2756
      %v2853 = vunpack.c.l.b16 %v2757
      %v2854 = vunpack.c.l.b16 %v2758
      %v2855 = vunpack.c.l.b16 %v2759
      %v2856 = vunpack.c.l.b16 %v2760
      %v2857 = vunpack.c.l.b16 %v2761
      %v2858 = vunpack.c.l.b16 %v2762
      %v2859 = vunpack.c.l.b16 %v2763
      %v2860 = vunpack.c.l.b16 %v2764
      %v2861 = vunpack.c.l.b16 %v2765
      %v2862 = vunpack.c.l.b16 %v2766
      %v2863 = vunpack.c.l.b16 %v2767
      %v2864 = vunpack.c.l.b16 %v2768
      %v2865 = vunpack.c.l.b16 %v2769
      %v2866 = vunpack.c.l.b16 %v2770
      %v2867 = vunpack.c.l.b16 %v2771
      %v2868 = vunpack.c.l.b16 %v2772
      %v2869 = vunpack.c.l.b16 %v2773
      %v2870 = vunpack.c.l.b16 %v2774
      %v2871 = vunpack.c.l.b16 %v2775
      %v2872 = vunpack.c.l.b16 %v2776
      %v2873 = vunpack.c.l.b16 %v2777
      %v2874 = vpack.c.b16 %v2827, %v2826
      %v2875 = vpack.c.b16 %v2829, %v2828
      %v2876 = vpack.c.b16 %v2831, %v2830
      %v2877 = vpack.c.b16 %v2833, %v2832
      %v2878 = vpack.c.b16 %v2835, %v2834
      %v2879 = vpack.c.b16 %v2837, %v2836
      %v2880 = vpack.c.b16 %v2839, %v2838
      %v2881 = vpack.c.b16 %v2841, %v2840
      %v2882 = vpack.c.b16 %v2843, %v2842
      %v2883 = vpack.c.b16 %v2845, %v2844
      %v2884 = vpack.c.b16 %v2847, %v2846
      %v2885 = vpack.c.b16 %v2849, %v2848
      %v2886 = vpack.c.b16 %v2851, %v2850
      %v2887 = vpack.c.b16 %v2853, %v2852
      %v2888 = vpack.c.b16 %v2855, %v2854
      %v2889 = vpack.c.b16 %v2857, %v2856
      %v2890 = vpack.c.b16 %v2859, %v2858
      %v2891 = vpack.c.b16 %v2861, %v2860
      %v2892 = vpack.c.b16 %v2863, %v2862
      %v2893 = vpack.c.b16 %v2865, %v2864
      %v2894 = vpack.c.b16 %v2867, %v2866
      %v2895 = vpack.c.b16 %v2869, %v2868
      %v2896 = vpack.c.b16 %v2871, %v2870
      %v2897 = vpack.c.b16 %v2873, %v2872
      %2922 = vmatprep.subr.bf16.mxu0 0
      %2923 = vmatpush1.bf16.msra.mxu0 %v2874
      %2924 = vmatprep.subr.bf16.mxu0 0
      %2925 = vmatpush1.bf16.msra.mxu0 %v2875
      %2926 = vmatprep.subr.bf16.mxu0 0
      %2927 = vmatpush1.bf16.msra.mxu0 %v2876
      %2928 = vmatprep.subr.bf16.mxu0 0
      %2929 = vmatpush1.bf16.msra.mxu0 %v2877
      %2930 = vmatprep.subr.bf16.mxu0 0
      %2931 = vmatpush1.bf16.msra.mxu0 %v2878
      %2932 = vmatprep.subr.bf16.mxu0 0
      %2933 = vmatpush1.bf16.msra.mxu0 %v2879
      %2934 = vmatprep.subr.bf16.mxu0 0
      %2935 = vmatpush1.bf16.msra.mxu0 %v2880
      %2936 = vmatprep.subr.bf16.mxu0 0
      %2937 = vmatpush1.bf16.msra.mxu0 %v2881
      %2938 = vmatprep.subr.bf16.mxu0 0
      %2939 = vmatpush1.bf16.msra.mxu0 %v2882
      %2940 = vmatprep.subr.bf16.mxu0 0
      %2941 = vmatpush1.bf16.msra.mxu0 %v2883
      %2942 = vmatprep.subr.bf16.mxu0 0
      %2943 = vmatpush1.bf16.msra.mxu0 %v2884
      %2944 = vmatprep.subr.bf16.mxu0 0
      %2945 = vmatpush1.bf16.msra.mxu0 %v2885
      %2946 = vmatprep.subr.bf16.mxu0 0
      %2947 = vmatpush1.bf16.msra.mxu0 %v2886
      %2948 = vmatprep.subr.bf16.mxu0 0
      %2949 = vmatpush1.bf16.msra.mxu0 %v2887
      %2950 = vmatprep.subr.bf16.mxu0 0
      %2951 = vmatpush1.bf16.msra.mxu0 %v2888
      %2952 = vmatprep.subr.bf16.mxu0 0
      %2953 = vmatpush1.bf16.msra.mxu0 %v2889
      %2954 = vmatprep.mubr.bf16.mxu0 %v2420
      %2955 = vmatmul.mubr.bf16.gmra.mrb[0].mxu0 %v2329
      %v2956 = vpop.f32.mrb[0].mxu0
      %v2957 = vadd.f32 0.0, %v2956
      %v2958 = vpop.f32.mrb[0].mxu0
      %v2959 = vpop.f32.mrb[0].mxu0
      %v2960 = vadd.f32 0.0, %v2959
      %v2961 = vpop.f32.mrb[0].mxu0
      %2962 = vmatprep.mubr.bf16.mxu0 %v2432
      %2963 = vmatmul.mubr.bf16.gmra.mrb[0].mxu0 %v2330
      %v2964 = vpop.f32.mrb[0].mxu0
      %v2965 = vadd.f32 0.0, %v2964
      %v2966 = vpop.f32.mrb[0].mxu0
      %v2967 = vpop.f32.mrb[0].mxu0
      %v2968 = vadd.f32 0.0, %v2967
      %v2969 = vpop.f32.mrb[0].mxu0
      %2970 = vmatprep.mubr.bf16.mxu0 %v2444
      %2971 = vmatmul.mubr.bf16.gmra.mrb[0].mxu0 %v2331
      %v2972 = vpop.f32.mrb[0].mxu0
      %v2973 = vadd.f32 0.0, %v2972
      %v2974 = vpop.f32.mrb[0].mxu0
      %v2975 = vpop.f32.mrb[0].mxu0
      %v2976 = vadd.f32 0.0, %v2975
      %v2977 = vpop.f32.mrb[0].mxu0
      %2978 = vmatprep.mubr.bf16.mxu0 %v2456
      %2979 = vmatmul.mubr.bf16.gmra.mrb[0].mxu0 %v2332
      %v2980 = vpop.f32.mrb[0].mxu0
      %v2981 = vadd.f32 0.0, %v2980
      %v2982 = vpop.f32.mrb[0].mxu0
      %v2983 = vpop.f32.mrb[0].mxu0
      %v2984 = vadd.f32 0.0, %v2983
      %v2985 = vpop.f32.mrb[0].mxu0
      %2986 = vmatprep.mubr.bf16.mxu0 %v2468
      %2987 = vmatmul.mubr.bf16.gmra.mrb[0].mxu0 %v2333
      %v2988 = vpop.f32.mrb[0].mxu0
      %v2989 = vadd.f32 0.0, %v2988
      %v2990 = vpop.f32.mrb[0].mxu0
      %v2991 = vpop.f32.mrb[0].mxu0
      %v2992 = vadd.f32 0.0, %v2991
      %v2993 = vpop.f32.mrb[0].mxu0
      %2994 = vmatprep.mubr.bf16.mxu0 %v2480
      %2995 = vmatmul.mubr.bf16.gmra.mrb[0].mxu0 %v2334
      %v2996 = vpop.f32.mrb[0].mxu0
      %v2997 = vadd.f32 0.0, %v2996
      %v2998 = vpop.f32.mrb[0].mxu0
      %v2999 = vpop.f32.mrb[0].mxu0
      %v3000 = vadd.f32 0.0, %v2999
      %v3001 = vpop.f32.mrb[0].mxu0
      %3002 = vmatprep.mubr.bf16.mxu0 %v2492
      %3003 = vmatmul.mubr.bf16.gmra.mrb[0].mxu0 %v2335
      %v3004 = vpop.f32.mrb[0].mxu0
      %v3005 = vadd.f32 0.0, %v3004
      %v3006 = vpop.f32.mrb[0].mxu0
      %v3007 = vpop.f32.mrb[0].mxu0
      %v3008 = vadd.f32 0.0, %v3007
      %v3009 = vpop.f32.mrb[0].mxu0
      %3010 = vmatprep.mubr.bf16.mxu0 %v2504
      %3011 = vmatmul.mubr.bf16.gmra.mrb[0].mxu0 %v2336
      %v3012 = vpop.f32.mrb[0].mxu0
      %v3013 = vadd.f32 0.0, %v3012
      %v3014 = vpop.f32.mrb[0].mxu0
      %v3015 = vpop.f32.mrb[0].mxu0
      %v3016 = vadd.f32 0.0, %v3015
      %v3017 = vpop.f32.mrb[0].mxu0
      %3018 = vmatprep.mubr.bf16.mxu0 %v2516
      %3019 = vmatmul.mubr.bf16.gmra.mrb[0].mxu0 %v2337
      %v3020 = vpop.f32.mrb[0].mxu0
      %v3021 = vadd.f32 0.0, %v3020
      %v3022 = vpop.f32.mrb[0].mxu0
      %v3023 = vpop.f32.mrb[0].mxu0
      %v3024 = vadd.f32 0.0, %v3023
      %v3025 = vpop.f32.mrb[0].mxu0
      %3026 = vmatprep.mubr.bf16.mxu0 %v2528
      %3027 = vmatmul.mubr.bf16.gmra.mrb[0].mxu0 %v2338
      %v3028 = vpop.f32.mrb[0].mxu0
      %v3029 = vadd.f32 0.0, %v3028
      %v3030 = vpop.f32.mrb[0].mxu0
      %v3031 = vpop.f32.mrb[0].mxu0
      %v3032 = vadd.f32 0.0, %v3031
      %v3033 = vpop.f32.mrb[0].mxu0
      %3034 = vmatprep.mubr.bf16.mxu0 %v2540
      %3035 = vmatmul.mubr.bf16.gmra.mrb[0].mxu0 %v2339
      %v3036 = vpop.f32.mrb[0].mxu0
      %v3037 = vadd.f32 0.0, %v3036
      %v3038 = vpop.f32.mrb[0].mxu0
      %v3039 = vpop.f32.mrb[0].mxu0
      %v3040 = vadd.f32 0.0, %v3039
      %v3041 = vpop.f32.mrb[0].mxu0
      %3042 = vmatprep.mubr.bf16.mxu0 %v2552
      %3043 = vmatmul.mubr.bf16.gmra.mrb[0].mxu0 %v2340
      %v3044 = vpop.f32.mrb[0].mxu0
      %v3045 = vadd.f32 0.0, %v3044
      %v3046 = vpop.f32.mrb[0].mxu0
      %v3047 = vpop.f32.mrb[0].mxu0
      %v3048 = vadd.f32 0.0, %v3047
      %v3049 = vpop.f32.mrb[0].mxu0
      %3050 = vmatprep.mubr.bf16.mxu0 %v2564
      %3051 = vmatmul.mubr.bf16.gmra.mrb[0].mxu0 %v2341
      %v3052 = vpop.f32.mrb[0].mxu0
      %v3053 = vadd.f32 0.0, %v3052
      %v3054 = vpop.f32.mrb[0].mxu0
      %v3055 = vpop.f32.mrb[0].mxu0
      %v3056 = vadd.f32 0.0, %v3055
      %v3057 = vpop.f32.mrb[0].mxu0
      %3058 = vmatprep.mubr.bf16.mxu0 %v2576
      %3059 = vmatmul.mubr.bf16.gmra.mrb[0].mxu0 %v2342
      %v3060 = vpop.f32.mrb[0].mxu0
      %v3061 = vadd.f32 0.0, %v3060
      %v3062 = vpop.f32.mrb[0].mxu0
      %v3063 = vpop.f32.mrb[0].mxu0
      %v3064 = vadd.f32 0.0, %v3063
      %v3065 = vpop.f32.mrb[0].mxu0
      %3066 = vmatprep.mubr.bf16.mxu0 %v2588
      %3067 = vmatmul.mubr.bf16.gmra.mrb[0].mxu0 %v2343
      %v3068 = vpop.f32.mrb[0].mxu0
      %v3069 = vadd.f32 0.0, %v3068
      %v3070 = vpop.f32.mrb[0].mxu0
      %v3071 = vpop.f32.mrb[0].mxu0
      %v3072 = vadd.f32 0.0, %v3071
      %v3073 = vpop.f32.mrb[0].mxu0
      %3074 = vmatprep.mubr.bf16.mxu0 %v2600
      %3075 = vmatmul.mubr.bf16.gmra.mrb[0].mxu0 %v2344
      %v3076 = vpop.f32.mrb[0].mxu0
      %v3077 = vadd.f32 0.0, %v3076
      %v3078 = vpop.f32.mrb[0].mxu0
      %v3079 = vpop.f32.mrb[0].mxu0
      %v3080 = vadd.f32 0.0, %v3079
      %v3081 = vpop.f32.mrb[0].mxu0
      %3082 = vdwg.mxu0
      %3083 = vmatprep.subr.bf16.mxu0 0
      %3084 = vmatpush1.bf16.msra.mxu0 %v2890
      %3085 = vmatprep.subr.bf16.mxu0 0
      %3086 = vmatpush1.bf16.msra.mxu0 %v2891
      %3087 = vmatprep.subr.bf16.mxu0 0
      %3088 = vmatpush1.bf16.msra.mxu0 %v2892
      %3089 = vmatprep.subr.bf16.mxu0 0
      %3090 = vmatpush1.bf16.msra.mxu0 %v2893
      %3091 = vmatprep.subr.bf16.mxu0 0
      %3092 = vmatpush1.bf16.msra.mxu0 %v2894
      %3093 = vmatprep.subr.bf16.mxu0 0
      %3094 = vmatpush1.bf16.msra.mxu0 %v2895
      %3095 = vmatprep.subr.bf16.mxu0 0
      %3096 = vmatpush1.bf16.msra.mxu0 %v2896
      %3097 = vmatprep.subr.bf16.mxu0 0
      %3098 = vmatpush1.bf16.msra.mxu0 %v2897
      %3099 = vmatprep.subr.bf16.mxu0 0
      %3100 = vmatpush1.bf16.msra.mxu0 0
      %3101 = vmatprep.subr.bf16.mxu0 0
      %3102 = vmatpush1.bf16.msra.mxu0 0
      %3103 = vmatprep.subr.bf16.mxu0 0
      %3104 = vmatpush1.bf16.msra.mxu0 0
      %3105 = vmatprep.subr.bf16.mxu0 0
      %3106 = vmatpush1.bf16.msra.mxu0 0
      %3107 = vmatprep.subr.bf16.mxu0 0
      %3108 = vmatpush1.bf16.msra.mxu0 0
      %3109 = vmatprep.subr.bf16.mxu0 0
      %3110 = vmatpush1.bf16.msra.mxu0 0
      %3111 = vmatprep.subr.bf16.mxu0 0
      %3112 = vmatpush1.bf16.msra.mxu0 0
      %3113 = vmatprep.subr.bf16.mxu0 0
      %3114 = vmatpush1.bf16.msra.mxu0 0
      %3115 = vmatprep.mubr.bf16.mxu0 0
      %3116 = vmatmul.mubr.bf16.gmra.mrb[0].mxu0 %v2667
      %v3117 = vpop.f32.mrb[0].mxu0
      %v3118 = vadd.f32 %v2957, %v3117
      %v3119 = vpop.f32.mrb[0].mxu0
      %v3120 = vpop.f32.mrb[0].mxu0
      %v3121 = vadd.f32 %v2960, %v3120
      %v3122 = vpop.f32.mrb[0].mxu0
      %3123 = vmatprep.mubr.bf16.mxu0 0
      %3124 = vmatmul.mubr.bf16.gmra.mrb[0].mxu0 %v2670
      %v3125 = vpop.f32.mrb[0].mxu0
      %v3126 = vadd.f32 %v2965, %v3125
      %v3127 = vpop.f32.mrb[0].mxu0
      %v3128 = vpop.f32.mrb[0].mxu0
      %v3129 = vadd.f32 %v2968, %v3128
      %v3130 = vpop.f32.mrb[0].mxu0
      %3131 = vmatprep.mubr.bf16.mxu0 0
      %3132 = vmatmul.mubr.bf16.gmra.mrb[0].mxu0 %v2673
      %v3133 = vpop.f32.mrb[0].mxu0
      %v3134 = vadd.f32 %v2973, %v3133
      %v3135 = vpop.f32.mrb[0].mxu0
      %v3136 = vpop.f32.mrb[0].mxu0
      %v3137 = vadd.f32 %v2976, %v3136
      %v3138 = vpop.f32.mrb[0].mxu0
      %3139 = vmatprep.mubr.bf16.mxu0 0
      %3140 = vmatmul.mubr.bf16.gmra.mrb[0].mxu0 %v2676
      %v3141 = vpop.f32.mrb[0].mxu0
      %v3142 = vadd.f32 %v2981, %v3141
      %v3143 = vpop.f32.mrb[0].mxu0
      %v3144 = vpop.f32.mrb[0].mxu0
      %v3145 = vadd.f32 %v2984, %v3144
      %v3146 = vpop.f32.mrb[0].mxu0
      %3147 = vmatprep.mubr.bf16.mxu0 0
      %3148 = vmatmul.mubr.bf16.gmra.mrb[0].mxu0 %v2679
      %v3149 = vpop.f32.mrb[0].mxu0
      %v3150 = vadd.f32 %v2989, %v3149
      %v3151 = vpop.f32.mrb[0].mxu0
      %v3152 = vpop.f32.mrb[0].mxu0
      %v3153 = vadd.f32 %v2992, %v3152
      %v3154 = vpop.f32.mrb[0].mxu0
      %3155 = vmatprep.mubr.bf16.mxu0 0
      %3156 = vmatmul.mubr.bf16.gmra.mrb[0].mxu0 %v2682
      %v3157 = vpop.f32.mrb[0].mxu0
      %v3158 = vadd.f32 %v2997, %v3157
      %v3159 = vpop.f32.mrb[0].mxu0
      %v3160 = vpop.f32.mrb[0].mxu0
      %v3161 = vadd.f32 %v3000, %v3160
      %v3162 = vpop.f32.mrb[0].mxu0
      %3163 = vmatprep.mubr.bf16.mxu0 0
      %3164 = vmatmul.mubr.bf16.gmra.mrb[0].mxu0 %v2685
      %v3165 = vpop.f32.mrb[0].mxu0
      %v3166 = vadd.f32 %v3005, %v3165
      %v3167 = vpop.f32.mrb[0].mxu0
      %v3168 = vpop.f32.mrb[0].mxu0
      %v3169 = vadd.f32 %v3008, %v3168
      %v3170 = vpop.f32.mrb[0].mxu0
      %3171 = vmatprep.mubr.bf16.mxu0 0
      %3172 = vmatmul.mubr.bf16.gmra.mrb[0].mxu0 %v2688
      %v3173 = vpop.f32.mrb[0].mxu0
      %v3174 = vadd.f32 %v3013, %v3173
      %v3175 = vpop.f32.mrb[0].mxu0
      %v3176 = vpop.f32.mrb[0].mxu0
      %v3177 = vadd.f32 %v3016, %v3176
      %v3178 = vpop.f32.mrb[0].mxu0
      %3179 = vmatprep.mubr.bf16.mxu0 0
      %3180 = vmatmul.mubr.bf16.gmra.mrb[0].mxu0 %v2691
      %v3181 = vpop.f32.mrb[0].mxu0
      %v3182 = vadd.f32 %v3021, %v3181
      %v3183 = vpop.f32.mrb[0].mxu0
      %v3184 = vpop.f32.mrb[0].mxu0
      %v3185 = vadd.f32 %v3024, %v3184
      %v3186 = vpop.f32.mrb[0].mxu0
      %3187 = vmatprep.mubr.bf16.mxu0 0
      %3188 = vmatmul.mubr.bf16.gmra.mrb[0].mxu0 %v2694
      %v3189 = vpop.f32.mrb[0].mxu0
      %v3190 = vadd.f32 %v3029, %v3189
      %v3191 = vpop.f32.mrb[0].mxu0
      %v3192 = vpop.f32.mrb[0].mxu0
      %v3193 = vadd.f32 %v3032, %v3192
      %v3194 = vpop.f32.mrb[0].mxu0
      %3195 = vmatprep.mubr.bf16.mxu0 0
      %3196 = vmatmul.mubr.bf16.gmra.mrb[0].mxu0 %v2697
      %v3197 = vpop.f32.mrb[0].mxu0
      %v3198 = vadd.f32 %v3037, %v3197
      %v3199 = vpop.f32.mrb[0].mxu0
      %v3200 = vpop.f32.mrb[0].mxu0
      %v3201 = vadd.f32 %v3040, %v3200
      %v3202 = vpop.f32.mrb[0].mxu0
      %3203 = vmatprep.mubr.bf16.mxu0 0
      %3204 = vmatmul.mubr.bf16.gmra.mrb[0].mxu0 %v2700
      %v3205 = vpop.f32.mrb[0].mxu0
      %v3206 = vadd.f32 %v3045, %v3205
      %v3207 = vpop.f32.mrb[0].mxu0
      %v3208 = vpop.f32.mrb[0].mxu0
      %v3209 = vadd.f32 %v3048, %v3208
      %v3210 = vpop.f32.mrb[0].mxu0
      %3211 = vmatprep.mubr.bf16.mxu0 0
      %3212 = vmatmul.mubr.bf16.gmra.mrb[0].mxu0 %v2703
      %v3213 = vpop.f32.mrb[0].mxu0
      %v3214 = vadd.f32 %v3053, %v3213
      %v3215 = vpop.f32.mrb[0].mxu0
      %v3216 = vpop.f32.mrb[0].mxu0
      %v3217 = vadd.f32 %v3056, %v3216
      %v3218 = vpop.f32.mrb[0].mxu0
      %3219 = vmatprep.mubr.bf16.mxu0 0
      %3220 = vmatmul.mubr.bf16.gmra.mrb[0].mxu0 %v2706
      %v3221 = vpop.f32.mrb[0].mxu0
      %v3222 = vadd.f32 %v3061, %v3221
      %v3223 = vpop.f32.mrb[0].mxu0
      %v3224 = vpop.f32.mrb[0].mxu0
      %v3225 = vadd.f32 %v3064, %v3224
      %v3226 = vpop.f32.mrb[0].mxu0
      %3227 = vmatprep.mubr.bf16.mxu0 0
      %3228 = vmatmul.mubr.bf16.gmra.mrb[0].mxu0 %v2709
      %v3229 = vpop.f32.mrb[0].mxu0
      %v3230 = vadd.f32 %v3069, %v3229
      %v3231 = vpop.f32.mrb[0].mxu0
      %v3232 = vpop.f32.mrb[0].mxu0
      %v3233 = vadd.f32 %v3072, %v3232
      %v3234 = vpop.f32.mrb[0].mxu0
      %3235 = vmatprep.mubr.bf16.mxu0 0
      %3236 = vmatmul.mubr.bf16.gmra.mrb[0].mxu0 %v2712
      %v3237 = vpop.f32.mrb[0].mxu0
      %v3238 = vadd.f32 %v3077, %v3237
      %v3239 = vpop.f32.mrb[0].mxu0
      %v3240 = vpop.f32.mrb[0].mxu0
      %v3241 = vadd.f32 %v3080, %v3240
      %v3242 = vpop.f32.mrb[0].mxu0
      %3243 = vdwg.mxu0
      %v3244 = vadd.f32 %v2168, %v3118
      %v3245 = vadd.f32 %v2169, %v3121
      %v3246 = vadd.f32 %v2170, %v3126
      %v3247 = vadd.f32 %v2171, %v3129
      %v3248 = vadd.f32 %v2172, %v3134
      %v3249 = vadd.f32 %v2173, %v3137
      %v3250 = vadd.f32 %v2174, %v3142
      %v3251 = vadd.f32 %v2175, %v3145
      %v3252 = vadd.f32 %v2176, %v3150
      %v3253 = vadd.f32 %v2177, %v3153
      %v3254 = vadd.f32 %v2178, %v3158
      %v3255 = vadd.f32 %v2179, %v3161
      %v3256 = vadd.f32 %v2180, %v3166
      %v3257 = vadd.f32 %v2181, %v3169
      %v3258 = vadd.f32 %v2182, %v3174
      %v3259 = vadd.f32 %v2183, %v3177
      %v3260 = vadd.f32 %v2184, %v3182
      %v3261 = vadd.f32 %v2185, %v3185
      %v3262 = vadd.f32 %v2186, %v3190
      %v3263 = vadd.f32 %v2187, %v3193
      %v3264 = vadd.f32 %v2188, %v3198
      %v3265 = vadd.f32 %v2189, %v3201
      %v3266 = vadd.f32 %v2190, %v3206
      %v3267 = vadd.f32 %v2191, %v3209
      %v3268 = vadd.f32 %v2192, %v3214
      %v3269 = vadd.f32 %v2193, %v3217
      %v3270 = vadd.f32 %v2194, %v3222
      %v3271 = vadd.f32 %v2195, %v3225
      %v3272 = vadd.f32 %v2196, %v3230
      %v3273 = vadd.f32 %v2197, %v3233
      %v3274 = vadd.f32 %v2198, %v3238
      %v3275 = vadd.f32 %v2199, %v3241
      %s3276 = scalar_lea.vmem [#allocation2], 24
      %v3277 = vld [vmem:[%s3276] sm:$0xf]
      %v3278 = vld [vmem:[%s3276 + $0x4] sm:$0xf]
      %v3279 = vld [vmem:[%s3276 + $0xc] sm:$0xf]
      %v3280 = vld [vmem:[%s3276 + $0x10] sm:$0xf]
      %v3281 = vld [vmem:[%s3276 + $0x18] sm:$0xf]
      %v3282 = vld [vmem:[%s3276 + $0x1c] sm:$0xf]
      %v3283 = vld [vmem:[%s3276 + $0x24] sm:$0xf]
      %v3284 = vld [vmem:[%s3276 + $0x28] sm:$0xf]
      %v3285 = vld [vmem:[%s3276 + $0x30] sm:$0xf]
      %v3286 = vld [vmem:[%s3276 + $0x34] sm:$0xf]
      %v3287 = vld [vmem:[%s3276 + $0x3c] sm:$0xf]
      %v3288 = vld [vmem:[%s3276 + $0x40] sm:$0xf]
      %v3289 = vld [vmem:[%s3276 + $0x48] sm:$0xf]
      %v3290 = vld [vmem:[%s3276 + $0x4c] sm:$0xf]
      %v3291 = vld [vmem:[%s3276 + $0x54] sm:$0xf]
      %v3292 = vld [vmem:[%s3276 + $0x58] sm:$0xf]
      %v3293 = vld [vmem:[%s3276 + $0x60] sm:$0xf]
      %v3294 = vld [vmem:[%s3276 + $0x64] sm:$0xf]
      %v3295 = vld [vmem:[%s3276 + $0x6c] sm:$0xf]
      %v3296 = vld [vmem:[%s3276 + $0x70] sm:$0xf]
      %v3297 = vld [vmem:[%s3276 + $0x78] sm:$0xf]
      %v3298 = vld [vmem:[%s3276 + $0x7c] sm:$0xf]
      %v3299 = vld [vmem:[%s3276 + $0x84] sm:$0xf]
      %v3300 = vld [vmem:[%s3276 + $0x88] sm:$0xf]
      %v3301 = vld [vmem:[%s3276 + $0x90] sm:$0xf]
      %v3302 = vld [vmem:[%s3276 + $0x94] sm:$0xf]
      %v3303 = vld [vmem:[%s3276 + $0x9c] sm:$0xf]
      %v3304 = vld [vmem:[%s3276 + $0xa0] sm:$0xf]
      %v3305 = vld [vmem:[%s3276 + $0xa8] sm:$0xf]
      %v3306 = vld [vmem:[%s3276 + $0xac] sm:$0xf]
      %v3307 = vld [vmem:[%s3276 + $0xb4] sm:$0xf]
      %v3308 = vld [vmem:[%s3276 + $0xb8] sm:$0xf]
      %v3309 = vld [vmem:[%s3276 + $0x8] sm:$0x1]
      %v3310 = vld [vmem:[%s3276 + $0x14] sm:$0x1]
      %v3311 = vld [vmem:[%s3276 + $0x20] sm:$0x1]
      %v3312 = vld [vmem:[%s3276 + $0x2c] sm:$0x1]
      %v3313 = vld [vmem:[%s3276 + $0x38] sm:$0x1]
      %v3314 = vld [vmem:[%s3276 + $0x44] sm:$0x1]
      %v3315 = vld [vmem:[%s3276 + $0x50] sm:$0x1]
      %v3316 = vld [vmem:[%s3276 + $0x5c] sm:$0x1]
      %v3317 = vld [vmem:[%s3276 + $0x68] sm:$0x1]
      %v3318 = vld [vmem:[%s3276 + $0x74] sm:$0x1]
      %v3319 = vld [vmem:[%s3276 + $0x80] sm:$0x1]
      %v3320 = vld [vmem:[%s3276 + $0x8c] sm:$0x1]
      %v3321 = vld [vmem:[%s3276 + $0x98] sm:$0x1]
      %v3322 = vld [vmem:[%s3276 + $0xa4] sm:$0x1]
      %v3323 = vld [vmem:[%s3276 + $0xb0] sm:$0x1]
      %v3324 = vld [vmem:[%s3276 + $0xbc] sm:$0x1]
      %v3325 = vld [vmem:[%s3276] sm:$0xe]
      %v3326 = vld [vmem:[%s3276 + $0xc] sm:$0xe]
      %v3327 = vld [vmem:[%s3276 + $0x18] sm:$0xe]
      %v3328 = vld [vmem:[%s3276 + $0x24] sm:$0xe]
      %v3329 = vld [vmem:[%s3276 + $0x30] sm:$0xe]
      %v3330 = vld [vmem:[%s3276 + $0x3c] sm:$0xe]
      %v3331 = vld [vmem:[%s3276 + $0x48] sm:$0xe]
      %v3332 = vld [vmem:[%s3276 + $0x54] sm:$0xe]
      %v3333 = vld [vmem:[%s3276 + $0x60] sm:$0xe]
      %v3334 = vld [vmem:[%s3276 + $0x6c] sm:$0xe]
      %v3335 = vld [vmem:[%s3276 + $0x78] sm:$0xe]
      %v3336 = vld [vmem:[%s3276 + $0x84] sm:$0xe]
      %v3337 = vld [vmem:[%s3276 + $0x90] sm:$0xe]
      %v3338 = vld [vmem:[%s3276 + $0x9c] sm:$0xe]
      %v3339 = vld [vmem:[%s3276 + $0xa8] sm:$0xe]
      %v3340 = vld [vmem:[%s3276 + $0xb4] sm:$0xe]
      %v3373 = vunpack.c.l.b16 %v3277
      %v3374 = vunpack.c.l.b16 %v3278
      %v3375 = vunpack.c.l.b16 %v3279
      %v3376 = vunpack.c.l.b16 %v3280
      %v3377 = vunpack.c.l.b16 %v3281
      %v3378 = vunpack.c.l.b16 %v3282
      %v3379 = vunpack.c.l.b16 %v3283
      %v3380 = vunpack.c.l.b16 %v3284
      %v3381 = vunpack.c.l.b16 %v3285
      %v3382 = vunpack.c.l.b16 %v3286
      %v3383 = vunpack.c.l.b16 %v3287
      %v3384 = vunpack.c.l.b16 %v3288
      %v3385 = vunpack.c.l.b16 %v3289
      %v3386 = vunpack.c.l.b16 %v3290
      %v3387 = vunpack.c.l.b16 %v3291
      %v3388 = vunpack.c.l.b16 %v3292
      %v3389 = vunpack.c.l.b16 %v3293
      %v3390 = vunpack.c.l.b16 %v3294
      %v3391 = vunpack.c.l.b16 %v3295
      %v3392 = vunpack.c.l.b16 %v3296
      %v3393 = vunpack.c.l.b16 %v3297
      %v3394 = vunpack.c.l.b16 %v3298
      %v3395 = vunpack.c.l.b16 %v3299
      %v3396 = vunpack.c.l.b16 %v3300
      %v3397 = vunpack.c.l.b16 %v3301
      %v3398 = vunpack.c.l.b16 %v3302
      %v3399 = vunpack.c.l.b16 %v3303
      %v3400 = vunpack.c.l.b16 %v3304
      %v3401 = vunpack.c.l.b16 %v3305
      %v3402 = vunpack.c.l.b16 %v3306
      %v3403 = vunpack.c.l.b16 %v3307
      %v3404 = vunpack.c.l.b16 %v3308
      %v3405 = vpack.c.b16 %v3374, %v3373
      %v3406 = vpack.c.b16 %v3376, %v3375
      %v3407 = vpack.c.b16 %v3378, %v3377
      %v3408 = vpack.c.b16 %v3380, %v3379
      %v3409 = vpack.c.b16 %v3382, %v3381
      %v3410 = vpack.c.b16 %v3384, %v3383
      %v3411 = vpack.c.b16 %v3386, %v3385
      %v3412 = vpack.c.b16 %v3388, %v3387
      %v3413 = vpack.c.b16 %v3390, %v3389
      %v3414 = vpack.c.b16 %v3392, %v3391
      %v3415 = vpack.c.b16 %v3394, %v3393
      %v3416 = vpack.c.b16 %v3396, %v3395
      %v3417 = vpack.c.b16 %v3398, %v3397
      %v3418 = vpack.c.b16 %v3400, %v3399
      %v3419 = vpack.c.b16 %v3402, %v3401
      %v3420 = vpack.c.b16 %v3404, %v3403
      %v3453 = vunpack.c.l.b16 %v3309
      %v3454 = vunpack.c.l.b16 %v3310
      %v3455 = vunpack.c.l.b16 %v3311
      %v3456 = vunpack.c.l.b16 %v3312
      %v3457 = vunpack.c.l.b16 %v3313
      %v3458 = vunpack.c.l.b16 %v3314
      %v3459 = vunpack.c.l.b16 %v3315
      %v3460 = vunpack.c.l.b16 %v3316
      %v3461 = vunpack.c.l.b16 %v3317
      %v3462 = vunpack.c.l.b16 %v3318
      %v3463 = vunpack.c.l.b16 %v3319
      %v3464 = vunpack.c.l.b16 %v3320
      %v3465 = vunpack.c.l.b16 %v3321
      %v3466 = vunpack.c.l.b16 %v3322
      %v3467 = vunpack.c.l.b16 %v3323
      %v3468 = vunpack.c.l.b16 %v3324
      %v3469 = vpack.c.b16 %v3453, %v3453
      %v3470 = vpack.c.b16 %v3454, %v3454
      %v3471 = vpack.c.b16 %v3455, %v3455
      %v3472 = vpack.c.b16 %v3456, %v3456
      %v3473 = vpack.c.b16 %v3457, %v3457
      %v3474 = vpack.c.b16 %v3458, %v3458
      %v3475 = vpack.c.b16 %v3459, %v3459
      %v3476 = vpack.c.b16 %v3460, %v3460
      %v3477 = vpack.c.b16 %v3461, %v3461
      %v3478 = vpack.c.b16 %v3462, %v3462
      %v3479 = vpack.c.b16 %v3463, %v3463
      %v3480 = vpack.c.b16 %v3464, %v3464
      %v3481 = vpack.c.b16 %v3465, %v3465
      %v3482 = vpack.c.b16 %v3466, %v3466
      %v3483 = vpack.c.b16 %v3467, %v3467
      %v3484 = vpack.c.b16 %v3468, %v3468
      %v3486 = vshrl.u32 %v3405, 16
      %v3488 = vshll.u32 %v3405, 16
      %v3490 = vrot.slane %v3488, 1
      %v3491 = vor.u32 %v3486, %v3490
      %v3493 = vshll.u32 %v3469, 16
      %v3495 = vrot.slane %v3493, 1
      %v3496 = vsel %vm1332, %v3491, %v3495
      %v3498 = vshrl.u32 %v3406, 16
      %v3500 = vshll.u32 %v3406, 16
      %v3502 = vrot.slane %v3500, 1
      %v3503 = vor.u32 %v3498, %v3502
      %v3505 = vshll.u32 %v3470, 16
      %v3507 = vrot.slane %v3505, 1
      %v3508 = vsel %vm1332, %v3503, %v3507
      %v3510 = vshrl.u32 %v3407, 16
      %v3512 = vshll.u32 %v3407, 16
      %v3514 = vrot.slane %v3512, 1
      %v3515 = vor.u32 %v3510, %v3514
      %v3517 = vshll.u32 %v3471, 16
      %v3519 = vrot.slane %v3517, 1
      %v3520 = vsel %vm1332, %v3515, %v3519
      %v3522 = vshrl.u32 %v3408, 16
      %v3524 = vshll.u32 %v3408, 16
      %v3526 = vrot.slane %v3524, 1
      %v3527 = vor.u32 %v3522, %v3526
      %v3529 = vshll.u32 %v3472, 16
      %v3531 = vrot.slane %v3529, 1
      %v3532 = vsel %vm1332, %v3527, %v3531
      %v3534 = vshrl.u32 %v3409, 16
      %v3536 = vshll.u32 %v3409, 16
      %v3538 = vrot.slane %v3536, 1
      %v3539 = vor.u32 %v3534, %v3538
      %v3541 = vshll.u32 %v3473, 16
      %v3543 = vrot.slane %v3541, 1
      %v3544 = vsel %vm1332, %v3539, %v3543
      %v3546 = vshrl.u32 %v3410, 16
      %v3548 = vshll.u32 %v3410, 16
      %v3550 = vrot.slane %v3548, 1
      %v3551 = vor.u32 %v3546, %v3550
      %v3553 = vshll.u32 %v3474, 16
      %v3555 = vrot.slane %v3553, 1
      %v3556 = vsel %vm1332, %v3551, %v3555
      %v3558 = vshrl.u32 %v3411, 16
      %v3560 = vshll.u32 %v3411, 16
      %v3562 = vrot.slane %v3560, 1
      %v3563 = vor.u32 %v3558, %v3562
      %v3565 = vshll.u32 %v3475, 16
      %v3567 = vrot.slane %v3565, 1
      %v3568 = vsel %vm1332, %v3563, %v3567
      %v3570 = vshrl.u32 %v3412, 16
      %v3572 = vshll.u32 %v3412, 16
      %v3574 = vrot.slane %v3572, 1
      %v3575 = vor.u32 %v3570, %v3574
      %v3577 = vshll.u32 %v3476, 16
      %v3579 = vrot.slane %v3577, 1
      %v3580 = vsel %vm1332, %v3575, %v3579
      %v3582 = vshrl.u32 %v3413, 16
      %v3584 = vshll.u32 %v3413, 16
      %v3586 = vrot.slane %v3584, 1
      %v3587 = vor.u32 %v3582, %v3586
      %v3589 = vshll.u32 %v3477, 16
      %v3591 = vrot.slane %v3589, 1
      %v3592 = vsel %vm1332, %v3587, %v3591
      %v3594 = vshrl.u32 %v3414, 16
      %v3596 = vshll.u32 %v3414, 16
      %v3598 = vrot.slane %v3596, 1
      %v3599 = vor.u32 %v3594, %v3598
      %v3601 = vshll.u32 %v3478, 16
      %v3603 = vrot.slane %v3601, 1
      %v3604 = vsel %vm1332, %v3599, %v3603
      %v3606 = vshrl.u32 %v3415, 16
      %v3608 = vshll.u32 %v3415, 16
      %v3610 = vrot.slane %v3608, 1
      %v3611 = vor.u32 %v3606, %v3610
      %v3613 = vshll.u32 %v3479, 16
      %v3615 = vrot.slane %v3613, 1
      %v3616 = vsel %vm1332, %v3611, %v3615
      %v3618 = vshrl.u32 %v3416, 16
      %v3620 = vshll.u32 %v3416, 16
      %v3622 = vrot.slane %v3620, 1
      %v3623 = vor.u32 %v3618, %v3622
      %v3625 = vshll.u32 %v3480, 16
      %v3627 = vrot.slane %v3625, 1
      %v3628 = vsel %vm1332, %v3623, %v3627
      %v3630 = vshrl.u32 %v3417, 16
      %v3632 = vshll.u32 %v3417, 16
      %v3634 = vrot.slane %v3632, 1
      %v3635 = vor.u32 %v3630, %v3634
      %v3637 = vshll.u32 %v3481, 16
      %v3639 = vrot.slane %v3637, 1
      %v3640 = vsel %vm1332, %v3635, %v3639
      %v3642 = vshrl.u32 %v3418, 16
      %v3644 = vshll.u32 %v3418, 16
      %v3646 = vrot.slane %v3644, 1
      %v3647 = vor.u32 %v3642, %v3646
      %v3649 = vshll.u32 %v3482, 16
      %v3651 = vrot.slane %v3649, 1
      %v3652 = vsel %vm1332, %v3647, %v3651
      %v3654 = vshrl.u32 %v3419, 16
      %v3656 = vshll.u32 %v3419, 16
      %v3658 = vrot.slane %v3656, 1
      %v3659 = vor.u32 %v3654, %v3658
      %v3661 = vshll.u32 %v3483, 16
      %v3663 = vrot.slane %v3661, 1
      %v3664 = vsel %vm1332, %v3659, %v3663
      %v3666 = vshrl.u32 %v3420, 16
      %v3668 = vshll.u32 %v3420, 16
      %v3670 = vrot.slane %v3668, 1
      %v3671 = vor.u32 %v3666, %v3670
      %v3673 = vshll.u32 %v3484, 16
      %v3675 = vrot.slane %v3673, 1
      %v3676 = vsel %vm1332, %v3671, %v3675
      %v3709 = vunpack.c.l.b16 %v3325
      %v3710 = vunpack.c.l.b16 %v3326
      %v3711 = vunpack.c.l.b16 %v3327
      %v3712 = vunpack.c.l.b16 %v3328
      %v3713 = vunpack.c.l.b16 %v3329
      %v3714 = vunpack.c.l.b16 %v3330
      %v3715 = vunpack.c.l.b16 %v3331
      %v3716 = vunpack.c.l.b16 %v3332
      %v3717 = vunpack.c.l.b16 %v3333
      %v3718 = vunpack.c.l.b16 %v3334
      %v3719 = vunpack.c.l.b16 %v3335
      %v3720 = vunpack.c.l.b16 %v3336
      %v3721 = vunpack.c.l.b16 %v3337
      %v3722 = vunpack.c.l.b16 %v3338
      %v3723 = vunpack.c.l.b16 %v3339
      %v3724 = vunpack.c.l.b16 %v3340
      %v3725 = vpack.c.b16 %v3374, %v3709
      %v3726 = vpack.c.b16 %v3376, %v3710
      %v3727 = vpack.c.b16 %v3378, %v3711
      %v3728 = vpack.c.b16 %v3380, %v3712
      %v3729 = vpack.c.b16 %v3382, %v3713
      %v3730 = vpack.c.b16 %v3384, %v3714
      %v3731 = vpack.c.b16 %v3386, %v3715
      %v3732 = vpack.c.b16 %v3388, %v3716
      %v3733 = vpack.c.b16 %v3390, %v3717
      %v3734 = vpack.c.b16 %v3392, %v3718
      %v3735 = vpack.c.b16 %v3394, %v3719
      %v3736 = vpack.c.b16 %v3396, %v3720
      %v3737 = vpack.c.b16 %v3398, %v3721
      %v3738 = vpack.c.b16 %v3400, %v3722
      %v3739 = vpack.c.b16 %v3402, %v3723
      %v3740 = vpack.c.b16 %v3404, %v3724
      %v3741 = vrot.slane %v3725, 1
      %v3742 = vrot.slane %v3469, 1
      %v3743 = vsel %vm1589, %v3741, %v3742
      %v3744 = vrot.slane %v3726, 1
      %v3745 = vrot.slane %v3470, 1
      %v3746 = vsel %vm1589, %v3744, %v3745
      %v3747 = vrot.slane %v3727, 1
      %v3748 = vrot.slane %v3471, 1
      %v3749 = vsel %vm1589, %v3747, %v3748
      %v3750 = vrot.slane %v3728, 1
      %v3751 = vrot.slane %v3472, 1
      %v3752 = vsel %vm1589, %v3750, %v3751
      %v3753 = vrot.slane %v3729, 1
      %v3754 = vrot.slane %v3473, 1
      %v3755 = vsel %vm1589, %v3753, %v3754
      %v3756 = vrot.slane %v3730, 1
      %v3757 = vrot.slane %v3474, 1
      %v3758 = vsel %vm1589, %v3756, %v3757
      %v3759 = vrot.slane %v3731, 1
      %v3760 = vrot.slane %v3475, 1
      %v3761 = vsel %vm1589, %v3759, %v3760
      %v3762 = vrot.slane %v3732, 1
      %v3763 = vrot.slane %v3476, 1
      %v3764 = vsel %vm1589, %v3762, %v3763
      %v3765 = vrot.slane %v3733, 1
      %v3766 = vrot.slane %v3477, 1
      %v3767 = vsel %vm1589, %v3765, %v3766
      %v3768 = vrot.slane %v3734, 1
      %v3769 = vrot.slane %v3478, 1
      %v3770 = vsel %vm1589, %v3768, %v3769
      %v3771 = vrot.slane %v3735, 1
      %v3772 = vrot.slane %v3479, 1
      %v3773 = vsel %vm1589, %v3771, %v3772
      %v3774 = vrot.slane %v3736, 1
      %v3775 = vrot.slane %v3480, 1
      %v3776 = vsel %vm1589, %v3774, %v3775
      %v3777 = vrot.slane %v3737, 1
      %v3778 = vrot.slane %v3481, 1
      %v3779 = vsel %vm1589, %v3777, %v3778
      %v3780 = vrot.slane %v3738, 1
      %v3781 = vrot.slane %v3482, 1
      %v3782 = vsel %vm1589, %v3780, %v3781
      %v3783 = vrot.slane %v3739, 1
      %v3784 = vrot.slane %v3483, 1
      %v3785 = vsel %vm1589, %v3783, %v3784
      %v3786 = vrot.slane %v3740, 1
      %v3787 = vrot.slane %v3484, 1
      %v3788 = vsel %vm1589, %v3786, %v3787
      %s3805 = scalar_lea.vmem %s2, 384
      %v3806 = vld [vmem:[%s3805] sm:$0xf]
      %v3807 = vld [vmem:[%s3805 + $0x4] sm:$0xf]
      %v3808 = vld [vmem:[%s3805 + $0x8] sm:$0xf]
      %v3809 = vld [vmem:[%s3805 + $0xc] sm:$0xf]
      %v3810 = vld [vmem:[%s3805 + $0x10] sm:$0xf]
      %v3811 = vld [vmem:[%s3805 + $0x14] sm:$0xf]
      %v3812 = vld [vmem:[%s3805 + $0x18] sm:$0xf]
      %v3813 = vld [vmem:[%s3805 + $0x1c] sm:$0xf]
      %v3814 = vld [vmem:[%s3805 + $0x20] sm:$0xf]
      %v3815 = vld [vmem:[%s3805 + $0x24] sm:$0xf]
      %v3816 = vld [vmem:[%s3805 + $0x28] sm:$0xf]
      %v3817 = vld [vmem:[%s3805 + $0x2c] sm:$0xf]
      %v3818 = vld [vmem:[%s3805 + $0x30] sm:$0xf]
      %v3819 = vld [vmem:[%s3805 + $0x34] sm:$0xf]
      %v3820 = vld [vmem:[%s3805 + $0x38] sm:$0xf]
      %v3821 = vld [vmem:[%s3805 + $0x3c] sm:$0xf]
      %v3822 = vld [vmem:[%s3805 + $0x40] sm:$0xf]
      %v3823 = vld [vmem:[%s3805 + $0x44] sm:$0xf]
      %v3824 = vld [vmem:[%s3805 + $0x48] sm:$0xf]
      %v3825 = vld [vmem:[%s3805 + $0x4c] sm:$0xf]
      %v3826 = vld [vmem:[%s3805 + $0x50] sm:$0xf]
      %v3827 = vld [vmem:[%s3805 + $0x54] sm:$0xf]
      %v3828 = vld [vmem:[%s3805 + $0x58] sm:$0xf]
      %v3829 = vld [vmem:[%s3805 + $0x5c] sm:$0xf]
      %v3830 = vld [vmem:[%s3805 + $0x60] sm:$0xf]
      %v3831 = vld [vmem:[%s3805 + $0x64] sm:$0xf]
      %v3832 = vld [vmem:[%s3805 + $0x68] sm:$0xf]
      %v3833 = vld [vmem:[%s3805 + $0x6c] sm:$0xf]
      %v3834 = vld [vmem:[%s3805 + $0x70] sm:$0xf]
      %v3835 = vld [vmem:[%s3805 + $0x74] sm:$0xf]
      %v3836 = vld [vmem:[%s3805 + $0x78] sm:$0xf]
      %v3837 = vld [vmem:[%s3805 + $0x7c] sm:$0xf]
      %v3838 = vld [vmem:[%s3805 + $0x80] sm:$0xf]
      %v3839 = vld [vmem:[%s3805 + $0x84] sm:$0xf]
      %v3840 = vld [vmem:[%s3805 + $0x88] sm:$0xf]
      %v3841 = vld [vmem:[%s3805 + $0x8c] sm:$0xf]
      %v3842 = vld [vmem:[%s3805 + $0x90] sm:$0xf]
      %v3843 = vld [vmem:[%s3805 + $0x94] sm:$0xf]
      %v3844 = vld [vmem:[%s3805 + $0x98] sm:$0xf]
      %v3845 = vld [vmem:[%s3805 + $0x9c] sm:$0xf]
      %v3846 = vld [vmem:[%s3805 + $0xa0] sm:$0xf]
      %v3847 = vld [vmem:[%s3805 + $0xa4] sm:$0xf]
      %v3848 = vld [vmem:[%s3805 + $0xa8] sm:$0xf]
      %v3849 = vld [vmem:[%s3805 + $0xac] sm:$0xf]
      %v3850 = vld [vmem:[%s3805 + $0xb0] sm:$0xf]
      %v3851 = vld [vmem:[%s3805 + $0xb4] sm:$0xf]
      %v3852 = vld [vmem:[%s3805 + $0xb8] sm:$0xf]
      %v3853 = vld [vmem:[%s3805 + $0xbc] sm:$0xf]
      %v3902 = vunpack.c.l.b16 %v3806
      %v3903 = vunpack.c.l.b16 %v3807
      %v3904 = vunpack.c.l.b16 %v3808
      %v3905 = vunpack.c.l.b16 %v3809
      %v3906 = vunpack.c.l.b16 %v3810
      %v3907 = vunpack.c.l.b16 %v3811
      %v3908 = vunpack.c.l.b16 %v3812
      %v3909 = vunpack.c.l.b16 %v3813
      %v3910 = vunpack.c.l.b16 %v3814
      %v3911 = vunpack.c.l.b16 %v3815
      %v3912 = vunpack.c.l.b16 %v3816
      %v3913 = vunpack.c.l.b16 %v3817
      %v3914 = vunpack.c.l.b16 %v3818
      %v3915 = vunpack.c.l.b16 %v3819
      %v3916 = vunpack.c.l.b16 %v3820
      %v3917 = vunpack.c.l.b16 %v3821
      %v3918 = vunpack.c.l.b16 %v3822
      %v3919 = vunpack.c.l.b16 %v3823
      %v3920 = vunpack.c.l.b16 %v3824
      %v3921 = vunpack.c.l.b16 %v3825
      %v3922 = vunpack.c.l.b16 %v3826
      %v3923 = vunpack.c.l.b16 %v3827
      %v3924 = vunpack.c.l.b16 %v3828
      %v3925 = vunpack.c.l.b16 %v3829
      %v3926 = vunpack.c.l.b16 %v3830
      %v3927 = vunpack.c.l.b16 %v3831
      %v3928 = vunpack.c.l.b16 %v3832
      %v3929 = vunpack.c.l.b16 %v3833
      %v3930 = vunpack.c.l.b16 %v3834
      %v3931 = vunpack.c.l.b16 %v3835
      %v3932 = vunpack.c.l.b16 %v3836
      %v3933 = vunpack.c.l.b16 %v3837
      %v3934 = vunpack.c.l.b16 %v3838
      %v3935 = vunpack.c.l.b16 %v3839
      %v3936 = vunpack.c.l.b16 %v3840
      %v3937 = vunpack.c.l.b16 %v3841
      %v3938 = vunpack.c.l.b16 %v3842
      %v3939 = vunpack.c.l.b16 %v3843
      %v3940 = vunpack.c.l.b16 %v3844
      %v3941 = vunpack.c.l.b16 %v3845
      %v3942 = vunpack.c.l.b16 %v3846
      %v3943 = vunpack.c.l.b16 %v3847
      %v3944 = vunpack.c.l.b16 %v3848
      %v3945 = vunpack.c.l.b16 %v3849
      %v3946 = vunpack.c.l.b16 %v3850
      %v3947 = vunpack.c.l.b16 %v3851
      %v3948 = vunpack.c.l.b16 %v3852
      %v3949 = vunpack.c.l.b16 %v3853
      %v3950 = vpack.c.b16 %v3903, %v3902
      %v3951 = vpack.c.b16 %v3905, %v3904
      %v3952 = vpack.c.b16 %v3907, %v3906
      %v3953 = vpack.c.b16 %v3909, %v3908
      %v3954 = vpack.c.b16 %v3911, %v3910
      %v3955 = vpack.c.b16 %v3913, %v3912
      %v3956 = vpack.c.b16 %v3915, %v3914
      %v3957 = vpack.c.b16 %v3917, %v3916
      %v3958 = vpack.c.b16 %v3919, %v3918
      %v3959 = vpack.c.b16 %v3921, %v3920
      %v3960 = vpack.c.b16 %v3923, %v3922
      %v3961 = vpack.c.b16 %v3925, %v3924
      %v3962 = vpack.c.b16 %v3927, %v3926
      %v3963 = vpack.c.b16 %v3929, %v3928
      %v3964 = vpack.c.b16 %v3931, %v3930
      %v3965 = vpack.c.b16 %v3933, %v3932
      %v3966 = vpack.c.b16 %v3935, %v3934
      %v3967 = vpack.c.b16 %v3937, %v3936
      %v3968 = vpack.c.b16 %v3939, %v3938
      %v3969 = vpack.c.b16 %v3941, %v3940
      %v3970 = vpack.c.b16 %v3943, %v3942
      %v3971 = vpack.c.b16 %v3945, %v3944
      %v3972 = vpack.c.b16 %v3947, %v3946
      %v3973 = vpack.c.b16 %v3949, %v3948
      %3998 = vmatprep.subr.bf16.mxu0 0
      %3999 = vmatpush1.bf16.msra.mxu0 %v3950
      %4000 = vmatprep.subr.bf16.mxu0 0
      %4001 = vmatpush1.bf16.msra.mxu0 %v3951
      %4002 = vmatprep.subr.bf16.mxu0 0
      %4003 = vmatpush1.bf16.msra.mxu0 %v3952
      %4004 = vmatprep.subr.bf16.mxu0 0
      %4005 = vmatpush1.bf16.msra.mxu0 %v3953
      %4006 = vmatprep.subr.bf16.mxu0 0
      %4007 = vmatpush1.bf16.msra.mxu0 %v3954
      %4008 = vmatprep.subr.bf16.mxu0 0
      %4009 = vmatpush1.bf16.msra.mxu0 %v3955
      %4010 = vmatprep.subr.bf16.mxu0 0
      %4011 = vmatpush1.bf16.msra.mxu0 %v3956
      %4012 = vmatprep.subr.bf16.mxu0 0
      %4013 = vmatpush1.bf16.msra.mxu0 %v3957
      %4014 = vmatprep.subr.bf16.mxu0 0
      %4015 = vmatpush1.bf16.msra.mxu0 %v3958
      %4016 = vmatprep.subr.bf16.mxu0 0
      %4017 = vmatpush1.bf16.msra.mxu0 %v3959
      %4018 = vmatprep.subr.bf16.mxu0 0
      %4019 = vmatpush1.bf16.msra.mxu0 %v3960
      %4020 = vmatprep.subr.bf16.mxu0 0
      %4021 = vmatpush1.bf16.msra.mxu0 %v3961
      %4022 = vmatprep.subr.bf16.mxu0 0
      %4023 = vmatpush1.bf16.msra.mxu0 %v3962
      %4024 = vmatprep.subr.bf16.mxu0 0
      %4025 = vmatpush1.bf16.msra.mxu0 %v3963
      %4026 = vmatprep.subr.bf16.mxu0 0
      %4027 = vmatpush1.bf16.msra.mxu0 %v3964
      %4028 = vmatprep.subr.bf16.mxu0 0
      %4029 = vmatpush1.bf16.msra.mxu0 %v3965
      %4030 = vmatprep.mubr.bf16.mxu0 %v3496
      %4031 = vmatmul.mubr.bf16.gmra.mrb[0].mxu0 %v3405
      %v4032 = vpop.f32.mrb[0].mxu0
      %v4033 = vadd.f32 0.0, %v4032
      %v4034 = vpop.f32.mrb[0].mxu0
      %v4035 = vpop.f32.mrb[0].mxu0
      %v4036 = vadd.f32 0.0, %v4035
      %v4037 = vpop.f32.mrb[0].mxu0
      %4038 = vmatprep.mubr.bf16.mxu0 %v3508
      %4039 = vmatmul.mubr.bf16.gmra.mrb[0].mxu0 %v3406
      %v4040 = vpop.f32.mrb[0].mxu0
      %v4041 = vadd.f32 0.0, %v4040
      %v4042 = vpop.f32.mrb[0].mxu0
      %v4043 = vpop.f32.mrb[0].mxu0
      %v4044 = vadd.f32 0.0, %v4043
      %v4045 = vpop.f32.mrb[0].mxu0
      %4046 = vmatprep.mubr.bf16.mxu0 %v3520
      %4047 = vmatmul.mubr.bf16.gmra.mrb[0].mxu0 %v3407
      %v4048 = vpop.f32.mrb[0].mxu0
      %v4049 = vadd.f32 0.0, %v4048
      %v4050 = vpop.f32.mrb[0].mxu0
      %v4051 = vpop.f32.mrb[0].mxu0
      %v4052 = vadd.f32 0.0, %v4051
      %v4053 = vpop.f32.mrb[0].mxu0
      %4054 = vmatprep.mubr.bf16.mxu0 %v3532
      %4055 = vmatmul.mubr.bf16.gmra.mrb[0].mxu0 %v3408
      %v4056 = vpop.f32.mrb[0].mxu0
      %v4057 = vadd.f32 0.0, %v4056
      %v4058 = vpop.f32.mrb[0].mxu0
      %v4059 = vpop.f32.mrb[0].mxu0
      %v4060 = vadd.f32 0.0, %v4059
      %v4061 = vpop.f32.mrb[0].mxu0
      %4062 = vmatprep.mubr.bf16.mxu0 %v3544
      %4063 = vmatmul.mubr.bf16.gmra.mrb[0].mxu0 %v3409
      %v4064 = vpop.f32.mrb[0].mxu0
      %v4065 = vadd.f32 0.0, %v4064
      %v4066 = vpop.f32.mrb[0].mxu0
      %v4067 = vpop.f32.mrb[0].mxu0
      %v4068 = vadd.f32 0.0, %v4067
      %v4069 = vpop.f32.mrb[0].mxu0
      %4070 = vmatprep.mubr.bf16.mxu0 %v3556
      %4071 = vmatmul.mubr.bf16.gmra.mrb[0].mxu0 %v3410
      %v4072 = vpop.f32.mrb[0].mxu0
      %v4073 = vadd.f32 0.0, %v4072
      %v4074 = vpop.f32.mrb[0].mxu0
      %v4075 = vpop.f32.mrb[0].mxu0
      %v4076 = vadd.f32 0.0, %v4075
      %v4077 = vpop.f32.mrb[0].mxu0
      %4078 = vmatprep.mubr.bf16.mxu0 %v3568
      %4079 = vmatmul.mubr.bf16.gmra.mrb[0].mxu0 %v3411
      %v4080 = vpop.f32.mrb[0].mxu0
      %v4081 = vadd.f32 0.0, %v4080
      %v4082 = vpop.f32.mrb[0].mxu0
      %v4083 = vpop.f32.mrb[0].mxu0
      %v4084 = vadd.f32 0.0, %v4083
      %v4085 = vpop.f32.mrb[0].mxu0
      %4086 = vmatprep.mubr.bf16.mxu0 %v3580
      %4087 = vmatmul.mubr.bf16.gmra.mrb[0].mxu0 %v3412
      %v4088 = vpop.f32.mrb[0].mxu0
      %v4089 = vadd.f32 0.0, %v4088
      %v4090 = vpop.f32.mrb[0].mxu0
      %v4091 = vpop.f32.mrb[0].mxu0
      %v4092 = vadd.f32 0.0, %v4091
      %v4093 = vpop.f32.mrb[0].mxu0
      %4094 = vmatprep.mubr.bf16.mxu0 %v3592
      %4095 = vmatmul.mubr.bf16.gmra.mrb[0].mxu0 %v3413
      %v4096 = vpop.f32.mrb[0].mxu0
      %v4097 = vadd.f32 0.0, %v4096
      %v4098 = vpop.f32.mrb[0].mxu0
      %v4099 = vpop.f32.mrb[0].mxu0
      %v4100 = vadd.f32 0.0, %v4099
      %v4101 = vpop.f32.mrb[0].mxu0
      %4102 = vmatprep.mubr.bf16.mxu0 %v3604
      %4103 = vmatmul.mubr.bf16.gmra.mrb[0].mxu0 %v3414
      %v4104 = vpop.f32.mrb[0].mxu0
      %v4105 = vadd.f32 0.0, %v4104
      %v4106 = vpop.f32.mrb[0].mxu0
      %v4107 = vpop.f32.mrb[0].mxu0
      %v4108 = vadd.f32 0.0, %v4107
      %v4109 = vpop.f32.mrb[0].mxu0
      %4110 = vmatprep.mubr.bf16.mxu0 %v3616
      %4111 = vmatmul.mubr.bf16.gmra.mrb[0].mxu0 %v3415
      %v4112 = vpop.f32.mrb[0].mxu0
      %v4113 = vadd.f32 0.0, %v4112
      %v4114 = vpop.f32.mrb[0].mxu0
      %v4115 = vpop.f32.mrb[0].mxu0
      %v4116 = vadd.f32 0.0, %v4115
      %v4117 = vpop.f32.mrb[0].mxu0
      %4118 = vmatprep.mubr.bf16.mxu0 %v3628
      %4119 = vmatmul.mubr.bf16.gmra.mrb[0].mxu0 %v3416
      %v4120 = vpop.f32.mrb[0].mxu0
      %v4121 = vadd.f32 0.0, %v4120
      %v4122 = vpop.f32.mrb[0].mxu0
      %v4123 = vpop.f32.mrb[0].mxu0
      %v4124 = vadd.f32 0.0, %v4123
      %v4125 = vpop.f32.mrb[0].mxu0
      %4126 = vmatprep.mubr.bf16.mxu0 %v3640
      %4127 = vmatmul.mubr.bf16.gmra.mrb[0].mxu0 %v3417
      %v4128 = vpop.f32.mrb[0].mxu0
      %v4129 = vadd.f32 0.0, %v4128
      %v4130 = vpop.f32.mrb[0].mxu0
      %v4131 = vpop.f32.mrb[0].mxu0
      %v4132 = vadd.f32 0.0, %v4131
      %v4133 = vpop.f32.mrb[0].mxu0
      %4134 = vmatprep.mubr.bf16.mxu0 %v3652
      %4135 = vmatmul.mubr.bf16.gmra.mrb[0].mxu0 %v3418
      %v4136 = vpop.f32.mrb[0].mxu0
      %v4137 = vadd.f32 0.0, %v4136
      %v4138 = vpop.f32.mrb[0].mxu0
      %v4139 = vpop.f32.mrb[0].mxu0
      %v4140 = vadd.f32 0.0, %v4139
      %v4141 = vpop.f32.mrb[0].mxu0
      %4142 = vmatprep.mubr.bf16.mxu0 %v3664
      %4143 = vmatmul.mubr.bf16.gmra.mrb[0].mxu0 %v3419
      %v4144 = vpop.f32.mrb[0].mxu0
      %v4145 = vadd.f32 0.0, %v4144
      %v4146 = vpop.f32.mrb[0].mxu0
      %v4147 = vpop.f32.mrb[0].mxu0
      %v4148 = vadd.f32 0.0, %v4147
      %v4149 = vpop.f32.mrb[0].mxu0
      %4150 = vmatprep.mubr.bf16.mxu0 %v3676
      %4151 = vmatmul.mubr.bf16.gmra.mrb[0].mxu0 %v3420
      %v4152 = vpop.f32.mrb[0].mxu0
      %v4153 = vadd.f32 0.0, %v4152
      %v4154 = vpop.f32.mrb[0].mxu0
      %v4155 = vpop.f32.mrb[0].mxu0
      %v4156 = vadd.f32 0.0, %v4155
      %v4157 = vpop.f32.mrb[0].mxu0
      %4158 = vdwg.mxu0
      %4159 = vmatprep.subr.bf16.mxu0 0
      %4160 = vmatpush1.bf16.msra.mxu0 %v3966
      %4161 = vmatprep.subr.bf16.mxu0 0
      %4162 = vmatpush1.bf16.msra.mxu0 %v3967
      %4163 = vmatprep.subr.bf16.mxu0 0
      %4164 = vmatpush1.bf16.msra.mxu0 %v3968
      %4165 = vmatprep.subr.bf16.mxu0 0
      %4166 = vmatpush1.bf16.msra.mxu0 %v3969
      %4167 = vmatprep.subr.bf16.mxu0 0
      %4168 = vmatpush1.bf16.msra.mxu0 %v3970
      %4169 = vmatprep.subr.bf16.mxu0 0
      %4170 = vmatpush1.bf16.msra.mxu0 %v3971
      %4171 = vmatprep.subr.bf16.mxu0 0
      %4172 = vmatpush1.bf16.msra.mxu0 %v3972
      %4173 = vmatprep.subr.bf16.mxu0 0
      %4174 = vmatpush1.bf16.msra.mxu0 %v3973
      %4175 = vmatprep.subr.bf16.mxu0 0
      %4176 = vmatpush1.bf16.msra.mxu0 0
      %4177 = vmatprep.subr.bf16.mxu0 0
      %4178 = vmatpush1.bf16.msra.mxu0 0
      %4179 = vmatprep.subr.bf16.mxu0 0
      %4180 = vmatpush1.bf16.msra.mxu0 0
      %4181 = vmatprep.subr.bf16.mxu0 0
      %4182 = vmatpush1.bf16.msra.mxu0 0
      %4183 = vmatprep.subr.bf16.mxu0 0
      %4184 = vmatpush1.bf16.msra.mxu0 0
      %4185 = vmatprep.subr.bf16.mxu0 0
      %4186 = vmatpush1.bf16.msra.mxu0 0
      %4187 = vmatprep.subr.bf16.mxu0 0
      %4188 = vmatpush1.bf16.msra.mxu0 0
      %4189 = vmatprep.subr.bf16.mxu0 0
      %4190 = vmatpush1.bf16.msra.mxu0 0
      %4191 = vmatprep.mubr.bf16.mxu0 0
      %4192 = vmatmul.mubr.bf16.gmra.mrb[0].mxu0 %v3743
      %v4193 = vpop.f32.mrb[0].mxu0
      %v4194 = vadd.f32 %v4033, %v4193
      %v4195 = vpop.f32.mrb[0].mxu0
      %v4196 = vpop.f32.mrb[0].mxu0
      %v4197 = vadd.f32 %v4036, %v4196
      %v4198 = vpop.f32.mrb[0].mxu0
      %4199 = vmatprep.mubr.bf16.mxu0 0
      %4200 = vmatmul.mubr.bf16.gmra.mrb[0].mxu0 %v3746
      %v4201 = vpop.f32.mrb[0].mxu0
      %v4202 = vadd.f32 %v4041, %v4201
      %v4203 = vpop.f32.mrb[0].mxu0
      %v4204 = vpop.f32.mrb[0].mxu0
      %v4205 = vadd.f32 %v4044, %v4204
      %v4206 = vpop.f32.mrb[0].mxu0
      %4207 = vmatprep.mubr.bf16.mxu0 0
      %4208 = vmatmul.mubr.bf16.gmra.mrb[0].mxu0 %v3749
      %v4209 = vpop.f32.mrb[0].mxu0
      %v4210 = vadd.f32 %v4049, %v4209
      %v4211 = vpop.f32.mrb[0].mxu0
      %v4212 = vpop.f32.mrb[0].mxu0
      %v4213 = vadd.f32 %v4052, %v4212
      %v4214 = vpop.f32.mrb[0].mxu0
      %4215 = vmatprep.mubr.bf16.mxu0 0
      %4216 = vmatmul.mubr.bf16.gmra.mrb[0].mxu0 %v3752
      %v4217 = vpop.f32.mrb[0].mxu0
      %v4218 = vadd.f32 %v4057, %v4217
      %v4219 = vpop.f32.mrb[0].mxu0
      %v4220 = vpop.f32.mrb[0].mxu0
      %v4221 = vadd.f32 %v4060, %v4220
      %v4222 = vpop.f32.mrb[0].mxu0
      %4223 = vmatprep.mubr.bf16.mxu0 0
      %4224 = vmatmul.mubr.bf16.gmra.mrb[0].mxu0 %v3755
      %v4225 = vpop.f32.mrb[0].mxu0
      %v4226 = vadd.f32 %v4065, %v4225
      %v4227 = vpop.f32.mrb[0].mxu0
      %v4228 = vpop.f32.mrb[0].mxu0
      %v4229 = vadd.f32 %v4068, %v4228
      %v4230 = vpop.f32.mrb[0].mxu0
      %4231 = vmatprep.mubr.bf16.mxu0 0
      %4232 = vmatmul.mubr.bf16.gmra.mrb[0].mxu0 %v3758
      %v4233 = vpop.f32.mrb[0].mxu0
      %v4234 = vadd.f32 %v4073, %v4233
      %v4235 = vpop.f32.mrb[0].mxu0
      %v4236 = vpop.f32.mrb[0].mxu0
      %v4237 = vadd.f32 %v4076, %v4236
      %v4238 = vpop.f32.mrb[0].mxu0
      %4239 = vmatprep.mubr.bf16.mxu0 0
      %4240 = vmatmul.mubr.bf16.gmra.mrb[0].mxu0 %v3761
      %v4241 = vpop.f32.mrb[0].mxu0
      %v4242 = vadd.f32 %v4081, %v4241
      %v4243 = vpop.f32.mrb[0].mxu0
      %v4244 = vpop.f32.mrb[0].mxu0
      %v4245 = vadd.f32 %v4084, %v4244
      %v4246 = vpop.f32.mrb[0].mxu0
      %4247 = vmatprep.mubr.bf16.mxu0 0
      %4248 = vmatmul.mubr.bf16.gmra.mrb[0].mxu0 %v3764
      %v4249 = vpop.f32.mrb[0].mxu0
      %v4250 = vadd.f32 %v4089, %v4249
      %v4251 = vpop.f32.mrb[0].mxu0
      %v4252 = vpop.f32.mrb[0].mxu0
      %v4253 = vadd.f32 %v4092, %v4252
      %v4254 = vpop.f32.mrb[0].mxu0
      %4255 = vmatprep.mubr.bf16.mxu0 0
      %4256 = vmatmul.mubr.bf16.gmra.mrb[0].mxu0 %v3767
      %v4257 = vpop.f32.mrb[0].mxu0
      %v4258 = vadd.f32 %v4097, %v4257
      %v4259 = vpop.f32.mrb[0].mxu0
      %v4260 = vpop.f32.mrb[0].mxu0
      %v4261 = vadd.f32 %v4100, %v4260
      %v4262 = vpop.f32.mrb[0].mxu0
      %4263 = vmatprep.mubr.bf16.mxu0 0
      %4264 = vmatmul.mubr.bf16.gmra.mrb[0].mxu0 %v3770
      %v4265 = vpop.f32.mrb[0].mxu0
      %v4266 = vadd.f32 %v4105, %v4265
      %v4267 = vpop.f32.mrb[0].mxu0
      %v4268 = vpop.f32.mrb[0].mxu0
      %v4269 = vadd.f32 %v4108, %v4268
      %v4270 = vpop.f32.mrb[0].mxu0
      %4271 = vmatprep.mubr.bf16.mxu0 0
      %4272 = vmatmul.mubr.bf16.gmra.mrb[0].mxu0 %v3773
      %v4273 = vpop.f32.mrb[0].mxu0
      %v4274 = vadd.f32 %v4113, %v4273
      %v4275 = vpop.f32.mrb[0].mxu0
      %v4276 = vpop.f32.mrb[0].mxu0
      %v4277 = vadd.f32 %v4116, %v4276
      %v4278 = vpop.f32.mrb[0].mxu0
      %4279 = vmatprep.mubr.bf16.mxu0 0
      %4280 = vmatmul.mubr.bf16.gmra.mrb[0].mxu0 %v3776
      %v4281 = vpop.f32.mrb[0].mxu0
      %v4282 = vadd.f32 %v4121, %v4281
      %v4283 = vpop.f32.mrb[0].mxu0
      %v4284 = vpop.f32.mrb[0].mxu0
      %v4285 = vadd.f32 %v4124, %v4284
      %v4286 = vpop.f32.mrb[0].mxu0
      %4287 = vmatprep.mubr.bf16.mxu0 0
      %4288 = vmatmul.mubr.bf16.gmra.mrb[0].mxu0 %v3779
      %v4289 = vpop.f32.mrb[0].mxu0
      %v4290 = vadd.f32 %v4129, %v4289
      %v4291 = vpop.f32.mrb[0].mxu0
      %v4292 = vpop.f32.mrb[0].mxu0
      %v4293 = vadd.f32 %v4132, %v4292
      %v4294 = vpop.f32.mrb[0].mxu0
      %4295 = vmatprep.mubr.bf16.mxu0 0
      %4296 = vmatmul.mubr.bf16.gmra.mrb[0].mxu0 %v3782
      %v4297 = vpop.f32.mrb[0].mxu0
      %v4298 = vadd.f32 %v4137, %v4297
      %v4299 = vpop.f32.mrb[0].mxu0
      %v4300 = vpop.f32.mrb[0].mxu0
      %v4301 = vadd.f32 %v4140, %v4300
      %v4302 = vpop.f32.mrb[0].mxu0
      %4303 = vmatprep.mubr.bf16.mxu0 0
      %4304 = vmatmul.mubr.bf16.gmra.mrb[0].mxu0 %v3785
      %v4305 = vpop.f32.mrb[0].mxu0
      %v4306 = vadd.f32 %v4145, %v4305
      %v4307 = vpop.f32.mrb[0].mxu0
      %v4308 = vpop.f32.mrb[0].mxu0
      %v4309 = vadd.f32 %v4148, %v4308
      %v4310 = vpop.f32.mrb[0].mxu0
      %4311 = vmatprep.mubr.bf16.mxu0 0
      %4312 = vmatmul.mubr.bf16.gmra.mrb[0].mxu0 %v3788
      %v4313 = vpop.f32.mrb[0].mxu0
      %v4314 = vadd.f32 %v4153, %v4313
      %v4315 = vpop.f32.mrb[0].mxu0
      %v4316 = vpop.f32.mrb[0].mxu0
      %v4317 = vadd.f32 %v4156, %v4316
      %v4318 = vpop.f32.mrb[0].mxu0
      %4319 = vdwg.mxu0
      %v4320 = vadd.f32 %v3244, %v4194
      %v4321 = vadd.f32 %v3245, %v4197
      %v4322 = vadd.f32 %v3246, %v4202
      %v4323 = vadd.f32 %v3247, %v4205
      %v4324 = vadd.f32 %v3248, %v4210
      %v4325 = vadd.f32 %v3249, %v4213
      %v4326 = vadd.f32 %v3250, %v4218
      %v4327 = vadd.f32 %v3251, %v4221
      %v4328 = vadd.f32 %v3252, %v4226
      %v4329 = vadd.f32 %v3253, %v4229
      %v4330 = vadd.f32 %v3254, %v4234
      %v4331 = vadd.f32 %v3255, %v4237
      %v4332 = vadd.f32 %v3256, %v4242
      %v4333 = vadd.f32 %v3257, %v4245
      %v4334 = vadd.f32 %v3258, %v4250
      %v4335 = vadd.f32 %v3259, %v4253
      %v4336 = vadd.f32 %v3260, %v4258
      %v4337 = vadd.f32 %v3261, %v4261
      %v4338 = vadd.f32 %v3262, %v4266
      %v4339 = vadd.f32 %v3263, %v4269
      %v4340 = vadd.f32 %v3264, %v4274
      %v4341 = vadd.f32 %v3265, %v4277
      %v4342 = vadd.f32 %v3266, %v4282
      %v4343 = vadd.f32 %v3267, %v4285
      %v4344 = vadd.f32 %v3268, %v4290
      %v4345 = vadd.f32 %v3269, %v4293
      %v4346 = vadd.f32 %v3270, %v4298
      %v4347 = vadd.f32 %v3271, %v4301
      %v4348 = vadd.f32 %v3272, %v4306
      %v4349 = vadd.f32 %v3273, %v4309
      %v4350 = vadd.f32 %v3274, %v4314
      %v4351 = vadd.f32 %v3275, %v4317
      %s4352 = smul.u32 %s24, 16
      %v4353 = vstv %s4352
      %v4354 = vadd.s32 %v4353, 1
      %v4355 = vadd.s32 %v4353, 2
      %v4356 = vadd.s32 %v4353, 3
      %v4357 = vadd.s32 %v4353, 4
      %v4358 = vadd.s32 %v4353, 5
      %v4359 = vadd.s32 %v4353, 6
      %v4360 = vadd.s32 %v4353, 7
      %v4361 = vadd.s32 %v4353, 8
      %v4362 = vadd.s32 %v4353, 9
      %v4363 = vadd.s32 %v4353, 10
      %v4364 = vadd.s32 %v4353, 11
      %v4365 = vadd.s32 %v4353, 12
      %v4366 = vadd.s32 %v4353, 13
      %v4367 = vadd.s32 %v4353, 14
      %v4368 = vadd.s32 %v4353, 15
      %vm4369 = vcmp.lt.s32.totalorder %v4353, 16
      %vm4370 = vcmp.lt.s32.totalorder %v4354, 16
      %vm4371 = vcmp.lt.s32.totalorder %v4355, 16
      %vm4372 = vcmp.lt.s32.totalorder %v4356, 16
      %vm4373 = vcmp.lt.s32.totalorder %v4357, 16
      %vm4374 = vcmp.lt.s32.totalorder %v4358, 16
      %vm4375 = vcmp.lt.s32.totalorder %v4359, 16
      %vm4376 = vcmp.lt.s32.totalorder %v4360, 16
      %vm4377 = vcmp.lt.s32.totalorder %v4361, 16
      %vm4378 = vcmp.lt.s32.totalorder %v4362, 16
      %vm4379 = vcmp.lt.s32.totalorder %v4363, 16
      %vm4380 = vcmp.lt.s32.totalorder %v4364, 16
      %vm4381 = vcmp.lt.s32.totalorder %v4365, 16
      %vm4382 = vcmp.lt.s32.totalorder %v4366, 16
      %vm4383 = vcmp.lt.s32.totalorder %v4367, 16
      %vm4384 = vcmp.lt.s32.totalorder %v4368, 16
      %v4385 = vsel %vm4369, 1, 0
      %v4386 = vsel %vm4370, 1, 0
      %v4387 = vsel %vm4371, 1, 0
      %v4388 = vsel %vm4372, 1, 0
      %v4389 = vsel %vm4373, 1, 0
      %v4390 = vsel %vm4374, 1, 0
      %v4391 = vsel %vm4375, 1, 0
      %v4392 = vsel %vm4376, 1, 0
      %v4393 = vsel %vm4377, 1, 0
      %v4394 = vsel %vm4378, 1, 0
      %v4395 = vsel %vm4379, 1, 0
      %v4396 = vsel %vm4380, 1, 0
      %v4397 = vsel %vm4381, 1, 0
      %v4398 = vsel %vm4382, 1, 0
      %v4399 = vsel %vm4383, 1, 0
      %v4400 = vsel %vm4384, 1, 0
      %v4401 = vcvt.s32.f32 %v4385
      %v4402 = vcvt.s32.f32 %v4386
      %v4403 = vcvt.s32.f32 %v4387
      %v4404 = vcvt.s32.f32 %v4388
      %v4405 = vcvt.s32.f32 %v4389
      %v4406 = vcvt.s32.f32 %v4390
      %v4407 = vcvt.s32.f32 %v4391
      %v4408 = vcvt.s32.f32 %v4392
      %v4409 = vcvt.s32.f32 %v4393
      %v4410 = vcvt.s32.f32 %v4394
      %v4411 = vcvt.s32.f32 %v4395
      %v4412 = vcvt.s32.f32 %v4396
      %v4413 = vcvt.s32.f32 %v4397
      %v4414 = vcvt.s32.f32 %v4398
      %v4415 = vcvt.s32.f32 %v4399
      %v4416 = vcvt.s32.f32 %v4400
      %v4417 = vmul.f32 %v4320, %v4401
      %v4418 = vmul.f32 %v4321, %v4401
      %v4419 = vmul.f32 %v4322, %v4402
      %v4420 = vmul.f32 %v4323, %v4402
      %v4421 = vmul.f32 %v4324, %v4403
      %v4422 = vmul.f32 %v4325, %v4403
      %v4423 = vmul.f32 %v4326, %v4404
      %v4424 = vmul.f32 %v4327, %v4404
      %v4425 = vmul.f32 %v4328, %v4405
      %v4426 = vmul.f32 %v4329, %v4405
      %v4427 = vmul.f32 %v4330, %v4406
      %v4428 = vmul.f32 %v4331, %v4406
      %v4429 = vmul.f32 %v4332, %v4407
      %v4430 = vmul.f32 %v4333, %v4407
      %v4431 = vmul.f32 %v4334, %v4408
      %v4432 = vmul.f32 %v4335, %v4408
      %v4433 = vmul.f32 %v4336, %v4409
      %v4434 = vmul.f32 %v4337, %v4409
      %v4435 = vmul.f32 %v4338, %v4410
      %v4436 = vmul.f32 %v4339, %v4410
      %v4437 = vmul.f32 %v4340, %v4411
      %v4438 = vmul.f32 %v4341, %v4411
      %v4439 = vmul.f32 %v4342, %v4412
      %v4440 = vmul.f32 %v4343, %v4412
      %v4441 = vmul.f32 %v4344, %v4413
      %v4442 = vmul.f32 %v4345, %v4413
      %v4443 = vmul.f32 %v4346, %v4414
      %v4444 = vmul.f32 %v4347, %v4414
      %v4445 = vmul.f32 %v4348, %v4415
      %v4446 = vmul.f32 %v4349, %v4415
      %v4447 = vmul.f32 %v4350, %v4416
      %v4448 = vmul.f32 %v4351, %v4416
      %v4449 = vadd.f32 %v4417, %v4419
      %v4450 = vadd.f32 %v4449, %v4421
      %v4451 = vadd.f32 %v4450, %v4423
      %v4452 = vadd.f32 %v4451, %v4425
      %v4453 = vadd.f32 %v4452, %v4427
      %v4454 = vadd.f32 %v4453, %v4429
      %v4455 = vadd.f32 %v4454, %v4431
      %v4456 = vadd.f32 %v4455, %v4433
      %v4457 = vadd.f32 %v4456, %v4435
      %v4458 = vadd.f32 %v4457, %v4437
      %v4459 = vadd.f32 %v4458, %v4439
      %v4460 = vadd.f32 %v4459, %v4441
      %v4461 = vadd.f32 %v4460, %v4443
      %v4462 = vadd.f32 %v4461, %v4445
      %v4463 = vadd.f32 %v4462, %v4447
      %v4464 = vadd.f32 %v4418, %v4420
      %v4465 = vadd.f32 %v4464, %v4422
      %v4466 = vadd.f32 %v4465, %v4424
      %v4467 = vadd.f32 %v4466, %v4426
      %v4468 = vadd.f32 %v4467, %v4428
      %v4469 = vadd.f32 %v4468, %v4430
      %v4470 = vadd.f32 %v4469, %v4432
      %v4471 = vadd.f32 %v4470, %v4434
      %v4472 = vadd.f32 %v4471, %v4436
      %v4473 = vadd.f32 %v4472, %v4438
      %v4474 = vadd.f32 %v4473, %v4440
      %v4475 = vadd.f32 %v4474, %v4442
      %v4476 = vadd.f32 %v4475, %v4444
      %v4477 = vadd.f32 %v4476, %v4446
      %v4478 = vadd.f32 %v4477, %v4448
      %4479 = vst [vmem:[%s417] sm:$0xff] %v4463
      %4480 = vst [vmem:[%s417 + $0x8] sm:$0xff] %v4478
      %v4481 = vmul.f32 %v4417, %v4320
      %v4482 = vmul.f32 %v4418, %v4321
      %v4483 = vmul.f32 %v4419, %v4322
      %v4484 = vmul.f32 %v4420, %v4323
      %v4485 = vmul.f32 %v4421, %v4324
      %v4486 = vmul.f32 %v4422, %v4325
      %v4487 = vmul.f32 %v4423, %v4326
      %v4488 = vmul.f32 %v4424, %v4327
      %v4489 = vmul.f32 %v4425, %v4328
      %v4490 = vmul.f32 %v4426, %v4329
      %v4491 = vmul.f32 %v4427, %v4330
      %v4492 = vmul.f32 %v4428, %v4331
      %v4493 = vmul.f32 %v4429, %v4332
      %v4494 = vmul.f32 %v4430, %v4333
      %v4495 = vmul.f32 %v4431, %v4334
      %v4496 = vmul.f32 %v4432, %v4335
      %v4497 = vmul.f32 %v4433, %v4336
      %v4498 = vmul.f32 %v4434, %v4337
      %v4499 = vmul.f32 %v4435, %v4338
      %v4500 = vmul.f32 %v4436, %v4339
      %v4501 = vmul.f32 %v4437, %v4340
      %v4502 = vmul.f32 %v4438, %v4341
      %v4503 = vmul.f32 %v4439, %v4342
      %v4504 = vmul.f32 %v4440, %v4343
      %v4505 = vmul.f32 %v4441, %v4344
      %v4506 = vmul.f32 %v4442, %v4345
      %v4507 = vmul.f32 %v4443, %v4346
      %v4508 = vmul.f32 %v4444, %v4347
      %v4509 = vmul.f32 %v4445, %v4348
      %v4510 = vmul.f32 %v4446, %v4349
      %v4511 = vmul.f32 %v4447, %v4350
      %v4512 = vmul.f32 %v4448, %v4351
      %v4513 = vadd.f32 %v4481, %v4483
      %v4514 = vadd.f32 %v4513, %v4485
      %v4515 = vadd.f32 %v4514, %v4487
      %v4516 = vadd.f32 %v4515, %v4489
      %v4517 = vadd.f32 %v4516, %v4491
      %v4518 = vadd.f32 %v4517, %v4493
      %v4519 = vadd.f32 %v4518, %v4495
      %v4520 = vadd.f32 %v4519, %v4497
      %v4521 = vadd.f32 %v4520, %v4499
      %v4522 = vadd.f32 %v4521, %v4501
      %v4523 = vadd.f32 %v4522, %v4503
      %v4524 = vadd.f32 %v4523, %v4505
      %v4525 = vadd.f32 %v4524, %v4507
      %v4526 = vadd.f32 %v4525, %v4509
      %v4527 = vadd.f32 %v4526, %v4511
      %v4528 = vadd.f32 %v4482, %v4484
      %v4529 = vadd.f32 %v4528, %v4486
      %v4530 = vadd.f32 %v4529, %v4488
      %v4531 = vadd.f32 %v4530, %v4490
      %v4532 = vadd.f32 %v4531, %v4492
      %v4533 = vadd.f32 %v4532, %v4494
      %v4534 = vadd.f32 %v4533, %v4496
      %v4535 = vadd.f32 %v4534, %v4498
      %v4536 = vadd.f32 %v4535, %v4500
      %v4537 = vadd.f32 %v4536, %v4502
      %v4538 = vadd.f32 %v4537, %v4504
      %v4539 = vadd.f32 %v4538, %v4506
      %v4540 = vadd.f32 %v4539, %v4508
      %v4541 = vadd.f32 %v4540, %v4510
      %v4542 = vadd.f32 %v4541, %v4512
      %s4543 = scalar_lea.vmem %s417, 16
      %4544 = vst [vmem:[%s4543] sm:$0xff] %v4527
      %4545 = vst [vmem:[%s4543 + $0x8] sm:$0xff] %v4542
      %v4546 = vpack.c.bf16 %v4321, %v4320
      %v4547 = vpack.c.bf16 %v4323, %v4322
      %v4548 = vpack.c.bf16 %v4325, %v4324
      %v4549 = vpack.c.bf16 %v4327, %v4326
      %v4550 = vpack.c.bf16 %v4329, %v4328
      %v4551 = vpack.c.bf16 %v4331, %v4330
      %v4552 = vpack.c.bf16 %v4333, %v4332
      %v4553 = vpack.c.bf16 %v4335, %v4334
      %v4554 = vpack.c.bf16 %v4337, %v4336
      %v4555 = vpack.c.bf16 %v4339, %v4338
      %v4556 = vpack.c.bf16 %v4341, %v4340
      %v4557 = vpack.c.bf16 %v4343, %v4342
      %v4558 = vpack.c.bf16 %v4345, %v4344
      %v4559 = vpack.c.bf16 %v4347, %v4346
      %v4560 = vpack.c.bf16 %v4349, %v4348
      %v4561 = vpack.c.bf16 %v4351, %v4350
      %v4578 = vunpack.c.l.b16 %v4546
      %v4579 = vunpack.c.h.b16 %v4546
      %v4580 = vunpack.c.l.b16 %v4547
      %v4581 = vunpack.c.h.b16 %v4547
      %v4582 = vunpack.c.l.b16 %v4548
      %v4583 = vunpack.c.h.b16 %v4548
      %v4584 = vunpack.c.l.b16 %v4549
      %v4585 = vunpack.c.h.b16 %v4549
      %v4586 = vunpack.c.l.b16 %v4550
      %v4587 = vunpack.c.h.b16 %v4550
      %v4588 = vunpack.c.l.b16 %v4551
      %v4589 = vunpack.c.h.b16 %v4551
      %v4590 = vunpack.c.l.b16 %v4552
      %v4591 = vunpack.c.h.b16 %v4552
      %v4592 = vunpack.c.l.b16 %v4553
      %v4593 = vunpack.c.h.b16 %v4553
      %v4594 = vunpack.c.l.b16 %v4554
      %v4595 = vunpack.c.h.b16 %v4554
      %v4596 = vunpack.c.l.b16 %v4555
      %v4597 = vunpack.c.h.b16 %v4555
      %v4598 = vunpack.c.l.b16 %v4556
      %v4599 = vunpack.c.h.b16 %v4556
      %v4600 = vunpack.c.l.b16 %v4557
      %v4601 = vunpack.c.h.b16 %v4557
      %v4602 = vunpack.c.l.b16 %v4558
      %v4603 = vunpack.c.h.b16 %v4558
      %v4604 = vunpack.c.l.b16 %v4559
      %v4605 = vunpack.c.h.b16 %v4559
      %v4606 = vunpack.c.l.b16 %v4560
      %v4607 = vunpack.c.h.b16 %v4560
      %v4608 = vunpack.c.l.b16 %v4561
      %v4609 = vunpack.c.h.b16 %v4561
      %v4610 = vpack.c.b16 %v4578, %v4578
      %v4611 = vpack.c.b16 %v4579, %v4579
      %v4612 = vpack.c.b16 %v4580, %v4580
      %v4613 = vpack.c.b16 %v4581, %v4581
      %v4614 = vpack.c.b16 %v4582, %v4582
      %v4615 = vpack.c.b16 %v4583, %v4583
      %v4616 = vpack.c.b16 %v4584, %v4584
      %v4617 = vpack.c.b16 %v4585, %v4585
      %v4618 = vpack.c.b16 %v4586, %v4586
      %v4619 = vpack.c.b16 %v4587, %v4587
      %v4620 = vpack.c.b16 %v4588, %v4588
      %v4621 = vpack.c.b16 %v4589, %v4589
      %v4622 = vpack.c.b16 %v4590, %v4590
      %v4623 = vpack.c.b16 %v4591, %v4591
      %v4624 = vpack.c.b16 %v4592, %v4592
      %v4625 = vpack.c.b16 %v4593, %v4593
      %v4626 = vpack.c.b16 %v4594, %v4594
      %v4627 = vpack.c.b16 %v4595, %v4595
      %v4628 = vpack.c.b16 %v4596, %v4596
      %v4629 = vpack.c.b16 %v4597, %v4597
      %v4630 = vpack.c.b16 %v4598, %v4598
      %v4631 = vpack.c.b16 %v4599, %v4599
      %v4632 = vpack.c.b16 %v4600, %v4600
      %v4633 = vpack.c.b16 %v4601, %v4601
      %v4634 = vpack.c.b16 %v4602, %v4602
      %v4635 = vpack.c.b16 %v4603, %v4603
      %v4636 = vpack.c.b16 %v4604, %v4604
      %v4637 = vpack.c.b16 %v4605, %v4605
      %v4638 = vpack.c.b16 %v4606, %v4606
      %v4639 = vpack.c.b16 %v4607, %v4607
      %v4640 = vpack.c.b16 %v4608, %v4608
      %v4641 = vpack.c.b16 %v4609, %v4609
      %4674 = vst [vmem:[%s410] sm:$0xf] %v4610
      %4675 = vst [vmem:[%s410 + $0x4] sm:$0xf] %v4611
      %4676 = vst [vmem:[%s410 + $0x8] sm:$0xf] %v4612
      %4677 = vst [vmem:[%s410 + $0xc] sm:$0xf] %v4613
      %4678 = vst [vmem:[%s410 + $0x10] sm:$0xf] %v4614
      %4679 = vst [vmem:[%s410 + $0x14] sm:$0xf] %v4615
      %4680 = vst [vmem:[%s410 + $0x18] sm:$0xf] %v4616
      %4681 = vst [vmem:[%s410 + $0x1c] sm:$0xf] %v4617
      %4682 = vst [vmem:[%s410 + $0x20] sm:$0xf] %v4618
      %4683 = vst [vmem:[%s410 + $0x24] sm:$0xf] %v4619
      %4684 = vst [vmem:[%s410 + $0x28] sm:$0xf] %v4620
      %4685 = vst [vmem:[%s410 + $0x2c] sm:$0xf] %v4621
      %4686 = vst [vmem:[%s410 + $0x30] sm:$0xf] %v4622
      %4687 = vst [vmem:[%s410 + $0x34] sm:$0xf] %v4623
      %4688 = vst [vmem:[%s410 + $0x38] sm:$0xf] %v4624
      %4689 = vst [vmem:[%s410 + $0x3c] sm:$0xf] %v4625
      %4690 = vst [vmem:[%s410 + $0x40] sm:$0xf] %v4626
      %4691 = vst [vmem:[%s410 + $0x44] sm:$0xf] %v4627
      %4692 = vst [vmem:[%s410 + $0x48] sm:$0xf] %v4628
      %4693 = vst [vmem:[%s410 + $0x4c] sm:$0xf] %v4629
      %4694 = vst [vmem:[%s410 + $0x50] sm:$0xf] %v4630
      %4695 = vst [vmem:[%s410 + $0x54] sm:$0xf] %v4631
      %4696 = vst [vmem:[%s410 + $0x58] sm:$0xf] %v4632
      %4697 = vst [vmem:[%s410 + $0x5c] sm:$0xf] %v4633
      %4698 = vst [vmem:[%s410 + $0x60] sm:$0xf] %v4634
      %4699 = vst [vmem:[%s410 + $0x64] sm:$0xf] %v4635
      %4700 = vst [vmem:[%s410 + $0x68] sm:$0xf] %v4636
      %4701 = vst [vmem:[%s410 + $0x6c] sm:$0xf] %v4637
      %4702 = vst [vmem:[%s410 + $0x70] sm:$0xf] %v4638
      %4703 = vst [vmem:[%s410 + $0x74] sm:$0xf] %v4639
      %4704 = vst [vmem:[%s410 + $0x78] sm:$0xf] %v4640
      %4705 = vst [vmem:[%s410 + $0x7c] sm:$0xf] %v4641
      %s4706 = smul.u32 16, %s24
      %p4707 = scmp.lt.s32.totalorder %s23, 1
      %s4708 = scalar_select %p4707, %s23, 1
      %p4709 = scmp.lt.s32.totalorder %s4706, 15
      %s4710 = scalar_select %p4709, %s4706, 15
      %s4711 = smul.addr %s4710, 2
      %s4712 = smul.addr %s4708, 32
      %s4713 = sadd.s32 %s4711, %s4712
      %s4714 = smul.addr %s4713, 4
      %s4715 = scalar_lea.vmem %s6, %s4714
      %s4716 = sadd.s32 %s23, %s24
      %p4717 = scmp.lt.s32.totalorder %s4716, 1
      %s4718 = scalar_select %p4717, %s4716, 1
      %s4719 = smul.addr %s4718, 4
      %s4720 = smul.addr %s4719, 8
      %s4721 = scalar_lea.vmem %s7, %s4720
      // Predicated region
      $region49: #{double_conv_forward.4} parent=43 // pred_check
        %p4722 = pneg %p195
      $region50: #{double_conv_forward.4} parent=43 // pred_check_branch
        %4724 = sbr.rel (%p4722) target = $region52
      $region51: #{double_conv_forward.4} parent=43 // pred_region
        %s4725 = smul.u32 16, %s24
      $region52: #{double_conv_forward.4} parent=43 // pred_fallthru
        _
      // Predicated region
      $region53: #{double_conv_forward.4} parent=43 // pred_check
        %p4726 = pneg %p223
      $region54: #{double_conv_forward.4} parent=43 // pred_check_branch
        %4728 = sbr.rel (%p4726) target = $region56
      $region55: #{double_conv_forward.4} parent=43 // pred_region
        %s4729 = sadd.s32 %s23, %s24
      $region56: #{double_conv_forward.4} parent=43 // pred_fallthru
        _
    $region44: #{double_conv_forward.4} parent=5 // pred_fallthru
      _
    %p4730 = scmp.le.s32.totalorder 2, %s14
    // Predicated region
    $region57: #{double_conv_forward.4} parent=5 // pred_check
      %p4731 = pneg %p4730
    $region58: #{double_conv_forward.4} parent=5 // pred_check_branch
      %4733 = sbr.rel (%p4731) target = $region60
    $region59: #{double_conv_forward.4} parent=5 // pred_region
      %s4734 = ssub.s32 %s14, 2
      // Predicated region
      $region61: #{double_conv_forward.4} parent=59 // pred_check
        %p4735 = pneg %p201
      $region62: #{double_conv_forward.4} parent=59 // pred_check_branch
        %4737 = sbr.rel (%p4735) target = $region64
      $region63: #{double_conv_forward.4} parent=59 // pred_region
        %s4738 = smul.u32 16, %s26
        %p4739 = scmp.lt.s32.totalorder %s25, 1
        %s4740 = scalar_select %p4739, %s25, 1
        %p4741 = scmp.lt.s32.totalorder %s4738, 15
        %s4742 = scalar_select %p4741, %s4738, 15
        %s4743 = smul.addr %s4742, 2
        %s4744 = smul.addr %s4740, 32
        %s4745 = sadd.s32 %s4743, %s4744
        %s4746 = smul.addr %s4745, 4
        %s4747 = scalar_lea.vmem %s6, %s4746
      $region64: #{double_conv_forward.4} parent=59 // pred_fallthru
        _
      // Predicated region
      $region65: #{double_conv_forward.4} parent=59 // pred_check
        %p4748 = pneg %p229
      $region66: #{double_conv_forward.4} parent=59 // pred_check_branch
        %4750 = sbr.rel (%p4748) target = $region68
      $region67: #{double_conv_forward.4} parent=59 // pred_region
        %s4751 = sadd.s32 %s25, %s26
        %p4752 = scmp.lt.s32.totalorder %s4751, 1
        %s4753 = scalar_select %p4752, %s4751, 1
        %s4754 = smul.addr %s4753, 4
        %s4755 = smul.addr %s4754, 8
        %s4756 = scalar_lea.vmem %s7, %s4755
      $region68: #{double_conv_forward.4} parent=59 // pred_fallthru
        _
    $region60: #{double_conv_forward.4} parent=5 // pred_fallthru
      _
  $region6: #{double_conv_forward.4} parent=0 // loop_footer
    %s18 = sadd.s32 1, %s14
  $region7: #{double_conv_forward.4} parent=0 // loop_footer_branch
    %13 = sbr.rel target = $region3
  $region8: #{double_conv_forward.4} parent=0 // loop_exit
    _

</llo_original>
